<compile_context>
chip_gen: v7x
topology: tpu7x:2x2x1
jax: 0.10.0
libtpu: 0.0.40
codegen_flags: <defaults>
</compile_context>

<pallas_src>
import functools

import jax
import jax.numpy as jnp
from jax.experimental import pallas as pl
from jax.experimental.pallas import tpu as pltpu

# torchvision vgg16 feature config "D"
VGG16_CFG = [64, 64, "M", 128, 128, "M", 256, 256, 256, "M",
             512, 512, 512, "M", 512, 512, 512, "M"]


def _vmem_limit_bytes():
    # Conservative default (v7x has only 64 MiB physical VMEM); refine via get_tpu_info
    # when available.  Never request more than 3/4 of physical, capped at 96 MiB.
    cap = 64 * 1024 * 1024
    try:
        info = pltpu.get_tpu_info()
        cap = int(getattr(info, "vmem_capacity_bytes", cap)) or cap
    except Exception:
        pass
    return min((cap * 3) // 4, 96 * 1024 * 1024)


_VMEM_LIMIT = _vmem_limit_bytes()
# Linear-layer weight tile budget (double buffered): ~16 MiB on v7x, ~32 MiB on v5e/v6e.
_WEIGHT_TILE_BYTES = max(8 * 1024 * 1024, _VMEM_LIMIT // 3)


def _largest_divisor(n, cap, *, even=False):
    """Largest divisor of n that is <= cap (optionally even)."""
    cap = max(1, min(int(cap), n))
    for d in range(cap, 0, -1):
        if n % d == 0 and (not even or d % 2 == 0):
            return d
    return 2 if even else 1


# --------------------------------------------------------------------------
# 3x3 conv (pad=1, stride=1) + bias + fused ReLU (+ optional fused 2x2/2 maxpool)
# --------------------------------------------------------------------------
def _conv3x3_kernel(x_ref, w_ref, b_ref, o_ref, *, TH, W, Wp, cin, cout, pool):
    # x_ref: (1, H+2, Wpad, Cin) whole zero-padded image (block resident across strips)
    # w_ref: (3, 3*Cin, Cout)    kh-major, kw folded into the contraction dim
    # b_ref: (1, Cout)
    # o_ref: (1, TH, W, Cout)  or  (1, TH//2, W//2, Cout) when the maxpool is fused
    s = pl.program_id(1)
    r0 = s * TH
    if TH % 8 == 0:
        r0 = pl.multiple_of(r0, 8)

    # 3 MXU matmuls per strip with K = 3*Cin: per kh, load ONE aligned full-width row
    # block and build the 3 kw shifts by channel-axis concat, so the f32 accumulator is
    # read-modify-written 3x (not 9x) per strip and MXU K is 3x larger.
    acc = jnp.zeros((TH * Wp, cout), jnp.float32)
    for kh in range(3):
        rows = x_ref[0, pl.ds(r0 + kh, TH), :, :]                     # (TH, Wpad, Cin)
        patch = jnp.concatenate(
            [rows[:, 0:Wp, :], rows[:, 1:Wp + 1, :], rows[:, 2:Wp + 2, :]], axis=-1)
        acc = acc + jnp.dot(patch.reshape(TH * Wp, 3 * cin), w_ref[kh],
                            preferred_element_type=jnp.float32)

    # bias + ReLU applied once per strip (hoisted out of all loops)
    out = jnp.maximum(acc + b_ref[...], 0.0).reshape(TH, Wp, cout)

    if pool:
        # Fused 2x2 stride-2 maxpool.  Merge row pairs into the width axis (layout
        # trivial since Wp % 8 == 0), max the halves, then pair adjacent columns.
        x2 = out.reshape(TH // 2, 2 * Wp, cout)
        rowmax = jnp.maximum(x2[:, :Wp, :], x2[:, Wp:, :])            # (TH//2, Wp, Cout)
        pooled = jnp.max(rowmax.reshape(TH // 2, Wp // 2, 2, cout), axis=2)
        o_ref[0] = pooled[:, : W // 2, :]
    else:
        o_ref[0] = out[:, :W, :]


def conv3x3_relu(x, w, b, *, pool):
    # x: (N, H, W, Cin) f32 -> (N, H, W, Cout), or (N, H//2, W//2, Cout) if pool=True.
    N, H, W, cin = x.shape
    cout = w.shape[-1]
    # zero-pad tiny channel counts (first layer Cin=3) up to a multiple of 8;
    # zeros do not change the convolution result.
    if cin % 8 != 0:
        pc = 8 - cin % 8
        x = jnp.pad(x, ((0, 0), (0, 0), (0, 0), (0, pc)))
        w = jnp.pad(w, ((0, 0), (0, 0), (0, pc), (0, 0)))
        cin += pc

    Wp = ((W + 7) // 8) * 8      # computational width (sublane aligned)
    Wpad = Wp + 8                # padded image width: multiple of 8, >= Wp + 2
    xp = jnp.pad(x, ((0, 0), (1, 1), (1, Wpad - 1 - W), (0, 0)))   # spatial zero pad
    w3 = w.reshape(3, 3 * cin, cout)                               # fold kw into K

    # strip of TH output rows per grid step; keep the (TH*Wp, Cout) f32 acc ~<=512 KiB.
    cap = max(1, (1 << 17) // (cout * Wp))
    TH = _largest_divisor(H, cap, even=pool)
    n_strips = H // TH

    Ho, Wo = (H // 2, W // 2) if pool else (H, W)
    out_rows = TH // 2 if pool else TH

    kern = functools.partial(_conv3x3_kernel, TH=TH, W=W, Wp=Wp,
                             cin=cin, cout=cout, pool=pool)
    return pl.pallas_call(
        kern,
        out_shape=jax.ShapeDtypeStruct((N, Ho, Wo, cout), jnp.float32),
        grid_spec=pltpu.PrefetchScalarGridSpec(
            num_scalar_prefetch=0,
            grid=(N, n_strips),
            in_specs=[
                # whole padded image; same block across the strip axis (kept resident).
                # TODO(synk): on v7x a single-buffered / halo-strip variant would free
                # ~13 MiB at 224-res; current form still fits the 48 MiB scoped limit.
                pl.BlockSpec((1, H + 2, Wpad, cin), lambda n, s: (n, 0, 0, 0)),
                pl.BlockSpec((3, 3 * cin, cout), lambda n, s: (0, 0, 0)),
                pl.BlockSpec((1, cout), lambda n, s: (0, 0)),
            ],
            out_specs=pl.BlockSpec((1, out_rows, Wo, cout), lambda n, s: (n, s, 0, 0)),
        ),
        compiler_params=pltpu.CompilerParams(
            dimension_semantics=("parallel", "parallel"),
            vmem_limit_bytes=_VMEM_LIMIT,
        ),
    )(xp, w3, b.reshape(1, cout))


# --------------------------------------------------------------------------
# Linear (matmul + bias, optional fused ReLU), bf16 weight stream, f32 accumulate
# --------------------------------------------------------------------------
def _linear_kernel(x_ref, w_ref, b_ref, o_ref, *, relu):
    k = pl.program_id(1)

    @pl.when(k == 0)
    def _():
        o_ref[...] = jnp.zeros_like(o_ref)

    # weights streamed from HBM in bf16 (halves the dominant weight traffic at small
    # batch); MXU accumulates in f32 directly into the resident output block.
    o_ref[...] += jnp.dot(x_ref[...].astype(jnp.bfloat16), w_ref[...],
                          preferred_element_type=jnp.float32)

    @pl.when(k == pl.num_programs(1) - 1)
    def _():
        r = o_ref[...] + b_ref[...]
        if relu:
            r = jnp.maximum(r, 0.0)
        o_ref[...] = r


def linear(x, w, b, *, relu):
    # x: (M, K) f32, w: (K, Nf) bf16, b: (Nf,) f32 -> (M, Nf) f32
    M, K = x.shape
    Nf = w.shape[1]
    tn = _largest_divisor(Nf, 1024)
    tk = _largest_divisor(K, max(512, _WEIGHT_TILE_BYTES // (tn * w.dtype.itemsize)))
    grid = (Nf // tn, K // tk)
    kern = functools.partial(_linear_kernel, relu=relu)
    return pl.pallas_call(
        kern,
        out_shape=jax.ShapeDtypeStruct((M, Nf), jnp.float32),
        grid_spec=pltpu.PrefetchScalarGridSpec(
            num_scalar_prefetch=0,
            grid=grid,
            in_specs=[
                pl.BlockSpec((M, tk), lambda j, k: (0, k)),
                pl.BlockSpec((tk, tn), lambda j, k: (k, j)),
                pl.BlockSpec((1, tn), lambda j, k: (0, j)),
            ],
            out_specs=pl.BlockSpec((M, tn), lambda j, k: (0, j)),
        ),
        compiler_params=pltpu.CompilerParams(
            dimension_semantics=("parallel", "arbitrary"),
            vmem_limit_bytes=_VMEM_LIMIT,
        ),
    )(x, w, b.reshape(1, Nf))


# --------------------------------------------------------------------------
# AdaptiveAvgPool2d((7,7)) -- tiny (~100 KB) averaging / data movement, kept as JAX glue
# --------------------------------------------------------------------------
def adaptive_avg_pool_7x7(x):
    # x: (N, H, W, C) -> (N, 7, 7, C), PyTorch adaptive-pool bin semantics
    N, H, W, C = x.shape
    if H == 7 and W == 7:
        return x                                                   # 224-res: identity
    if H % 7 == 0 and W % 7 == 0:
        return x.reshape(N, 7, H // 7, 7, W // 7, C).mean(axis=(2, 4))
    rows = []
    for i in range(7):
        h0, h1 = (i * H) // 7, -(-((i + 1) * H) // 7)
        cols = []
        for j in range(7):
            w0, w1 = (j * W) // 7, -(-((j + 1) * W) // 7)
            cols.append(jnp.mean(x[:, h0:h1, w0:w1, :], axis=(1, 2)))
        rows.append(jnp.stack(cols, axis=1))
    return jnp.stack(rows, axis=1)


# --------------------------------------------------------------------------
# Parameters (deterministic synthetic init -- shapes match torchvision vgg16 +
# replaced classifier[6] = Sequential(Dropout(0.4), Linear(4096, 2)))
# --------------------------------------------------------------------------
def init_params(key):
    conv_params = []
    cin = 3
    for v in VGG16_CFG:
        if v == "M":
            continue
        key, kw_, kb_ = jax.random.split(key, 3)
        w = jax.random.normal(kw_, (3, 3, cin, v), jnp.float32) * jnp.sqrt(2.0 / (9 * cin))
        bb = jax.random.normal(kb_, (v,), jnp.float32) * 0.01
        conv_params.append((w, bb))
        cin = v
    fc_params = []
    for din, dout in [(512 * 7 * 7, 4096), (4096, 4096), (4096, 2)]:
        key, kw_, kb_ = jax.random.split(key, 3)
        w = (jax.random.normal(kw_, (din, dout), jnp.float32)
             * jnp.sqrt(2.0 / din)).astype(jnp.bfloat16)           # bf16 weight stream
        bb = jax.random.normal(kb_, (dout,), jnp.float32) * 0.01
        fc_params.append((w, bb))
    return conv_params, fc_params


# --------------------------------------------------------------------------
# Forward pass (VGG16Modified.forward)
# --------------------------------------------------------------------------
def vgg16_modified_forward(x_nchw, conv_params, fc_params):
    x = jnp.transpose(x_nchw, (0, 2, 3, 1)).astype(jnp.float32)   # NCHW -> NHWC
    ci = 0
    for idx, v in enumerate(VGG16_CFG):
        if v == "M":
            continue                                  # fused into the preceding conv
        w, bb = conv_params[ci]
        ci += 1
        pool = idx + 1 < len(VGG16_CFG) and VGG16_CFG[idx + 1] == "M"
        x = conv3x3_relu(x, w, bb, pool=pool)
    x = adaptive_avg_pool_7x7(x)                                  # (N, 7, 7, 512)
    # match torch.flatten(x, 1) on the NCHW tensor
    x = jnp.transpose(x, (0, 3, 1, 2)).reshape(x.shape[0], -1)    # (N, 25088)
    (w1, b1), (w2, b2), (w3, b3) = fc_params
    # Dropout(0.5)/Dropout(0.5)/Dropout(0.4) are identity in inference mode.
    x = linear(x, w1, b1, relu=True)    # Linear(25088,4096)+ReLU
    x = linear(x, w2, b2, relu=True)    # Linear(4096,4096)+ReLU
    x = linear(x, w3, b3, relu=False)   # Linear(4096,2)
    return x


if __name__ == "__main__":
    key = jax.random.PRNGKey(0)
    key, pkey, xkey = jax.random.split(key, 3)
    conv_params, fc_params = init_params(pkey)
    # Smallest spatial size VGG16 accepts is 32x32 (five 2x2 max-pools); batch = 2, NCHW.
    x = jax.random.normal(xkey, (2, 3, 32, 32), jnp.float32)
    out = vgg16_modified_forward(x, conv_params, fc_params)
    out = jax.block_until_ready(out)
    assert out.shape == (2, 2), out.shape
    assert bool(jnp.all(jnp.isfinite(out)))
    print("KERNEL_OK")
</pallas_src>

<mosaic_0001>
module attributes {stable_mosaic.version = 11 : i64} {
  func.func @_conv3x3_kernel(%arg0: i32, %arg1: i32, %arg2: memref<1x34x40x8xf32, #tpu.memory_space<vmem>>, %arg3: memref<3x24x64xf32, #tpu.memory_space<vmem>>, %arg4: memref<1x64xf32, #tpu.memory_space<vmem>>, %arg5: memref<1x32x32x64xf32, #tpu.memory_space<vmem>>) attributes {dimension_semantics = [#tpu.dimension_semantics<parallel>, #tpu.dimension_semantics<parallel>], iteration_bounds = array<i64: 2, 1>, scalar_prefetch = 0 : i64, scratch_operands = 0 : i64, tpu.core_type = #tpu.core_type<tc>, window_params = [{transform_indices = @transform_0, window_bounds = array<i64: 1, 34, 40, 8>}, {pipeline_mode = #tpu.pipeline_mode<synchronous>, transform_indices = @transform_1, window_bounds = array<i64: 3, 24, 64>}, {pipeline_mode = #tpu.pipeline_mode<synchronous>, transform_indices = @transform_2, window_bounds = array<i64: 1, 64>}, {transform_indices = @transform_3, window_bounds = array<i64: 1, 32, 32, 64>}]} {
    %c32_i32 = arith.constant 32 : i32
    %0 = arith.muli %arg1, %c32_i32 : i32
    %1 = tpu.assume_multiple %0, 8 : i32
    %cst = arith.constant 0.000000e+00 : f32
    %2 = vector.broadcast %cst : f32 to vector<1024x64xf32>
    %c0_i32 = arith.constant 0 : i32
    %3 = arith.addi %1, %c0_i32 : i32
    %c0 = arith.constant 0 : index
    %4 = arith.index_cast %3 : i32 to index
    %c0_0 = arith.constant 0 : index
    %c0_1 = arith.constant 0 : index
    %5 = vector.load %arg2[%c0, %4, %c0_0, %c0_1] : memref<1x34x40x8xf32, #tpu.memory_space<vmem>>, vector<1x32x40x8xf32>
    %6 = vector.shape_cast %5 : vector<1x32x40x8xf32> to vector<32x40x8xf32>
    %7 = vector.extract_strided_slice %6 {offsets = [0, 0, 0], sizes = [32, 32, 8], strides = [1, 1, 1]} : vector<32x40x8xf32> to vector<32x32x8xf32>
    %8 = vector.extract_strided_slice %6 {offsets = [0, 1, 0], sizes = [32, 32, 8], strides = [1, 1, 1]} : vector<32x40x8xf32> to vector<32x32x8xf32>
    %9 = vector.extract_strided_slice %6 {offsets = [0, 2, 0], sizes = [32, 32, 8], strides = [1, 1, 1]} : vector<32x40x8xf32> to vector<32x32x8xf32>
    %10 = tpu.concatenate %7, %8, %9 in 2 : vector<32x32x8xf32>, vector<32x32x8xf32>, vector<32x32x8xf32> -> vector<32x32x24xf32>
    %11 = vector.shape_cast %10 : vector<32x32x24xf32> to vector<1024x24xf32>
    %c0_2 = arith.constant 0 : index
    %c0_3 = arith.constant 0 : index
    %c0_4 = arith.constant 0 : index
    %12 = vector.load %arg3[%c0_2, %c0_3, %c0_4] : memref<3x24x64xf32, #tpu.memory_space<vmem>>, vector<1x24x64xf32>
    %13 = vector.shape_cast %12 : vector<1x24x64xf32> to vector<24x64xf32>
    %cst_5 = arith.constant dense<0.000000e+00> : vector<1024x64xf32>
    %14 = tpu.matmul %11, %13, %cst_5 {dimension_numbers = #tpu.dot_dimension_numbers<[1], [0], [0], [1], [0, 0, 1, 1], [], []>} : vector<1024x24xf32>, vector<24x64xf32>, vector<1024x64xf32> -> vector<1024x64xf32>
    %15 = arith.addf %2, %14 : vector<1024x64xf32>
    %c1_i32 = arith.constant 1 : i32
    %16 = arith.addi %1, %c1_i32 : i32
    %c0_6 = arith.constant 0 : index
    %17 = arith.index_cast %16 : i32 to index
    %c0_7 = arith.constant 0 : index
    %c0_8 = arith.constant 0 : index
    %18 = vector.load %arg2[%c0_6, %17, %c0_7, %c0_8] : memref<1x34x40x8xf32, #tpu.memory_space<vmem>>, vector<1x32x40x8xf32>
    %19 = vector.shape_cast %18 : vector<1x32x40x8xf32> to vector<32x40x8xf32>
    %20 = vector.extract_strided_slice %19 {offsets = [0, 0, 0], sizes = [32, 32, 8], strides = [1, 1, 1]} : vector<32x40x8xf32> to vector<32x32x8xf32>
    %21 = vector.extract_strided_slice %19 {offsets = [0, 1, 0], sizes = [32, 32, 8], strides = [1, 1, 1]} : vector<32x40x8xf32> to vector<32x32x8xf32>
    %22 = vector.extract_strided_slice %19 {offsets = [0, 2, 0], sizes = [32, 32, 8], strides = [1, 1, 1]} : vector<32x40x8xf32> to vector<32x32x8xf32>
    %23 = tpu.concatenate %20, %21, %22 in 2 : vector<32x32x8xf32>, vector<32x32x8xf32>, vector<32x32x8xf32> -> vector<32x32x24xf32>
    %24 = vector.shape_cast %23 : vector<32x32x24xf32> to vector<1024x24xf32>
    %c1 = arith.constant 1 : index
    %c0_9 = arith.constant 0 : index
    %c0_10 = arith.constant 0 : index
    %25 = vector.load %arg3[%c1, %c0_9, %c0_10] : memref<3x24x64xf32, #tpu.memory_space<vmem>>, vector<1x24x64xf32>
    %26 = vector.shape_cast %25 : vector<1x24x64xf32> to vector<24x64xf32>
    %cst_11 = arith.constant dense<0.000000e+00> : vector<1024x64xf32>
    %27 = tpu.matmul %24, %26, %cst_11 {dimension_numbers = #tpu.dot_dimension_numbers<[1], [0], [0], [1], [0, 0, 1, 1], [], []>} : vector<1024x24xf32>, vector<24x64xf32>, vector<1024x64xf32> -> vector<1024x64xf32>
    %28 = arith.addf %15, %27 : vector<1024x64xf32>
    %c2_i32 = arith.constant 2 : i32
    %29 = arith.addi %1, %c2_i32 : i32
    %c0_12 = arith.constant 0 : index
    %30 = arith.index_cast %29 : i32 to index
    %c0_13 = arith.constant 0 : index
    %c0_14 = arith.constant 0 : index
    %31 = vector.load %arg2[%c0_12, %30, %c0_13, %c0_14] : memref<1x34x40x8xf32, #tpu.memory_space<vmem>>, vector<1x32x40x8xf32>
    %32 = vector.shape_cast %31 : vector<1x32x40x8xf32> to vector<32x40x8xf32>
    %33 = vector.extract_strided_slice %32 {offsets = [0, 0, 0], sizes = [32, 32, 8], strides = [1, 1, 1]} : vector<32x40x8xf32> to vector<32x32x8xf32>
    %34 = vector.extract_strided_slice %32 {offsets = [0, 1, 0], sizes = [32, 32, 8], strides = [1, 1, 1]} : vector<32x40x8xf32> to vector<32x32x8xf32>
    %35 = vector.extract_strided_slice %32 {offsets = [0, 2, 0], sizes = [32, 32, 8], strides = [1, 1, 1]} : vector<32x40x8xf32> to vector<32x32x8xf32>
    %36 = tpu.concatenate %33, %34, %35 in 2 : vector<32x32x8xf32>, vector<32x32x8xf32>, vector<32x32x8xf32> -> vector<32x32x24xf32>
    %37 = vector.shape_cast %36 : vector<32x32x24xf32> to vector<1024x24xf32>
    %c2 = arith.constant 2 : index
    %c0_15 = arith.constant 0 : index
    %c0_16 = arith.constant 0 : index
    %38 = vector.load %arg3[%c2, %c0_15, %c0_16] : memref<3x24x64xf32, #tpu.memory_space<vmem>>, vector<1x24x64xf32>
    %39 = vector.shape_cast %38 : vector<1x24x64xf32> to vector<24x64xf32>
    %cst_17 = arith.constant dense<0.000000e+00> : vector<1024x64xf32>
    %40 = tpu.matmul %37, %39, %cst_17 {dimension_numbers = #tpu.dot_dimension_numbers<[1], [0], [0], [1], [0, 0, 1, 1], [], []>} : vector<1024x24xf32>, vector<24x64xf32>, vector<1024x64xf32> -> vector<1024x64xf32>
    %41 = arith.addf %28, %40 : vector<1024x64xf32>
    %c0_18 = arith.constant 0 : index
    %c0_19 = arith.constant 0 : index
    %42 = vector.load %arg4[%c0_18, %c0_19] : memref<1x64xf32, #tpu.memory_space<vmem>>, vector<1x64xf32>
    %43 = vector.broadcast %42 : vector<1x64xf32> to vector<1024x64xf32>
    %44 = arith.addf %41, %43 : vector<1024x64xf32>
    %cst_20 = arith.constant 0.000000e+00 : f32
    %45 = vector.broadcast %cst_20 : f32 to vector<1024x64xf32>
    %46 = arith.maximumf %44, %45 : vector<1024x64xf32>
    %47 = vector.shape_cast %46 : vector<1024x64xf32> to vector<32x32x64xf32>
    %c0_21 = arith.constant 0 : index
    %c0_22 = arith.constant 0 : index
    %c0_23 = arith.constant 0 : index
    %c0_24 = arith.constant 0 : index
    %48 = vector.load %arg5[%c0_21, %c0_22, %c0_23, %c0_24] : memref<1x32x32x64xf32, #tpu.memory_space<vmem>>, vector<1x32x32x64xf32>
    %49 = vector.shape_cast %48 : vector<1x32x32x64xf32> to vector<32x32x64xf32>
    %50 = vector.shape_cast %47 : vector<32x32x64xf32> to vector<1x32x32x64xf32>
    tpu.vector_store %arg5[%c0_21, %c0_22, %c0_23, %c0_24], %50 {strides = array<i32>} : memref<1x32x32x64xf32, #tpu.memory_space<vmem>>, vector<1x32x32x64xf32>,
    return
  }
  func.func @transform_0(%arg0: i32, %arg1: i32) -> (i32, i32, i32, i32) {
    %c0_i32 = arith.constant 0 : i32
    %c0_i32_0 = arith.constant 0 : i32
    %c0_i32_1 = arith.constant 0 : i32
    %c0_i32_2 = arith.constant 0 : i32
    return %arg0, %c0_i32, %c0_i32_0, %c0_i32_1 : i32, i32, i32, i32
  }
  func.func @transform_1(%arg0: i32, %arg1: i32) -> (i32, i32, i32) {
    %c0_i32 = arith.constant 0 : i32
    %c0_i32_0 = arith.constant 0 : i32
    %c0_i32_1 = arith.constant 0 : i32
    %c0_i32_2 = arith.constant 0 : i32
    return %c0_i32, %c0_i32_0, %c0_i32_1 : i32, i32, i32
  }
  func.func @transform_2(%arg0: i32, %arg1: i32) -> (i32, i32) {
    %c0_i32 = arith.constant 0 : i32
    %c0_i32_0 = arith.constant 0 : i32
    %c0_i32_1 = arith.constant 0 : i32
    return %c0_i32, %c0_i32_0 : i32, i32
  }
  func.func @transform_3(%arg0: i32, %arg1: i32) -> (i32, i32, i32, i32) {
    %c0_i32 = arith.constant 0 : i32
    %c0_i32_0 = arith.constant 0 : i32
    %c0_i32_1 = arith.constant 0 : i32
    return %arg0, %arg1, %c0_i32, %c0_i32_0 : i32, i32, i32, i32
  }
}

</mosaic_0001>

<llo_original>
// kernel: tpu_custom_call.1
$region0: #{tpu_custom_call.1}
  #allocation0 [shape = 'u32[]', space=smem, size = 0x4, offset = 0x4, fixed_abs, tag = 'smem constant byte address 0x4 - core index']
  #allocation1 [shape = 'u32[144,128]{1,0:T(1,128)}', space=vmem, size = 0x12000, scoped, tag = 'internal scratch']
  %s0 = inlined_call_operand.vmem [shape: f32[2,34,40,8], index: 0, kind: input, shape index: {}]
  %s1 = inlined_call_operand.vmem [shape: f32[3,24,64], index: 1, kind: input, shape index: {}]
  %s2 = inlined_call_operand.vmem [shape: f32[1,64], index: 2, kind: input, shape index: {}]
  %s3 = inlined_call_operand.hbm [shape: f32[2,32,32,64], index: 3, kind: output, shape index: {}]
  %s4 = sld [smem:[#allocation0]]
  $region45: #{tpu_custom_call.1} parent=0
    _
  %s6 = ssub.s32 1, %s4
  %s7 = scalar_select 0, %s6, %s4
  $region1: #{tpu_custom_call.1} parent=0
    #allocation2 [shape = 'u8[1048576]{0}', space=vmem, size = 0x100000, scoped, tag = 'output window, operand 0']
    #allocation3 [shape = 's32[2]{0}', space=sflag, size = 0x8, scoped, tag = 'scoped memory for tpu_custom_call.1']
    %8 = vsyncpa [#allocation3], 0
    %s9 = scalar_lea.sflag [#allocation3], 1
    %10 = vsyncpa %s9, 0
    loop: start=0, step=1, limit=4
    $region2: #{tpu_custom_call.1} parent=1 // loop_pre_header
      _
    $region3: #{tpu_custom_call.1} parent=1 // loop_header
      %s12 = sphi 0, %s16
      %p13 = scmp.ge.s32.totalorder %s12, 4
      %s19 = sphi 0, %s31
      %s20 = sphi 0, %s27
      %s21 = sphi 0, %s19
      %s22 = sphi 0, %s20
      %s23 = sphi 0, %s21
      %s24 = sphi 0, %s22
      %s34 = sphi 0, %s36
      %s37 = sphi 0, %s34
      %s38 = sphi 0, %s37
      %s54 = sphi 0, %s38
      %s58 = sphi 0, %s58
      %s60 = sphi 0, %s58
      %s61 = sphi 0, %s60
      %s75 = sphi 0, %s61
      %s79 = sphi 0, %s79
      %s81 = sphi 0, %s79
      %s82 = sphi 0, %s81
      %s96 = sphi 0, %s82
      %s104 = sphi 0, %s106
      %s107 = sphi 0, %s104
      %s108 = sphi 0, %s107
      %s124 = sphi 0, %s108
    $region4: #{tpu_custom_call.1} parent=1 // loop_header_branch
      %15 = sbr.rel (%p13) target = $region8
    $region5: #{tpu_custom_call.1} parent=1 // loop_body
      %s17 = ssub.s32 %s12, 1
      %s18 = ssub.s32 %s12, 2
      %s25 = sadd.s32 1, %s20
      %p26 = scmp.ge.s32.totalorder %s25, 1
      %s27 = scalar_select %p26, 0, %s25
      %s28 = sadd.s32 1, %s19
      %s29 = scalar_select %p26, %s28, %s19
      %p30 = scmp.ge.s32.totalorder %s29, 2
      %s31 = scalar_select %p30, 0, %s29
      %s32 = ssub.s32 %s19, %s31
      %p33 = scmp.eq.s32.totalorder %s32, 0
      %s35 = sadd.s32 %s34, 1
      %s36 = scalar_select %p33, %s34, %s35
      %p39 = pneg %p33
      %p40 = scmp.eq.s32.totalorder %s12, 1
      %p41 = por %p39, %p40
      %p42 = scmp.ne.s32.totalorder %s34, %s37
      %p43 = scmp.eq.s32.totalorder %s12, 0
      %p44 = por %p42, %p43
      %p45 = scmp.ne.s32.totalorder %s34, %s37
      %p46 = scmp.eq.s32.totalorder %s17, 1
      %p47 = por %p45, %p46
      %p48 = scmp.ne.s32.totalorder %s37, %s38
      %p49 = scmp.eq.s32.totalorder %s17, 0
      %p50 = por %p48, %p49
      %p51 = scmp.ne.s32.totalorder %s37, %s38
      %p52 = scmp.eq.s32.totalorder %s18, 1
      %p53 = por %p51, %p52
      %p55 = scmp.ne.s32.totalorder %s38, %s54
      %p56 = scmp.eq.s32.totalorder %s18, 0
      %p57 = por %p55, %p56
      %s59 = sadd.s32 %s58, 1
      %p62 = scmp.eq.s32.totalorder %s12, 1
      %p63 = scmp.ne.s32.totalorder %s58, %s60
      %p64 = scmp.eq.s32.totalorder %s12, 0
      %p65 = por %p63, %p64
      %p66 = scmp.ne.s32.totalorder %s58, %s60
      %p67 = scmp.eq.s32.totalorder %s17, 1
      %p68 = por %p66, %p67
      %p69 = scmp.ne.s32.totalorder %s60, %s61
      %p70 = scmp.eq.s32.totalorder %s17, 0
      %p71 = por %p69, %p70
      %p72 = scmp.ne.s32.totalorder %s60, %s61
      %p73 = scmp.eq.s32.totalorder %s18, 1
      %p74 = por %p72, %p73
      %p76 = scmp.ne.s32.totalorder %s61, %s75
      %p77 = scmp.eq.s32.totalorder %s18, 0
      %p78 = por %p76, %p77
      %s80 = sadd.s32 %s79, 1
      %p83 = scmp.eq.s32.totalorder %s12, 1
      %p84 = scmp.ne.s32.totalorder %s79, %s81
      %p85 = scmp.eq.s32.totalorder %s12, 0
      %p86 = por %p84, %p85
      %p87 = scmp.ne.s32.totalorder %s79, %s81
      %p88 = scmp.eq.s32.totalorder %s17, 1
      %p89 = por %p87, %p88
      %p90 = scmp.ne.s32.totalorder %s81, %s82
      %p91 = scmp.eq.s32.totalorder %s17, 0
      %p92 = por %p90, %p91
      %p93 = scmp.ne.s32.totalorder %s81, %s82
      %p94 = scmp.eq.s32.totalorder %s18, 1
      %p95 = por %p93, %p94
      %p97 = scmp.ne.s32.totalorder %s82, %s96
      %p98 = scmp.eq.s32.totalorder %s18, 0
      %p99 = por %p97, %p98
      %s100 = ssub.s32 %s19, %s31
      %s101 = ssub.s32 %s20, %s27
      %s102 = sor.u32 %s100, %s101
      %p103 = scmp.eq.s32.totalorder %s102, 0
      %s105 = sadd.s32 %s104, 1
      %s106 = scalar_select %p103, %s104, %s105
      %p109 = pneg %p103
      %p110 = scmp.eq.s32.totalorder %s12, 1
      %p111 = por %p109, %p110
      %p112 = scmp.ne.s32.totalorder %s104, %s107
      %p113 = scmp.eq.s32.totalorder %s12, 0
      %p114 = por %p112, %p113
      %p115 = scmp.ne.s32.totalorder %s104, %s107
      %p116 = scmp.eq.s32.totalorder %s17, 1
      %p117 = por %p115, %p116
      %p118 = scmp.ne.s32.totalorder %s107, %s108
      %p119 = scmp.eq.s32.totalorder %s17, 0
      %p120 = por %p118, %p119
      %p121 = scmp.ne.s32.totalorder %s107, %s108
      %p122 = scmp.eq.s32.totalorder %s18, 1
      %p123 = por %p121, %p122
      %p125 = scmp.ne.s32.totalorder %s108, %s124
      %p126 = scmp.eq.s32.totalorder %s18, 0
      %p127 = por %p125, %p126
      %p128 = scmp.le.s32.totalorder 1, %s12
      %p129 = scmp.lt.s32.totalorder %s12, 3
      %p130 = pnand %p128, %p129
      %p131 = pneg %p130
      // Predicated region
      $region9: #{tpu_custom_call.1} parent=5 // pred_check
        _
      $region10: #{tpu_custom_call.1} parent=5 // pred_check_branch
        %133 = sbr.rel (%p130) target = $region12
      $region11: #{tpu_custom_call.1} parent=5 // pred_region
        %s134 = ssub.s32 %s12, 1
        // Predicated region
        $region13: #{tpu_custom_call.1} parent=11 // pred_check
          %p135 = pneg %p71
        $region14: #{tpu_custom_call.1} parent=11 // pred_check_branch
          %137 = sbr.rel (%p135) target = $region16
        $region15: #{tpu_custom_call.1} parent=11 // pred_region
          _
        $region16: #{tpu_custom_call.1} parent=11 // pred_fallthru
          _
        // Predicated region
        $region17: #{tpu_custom_call.1} parent=11 // pred_check
          %p138 = pneg %p92
        $region18: #{tpu_custom_call.1} parent=11 // pred_check_branch
          %140 = sbr.rel (%p138) target = $region20
        $region19: #{tpu_custom_call.1} parent=11 // pred_region
          _
        $region20: #{tpu_custom_call.1} parent=11 // pred_fallthru
          _
      $region12: #{tpu_custom_call.1} parent=5 // pred_fallthru
        _
      %p141 = scmp.lt.s32.totalorder %s12, 2
      // Predicated region
      $region21: #{tpu_custom_call.1} parent=5 // pred_check
        %p142 = pneg %p141
      $region22: #{tpu_custom_call.1} parent=5 // pred_check_branch
        %144 = sbr.rel (%p142) target = $region24
      $region23: #{tpu_custom_call.1} parent=5 // pred_region
        // Predicated region
        $region25: #{tpu_custom_call.1} parent=23 // pred_check
          %p145 = pneg %p44
        $region26: #{tpu_custom_call.1} parent=23 // pred_check_branch
          %147 = sbr.rel (%p145) target = $region28
        $region27: #{tpu_custom_call.1} parent=23 // pred_region
          %p148 = scmp.lt.s32.totalorder %s19, 1
          %s149 = scalar_select %p148, %s19, 1
          %s150 = smul.addr %s149, 170
          %s151 = smul.addr %s150, 8
          %s152 = scalar_lea.vmem %s0, %s151
        $region28: #{tpu_custom_call.1} parent=23 // pred_fallthru
          _
      $region24: #{tpu_custom_call.1} parent=5 // pred_fallthru
        _
      %p153 = scmp.le.s32.totalorder 1, %s12
      %p154 = scmp.lt.s32.totalorder %s12, 3
      %p155 = pnand %p153, %p154
      %p156 = pneg %p155
      // Predicated region
      $region29: #{tpu_custom_call.1} parent=5 // pred_check
        _
      $region30: #{tpu_custom_call.1} parent=5 // pred_check_branch
        %158 = sbr.rel (%p155) target = $region32
      $region31: #{tpu_custom_call.1} parent=5 // pred_region
        %s159 = ssub.s32 %s12, 1
        %p160 = scmp.lt.s32.totalorder %s21, 1
        %s161 = scalar_select %p160, %s21, 1
        %s162 = smul.addr %s161, 170
        %s163 = smul.addr %s162, 8
        %s164 = scalar_lea.vmem %s0, %s163
        %p165 = pneg %p50
        %p166 = pneg %p47
        %p167 = pneg %p71
        %p168 = pneg %p68
        %p169 = pneg %p92
        %p170 = pneg %p89
        %p171 = pneg %p120
        %p172 = pneg %p117
        %s173 = sand.u32 %s107, 1
        %s174 = scalar_lea.sflag [#allocation3], %s173
        %s175 = sand.u32 %s107, 1
        %s176 = smul.addr %s175, 1024
        %s177 = scalar_lea.vmem [#allocation2], %s176
        %p178 = scmp.lt.s32.totalorder %s21, 1
        %s179 = scalar_select %p178, %s21, 1
        %s180 = smul.addr %s179, 170
        %s181 = smul.addr %s180, 8
        %s182 = scalar_lea.vmem %s0, %s181
        %s183 = smul.u32 32, %s22
        %s184 = smul.u32 %s22, 32
        %s185 = smul.u32 %s184, 40
        %s186 = scalar_lea.vmem %s182, %s185
        %v187 = vld [vmem:[%s186] sm:$0xff]
        %v188 = vld [vmem:[%s186 + $0x8] sm:$0xff]
        %v189 = vld [vmem:[%s186 + $0x10] sm:$0xff]
        %v190 = vld [vmem:[%s186 + $0x18] sm:$0xff]
        %v191 = vld [vmem:[%s186 + $0x20] sm:$0xff]
        %v192 = vld [vmem:[%s186 + $0x28] sm:$0xff]
        %v193 = vld [vmem:[%s186 + $0x30] sm:$0xff]
        %v194 = vld [vmem:[%s186 + $0x38] sm:$0xff]
        %v195 = vld [vmem:[%s186 + $0x40] sm:$0xff]
        %v196 = vld [vmem:[%s186 + $0x48] sm:$0xff]
        %v197 = vld [vmem:[%s186 + $0x50] sm:$0xff]
        %v198 = vld [vmem:[%s186 + $0x58] sm:$0xff]
        %v199 = vld [vmem:[%s186 + $0x60] sm:$0xff]
        %v200 = vld [vmem:[%s186 + $0x68] sm:$0xff]
        %v201 = vld [vmem:[%s186 + $0x70] sm:$0xff]
        %v202 = vld [vmem:[%s186 + $0x78] sm:$0xff]
        %v203 = vld [vmem:[%s186 + $0x80] sm:$0xff]
        %v204 = vld [vmem:[%s186 + $0x88] sm:$0xff]
        %v205 = vld [vmem:[%s186 + $0x90] sm:$0xff]
        %v206 = vld [vmem:[%s186 + $0x98] sm:$0xff]
        %v207 = vld [vmem:[%s186 + $0xa0] sm:$0xff]
        %v208 = vld [vmem:[%s186 + $0xa8] sm:$0xff]
        %v209 = vld [vmem:[%s186 + $0xb0] sm:$0xff]
        %v210 = vld [vmem:[%s186 + $0xb8] sm:$0xff]
        %v211 = vld [vmem:[%s186 + $0xc0] sm:$0xff]
        %v212 = vld [vmem:[%s186 + $0xc8] sm:$0xff]
        %v213 = vld [vmem:[%s186 + $0xd0] sm:$0xff]
        %v214 = vld [vmem:[%s186 + $0xd8] sm:$0xff]
        %v215 = vld [vmem:[%s186 + $0xe0] sm:$0xff]
        %v216 = vld [vmem:[%s186 + $0xe8] sm:$0xff]
        %v217 = vld [vmem:[%s186 + $0xf0] sm:$0xff]
        %v218 = vld [vmem:[%s186 + $0xf8] sm:$0xff]
        %v219 = vld [vmem:[%s186 + $0x100] sm:$0xff]
        %v220 = vld [vmem:[%s186 + $0x108] sm:$0xff]
        %v221 = vld [vmem:[%s186 + $0x110] sm:$0xff]
        %v222 = vld [vmem:[%s186 + $0x118] sm:$0xff]
        %v223 = vld [vmem:[%s186 + $0x120] sm:$0xff]
        %v224 = vld [vmem:[%s186 + $0x128] sm:$0xff]
        %v225 = vld [vmem:[%s186 + $0x130] sm:$0xff]
        %v226 = vld [vmem:[%s186 + $0x138] sm:$0xff]
        %v227 = vld [vmem:[%s186 + $0x140] sm:$0xff]
        %v228 = vld [vmem:[%s186 + $0x148] sm:$0xff]
        %v229 = vld [vmem:[%s186 + $0x150] sm:$0xff]
        %v230 = vld [vmem:[%s186 + $0x158] sm:$0xff]
        %v231 = vld [vmem:[%s186 + $0x160] sm:$0xff]
        %v232 = vld [vmem:[%s186 + $0x168] sm:$0xff]
        %v233 = vld [vmem:[%s186 + $0x170] sm:$0xff]
        %v234 = vld [vmem:[%s186 + $0x178] sm:$0xff]
        %v235 = vld [vmem:[%s186 + $0x180] sm:$0xff]
        %v236 = vld [vmem:[%s186 + $0x188] sm:$0xff]
        %v237 = vld [vmem:[%s186 + $0x190] sm:$0xff]
        %v238 = vld [vmem:[%s186 + $0x198] sm:$0xff]
        %v239 = vld [vmem:[%s186 + $0x1a0] sm:$0xff]
        %v240 = vld [vmem:[%s186 + $0x1a8] sm:$0xff]
        %v241 = vld [vmem:[%s186 + $0x1b0] sm:$0xff]
        %v242 = vld [vmem:[%s186 + $0x1b8] sm:$0xff]
        %v243 = vld [vmem:[%s186 + $0x1c0] sm:$0xff]
        %v244 = vld [vmem:[%s186 + $0x1c8] sm:$0xff]
        %v245 = vld [vmem:[%s186 + $0x1d0] sm:$0xff]
        %v246 = vld [vmem:[%s186 + $0x1d8] sm:$0xff]
        %v247 = vld [vmem:[%s186 + $0x1e0] sm:$0xff]
        %v248 = vld [vmem:[%s186 + $0x1e8] sm:$0xff]
        %v249 = vld [vmem:[%s186 + $0x1f0] sm:$0xff]
        %v250 = vld [vmem:[%s186 + $0x1f8] sm:$0xff]
        %v251 = vld [vmem:[%s186 + $0x200] sm:$0xff]
        %v252 = vld [vmem:[%s186 + $0x208] sm:$0xff]
        %v253 = vld [vmem:[%s186 + $0x210] sm:$0xff]
        %v254 = vld [vmem:[%s186 + $0x218] sm:$0xff]
        %v255 = vld [vmem:[%s186 + $0x220] sm:$0xff]
        %v256 = vld [vmem:[%s186 + $0x228] sm:$0xff]
        %v257 = vld [vmem:[%s186 + $0x230] sm:$0xff]
        %v258 = vld [vmem:[%s186 + $0x238] sm:$0xff]
        %v259 = vld [vmem:[%s186 + $0x240] sm:$0xff]
        %v260 = vld [vmem:[%s186 + $0x248] sm:$0xff]
        %v261 = vld [vmem:[%s186 + $0x250] sm:$0xff]
        %v262 = vld [vmem:[%s186 + $0x258] sm:$0xff]
        %v263 = vld [vmem:[%s186 + $0x260] sm:$0xff]
        %v264 = vld [vmem:[%s186 + $0x268] sm:$0xff]
        %v265 = vld [vmem:[%s186 + $0x270] sm:$0xff]
        %v266 = vld [vmem:[%s186 + $0x278] sm:$0xff]
        %v267 = vld [vmem:[%s186 + $0x280] sm:$0xff]
        %v268 = vld [vmem:[%s186 + $0x288] sm:$0xff]
        %v269 = vld [vmem:[%s186 + $0x290] sm:$0xff]
        %v270 = vld [vmem:[%s186 + $0x298] sm:$0xff]
        %v271 = vld [vmem:[%s186 + $0x2a0] sm:$0xff]
        %v272 = vld [vmem:[%s186 + $0x2a8] sm:$0xff]
        %v273 = vld [vmem:[%s186 + $0x2b0] sm:$0xff]
        %v274 = vld [vmem:[%s186 + $0x2b8] sm:$0xff]
        %v275 = vld [vmem:[%s186 + $0x2c0] sm:$0xff]
        %v276 = vld [vmem:[%s186 + $0x2c8] sm:$0xff]
        %v277 = vld [vmem:[%s186 + $0x2d0] sm:$0xff]
        %v278 = vld [vmem:[%s186 + $0x2d8] sm:$0xff]
        %v279 = vld [vmem:[%s186 + $0x2e0] sm:$0xff]
        %v280 = vld [vmem:[%s186 + $0x2e8] sm:$0xff]
        %v281 = vld [vmem:[%s186 + $0x2f0] sm:$0xff]
        %v282 = vld [vmem:[%s186 + $0x2f8] sm:$0xff]
        %v283 = vld [vmem:[%s186 + $0x300] sm:$0xff]
        %v284 = vld [vmem:[%s186 + $0x308] sm:$0xff]
        %v285 = vld [vmem:[%s186 + $0x310] sm:$0xff]
        %v286 = vld [vmem:[%s186 + $0x318] sm:$0xff]
        %v287 = vld [vmem:[%s186 + $0x320] sm:$0xff]
        %v288 = vld [vmem:[%s186 + $0x328] sm:$0xff]
        %v289 = vld [vmem:[%s186 + $0x330] sm:$0xff]
        %v290 = vld [vmem:[%s186 + $0x338] sm:$0xff]
        %v291 = vld [vmem:[%s186 + $0x340] sm:$0xff]
        %v292 = vld [vmem:[%s186 + $0x348] sm:$0xff]
        %v293 = vld [vmem:[%s186 + $0x350] sm:$0xff]
        %v294 = vld [vmem:[%s186 + $0x358] sm:$0xff]
        %v295 = vld [vmem:[%s186 + $0x360] sm:$0xff]
        %v296 = vld [vmem:[%s186 + $0x368] sm:$0xff]
        %v297 = vld [vmem:[%s186 + $0x370] sm:$0xff]
        %v298 = vld [vmem:[%s186 + $0x378] sm:$0xff]
        %v299 = vld [vmem:[%s186 + $0x380] sm:$0xff]
        %v300 = vld [vmem:[%s186 + $0x388] sm:$0xff]
        %v301 = vld [vmem:[%s186 + $0x390] sm:$0xff]
        %v302 = vld [vmem:[%s186 + $0x398] sm:$0xff]
        %v303 = vld [vmem:[%s186 + $0x3a0] sm:$0xff]
        %v304 = vld [vmem:[%s186 + $0x3a8] sm:$0xff]
        %v305 = vld [vmem:[%s186 + $0x3b0] sm:$0xff]
        %v306 = vld [vmem:[%s186 + $0x3b8] sm:$0xff]
        %v307 = vld [vmem:[%s186 + $0x3c0] sm:$0xff]
        %v308 = vld [vmem:[%s186 + $0x3c8] sm:$0xff]
        %v309 = vld [vmem:[%s186 + $0x3d0] sm:$0xff]
        %v310 = vld [vmem:[%s186 + $0x3d8] sm:$0xff]
        %v311 = vld [vmem:[%s186 + $0x3e0] sm:$0xff]
        %v312 = vld [vmem:[%s186 + $0x3e8] sm:$0xff]
        %v313 = vld [vmem:[%s186 + $0x3f0] sm:$0xff]
        %v314 = vld [vmem:[%s186 + $0x3f8] sm:$0xff]
        %v315 = vld [vmem:[%s186 + $0x400] sm:$0xff]
        %v316 = vld [vmem:[%s186 + $0x408] sm:$0xff]
        %v317 = vld [vmem:[%s186 + $0x410] sm:$0xff]
        %v318 = vld [vmem:[%s186 + $0x418] sm:$0xff]
        %v319 = vld [vmem:[%s186 + $0x420] sm:$0xff]
        %v320 = vld [vmem:[%s186 + $0x428] sm:$0xff]
        %v321 = vld [vmem:[%s186 + $0x430] sm:$0xff]
        %v322 = vld [vmem:[%s186 + $0x438] sm:$0xff]
        %v323 = vld [vmem:[%s186 + $0x440] sm:$0xff]
        %v324 = vld [vmem:[%s186 + $0x448] sm:$0xff]
        %v325 = vld [vmem:[%s186 + $0x450] sm:$0xff]
        %v326 = vld [vmem:[%s186 + $0x458] sm:$0xff]
        %v327 = vld [vmem:[%s186 + $0x460] sm:$0xff]
        %v328 = vld [vmem:[%s186 + $0x468] sm:$0xff]
        %v329 = vld [vmem:[%s186 + $0x470] sm:$0xff]
        %v330 = vld [vmem:[%s186 + $0x478] sm:$0xff]
        %v331 = vld [vmem:[%s186 + $0x480] sm:$0xff]
        %v332 = vld [vmem:[%s186 + $0x488] sm:$0xff]
        %v333 = vld [vmem:[%s186 + $0x490] sm:$0xff]
        %v334 = vld [vmem:[%s186 + $0x498] sm:$0xff]
        %v335 = vld [vmem:[%s186 + $0x4a0] sm:$0xff]
        %v336 = vld [vmem:[%s186 + $0x4a8] sm:$0xff]
        %v337 = vld [vmem:[%s186 + $0x4b0] sm:$0xff]
        %v338 = vld [vmem:[%s186 + $0x4b8] sm:$0xff]
        %v339 = vld [vmem:[%s186 + $0x4c0] sm:$0xff]
        %v340 = vld [vmem:[%s186 + $0x4c8] sm:$0xff]
        %v341 = vld [vmem:[%s186 + $0x4d0] sm:$0xff]
        %v342 = vld [vmem:[%s186 + $0x4d8] sm:$0xff]
        %v343 = vld [vmem:[%s186 + $0x4e0] sm:$0xff]
        %v344 = vld [vmem:[%s186 + $0x4e8] sm:$0xff]
        %v345 = vld [vmem:[%s186 + $0x4f0] sm:$0xff]
        %v346 = vld [vmem:[%s186 + $0x4f8] sm:$0xff]
        %vm507 = vcmask 1046528
        %v508 = vrot.slane %v187, 1
        %v509 = vrot.slane %v188, 1
        %v510 = vsel %vm507, %v508, %v509
        %v511 = vrot.slane %v189, 1
        %v512 = vsel %vm507, %v509, %v511
        %v513 = vrot.slane %v190, 1
        %v514 = vsel %vm507, %v511, %v513
        %v515 = vrot.slane %v191, 1
        %v516 = vsel %vm507, %v513, %v515
        %v517 = vrot.slane %v192, 1
        %v518 = vrot.slane %v193, 1
        %v519 = vsel %vm507, %v517, %v518
        %v520 = vrot.slane %v194, 1
        %v521 = vsel %vm507, %v518, %v520
        %v522 = vrot.slane %v195, 1
        %v523 = vsel %vm507, %v520, %v522
        %v524 = vrot.slane %v196, 1
        %v525 = vsel %vm507, %v522, %v524
        %v526 = vrot.slane %v197, 1
        %v527 = vrot.slane %v198, 1
        %v528 = vsel %vm507, %v526, %v527
        %v529 = vrot.slane %v199, 1
        %v530 = vsel %vm507, %v527, %v529
        %v531 = vrot.slane %v200, 1
        %v532 = vsel %vm507, %v529, %v531
        %v533 = vrot.slane %v201, 1
        %v534 = vsel %vm507, %v531, %v533
        %v535 = vrot.slane %v202, 1
        %v536 = vrot.slane %v203, 1
        %v537 = vsel %vm507, %v535, %v536
        %v538 = vrot.slane %v204, 1
        %v539 = vsel %vm507, %v536, %v538
        %v540 = vrot.slane %v205, 1
        %v541 = vsel %vm507, %v538, %v540
        %v542 = vrot.slane %v206, 1
        %v543 = vsel %vm507, %v540, %v542
        %v544 = vrot.slane %v207, 1
        %v545 = vrot.slane %v208, 1
        %v546 = vsel %vm507, %v544, %v545
        %v547 = vrot.slane %v209, 1
        %v548 = vsel %vm507, %v545, %v547
        %v549 = vrot.slane %v210, 1
        %v550 = vsel %vm507, %v547, %v549
        %v551 = vrot.slane %v211, 1
        %v552 = vsel %vm507, %v549, %v551
        %v553 = vrot.slane %v212, 1
        %v554 = vrot.slane %v213, 1
        %v555 = vsel %vm507, %v553, %v554
        %v556 = vrot.slane %v214, 1
        %v557 = vsel %vm507, %v554, %v556
        %v558 = vrot.slane %v215, 1
        %v559 = vsel %vm507, %v556, %v558
        %v560 = vrot.slane %v216, 1
        %v561 = vsel %vm507, %v558, %v560
        %v562 = vrot.slane %v217, 1
        %v563 = vrot.slane %v218, 1
        %v564 = vsel %vm507, %v562, %v563
        %v565 = vrot.slane %v219, 1
        %v566 = vsel %vm507, %v563, %v565
        %v567 = vrot.slane %v220, 1
        %v568 = vsel %vm507, %v565, %v567
        %v569 = vrot.slane %v221, 1
        %v570 = vsel %vm507, %v567, %v569
        %v571 = vrot.slane %v222, 1
        %v572 = vrot.slane %v223, 1
        %v573 = vsel %vm507, %v571, %v572
        %v574 = vrot.slane %v224, 1
        %v575 = vsel %vm507, %v572, %v574
        %v576 = vrot.slane %v225, 1
        %v577 = vsel %vm507, %v574, %v576
        %v578 = vrot.slane %v226, 1
        %v579 = vsel %vm507, %v576, %v578
        %v580 = vrot.slane %v227, 1
        %v581 = vrot.slane %v228, 1
        %v582 = vsel %vm507, %v580, %v581
        %v583 = vrot.slane %v229, 1
        %v584 = vsel %vm507, %v581, %v583
        %v585 = vrot.slane %v230, 1
        %v586 = vsel %vm507, %v583, %v585
        %v587 = vrot.slane %v231, 1
        %v588 = vsel %vm507, %v585, %v587
        %v589 = vrot.slane %v232, 1
        %v590 = vrot.slane %v233, 1
        %v591 = vsel %vm507, %v589, %v590
        %v592 = vrot.slane %v234, 1
        %v593 = vsel %vm507, %v590, %v592
        %v594 = vrot.slane %v235, 1
        %v595 = vsel %vm507, %v592, %v594
        %v596 = vrot.slane %v236, 1
        %v597 = vsel %vm507, %v594, %v596
        %v598 = vrot.slane %v237, 1
        %v599 = vrot.slane %v238, 1
        %v600 = vsel %vm507, %v598, %v599
        %v601 = vrot.slane %v239, 1
        %v602 = vsel %vm507, %v599, %v601
        %v603 = vrot.slane %v240, 1
        %v604 = vsel %vm507, %v601, %v603
        %v605 = vrot.slane %v241, 1
        %v606 = vsel %vm507, %v603, %v605
        %v607 = vrot.slane %v242, 1
        %v608 = vrot.slane %v243, 1
        %v609 = vsel %vm507, %v607, %v608
        %v610 = vrot.slane %v244, 1
        %v611 = vsel %vm507, %v608, %v610
        %v612 = vrot.slane %v245, 1
        %v613 = vsel %vm507, %v610, %v612
        %v614 = vrot.slane %v246, 1
        %v615 = vsel %vm507, %v612, %v614
        %v616 = vrot.slane %v247, 1
        %v617 = vrot.slane %v248, 1
        %v618 = vsel %vm507, %v616, %v617
        %v619 = vrot.slane %v249, 1
        %v620 = vsel %vm507, %v617, %v619
        %v621 = vrot.slane %v250, 1
        %v622 = vsel %vm507, %v619, %v621
        %v623 = vrot.slane %v251, 1
        %v624 = vsel %vm507, %v621, %v623
        %v625 = vrot.slane %v252, 1
        %v626 = vrot.slane %v253, 1
        %v627 = vsel %vm507, %v625, %v626
        %v628 = vrot.slane %v254, 1
        %v629 = vsel %vm507, %v626, %v628
        %v630 = vrot.slane %v255, 1
        %v631 = vsel %vm507, %v628, %v630
        %v632 = vrot.slane %v256, 1
        %v633 = vsel %vm507, %v630, %v632
        %v634 = vrot.slane %v257, 1
        %v635 = vrot.slane %v258, 1
        %v636 = vsel %vm507, %v634, %v635
        %v637 = vrot.slane %v259, 1
        %v638 = vsel %vm507, %v635, %v637
        %v639 = vrot.slane %v260, 1
        %v640 = vsel %vm507, %v637, %v639
        %v641 = vrot.slane %v261, 1
        %v642 = vsel %vm507, %v639, %v641
        %v643 = vrot.slane %v262, 1
        %v644 = vrot.slane %v263, 1
        %v645 = vsel %vm507, %v643, %v644
        %v646 = vrot.slane %v264, 1
        %v647 = vsel %vm507, %v644, %v646
        %v648 = vrot.slane %v265, 1
        %v649 = vsel %vm507, %v646, %v648
        %v650 = vrot.slane %v266, 1
        %v651 = vsel %vm507, %v648, %v650
        %v652 = vrot.slane %v267, 1
        %v653 = vrot.slane %v268, 1
        %v654 = vsel %vm507, %v652, %v653
        %v655 = vrot.slane %v269, 1
        %v656 = vsel %vm507, %v653, %v655
        %v657 = vrot.slane %v270, 1
        %v658 = vsel %vm507, %v655, %v657
        %v659 = vrot.slane %v271, 1
        %v660 = vsel %vm507, %v657, %v659
        %v661 = vrot.slane %v272, 1
        %v662 = vrot.slane %v273, 1
        %v663 = vsel %vm507, %v661, %v662
        %v664 = vrot.slane %v274, 1
        %v665 = vsel %vm507, %v662, %v664
        %v666 = vrot.slane %v275, 1
        %v667 = vsel %vm507, %v664, %v666
        %v668 = vrot.slane %v276, 1
        %v669 = vsel %vm507, %v666, %v668
        %v670 = vrot.slane %v277, 1
        %v671 = vrot.slane %v278, 1
        %v672 = vsel %vm507, %v670, %v671
        %v673 = vrot.slane %v279, 1
        %v674 = vsel %vm507, %v671, %v673
        %v675 = vrot.slane %v280, 1
        %v676 = vsel %vm507, %v673, %v675
        %v677 = vrot.slane %v281, 1
        %v678 = vsel %vm507, %v675, %v677
        %v679 = vrot.slane %v282, 1
        %v680 = vrot.slane %v283, 1
        %v681 = vsel %vm507, %v679, %v680
        %v682 = vrot.slane %v284, 1
        %v683 = vsel %vm507, %v680, %v682
        %v684 = vrot.slane %v285, 1
        %v685 = vsel %vm507, %v682, %v684
        %v686 = vrot.slane %v286, 1
        %v687 = vsel %vm507, %v684, %v686
        %v688 = vrot.slane %v287, 1
        %v689 = vrot.slane %v288, 1
        %v690 = vsel %vm507, %v688, %v689
        %v691 = vrot.slane %v289, 1
        %v692 = vsel %vm507, %v689, %v691
        %v693 = vrot.slane %v290, 1
        %v694 = vsel %vm507, %v691, %v693
        %v695 = vrot.slane %v291, 1
        %v696 = vsel %vm507, %v693, %v695
        %v697 = vrot.slane %v292, 1
        %v698 = vrot.slane %v293, 1
        %v699 = vsel %vm507, %v697, %v698
        %v700 = vrot.slane %v294, 1
        %v701 = vsel %vm507, %v698, %v700
        %v702 = vrot.slane %v295, 1
        %v703 = vsel %vm507, %v700, %v702
        %v704 = vrot.slane %v296, 1
        %v705 = vsel %vm507, %v702, %v704
        %v706 = vrot.slane %v297, 1
        %v707 = vrot.slane %v298, 1
        %v708 = vsel %vm507, %v706, %v707
        %v709 = vrot.slane %v299, 1
        %v710 = vsel %vm507, %v707, %v709
        %v711 = vrot.slane %v300, 1
        %v712 = vsel %vm507, %v709, %v711
        %v713 = vrot.slane %v301, 1
        %v714 = vsel %vm507, %v711, %v713
        %v715 = vrot.slane %v302, 1
        %v716 = vrot.slane %v303, 1
        %v717 = vsel %vm507, %v715, %v716
        %v718 = vrot.slane %v304, 1
        %v719 = vsel %vm507, %v716, %v718
        %v720 = vrot.slane %v305, 1
        %v721 = vsel %vm507, %v718, %v720
        %v722 = vrot.slane %v306, 1
        %v723 = vsel %vm507, %v720, %v722
        %v724 = vrot.slane %v307, 1
        %v725 = vrot.slane %v308, 1
        %v726 = vsel %vm507, %v724, %v725
        %v727 = vrot.slane %v309, 1
        %v728 = vsel %vm507, %v725, %v727
        %v729 = vrot.slane %v310, 1
        %v730 = vsel %vm507, %v727, %v729
        %v731 = vrot.slane %v311, 1
        %v732 = vsel %vm507, %v729, %v731
        %v733 = vrot.slane %v312, 1
        %v734 = vrot.slane %v313, 1
        %v735 = vsel %vm507, %v733, %v734
        %v736 = vrot.slane %v314, 1
        %v737 = vsel %vm507, %v734, %v736
        %v738 = vrot.slane %v315, 1
        %v739 = vsel %vm507, %v736, %v738
        %v740 = vrot.slane %v316, 1
        %v741 = vsel %vm507, %v738, %v740
        %v742 = vrot.slane %v317, 1
        %v743 = vrot.slane %v318, 1
        %v744 = vsel %vm507, %v742, %v743
        %v745 = vrot.slane %v319, 1
        %v746 = vsel %vm507, %v743, %v745
        %v747 = vrot.slane %v320, 1
        %v748 = vsel %vm507, %v745, %v747
        %v749 = vrot.slane %v321, 1
        %v750 = vsel %vm507, %v747, %v749
        %v751 = vrot.slane %v322, 1
        %v752 = vrot.slane %v323, 1
        %v753 = vsel %vm507, %v751, %v752
        %v754 = vrot.slane %v324, 1
        %v755 = vsel %vm507, %v752, %v754
        %v756 = vrot.slane %v325, 1
        %v757 = vsel %vm507, %v754, %v756
        %v758 = vrot.slane %v326, 1
        %v759 = vsel %vm507, %v756, %v758
        %v760 = vrot.slane %v327, 1
        %v761 = vrot.slane %v328, 1
        %v762 = vsel %vm507, %v760, %v761
        %v763 = vrot.slane %v329, 1
        %v764 = vsel %vm507, %v761, %v763
        %v765 = vrot.slane %v330, 1
        %v766 = vsel %vm507, %v763, %v765
        %v767 = vrot.slane %v331, 1
        %v768 = vsel %vm507, %v765, %v767
        %v769 = vrot.slane %v332, 1
        %v770 = vrot.slane %v333, 1
        %v771 = vsel %vm507, %v769, %v770
        %v772 = vrot.slane %v334, 1
        %v773 = vsel %vm507, %v770, %v772
        %v774 = vrot.slane %v335, 1
        %v775 = vsel %vm507, %v772, %v774
        %v776 = vrot.slane %v336, 1
        %v777 = vsel %vm507, %v774, %v776
        %v778 = vrot.slane %v337, 1
        %v779 = vrot.slane %v338, 1
        %v780 = vsel %vm507, %v778, %v779
        %v781 = vrot.slane %v339, 1
        %v782 = vsel %vm507, %v779, %v781
        %v783 = vrot.slane %v340, 1
        %v784 = vsel %vm507, %v781, %v783
        %v785 = vrot.slane %v341, 1
        %v786 = vsel %vm507, %v783, %v785
        %v787 = vrot.slane %v342, 1
        %v788 = vrot.slane %v343, 1
        %v789 = vsel %vm507, %v787, %v788
        %v790 = vrot.slane %v344, 1
        %v791 = vsel %vm507, %v788, %v790
        %v792 = vrot.slane %v345, 1
        %v793 = vsel %vm507, %v790, %v792
        %v794 = vrot.slane %v346, 1
        %v795 = vsel %vm507, %v792, %v794
        %796 = vrot.lane.b32.xlu0 %v510, 8
        %v797 = vpop.permute.xlu0 %796
        %798 = vrot.lane.b32.xlu0 %v512, 8
        %v799 = vpop.permute.xlu0 %798
        %800 = vrot.lane.b32.xlu0 %v514, 8
        %v801 = vpop.permute.xlu0 %800
        %802 = vrot.lane.b32.xlu0 %v516, 8
        %v803 = vpop.permute.xlu0 %802
        %804 = vrot.lane.b32.xlu0 %v519, 8
        %v805 = vpop.permute.xlu0 %804
        %806 = vrot.lane.b32.xlu0 %v521, 8
        %v807 = vpop.permute.xlu0 %806
        %808 = vrot.lane.b32.xlu0 %v523, 8
        %v809 = vpop.permute.xlu0 %808
        %810 = vrot.lane.b32.xlu0 %v525, 8
        %v811 = vpop.permute.xlu0 %810
        %812 = vrot.lane.b32.xlu0 %v528, 8
        %v813 = vpop.permute.xlu0 %812
        %814 = vrot.lane.b32.xlu0 %v530, 8
        %v815 = vpop.permute.xlu0 %814
        %816 = vrot.lane.b32.xlu0 %v532, 8
        %v817 = vpop.permute.xlu0 %816
        %818 = vrot.lane.b32.xlu0 %v534, 8
        %v819 = vpop.permute.xlu0 %818
        %820 = vrot.lane.b32.xlu0 %v537, 8
        %v821 = vpop.permute.xlu0 %820
        %822 = vrot.lane.b32.xlu0 %v539, 8
        %v823 = vpop.permute.xlu0 %822
        %824 = vrot.lane.b32.xlu0 %v541, 8
        %v825 = vpop.permute.xlu0 %824
        %826 = vrot.lane.b32.xlu0 %v543, 8
        %v827 = vpop.permute.xlu0 %826
        %828 = vrot.lane.b32.xlu0 %v546, 8
        %v829 = vpop.permute.xlu0 %828
        %830 = vrot.lane.b32.xlu0 %v548, 8
        %v831 = vpop.permute.xlu0 %830
        %832 = vrot.lane.b32.xlu0 %v550, 8
        %v833 = vpop.permute.xlu0 %832
        %834 = vrot.lane.b32.xlu0 %v552, 8
        %v835 = vpop.permute.xlu0 %834
        %836 = vrot.lane.b32.xlu0 %v555, 8
        %v837 = vpop.permute.xlu0 %836
        %838 = vrot.lane.b32.xlu0 %v557, 8
        %v839 = vpop.permute.xlu0 %838
        %840 = vrot.lane.b32.xlu0 %v559, 8
        %v841 = vpop.permute.xlu0 %840
        %842 = vrot.lane.b32.xlu0 %v561, 8
        %v843 = vpop.permute.xlu0 %842
        %844 = vrot.lane.b32.xlu0 %v564, 8
        %v845 = vpop.permute.xlu0 %844
        %846 = vrot.lane.b32.xlu0 %v566, 8
        %v847 = vpop.permute.xlu0 %846
        %848 = vrot.lane.b32.xlu0 %v568, 8
        %v849 = vpop.permute.xlu0 %848
        %850 = vrot.lane.b32.xlu0 %v570, 8
        %v851 = vpop.permute.xlu0 %850
        %852 = vrot.lane.b32.xlu0 %v573, 8
        %v853 = vpop.permute.xlu0 %852
        %854 = vrot.lane.b32.xlu0 %v575, 8
        %v855 = vpop.permute.xlu0 %854
        %856 = vrot.lane.b32.xlu0 %v577, 8
        %v857 = vpop.permute.xlu0 %856
        %858 = vrot.lane.b32.xlu0 %v579, 8
        %v859 = vpop.permute.xlu0 %858
        %860 = vrot.lane.b32.xlu0 %v582, 8
        %v861 = vpop.permute.xlu0 %860
        %862 = vrot.lane.b32.xlu0 %v584, 8
        %v863 = vpop.permute.xlu0 %862
        %864 = vrot.lane.b32.xlu0 %v586, 8
        %v865 = vpop.permute.xlu0 %864
        %866 = vrot.lane.b32.xlu0 %v588, 8
        %v867 = vpop.permute.xlu0 %866
        %868 = vrot.lane.b32.xlu0 %v591, 8
        %v869 = vpop.permute.xlu0 %868
        %870 = vrot.lane.b32.xlu0 %v593, 8
        %v871 = vpop.permute.xlu0 %870
        %872 = vrot.lane.b32.xlu0 %v595, 8
        %v873 = vpop.permute.xlu0 %872
        %874 = vrot.lane.b32.xlu0 %v597, 8
        %v875 = vpop.permute.xlu0 %874
        %876 = vrot.lane.b32.xlu0 %v600, 8
        %v877 = vpop.permute.xlu0 %876
        %878 = vrot.lane.b32.xlu0 %v602, 8
        %v879 = vpop.permute.xlu0 %878
        %880 = vrot.lane.b32.xlu0 %v604, 8
        %v881 = vpop.permute.xlu0 %880
        %882 = vrot.lane.b32.xlu0 %v606, 8
        %v883 = vpop.permute.xlu0 %882
        %884 = vrot.lane.b32.xlu0 %v609, 8
        %v885 = vpop.permute.xlu0 %884
        %886 = vrot.lane.b32.xlu0 %v611, 8
        %v887 = vpop.permute.xlu0 %886
        %888 = vrot.lane.b32.xlu0 %v613, 8
        %v889 = vpop.permute.xlu0 %888
        %890 = vrot.lane.b32.xlu0 %v615, 8
        %v891 = vpop.permute.xlu0 %890
        %892 = vrot.lane.b32.xlu0 %v618, 8
        %v893 = vpop.permute.xlu0 %892
        %894 = vrot.lane.b32.xlu0 %v620, 8
        %v895 = vpop.permute.xlu0 %894
        %896 = vrot.lane.b32.xlu0 %v622, 8
        %v897 = vpop.permute.xlu0 %896
        %898 = vrot.lane.b32.xlu0 %v624, 8
        %v899 = vpop.permute.xlu0 %898
        %900 = vrot.lane.b32.xlu0 %v627, 8
        %v901 = vpop.permute.xlu0 %900
        %902 = vrot.lane.b32.xlu0 %v629, 8
        %v903 = vpop.permute.xlu0 %902
        %904 = vrot.lane.b32.xlu0 %v631, 8
        %v905 = vpop.permute.xlu0 %904
        %906 = vrot.lane.b32.xlu0 %v633, 8
        %v907 = vpop.permute.xlu0 %906
        %908 = vrot.lane.b32.xlu0 %v636, 8
        %v909 = vpop.permute.xlu0 %908
        %910 = vrot.lane.b32.xlu0 %v638, 8
        %v911 = vpop.permute.xlu0 %910
        %912 = vrot.lane.b32.xlu0 %v640, 8
        %v913 = vpop.permute.xlu0 %912
        %914 = vrot.lane.b32.xlu0 %v642, 8
        %v915 = vpop.permute.xlu0 %914
        %916 = vrot.lane.b32.xlu0 %v645, 8
        %v917 = vpop.permute.xlu0 %916
        %918 = vrot.lane.b32.xlu0 %v647, 8
        %v919 = vpop.permute.xlu0 %918
        %920 = vrot.lane.b32.xlu0 %v649, 8
        %v921 = vpop.permute.xlu0 %920
        %922 = vrot.lane.b32.xlu0 %v651, 8
        %v923 = vpop.permute.xlu0 %922
        %924 = vrot.lane.b32.xlu0 %v654, 8
        %v925 = vpop.permute.xlu0 %924
        %926 = vrot.lane.b32.xlu0 %v656, 8
        %v927 = vpop.permute.xlu0 %926
        %928 = vrot.lane.b32.xlu0 %v658, 8
        %v929 = vpop.permute.xlu0 %928
        %930 = vrot.lane.b32.xlu0 %v660, 8
        %v931 = vpop.permute.xlu0 %930
        %932 = vrot.lane.b32.xlu0 %v663, 8
        %v933 = vpop.permute.xlu0 %932
        %934 = vrot.lane.b32.xlu0 %v665, 8
        %v935 = vpop.permute.xlu0 %934
        %936 = vrot.lane.b32.xlu0 %v667, 8
        %v937 = vpop.permute.xlu0 %936
        %938 = vrot.lane.b32.xlu0 %v669, 8
        %v939 = vpop.permute.xlu0 %938
        %940 = vrot.lane.b32.xlu0 %v672, 8
        %v941 = vpop.permute.xlu0 %940
        %942 = vrot.lane.b32.xlu0 %v674, 8
        %v943 = vpop.permute.xlu0 %942
        %944 = vrot.lane.b32.xlu0 %v676, 8
        %v945 = vpop.permute.xlu0 %944
        %946 = vrot.lane.b32.xlu0 %v678, 8
        %v947 = vpop.permute.xlu0 %946
        %948 = vrot.lane.b32.xlu0 %v681, 8
        %v949 = vpop.permute.xlu0 %948
        %950 = vrot.lane.b32.xlu0 %v683, 8
        %v951 = vpop.permute.xlu0 %950
        %952 = vrot.lane.b32.xlu0 %v685, 8
        %v953 = vpop.permute.xlu0 %952
        %954 = vrot.lane.b32.xlu0 %v687, 8
        %v955 = vpop.permute.xlu0 %954
        %956 = vrot.lane.b32.xlu0 %v690, 8
        %v957 = vpop.permute.xlu0 %956
        %958 = vrot.lane.b32.xlu0 %v692, 8
        %v959 = vpop.permute.xlu0 %958
        %960 = vrot.lane.b32.xlu0 %v694, 8
        %v961 = vpop.permute.xlu0 %960
        %962 = vrot.lane.b32.xlu0 %v696, 8
        %v963 = vpop.permute.xlu0 %962
        %964 = vrot.lane.b32.xlu0 %v699, 8
        %v965 = vpop.permute.xlu0 %964
        %966 = vrot.lane.b32.xlu0 %v701, 8
        %v967 = vpop.permute.xlu0 %966
        %968 = vrot.lane.b32.xlu0 %v703, 8
        %v969 = vpop.permute.xlu0 %968
        %970 = vrot.lane.b32.xlu0 %v705, 8
        %v971 = vpop.permute.xlu0 %970
        %972 = vrot.lane.b32.xlu0 %v708, 8
        %v973 = vpop.permute.xlu0 %972
        %974 = vrot.lane.b32.xlu0 %v710, 8
        %v975 = vpop.permute.xlu0 %974
        %976 = vrot.lane.b32.xlu0 %v712, 8
        %v977 = vpop.permute.xlu0 %976
        %978 = vrot.lane.b32.xlu0 %v714, 8
        %v979 = vpop.permute.xlu0 %978
        %980 = vrot.lane.b32.xlu0 %v717, 8
        %v981 = vpop.permute.xlu0 %980
        %982 = vrot.lane.b32.xlu0 %v719, 8
        %v983 = vpop.permute.xlu0 %982
        %984 = vrot.lane.b32.xlu0 %v721, 8
        %v985 = vpop.permute.xlu0 %984
        %986 = vrot.lane.b32.xlu0 %v723, 8
        %v987 = vpop.permute.xlu0 %986
        %988 = vrot.lane.b32.xlu0 %v726, 8
        %v989 = vpop.permute.xlu0 %988
        %990 = vrot.lane.b32.xlu0 %v728, 8
        %v991 = vpop.permute.xlu0 %990
        %992 = vrot.lane.b32.xlu0 %v730, 8
        %v993 = vpop.permute.xlu0 %992
        %994 = vrot.lane.b32.xlu0 %v732, 8
        %v995 = vpop.permute.xlu0 %994
        %996 = vrot.lane.b32.xlu0 %v735, 8
        %v997 = vpop.permute.xlu0 %996
        %998 = vrot.lane.b32.xlu0 %v737, 8
        %v999 = vpop.permute.xlu0 %998
        %1000 = vrot.lane.b32.xlu0 %v739, 8
        %v1001 = vpop.permute.xlu0 %1000
        %1002 = vrot.lane.b32.xlu0 %v741, 8
        %v1003 = vpop.permute.xlu0 %1002
        %1004 = vrot.lane.b32.xlu0 %v744, 8
        %v1005 = vpop.permute.xlu0 %1004
        %1006 = vrot.lane.b32.xlu0 %v746, 8
        %v1007 = vpop.permute.xlu0 %1006
        %1008 = vrot.lane.b32.xlu0 %v748, 8
        %v1009 = vpop.permute.xlu0 %1008
        %1010 = vrot.lane.b32.xlu0 %v750, 8
        %v1011 = vpop.permute.xlu0 %1010
        %1012 = vrot.lane.b32.xlu0 %v753, 8
        %v1013 = vpop.permute.xlu0 %1012
        %1014 = vrot.lane.b32.xlu0 %v755, 8
        %v1015 = vpop.permute.xlu0 %1014
        %1016 = vrot.lane.b32.xlu0 %v757, 8
        %v1017 = vpop.permute.xlu0 %1016
        %1018 = vrot.lane.b32.xlu0 %v759, 8
        %v1019 = vpop.permute.xlu0 %1018
        %1020 = vrot.lane.b32.xlu0 %v762, 8
        %v1021 = vpop.permute.xlu0 %1020
        %1022 = vrot.lane.b32.xlu0 %v764, 8
        %v1023 = vpop.permute.xlu0 %1022
        %1024 = vrot.lane.b32.xlu0 %v766, 8
        %v1025 = vpop.permute.xlu0 %1024
        %1026 = vrot.lane.b32.xlu0 %v768, 8
        %v1027 = vpop.permute.xlu0 %1026
        %1028 = vrot.lane.b32.xlu0 %v771, 8
        %v1029 = vpop.permute.xlu0 %1028
        %1030 = vrot.lane.b32.xlu0 %v773, 8
        %v1031 = vpop.permute.xlu0 %1030
        %1032 = vrot.lane.b32.xlu0 %v775, 8
        %v1033 = vpop.permute.xlu0 %1032
        %1034 = vrot.lane.b32.xlu0 %v777, 8
        %v1035 = vpop.permute.xlu0 %1034
        %1036 = vrot.lane.b32.xlu0 %v780, 8
        %v1037 = vpop.permute.xlu0 %1036
        %1038 = vrot.lane.b32.xlu0 %v782, 8
        %v1039 = vpop.permute.xlu0 %1038
        %1040 = vrot.lane.b32.xlu0 %v784, 8
        %v1041 = vpop.permute.xlu0 %1040
        %1042 = vrot.lane.b32.xlu0 %v786, 8
        %v1043 = vpop.permute.xlu0 %1042
        %1044 = vrot.lane.b32.xlu0 %v789, 8
        %v1045 = vpop.permute.xlu0 %1044
        %1046 = vrot.lane.b32.xlu0 %v791, 8
        %v1047 = vpop.permute.xlu0 %1046
        %1048 = vrot.lane.b32.xlu0 %v793, 8
        %v1049 = vpop.permute.xlu0 %1048
        %1050 = vrot.lane.b32.xlu0 %v795, 8
        %v1051 = vpop.permute.xlu0 %1050
        %vm1180 = vcmask 1045504
        %v1181 = vrot.slane %v187, 2
        %v1182 = vrot.slane %v188, 2
        %v1183 = vsel %vm1180, %v1181, %v1182
        %v1184 = vrot.slane %v189, 2
        %v1185 = vsel %vm1180, %v1182, %v1184
        %v1186 = vrot.slane %v190, 2
        %v1187 = vsel %vm1180, %v1184, %v1186
        %v1188 = vrot.slane %v191, 2
        %v1189 = vsel %vm1180, %v1186, %v1188
        %v1190 = vrot.slane %v192, 2
        %v1191 = vrot.slane %v193, 2
        %v1192 = vsel %vm1180, %v1190, %v1191
        %v1193 = vrot.slane %v194, 2
        %v1194 = vsel %vm1180, %v1191, %v1193
        %v1195 = vrot.slane %v195, 2
        %v1196 = vsel %vm1180, %v1193, %v1195
        %v1197 = vrot.slane %v196, 2
        %v1198 = vsel %vm1180, %v1195, %v1197
        %v1199 = vrot.slane %v197, 2
        %v1200 = vrot.slane %v198, 2
        %v1201 = vsel %vm1180, %v1199, %v1200
        %v1202 = vrot.slane %v199, 2
        %v1203 = vsel %vm1180, %v1200, %v1202
        %v1204 = vrot.slane %v200, 2
        %v1205 = vsel %vm1180, %v1202, %v1204
        %v1206 = vrot.slane %v201, 2
        %v1207 = vsel %vm1180, %v1204, %v1206
        %v1208 = vrot.slane %v202, 2
        %v1209 = vrot.slane %v203, 2
        %v1210 = vsel %vm1180, %v1208, %v1209
        %v1211 = vrot.slane %v204, 2
        %v1212 = vsel %vm1180, %v1209, %v1211
        %v1213 = vrot.slane %v205, 2
        %v1214 = vsel %vm1180, %v1211, %v1213
        %v1215 = vrot.slane %v206, 2
        %v1216 = vsel %vm1180, %v1213, %v1215
        %v1217 = vrot.slane %v207, 2
        %v1218 = vrot.slane %v208, 2
        %v1219 = vsel %vm1180, %v1217, %v1218
        %v1220 = vrot.slane %v209, 2
        %v1221 = vsel %vm1180, %v1218, %v1220
        %v1222 = vrot.slane %v210, 2
        %v1223 = vsel %vm1180, %v1220, %v1222
        %v1224 = vrot.slane %v211, 2
        %v1225 = vsel %vm1180, %v1222, %v1224
        %v1226 = vrot.slane %v212, 2
        %v1227 = vrot.slane %v213, 2
        %v1228 = vsel %vm1180, %v1226, %v1227
        %v1229 = vrot.slane %v214, 2
        %v1230 = vsel %vm1180, %v1227, %v1229
        %v1231 = vrot.slane %v215, 2
        %v1232 = vsel %vm1180, %v1229, %v1231
        %v1233 = vrot.slane %v216, 2
        %v1234 = vsel %vm1180, %v1231, %v1233
        %v1235 = vrot.slane %v217, 2
        %v1236 = vrot.slane %v218, 2
        %v1237 = vsel %vm1180, %v1235, %v1236
        %v1238 = vrot.slane %v219, 2
        %v1239 = vsel %vm1180, %v1236, %v1238
        %v1240 = vrot.slane %v220, 2
        %v1241 = vsel %vm1180, %v1238, %v1240
        %v1242 = vrot.slane %v221, 2
        %v1243 = vsel %vm1180, %v1240, %v1242
        %v1244 = vrot.slane %v222, 2
        %v1245 = vrot.slane %v223, 2
        %v1246 = vsel %vm1180, %v1244, %v1245
        %v1247 = vrot.slane %v224, 2
        %v1248 = vsel %vm1180, %v1245, %v1247
        %v1249 = vrot.slane %v225, 2
        %v1250 = vsel %vm1180, %v1247, %v1249
        %v1251 = vrot.slane %v226, 2
        %v1252 = vsel %vm1180, %v1249, %v1251
        %v1253 = vrot.slane %v227, 2
        %v1254 = vrot.slane %v228, 2
        %v1255 = vsel %vm1180, %v1253, %v1254
        %v1256 = vrot.slane %v229, 2
        %v1257 = vsel %vm1180, %v1254, %v1256
        %v1258 = vrot.slane %v230, 2
        %v1259 = vsel %vm1180, %v1256, %v1258
        %v1260 = vrot.slane %v231, 2
        %v1261 = vsel %vm1180, %v1258, %v1260
        %v1262 = vrot.slane %v232, 2
        %v1263 = vrot.slane %v233, 2
        %v1264 = vsel %vm1180, %v1262, %v1263
        %v1265 = vrot.slane %v234, 2
        %v1266 = vsel %vm1180, %v1263, %v1265
        %v1267 = vrot.slane %v235, 2
        %v1268 = vsel %vm1180, %v1265, %v1267
        %v1269 = vrot.slane %v236, 2
        %v1270 = vsel %vm1180, %v1267, %v1269
        %v1271 = vrot.slane %v237, 2
        %v1272 = vrot.slane %v238, 2
        %v1273 = vsel %vm1180, %v1271, %v1272
        %v1274 = vrot.slane %v239, 2
        %v1275 = vsel %vm1180, %v1272, %v1274
        %v1276 = vrot.slane %v240, 2
        %v1277 = vsel %vm1180, %v1274, %v1276
        %v1278 = vrot.slane %v241, 2
        %v1279 = vsel %vm1180, %v1276, %v1278
        %v1280 = vrot.slane %v242, 2
        %v1281 = vrot.slane %v243, 2
        %v1282 = vsel %vm1180, %v1280, %v1281
        %v1283 = vrot.slane %v244, 2
        %v1284 = vsel %vm1180, %v1281, %v1283
        %v1285 = vrot.slane %v245, 2
        %v1286 = vsel %vm1180, %v1283, %v1285
        %v1287 = vrot.slane %v246, 2
        %v1288 = vsel %vm1180, %v1285, %v1287
        %v1289 = vrot.slane %v247, 2
        %v1290 = vrot.slane %v248, 2
        %v1291 = vsel %vm1180, %v1289, %v1290
        %v1292 = vrot.slane %v249, 2
        %v1293 = vsel %vm1180, %v1290, %v1292
        %v1294 = vrot.slane %v250, 2
        %v1295 = vsel %vm1180, %v1292, %v1294
        %v1296 = vrot.slane %v251, 2
        %v1297 = vsel %vm1180, %v1294, %v1296
        %v1298 = vrot.slane %v252, 2
        %v1299 = vrot.slane %v253, 2
        %v1300 = vsel %vm1180, %v1298, %v1299
        %v1301 = vrot.slane %v254, 2
        %v1302 = vsel %vm1180, %v1299, %v1301
        %v1303 = vrot.slane %v255, 2
        %v1304 = vsel %vm1180, %v1301, %v1303
        %v1305 = vrot.slane %v256, 2
        %v1306 = vsel %vm1180, %v1303, %v1305
        %v1307 = vrot.slane %v257, 2
        %v1308 = vrot.slane %v258, 2
        %v1309 = vsel %vm1180, %v1307, %v1308
        %v1310 = vrot.slane %v259, 2
        %v1311 = vsel %vm1180, %v1308, %v1310
        %v1312 = vrot.slane %v260, 2
        %v1313 = vsel %vm1180, %v1310, %v1312
        %v1314 = vrot.slane %v261, 2
        %v1315 = vsel %vm1180, %v1312, %v1314
        %v1316 = vrot.slane %v262, 2
        %v1317 = vrot.slane %v263, 2
        %v1318 = vsel %vm1180, %v1316, %v1317
        %v1319 = vrot.slane %v264, 2
        %v1320 = vsel %vm1180, %v1317, %v1319
        %v1321 = vrot.slane %v265, 2
        %v1322 = vsel %vm1180, %v1319, %v1321
        %v1323 = vrot.slane %v266, 2
        %v1324 = vsel %vm1180, %v1321, %v1323
        %v1325 = vrot.slane %v267, 2
        %v1326 = vrot.slane %v268, 2
        %v1327 = vsel %vm1180, %v1325, %v1326
        %v1328 = vrot.slane %v269, 2
        %v1329 = vsel %vm1180, %v1326, %v1328
        %v1330 = vrot.slane %v270, 2
        %v1331 = vsel %vm1180, %v1328, %v1330
        %v1332 = vrot.slane %v271, 2
        %v1333 = vsel %vm1180, %v1330, %v1332
        %v1334 = vrot.slane %v272, 2
        %v1335 = vrot.slane %v273, 2
        %v1336 = vsel %vm1180, %v1334, %v1335
        %v1337 = vrot.slane %v274, 2
        %v1338 = vsel %vm1180, %v1335, %v1337
        %v1339 = vrot.slane %v275, 2
        %v1340 = vsel %vm1180, %v1337, %v1339
        %v1341 = vrot.slane %v276, 2
        %v1342 = vsel %vm1180, %v1339, %v1341
        %v1343 = vrot.slane %v277, 2
        %v1344 = vrot.slane %v278, 2
        %v1345 = vsel %vm1180, %v1343, %v1344
        %v1346 = vrot.slane %v279, 2
        %v1347 = vsel %vm1180, %v1344, %v1346
        %v1348 = vrot.slane %v280, 2
        %v1349 = vsel %vm1180, %v1346, %v1348
        %v1350 = vrot.slane %v281, 2
        %v1351 = vsel %vm1180, %v1348, %v1350
        %v1352 = vrot.slane %v282, 2
        %v1353 = vrot.slane %v283, 2
        %v1354 = vsel %vm1180, %v1352, %v1353
        %v1355 = vrot.slane %v284, 2
        %v1356 = vsel %vm1180, %v1353, %v1355
        %v1357 = vrot.slane %v285, 2
        %v1358 = vsel %vm1180, %v1355, %v1357
        %v1359 = vrot.slane %v286, 2
        %v1360 = vsel %vm1180, %v1357, %v1359
        %v1361 = vrot.slane %v287, 2
        %v1362 = vrot.slane %v288, 2
        %v1363 = vsel %vm1180, %v1361, %v1362
        %v1364 = vrot.slane %v289, 2
        %v1365 = vsel %vm1180, %v1362, %v1364
        %v1366 = vrot.slane %v290, 2
        %v1367 = vsel %vm1180, %v1364, %v1366
        %v1368 = vrot.slane %v291, 2
        %v1369 = vsel %vm1180, %v1366, %v1368
        %v1370 = vrot.slane %v292, 2
        %v1371 = vrot.slane %v293, 2
        %v1372 = vsel %vm1180, %v1370, %v1371
        %v1373 = vrot.slane %v294, 2
        %v1374 = vsel %vm1180, %v1371, %v1373
        %v1375 = vrot.slane %v295, 2
        %v1376 = vsel %vm1180, %v1373, %v1375
        %v1377 = vrot.slane %v296, 2
        %v1378 = vsel %vm1180, %v1375, %v1377
        %v1379 = vrot.slane %v297, 2
        %v1380 = vrot.slane %v298, 2
        %v1381 = vsel %vm1180, %v1379, %v1380
        %v1382 = vrot.slane %v299, 2
        %v1383 = vsel %vm1180, %v1380, %v1382
        %v1384 = vrot.slane %v300, 2
        %v1385 = vsel %vm1180, %v1382, %v1384
        %v1386 = vrot.slane %v301, 2
        %v1387 = vsel %vm1180, %v1384, %v1386
        %v1388 = vrot.slane %v302, 2
        %v1389 = vrot.slane %v303, 2
        %v1390 = vsel %vm1180, %v1388, %v1389
        %v1391 = vrot.slane %v304, 2
        %v1392 = vsel %vm1180, %v1389, %v1391
        %v1393 = vrot.slane %v305, 2
        %v1394 = vsel %vm1180, %v1391, %v1393
        %v1395 = vrot.slane %v306, 2
        %v1396 = vsel %vm1180, %v1393, %v1395
        %v1397 = vrot.slane %v307, 2
        %v1398 = vrot.slane %v308, 2
        %v1399 = vsel %vm1180, %v1397, %v1398
        %v1400 = vrot.slane %v309, 2
        %v1401 = vsel %vm1180, %v1398, %v1400
        %v1402 = vrot.slane %v310, 2
        %v1403 = vsel %vm1180, %v1400, %v1402
        %v1404 = vrot.slane %v311, 2
        %v1405 = vsel %vm1180, %v1402, %v1404
        %v1406 = vrot.slane %v312, 2
        %v1407 = vrot.slane %v313, 2
        %v1408 = vsel %vm1180, %v1406, %v1407
        %v1409 = vrot.slane %v314, 2
        %v1410 = vsel %vm1180, %v1407, %v1409
        %v1411 = vrot.slane %v315, 2
        %v1412 = vsel %vm1180, %v1409, %v1411
        %v1413 = vrot.slane %v316, 2
        %v1414 = vsel %vm1180, %v1411, %v1413
        %v1415 = vrot.slane %v317, 2
        %v1416 = vrot.slane %v318, 2
        %v1417 = vsel %vm1180, %v1415, %v1416
        %v1418 = vrot.slane %v319, 2
        %v1419 = vsel %vm1180, %v1416, %v1418
        %v1420 = vrot.slane %v320, 2
        %v1421 = vsel %vm1180, %v1418, %v1420
        %v1422 = vrot.slane %v321, 2
        %v1423 = vsel %vm1180, %v1420, %v1422
        %v1424 = vrot.slane %v322, 2
        %v1425 = vrot.slane %v323, 2
        %v1426 = vsel %vm1180, %v1424, %v1425
        %v1427 = vrot.slane %v324, 2
        %v1428 = vsel %vm1180, %v1425, %v1427
        %v1429 = vrot.slane %v325, 2
        %v1430 = vsel %vm1180, %v1427, %v1429
        %v1431 = vrot.slane %v326, 2
        %v1432 = vsel %vm1180, %v1429, %v1431
        %v1433 = vrot.slane %v327, 2
        %v1434 = vrot.slane %v328, 2
        %v1435 = vsel %vm1180, %v1433, %v1434
        %v1436 = vrot.slane %v329, 2
        %v1437 = vsel %vm1180, %v1434, %v1436
        %v1438 = vrot.slane %v330, 2
        %v1439 = vsel %vm1180, %v1436, %v1438
        %v1440 = vrot.slane %v331, 2
        %v1441 = vsel %vm1180, %v1438, %v1440
        %v1442 = vrot.slane %v332, 2
        %v1443 = vrot.slane %v333, 2
        %v1444 = vsel %vm1180, %v1442, %v1443
        %v1445 = vrot.slane %v334, 2
        %v1446 = vsel %vm1180, %v1443, %v1445
        %v1447 = vrot.slane %v335, 2
        %v1448 = vsel %vm1180, %v1445, %v1447
        %v1449 = vrot.slane %v336, 2
        %v1450 = vsel %vm1180, %v1447, %v1449
        %v1451 = vrot.slane %v337, 2
        %v1452 = vrot.slane %v338, 2
        %v1453 = vsel %vm1180, %v1451, %v1452
        %v1454 = vrot.slane %v339, 2
        %v1455 = vsel %vm1180, %v1452, %v1454
        %v1456 = vrot.slane %v340, 2
        %v1457 = vsel %vm1180, %v1454, %v1456
        %v1458 = vrot.slane %v341, 2
        %v1459 = vsel %vm1180, %v1456, %v1458
        %v1460 = vrot.slane %v342, 2
        %v1461 = vrot.slane %v343, 2
        %v1462 = vsel %vm1180, %v1460, %v1461
        %v1463 = vrot.slane %v344, 2
        %v1464 = vsel %vm1180, %v1461, %v1463
        %v1465 = vrot.slane %v345, 2
        %v1466 = vsel %vm1180, %v1463, %v1465
        %v1467 = vrot.slane %v346, 2
        %v1468 = vsel %vm1180, %v1465, %v1467
        %1469 = vrot.lane.b32.xlu0 %v1183, 16
        %v1470 = vpop.permute.xlu0 %1469
        %1471 = vrot.lane.b32.xlu0 %v1185, 16
        %v1472 = vpop.permute.xlu0 %1471
        %1473 = vrot.lane.b32.xlu0 %v1187, 16
        %v1474 = vpop.permute.xlu0 %1473
        %1475 = vrot.lane.b32.xlu0 %v1189, 16
        %v1476 = vpop.permute.xlu0 %1475
        %1477 = vrot.lane.b32.xlu0 %v1192, 16
        %v1478 = vpop.permute.xlu0 %1477
        %1479 = vrot.lane.b32.xlu0 %v1194, 16
        %v1480 = vpop.permute.xlu0 %1479
        %1481 = vrot.lane.b32.xlu0 %v1196, 16
        %v1482 = vpop.permute.xlu0 %1481
        %1483 = vrot.lane.b32.xlu0 %v1198, 16
        %v1484 = vpop.permute.xlu0 %1483
        %1485 = vrot.lane.b32.xlu0 %v1201, 16
        %v1486 = vpop.permute.xlu0 %1485
        %1487 = vrot.lane.b32.xlu0 %v1203, 16
        %v1488 = vpop.permute.xlu0 %1487
        %1489 = vrot.lane.b32.xlu0 %v1205, 16
        %v1490 = vpop.permute.xlu0 %1489
        %1491 = vrot.lane.b32.xlu0 %v1207, 16
        %v1492 = vpop.permute.xlu0 %1491
        %1493 = vrot.lane.b32.xlu0 %v1210, 16
        %v1494 = vpop.permute.xlu0 %1493
        %1495 = vrot.lane.b32.xlu0 %v1212, 16
        %v1496 = vpop.permute.xlu0 %1495
        %1497 = vrot.lane.b32.xlu0 %v1214, 16
        %v1498 = vpop.permute.xlu0 %1497
        %1499 = vrot.lane.b32.xlu0 %v1216, 16
        %v1500 = vpop.permute.xlu0 %1499
        %1501 = vrot.lane.b32.xlu0 %v1219, 16
        %v1502 = vpop.permute.xlu0 %1501
        %1503 = vrot.lane.b32.xlu0 %v1221, 16
        %v1504 = vpop.permute.xlu0 %1503
        %1505 = vrot.lane.b32.xlu0 %v1223, 16
        %v1506 = vpop.permute.xlu0 %1505
        %1507 = vrot.lane.b32.xlu0 %v1225, 16
        %v1508 = vpop.permute.xlu0 %1507
        %1509 = vrot.lane.b32.xlu0 %v1228, 16
        %v1510 = vpop.permute.xlu0 %1509
        %1511 = vrot.lane.b32.xlu0 %v1230, 16
        %v1512 = vpop.permute.xlu0 %1511
        %1513 = vrot.lane.b32.xlu0 %v1232, 16
        %v1514 = vpop.permute.xlu0 %1513
        %1515 = vrot.lane.b32.xlu0 %v1234, 16
        %v1516 = vpop.permute.xlu0 %1515
        %1517 = vrot.lane.b32.xlu0 %v1237, 16
        %v1518 = vpop.permute.xlu0 %1517
        %1519 = vrot.lane.b32.xlu0 %v1239, 16
        %v1520 = vpop.permute.xlu0 %1519
        %1521 = vrot.lane.b32.xlu0 %v1241, 16
        %v1522 = vpop.permute.xlu0 %1521
        %1523 = vrot.lane.b32.xlu0 %v1243, 16
        %v1524 = vpop.permute.xlu0 %1523
        %1525 = vrot.lane.b32.xlu0 %v1246, 16
        %v1526 = vpop.permute.xlu0 %1525
        %1527 = vrot.lane.b32.xlu0 %v1248, 16
        %v1528 = vpop.permute.xlu0 %1527
        %1529 = vrot.lane.b32.xlu0 %v1250, 16
        %v1530 = vpop.permute.xlu0 %1529
        %1531 = vrot.lane.b32.xlu0 %v1252, 16
        %v1532 = vpop.permute.xlu0 %1531
        %1533 = vrot.lane.b32.xlu0 %v1255, 16
        %v1534 = vpop.permute.xlu0 %1533
        %1535 = vrot.lane.b32.xlu0 %v1257, 16
        %v1536 = vpop.permute.xlu0 %1535
        %1537 = vrot.lane.b32.xlu0 %v1259, 16
        %v1538 = vpop.permute.xlu0 %1537
        %1539 = vrot.lane.b32.xlu0 %v1261, 16
        %v1540 = vpop.permute.xlu0 %1539
        %1541 = vrot.lane.b32.xlu0 %v1264, 16
        %v1542 = vpop.permute.xlu0 %1541
        %1543 = vrot.lane.b32.xlu0 %v1266, 16
        %v1544 = vpop.permute.xlu0 %1543
        %1545 = vrot.lane.b32.xlu0 %v1268, 16
        %v1546 = vpop.permute.xlu0 %1545
        %1547 = vrot.lane.b32.xlu0 %v1270, 16
        %v1548 = vpop.permute.xlu0 %1547
        %1549 = vrot.lane.b32.xlu0 %v1273, 16
        %v1550 = vpop.permute.xlu0 %1549
        %1551 = vrot.lane.b32.xlu0 %v1275, 16
        %v1552 = vpop.permute.xlu0 %1551
        %1553 = vrot.lane.b32.xlu0 %v1277, 16
        %v1554 = vpop.permute.xlu0 %1553
        %1555 = vrot.lane.b32.xlu0 %v1279, 16
        %v1556 = vpop.permute.xlu0 %1555
        %1557 = vrot.lane.b32.xlu0 %v1282, 16
        %v1558 = vpop.permute.xlu0 %1557
        %1559 = vrot.lane.b32.xlu0 %v1284, 16
        %v1560 = vpop.permute.xlu0 %1559
        %1561 = vrot.lane.b32.xlu0 %v1286, 16
        %v1562 = vpop.permute.xlu0 %1561
        %1563 = vrot.lane.b32.xlu0 %v1288, 16
        %v1564 = vpop.permute.xlu0 %1563
        %1565 = vrot.lane.b32.xlu0 %v1291, 16
        %v1566 = vpop.permute.xlu0 %1565
        %1567 = vrot.lane.b32.xlu0 %v1293, 16
        %v1568 = vpop.permute.xlu0 %1567
        %1569 = vrot.lane.b32.xlu0 %v1295, 16
        %v1570 = vpop.permute.xlu0 %1569
        %1571 = vrot.lane.b32.xlu0 %v1297, 16
        %v1572 = vpop.permute.xlu0 %1571
        %1573 = vrot.lane.b32.xlu0 %v1300, 16
        %v1574 = vpop.permute.xlu0 %1573
        %1575 = vrot.lane.b32.xlu0 %v1302, 16
        %v1576 = vpop.permute.xlu0 %1575
        %1577 = vrot.lane.b32.xlu0 %v1304, 16
        %v1578 = vpop.permute.xlu0 %1577
        %1579 = vrot.lane.b32.xlu0 %v1306, 16
        %v1580 = vpop.permute.xlu0 %1579
        %1581 = vrot.lane.b32.xlu0 %v1309, 16
        %v1582 = vpop.permute.xlu0 %1581
        %1583 = vrot.lane.b32.xlu0 %v1311, 16
        %v1584 = vpop.permute.xlu0 %1583
        %1585 = vrot.lane.b32.xlu0 %v1313, 16
        %v1586 = vpop.permute.xlu0 %1585
        %1587 = vrot.lane.b32.xlu0 %v1315, 16
        %v1588 = vpop.permute.xlu0 %1587
        %1589 = vrot.lane.b32.xlu0 %v1318, 16
        %v1590 = vpop.permute.xlu0 %1589
        %1591 = vrot.lane.b32.xlu0 %v1320, 16
        %v1592 = vpop.permute.xlu0 %1591
        %1593 = vrot.lane.b32.xlu0 %v1322, 16
        %v1594 = vpop.permute.xlu0 %1593
        %1595 = vrot.lane.b32.xlu0 %v1324, 16
        %v1596 = vpop.permute.xlu0 %1595
        %1597 = vrot.lane.b32.xlu0 %v1327, 16
        %v1598 = vpop.permute.xlu0 %1597
        %1599 = vrot.lane.b32.xlu0 %v1329, 16
        %v1600 = vpop.permute.xlu0 %1599
        %1601 = vrot.lane.b32.xlu0 %v1331, 16
        %v1602 = vpop.permute.xlu0 %1601
        %1603 = vrot.lane.b32.xlu0 %v1333, 16
        %v1604 = vpop.permute.xlu0 %1603
        %1605 = vrot.lane.b32.xlu0 %v1336, 16
        %v1606 = vpop.permute.xlu0 %1605
        %1607 = vrot.lane.b32.xlu0 %v1338, 16
        %v1608 = vpop.permute.xlu0 %1607
        %1609 = vrot.lane.b32.xlu0 %v1340, 16
        %v1610 = vpop.permute.xlu0 %1609
        %1611 = vrot.lane.b32.xlu0 %v1342, 16
        %v1612 = vpop.permute.xlu0 %1611
        %1613 = vrot.lane.b32.xlu0 %v1345, 16
        %v1614 = vpop.permute.xlu0 %1613
        %1615 = vrot.lane.b32.xlu0 %v1347, 16
        %v1616 = vpop.permute.xlu0 %1615
        %1617 = vrot.lane.b32.xlu0 %v1349, 16
        %v1618 = vpop.permute.xlu0 %1617
        %1619 = vrot.lane.b32.xlu0 %v1351, 16
        %v1620 = vpop.permute.xlu0 %1619
        %1621 = vrot.lane.b32.xlu0 %v1354, 16
        %v1622 = vpop.permute.xlu0 %1621
        %1623 = vrot.lane.b32.xlu0 %v1356, 16
        %v1624 = vpop.permute.xlu0 %1623
        %1625 = vrot.lane.b32.xlu0 %v1358, 16
        %v1626 = vpop.permute.xlu0 %1625
        %1627 = vrot.lane.b32.xlu0 %v1360, 16
        %v1628 = vpop.permute.xlu0 %1627
        %1629 = vrot.lane.b32.xlu0 %v1363, 16
        %v1630 = vpop.permute.xlu0 %1629
        %1631 = vrot.lane.b32.xlu0 %v1365, 16
        %v1632 = vpop.permute.xlu0 %1631
        %1633 = vrot.lane.b32.xlu0 %v1367, 16
        %v1634 = vpop.permute.xlu0 %1633
        %1635 = vrot.lane.b32.xlu0 %v1369, 16
        %v1636 = vpop.permute.xlu0 %1635
        %1637 = vrot.lane.b32.xlu0 %v1372, 16
        %v1638 = vpop.permute.xlu0 %1637
        %1639 = vrot.lane.b32.xlu0 %v1374, 16
        %v1640 = vpop.permute.xlu0 %1639
        %1641 = vrot.lane.b32.xlu0 %v1376, 16
        %v1642 = vpop.permute.xlu0 %1641
        %1643 = vrot.lane.b32.xlu0 %v1378, 16
        %v1644 = vpop.permute.xlu0 %1643
        %1645 = vrot.lane.b32.xlu0 %v1381, 16
        %v1646 = vpop.permute.xlu0 %1645
        %1647 = vrot.lane.b32.xlu0 %v1383, 16
        %v1648 = vpop.permute.xlu0 %1647
        %1649 = vrot.lane.b32.xlu0 %v1385, 16
        %v1650 = vpop.permute.xlu0 %1649
        %1651 = vrot.lane.b32.xlu0 %v1387, 16
        %v1652 = vpop.permute.xlu0 %1651
        %1653 = vrot.lane.b32.xlu0 %v1390, 16
        %v1654 = vpop.permute.xlu0 %1653
        %1655 = vrot.lane.b32.xlu0 %v1392, 16
        %v1656 = vpop.permute.xlu0 %1655
        %1657 = vrot.lane.b32.xlu0 %v1394, 16
        %v1658 = vpop.permute.xlu0 %1657
        %1659 = vrot.lane.b32.xlu0 %v1396, 16
        %v1660 = vpop.permute.xlu0 %1659
        %1661 = vrot.lane.b32.xlu0 %v1399, 16
        %v1662 = vpop.permute.xlu0 %1661
        %1663 = vrot.lane.b32.xlu0 %v1401, 16
        %v1664 = vpop.permute.xlu0 %1663
        %1665 = vrot.lane.b32.xlu0 %v1403, 16
        %v1666 = vpop.permute.xlu0 %1665
        %1667 = vrot.lane.b32.xlu0 %v1405, 16
        %v1668 = vpop.permute.xlu0 %1667
        %1669 = vrot.lane.b32.xlu0 %v1408, 16
        %v1670 = vpop.permute.xlu0 %1669
        %1671 = vrot.lane.b32.xlu0 %v1410, 16
        %v1672 = vpop.permute.xlu0 %1671
        %1673 = vrot.lane.b32.xlu0 %v1412, 16
        %v1674 = vpop.permute.xlu0 %1673
        %1675 = vrot.lane.b32.xlu0 %v1414, 16
        %v1676 = vpop.permute.xlu0 %1675
        %1677 = vrot.lane.b32.xlu0 %v1417, 16
        %v1678 = vpop.permute.xlu0 %1677
        %1679 = vrot.lane.b32.xlu0 %v1419, 16
        %v1680 = vpop.permute.xlu0 %1679
        %1681 = vrot.lane.b32.xlu0 %v1421, 16
        %v1682 = vpop.permute.xlu0 %1681
        %1683 = vrot.lane.b32.xlu0 %v1423, 16
        %v1684 = vpop.permute.xlu0 %1683
        %1685 = vrot.lane.b32.xlu0 %v1426, 16
        %v1686 = vpop.permute.xlu0 %1685
        %1687 = vrot.lane.b32.xlu0 %v1428, 16
        %v1688 = vpop.permute.xlu0 %1687
        %1689 = vrot.lane.b32.xlu0 %v1430, 16
        %v1690 = vpop.permute.xlu0 %1689
        %1691 = vrot.lane.b32.xlu0 %v1432, 16
        %v1692 = vpop.permute.xlu0 %1691
        %1693 = vrot.lane.b32.xlu0 %v1435, 16
        %v1694 = vpop.permute.xlu0 %1693
        %1695 = vrot.lane.b32.xlu0 %v1437, 16
        %v1696 = vpop.permute.xlu0 %1695
        %1697 = vrot.lane.b32.xlu0 %v1439, 16
        %v1698 = vpop.permute.xlu0 %1697
        %1699 = vrot.lane.b32.xlu0 %v1441, 16
        %v1700 = vpop.permute.xlu0 %1699
        %1701 = vrot.lane.b32.xlu0 %v1444, 16
        %v1702 = vpop.permute.xlu0 %1701
        %1703 = vrot.lane.b32.xlu0 %v1446, 16
        %v1704 = vpop.permute.xlu0 %1703
        %1705 = vrot.lane.b32.xlu0 %v1448, 16
        %v1706 = vpop.permute.xlu0 %1705
        %1707 = vrot.lane.b32.xlu0 %v1450, 16
        %v1708 = vpop.permute.xlu0 %1707
        %1709 = vrot.lane.b32.xlu0 %v1453, 16
        %v1710 = vpop.permute.xlu0 %1709
        %1711 = vrot.lane.b32.xlu0 %v1455, 16
        %v1712 = vpop.permute.xlu0 %1711
        %1713 = vrot.lane.b32.xlu0 %v1457, 16
        %v1714 = vpop.permute.xlu0 %1713
        %1715 = vrot.lane.b32.xlu0 %v1459, 16
        %v1716 = vpop.permute.xlu0 %1715
        %1717 = vrot.lane.b32.xlu0 %v1462, 16
        %v1718 = vpop.permute.xlu0 %1717
        %1719 = vrot.lane.b32.xlu0 %v1464, 16
        %v1720 = vpop.permute.xlu0 %1719
        %1721 = vrot.lane.b32.xlu0 %v1466, 16
        %v1722 = vpop.permute.xlu0 %1721
        %1723 = vrot.lane.b32.xlu0 %v1468, 16
        %v1724 = vpop.permute.xlu0 %1723
        %vm1853 = vcmask 64512
        %v1854 = vsel %vm1853, %v187, %v797
        %v1855 = vsel %vm1853, %v188, %v799
        %v1856 = vsel %vm1853, %v189, %v801
        %v1857 = vsel %vm1853, %v190, %v803
        %v1858 = vsel %vm1853, %v192, %v805
        %v1859 = vsel %vm1853, %v193, %v807
        %v1860 = vsel %vm1853, %v194, %v809
        %v1861 = vsel %vm1853, %v195, %v811
        %v1862 = vsel %vm1853, %v197, %v813
        %v1863 = vsel %vm1853, %v198, %v815
        %v1864 = vsel %vm1853, %v199, %v817
        %v1865 = vsel %vm1853, %v200, %v819
        %v1866 = vsel %vm1853, %v202, %v821
        %v1867 = vsel %vm1853, %v203, %v823
        %v1868 = vsel %vm1853, %v204, %v825
        %v1869 = vsel %vm1853, %v205, %v827
        %v1870 = vsel %vm1853, %v207, %v829
        %v1871 = vsel %vm1853, %v208, %v831
        %v1872 = vsel %vm1853, %v209, %v833
        %v1873 = vsel %vm1853, %v210, %v835
        %v1874 = vsel %vm1853, %v212, %v837
        %v1875 = vsel %vm1853, %v213, %v839
        %v1876 = vsel %vm1853, %v214, %v841
        %v1877 = vsel %vm1853, %v215, %v843
        %v1878 = vsel %vm1853, %v217, %v845
        %v1879 = vsel %vm1853, %v218, %v847
        %v1880 = vsel %vm1853, %v219, %v849
        %v1881 = vsel %vm1853, %v220, %v851
        %v1882 = vsel %vm1853, %v222, %v853
        %v1883 = vsel %vm1853, %v223, %v855
        %v1884 = vsel %vm1853, %v224, %v857
        %v1885 = vsel %vm1853, %v225, %v859
        %v1886 = vsel %vm1853, %v227, %v861
        %v1887 = vsel %vm1853, %v228, %v863
        %v1888 = vsel %vm1853, %v229, %v865
        %v1889 = vsel %vm1853, %v230, %v867
        %v1890 = vsel %vm1853, %v232, %v869
        %v1891 = vsel %vm1853, %v233, %v871
        %v1892 = vsel %vm1853, %v234, %v873
        %v1893 = vsel %vm1853, %v235, %v875
        %v1894 = vsel %vm1853, %v237, %v877
        %v1895 = vsel %vm1853, %v238, %v879
        %v1896 = vsel %vm1853, %v239, %v881
        %v1897 = vsel %vm1853, %v240, %v883
        %v1898 = vsel %vm1853, %v242, %v885
        %v1899 = vsel %vm1853, %v243, %v887
        %v1900 = vsel %vm1853, %v244, %v889
        %v1901 = vsel %vm1853, %v245, %v891
        %v1902 = vsel %vm1853, %v247, %v893
        %v1903 = vsel %vm1853, %v248, %v895
        %v1904 = vsel %vm1853, %v249, %v897
        %v1905 = vsel %vm1853, %v250, %v899
        %v1906 = vsel %vm1853, %v252, %v901
        %v1907 = vsel %vm1853, %v253, %v903
        %v1908 = vsel %vm1853, %v254, %v905
        %v1909 = vsel %vm1853, %v255, %v907
        %v1910 = vsel %vm1853, %v257, %v909
        %v1911 = vsel %vm1853, %v258, %v911
        %v1912 = vsel %vm1853, %v259, %v913
        %v1913 = vsel %vm1853, %v260, %v915
        %v1914 = vsel %vm1853, %v262, %v917
        %v1915 = vsel %vm1853, %v263, %v919
        %v1916 = vsel %vm1853, %v264, %v921
        %v1917 = vsel %vm1853, %v265, %v923
        %v1918 = vsel %vm1853, %v267, %v925
        %v1919 = vsel %vm1853, %v268, %v927
        %v1920 = vsel %vm1853, %v269, %v929
        %v1921 = vsel %vm1853, %v270, %v931
        %v1922 = vsel %vm1853, %v272, %v933
        %v1923 = vsel %vm1853, %v273, %v935
        %v1924 = vsel %vm1853, %v274, %v937
        %v1925 = vsel %vm1853, %v275, %v939
        %v1926 = vsel %vm1853, %v277, %v941
        %v1927 = vsel %vm1853, %v278, %v943
        %v1928 = vsel %vm1853, %v279, %v945
        %v1929 = vsel %vm1853, %v280, %v947
        %v1930 = vsel %vm1853, %v282, %v949
        %v1931 = vsel %vm1853, %v283, %v951
        %v1932 = vsel %vm1853, %v284, %v953
        %v1933 = vsel %vm1853, %v285, %v955
        %v1934 = vsel %vm1853, %v287, %v957
        %v1935 = vsel %vm1853, %v288, %v959
        %v1936 = vsel %vm1853, %v289, %v961
        %v1937 = vsel %vm1853, %v290, %v963
        %v1938 = vsel %vm1853, %v292, %v965
        %v1939 = vsel %vm1853, %v293, %v967
        %v1940 = vsel %vm1853, %v294, %v969
        %v1941 = vsel %vm1853, %v295, %v971
        %v1942 = vsel %vm1853, %v297, %v973
        %v1943 = vsel %vm1853, %v298, %v975
        %v1944 = vsel %vm1853, %v299, %v977
        %v1945 = vsel %vm1853, %v300, %v979
        %v1946 = vsel %vm1853, %v302, %v981
        %v1947 = vsel %vm1853, %v303, %v983
        %v1948 = vsel %vm1853, %v304, %v985
        %v1949 = vsel %vm1853, %v305, %v987
        %v1950 = vsel %vm1853, %v307, %v989
        %v1951 = vsel %vm1853, %v308, %v991
        %v1952 = vsel %vm1853, %v309, %v993
        %v1953 = vsel %vm1853, %v310, %v995
        %v1954 = vsel %vm1853, %v312, %v997
        %v1955 = vsel %vm1853, %v313, %v999
        %v1956 = vsel %vm1853, %v314, %v1001
        %v1957 = vsel %vm1853, %v315, %v1003
        %v1958 = vsel %vm1853, %v317, %v1005
        %v1959 = vsel %vm1853, %v318, %v1007
        %v1960 = vsel %vm1853, %v319, %v1009
        %v1961 = vsel %vm1853, %v320, %v1011
        %v1962 = vsel %vm1853, %v322, %v1013
        %v1963 = vsel %vm1853, %v323, %v1015
        %v1964 = vsel %vm1853, %v324, %v1017
        %v1965 = vsel %vm1853, %v325, %v1019
        %v1966 = vsel %vm1853, %v327, %v1021
        %v1967 = vsel %vm1853, %v328, %v1023
        %v1968 = vsel %vm1853, %v329, %v1025
        %v1969 = vsel %vm1853, %v330, %v1027
        %v1970 = vsel %vm1853, %v332, %v1029
        %v1971 = vsel %vm1853, %v333, %v1031
        %v1972 = vsel %vm1853, %v334, %v1033
        %v1973 = vsel %vm1853, %v335, %v1035
        %v1974 = vsel %vm1853, %v337, %v1037
        %v1975 = vsel %vm1853, %v338, %v1039
        %v1976 = vsel %vm1853, %v339, %v1041
        %v1977 = vsel %vm1853, %v340, %v1043
        %v1978 = vsel %vm1853, %v342, %v1045
        %v1979 = vsel %vm1853, %v343, %v1047
        %v1980 = vsel %vm1853, %v344, %v1049
        %v1981 = vsel %vm1853, %v345, %v1051
        %vm1982 = vcmask 130048
        %v1983 = vsel %vm1982, %v1854, %v1470
        %v1984 = vsel %vm1982, %v1855, %v1472
        %v1985 = vsel %vm1982, %v1856, %v1474
        %v1986 = vsel %vm1982, %v1857, %v1476
        %v1987 = vsel %vm1982, %v1858, %v1478
        %v1988 = vsel %vm1982, %v1859, %v1480
        %v1989 = vsel %vm1982, %v1860, %v1482
        %v1990 = vsel %vm1982, %v1861, %v1484
        %v1991 = vsel %vm1982, %v1862, %v1486
        %v1992 = vsel %vm1982, %v1863, %v1488
        %v1993 = vsel %vm1982, %v1864, %v1490
        %v1994 = vsel %vm1982, %v1865, %v1492
        %v1995 = vsel %vm1982, %v1866, %v1494
        %v1996 = vsel %vm1982, %v1867, %v1496
        %v1997 = vsel %vm1982, %v1868, %v1498
        %v1998 = vsel %vm1982, %v1869, %v1500
        %v1999 = vsel %vm1982, %v1870, %v1502
        %v2000 = vsel %vm1982, %v1871, %v1504
        %v2001 = vsel %vm1982, %v1872, %v1506
        %v2002 = vsel %vm1982, %v1873, %v1508
        %v2003 = vsel %vm1982, %v1874, %v1510
        %v2004 = vsel %vm1982, %v1875, %v1512
        %v2005 = vsel %vm1982, %v1876, %v1514
        %v2006 = vsel %vm1982, %v1877, %v1516
        %v2007 = vsel %vm1982, %v1878, %v1518
        %v2008 = vsel %vm1982, %v1879, %v1520
        %v2009 = vsel %vm1982, %v1880, %v1522
        %v2010 = vsel %vm1982, %v1881, %v1524
        %v2011 = vsel %vm1982, %v1882, %v1526
        %v2012 = vsel %vm1982, %v1883, %v1528
        %v2013 = vsel %vm1982, %v1884, %v1530
        %v2014 = vsel %vm1982, %v1885, %v1532
        %v2015 = vsel %vm1982, %v1886, %v1534
        %v2016 = vsel %vm1982, %v1887, %v1536
        %v2017 = vsel %vm1982, %v1888, %v1538
        %v2018 = vsel %vm1982, %v1889, %v1540
        %v2019 = vsel %vm1982, %v1890, %v1542
        %v2020 = vsel %vm1982, %v1891, %v1544
        %v2021 = vsel %vm1982, %v1892, %v1546
        %v2022 = vsel %vm1982, %v1893, %v1548
        %v2023 = vsel %vm1982, %v1894, %v1550
        %v2024 = vsel %vm1982, %v1895, %v1552
        %v2025 = vsel %vm1982, %v1896, %v1554
        %v2026 = vsel %vm1982, %v1897, %v1556
        %v2027 = vsel %vm1982, %v1898, %v1558
        %v2028 = vsel %vm1982, %v1899, %v1560
        %v2029 = vsel %vm1982, %v1900, %v1562
        %v2030 = vsel %vm1982, %v1901, %v1564
        %v2031 = vsel %vm1982, %v1902, %v1566
        %v2032 = vsel %vm1982, %v1903, %v1568
        %v2033 = vsel %vm1982, %v1904, %v1570
        %v2034 = vsel %vm1982, %v1905, %v1572
        %v2035 = vsel %vm1982, %v1906, %v1574
        %v2036 = vsel %vm1982, %v1907, %v1576
        %v2037 = vsel %vm1982, %v1908, %v1578
        %v2038 = vsel %vm1982, %v1909, %v1580
        %v2039 = vsel %vm1982, %v1910, %v1582
        %v2040 = vsel %vm1982, %v1911, %v1584
        %v2041 = vsel %vm1982, %v1912, %v1586
        %v2042 = vsel %vm1982, %v1913, %v1588
        %v2043 = vsel %vm1982, %v1914, %v1590
        %v2044 = vsel %vm1982, %v1915, %v1592
        %v2045 = vsel %vm1982, %v1916, %v1594
        %v2046 = vsel %vm1982, %v1917, %v1596
        %v2047 = vsel %vm1982, %v1918, %v1598
        %v2048 = vsel %vm1982, %v1919, %v1600
        %v2049 = vsel %vm1982, %v1920, %v1602
        %v2050 = vsel %vm1982, %v1921, %v1604
        %v2051 = vsel %vm1982, %v1922, %v1606
        %v2052 = vsel %vm1982, %v1923, %v1608
        %v2053 = vsel %vm1982, %v1924, %v1610
        %v2054 = vsel %vm1982, %v1925, %v1612
        %v2055 = vsel %vm1982, %v1926, %v1614
        %v2056 = vsel %vm1982, %v1927, %v1616
        %v2057 = vsel %vm1982, %v1928, %v1618
        %v2058 = vsel %vm1982, %v1929, %v1620
        %v2059 = vsel %vm1982, %v1930, %v1622
        %v2060 = vsel %vm1982, %v1931, %v1624
        %v2061 = vsel %vm1982, %v1932, %v1626
        %v2062 = vsel %vm1982, %v1933, %v1628
        %v2063 = vsel %vm1982, %v1934, %v1630
        %v2064 = vsel %vm1982, %v1935, %v1632
        %v2065 = vsel %vm1982, %v1936, %v1634
        %v2066 = vsel %vm1982, %v1937, %v1636
        %v2067 = vsel %vm1982, %v1938, %v1638
        %v2068 = vsel %vm1982, %v1939, %v1640
        %v2069 = vsel %vm1982, %v1940, %v1642
        %v2070 = vsel %vm1982, %v1941, %v1644
        %v2071 = vsel %vm1982, %v1942, %v1646
        %v2072 = vsel %vm1982, %v1943, %v1648
        %v2073 = vsel %vm1982, %v1944, %v1650
        %v2074 = vsel %vm1982, %v1945, %v1652
        %v2075 = vsel %vm1982, %v1946, %v1654
        %v2076 = vsel %vm1982, %v1947, %v1656
        %v2077 = vsel %vm1982, %v1948, %v1658
        %v2078 = vsel %vm1982, %v1949, %v1660
        %v2079 = vsel %vm1982, %v1950, %v1662
        %v2080 = vsel %vm1982, %v1951, %v1664
        %v2081 = vsel %vm1982, %v1952, %v1666
        %v2082 = vsel %vm1982, %v1953, %v1668
        %v2083 = vsel %vm1982, %v1954, %v1670
        %v2084 = vsel %vm1982, %v1955, %v1672
        %v2085 = vsel %vm1982, %v1956, %v1674
        %v2086 = vsel %vm1982, %v1957, %v1676
        %v2087 = vsel %vm1982, %v1958, %v1678
        %v2088 = vsel %vm1982, %v1959, %v1680
        %v2089 = vsel %vm1982, %v1960, %v1682
        %v2090 = vsel %vm1982, %v1961, %v1684
        %v2091 = vsel %vm1982, %v1962, %v1686
        %v2092 = vsel %vm1982, %v1963, %v1688
        %v2093 = vsel %vm1982, %v1964, %v1690
        %v2094 = vsel %vm1982, %v1965, %v1692
        %v2095 = vsel %vm1982, %v1966, %v1694
        %v2096 = vsel %vm1982, %v1967, %v1696
        %v2097 = vsel %vm1982, %v1968, %v1698
        %v2098 = vsel %vm1982, %v1969, %v1700
        %v2099 = vsel %vm1982, %v1970, %v1702
        %v2100 = vsel %vm1982, %v1971, %v1704
        %v2101 = vsel %vm1982, %v1972, %v1706
        %v2102 = vsel %vm1982, %v1973, %v1708
        %v2103 = vsel %vm1982, %v1974, %v1710
        %v2104 = vsel %vm1982, %v1975, %v1712
        %v2105 = vsel %vm1982, %v1976, %v1714
        %v2106 = vsel %vm1982, %v1977, %v1716
        %v2107 = vsel %vm1982, %v1978, %v1718
        %v2108 = vsel %vm1982, %v1979, %v1720
        %v2109 = vsel %vm1982, %v1980, %v1722
        %v2110 = vsel %vm1982, %v1981, %v1724
        %v2111 = vld [vmem:[%s1] sm:$0xff]
        %v2112 = vld [vmem:[%s1 + $0x8] sm:$0xff]
        %v2113 = vld [vmem:[%s1 + $0x10] sm:$0xff]
        %s2114 = sadd.s32 %s184, 1
        %s2115 = smul.u32 %s2114, 40
        %s2116 = scalar_lea.vmem %s182, %s2115
        %v2117 = vld [vmem:[%s2116] sm:$0xff]
        %v2118 = vld [vmem:[%s2116 + $0x8] sm:$0xff]
        %v2119 = vld [vmem:[%s2116 + $0x10] sm:$0xff]
        %v2120 = vld [vmem:[%s2116 + $0x18] sm:$0xff]
        %v2121 = vld [vmem:[%s2116 + $0x20] sm:$0xff]
        %v2122 = vld [vmem:[%s2116 + $0x28] sm:$0xff]
        %v2123 = vld [vmem:[%s2116 + $0x30] sm:$0xff]
        %v2124 = vld [vmem:[%s2116 + $0x38] sm:$0xff]
        %v2125 = vld [vmem:[%s2116 + $0x40] sm:$0xff]
        %v2126 = vld [vmem:[%s2116 + $0x48] sm:$0xff]
        %v2127 = vld [vmem:[%s2116 + $0x50] sm:$0xff]
        %v2128 = vld [vmem:[%s2116 + $0x58] sm:$0xff]
        %v2129 = vld [vmem:[%s2116 + $0x60] sm:$0xff]
        %v2130 = vld [vmem:[%s2116 + $0x68] sm:$0xff]
        %v2131 = vld [vmem:[%s2116 + $0x70] sm:$0xff]
        %v2132 = vld [vmem:[%s2116 + $0x78] sm:$0xff]
        %v2133 = vld [vmem:[%s2116 + $0x80] sm:$0xff]
        %v2134 = vld [vmem:[%s2116 + $0x88] sm:$0xff]
        %v2135 = vld [vmem:[%s2116 + $0x90] sm:$0xff]
        %v2136 = vld [vmem:[%s2116 + $0x98] sm:$0xff]
        %v2137 = vld [vmem:[%s2116 + $0xa0] sm:$0xff]
        %v2138 = vld [vmem:[%s2116 + $0xa8] sm:$0xff]
        %v2139 = vld [vmem:[%s2116 + $0xb0] sm:$0xff]
        %v2140 = vld [vmem:[%s2116 + $0xb8] sm:$0xff]
        %v2141 = vld [vmem:[%s2116 + $0xc0] sm:$0xff]
        %v2142 = vld [vmem:[%s2116 + $0xc8] sm:$0xff]
        %v2143 = vld [vmem:[%s2116 + $0xd0] sm:$0xff]
        %v2144 = vld [vmem:[%s2116 + $0xd8] sm:$0xff]
        %v2145 = vld [vmem:[%s2116 + $0xe0] sm:$0xff]
        %v2146 = vld [vmem:[%s2116 + $0xe8] sm:$0xff]
        %v2147 = vld [vmem:[%s2116 + $0xf0] sm:$0xff]
        %v2148 = vld [vmem:[%s2116 + $0xf8] sm:$0xff]
        %v2149 = vld [vmem:[%s2116 + $0x100] sm:$0xff]
        %v2150 = vld [vmem:[%s2116 + $0x108] sm:$0xff]
        %v2151 = vld [vmem:[%s2116 + $0x110] sm:$0xff]
        %v2152 = vld [vmem:[%s2116 + $0x118] sm:$0xff]
        %v2153 = vld [vmem:[%s2116 + $0x120] sm:$0xff]
        %v2154 = vld [vmem:[%s2116 + $0x128] sm:$0xff]
        %v2155 = vld [vmem:[%s2116 + $0x130] sm:$0xff]
        %v2156 = vld [vmem:[%s2116 + $0x138] sm:$0xff]
        %v2157 = vld [vmem:[%s2116 + $0x140] sm:$0xff]
        %v2158 = vld [vmem:[%s2116 + $0x148] sm:$0xff]
        %v2159 = vld [vmem:[%s2116 + $0x150] sm:$0xff]
        %v2160 = vld [vmem:[%s2116 + $0x158] sm:$0xff]
        %v2161 = vld [vmem:[%s2116 + $0x160] sm:$0xff]
        %v2162 = vld [vmem:[%s2116 + $0x168] sm:$0xff]
        %v2163 = vld [vmem:[%s2116 + $0x170] sm:$0xff]
        %v2164 = vld [vmem:[%s2116 + $0x178] sm:$0xff]
        %v2165 = vld [vmem:[%s2116 + $0x180] sm:$0xff]
        %v2166 = vld [vmem:[%s2116 + $0x188] sm:$0xff]
        %v2167 = vld [vmem:[%s2116 + $0x190] sm:$0xff]
        %v2168 = vld [vmem:[%s2116 + $0x198] sm:$0xff]
        %v2169 = vld [vmem:[%s2116 + $0x1a0] sm:$0xff]
        %v2170 = vld [vmem:[%s2116 + $0x1a8] sm:$0xff]
        %v2171 = vld [vmem:[%s2116 + $0x1b0] sm:$0xff]
        %v2172 = vld [vmem:[%s2116 + $0x1b8] sm:$0xff]
        %v2173 = vld [vmem:[%s2116 + $0x1c0] sm:$0xff]
        %v2174 = vld [vmem:[%s2116 + $0x1c8] sm:$0xff]
        %v2175 = vld [vmem:[%s2116 + $0x1d0] sm:$0xff]
        %v2176 = vld [vmem:[%s2116 + $0x1d8] sm:$0xff]
        %v2177 = vld [vmem:[%s2116 + $0x1e0] sm:$0xff]
        %v2178 = vld [vmem:[%s2116 + $0x1e8] sm:$0xff]
        %v2179 = vld [vmem:[%s2116 + $0x1f0] sm:$0xff]
        %v2180 = vld [vmem:[%s2116 + $0x1f8] sm:$0xff]
        %v2181 = vld [vmem:[%s2116 + $0x200] sm:$0xff]
        %v2182 = vld [vmem:[%s2116 + $0x208] sm:$0xff]
        %v2183 = vld [vmem:[%s2116 + $0x210] sm:$0xff]
        %v2184 = vld [vmem:[%s2116 + $0x218] sm:$0xff]
        %v2185 = vld [vmem:[%s2116 + $0x220] sm:$0xff]
        %v2186 = vld [vmem:[%s2116 + $0x228] sm:$0xff]
        %v2187 = vld [vmem:[%s2116 + $0x230] sm:$0xff]
        %v2188 = vld [vmem:[%s2116 + $0x238] sm:$0xff]
        %v2189 = vld [vmem:[%s2116 + $0x240] sm:$0xff]
        %v2190 = vld [vmem:[%s2116 + $0x248] sm:$0xff]
        %v2191 = vld [vmem:[%s2116 + $0x250] sm:$0xff]
        %v2192 = vld [vmem:[%s2116 + $0x258] sm:$0xff]
        %v2193 = vld [vmem:[%s2116 + $0x260] sm:$0xff]
        %v2194 = vld [vmem:[%s2116 + $0x268] sm:$0xff]
        %v2195 = vld [vmem:[%s2116 + $0x270] sm:$0xff]
        %v2196 = vld [vmem:[%s2116 + $0x278] sm:$0xff]
        %v2197 = vld [vmem:[%s2116 + $0x280] sm:$0xff]
        %v2198 = vld [vmem:[%s2116 + $0x288] sm:$0xff]
        %v2199 = vld [vmem:[%s2116 + $0x290] sm:$0xff]
        %v2200 = vld [vmem:[%s2116 + $0x298] sm:$0xff]
        %v2201 = vld [vmem:[%s2116 + $0x2a0] sm:$0xff]
        %v2202 = vld [vmem:[%s2116 + $0x2a8] sm:$0xff]
        %v2203 = vld [vmem:[%s2116 + $0x2b0] sm:$0xff]
        %v2204 = vld [vmem:[%s2116 + $0x2b8] sm:$0xff]
        %v2205 = vld [vmem:[%s2116 + $0x2c0] sm:$0xff]
        %v2206 = vld [vmem:[%s2116 + $0x2c8] sm:$0xff]
        %v2207 = vld [vmem:[%s2116 + $0x2d0] sm:$0xff]
        %v2208 = vld [vmem:[%s2116 + $0x2d8] sm:$0xff]
        %v2209 = vld [vmem:[%s2116 + $0x2e0] sm:$0xff]
        %v2210 = vld [vmem:[%s2116 + $0x2e8] sm:$0xff]
        %v2211 = vld [vmem:[%s2116 + $0x2f0] sm:$0xff]
        %v2212 = vld [vmem:[%s2116 + $0x2f8] sm:$0xff]
        %v2213 = vld [vmem:[%s2116 + $0x300] sm:$0xff]
        %v2214 = vld [vmem:[%s2116 + $0x308] sm:$0xff]
        %v2215 = vld [vmem:[%s2116 + $0x310] sm:$0xff]
        %v2216 = vld [vmem:[%s2116 + $0x318] sm:$0xff]
        %v2217 = vld [vmem:[%s2116 + $0x320] sm:$0xff]
        %v2218 = vld [vmem:[%s2116 + $0x328] sm:$0xff]
        %v2219 = vld [vmem:[%s2116 + $0x330] sm:$0xff]
        %v2220 = vld [vmem:[%s2116 + $0x338] sm:$0xff]
        %v2221 = vld [vmem:[%s2116 + $0x340] sm:$0xff]
        %v2222 = vld [vmem:[%s2116 + $0x348] sm:$0xff]
        %v2223 = vld [vmem:[%s2116 + $0x350] sm:$0xff]
        %v2224 = vld [vmem:[%s2116 + $0x358] sm:$0xff]
        %v2225 = vld [vmem:[%s2116 + $0x360] sm:$0xff]
        %v2226 = vld [vmem:[%s2116 + $0x368] sm:$0xff]
        %v2227 = vld [vmem:[%s2116 + $0x370] sm:$0xff]
        %v2228 = vld [vmem:[%s2116 + $0x378] sm:$0xff]
        %v2229 = vld [vmem:[%s2116 + $0x380] sm:$0xff]
        %v2230 = vld [vmem:[%s2116 + $0x388] sm:$0xff]
        %v2231 = vld [vmem:[%s2116 + $0x390] sm:$0xff]
        %v2232 = vld [vmem:[%s2116 + $0x398] sm:$0xff]
        %v2233 = vld [vmem:[%s2116 + $0x3a0] sm:$0xff]
        %v2234 = vld [vmem:[%s2116 + $0x3a8] sm:$0xff]
        %v2235 = vld [vmem:[%s2116 + $0x3b0] sm:$0xff]
        %v2236 = vld [vmem:[%s2116 + $0x3b8] sm:$0xff]
        %v2237 = vld [vmem:[%s2116 + $0x3c0] sm:$0xff]
        %v2238 = vld [vmem:[%s2116 + $0x3c8] sm:$0xff]
        %v2239 = vld [vmem:[%s2116 + $0x3d0] sm:$0xff]
        %v2240 = vld [vmem:[%s2116 + $0x3d8] sm:$0xff]
        %v2241 = vld [vmem:[%s2116 + $0x3e0] sm:$0xff]
        %v2242 = vld [vmem:[%s2116 + $0x3e8] sm:$0xff]
        %v2243 = vld [vmem:[%s2116 + $0x3f0] sm:$0xff]
        %v2244 = vld [vmem:[%s2116 + $0x3f8] sm:$0xff]
        %v2245 = vld [vmem:[%s2116 + $0x400] sm:$0xff]
        %v2246 = vld [vmem:[%s2116 + $0x408] sm:$0xff]
        %v2247 = vld [vmem:[%s2116 + $0x410] sm:$0xff]
        %v2248 = vld [vmem:[%s2116 + $0x418] sm:$0xff]
        %v2249 = vld [vmem:[%s2116 + $0x420] sm:$0xff]
        %v2250 = vld [vmem:[%s2116 + $0x428] sm:$0xff]
        %v2251 = vld [vmem:[%s2116 + $0x430] sm:$0xff]
        %v2252 = vld [vmem:[%s2116 + $0x438] sm:$0xff]
        %v2253 = vld [vmem:[%s2116 + $0x440] sm:$0xff]
        %v2254 = vld [vmem:[%s2116 + $0x448] sm:$0xff]
        %v2255 = vld [vmem:[%s2116 + $0x450] sm:$0xff]
        %v2256 = vld [vmem:[%s2116 + $0x458] sm:$0xff]
        %v2257 = vld [vmem:[%s2116 + $0x460] sm:$0xff]
        %v2258 = vld [vmem:[%s2116 + $0x468] sm:$0xff]
        %v2259 = vld [vmem:[%s2116 + $0x470] sm:$0xff]
        %v2260 = vld [vmem:[%s2116 + $0x478] sm:$0xff]
        %v2261 = vld [vmem:[%s2116 + $0x480] sm:$0xff]
        %v2262 = vld [vmem:[%s2116 + $0x488] sm:$0xff]
        %v2263 = vld [vmem:[%s2116 + $0x490] sm:$0xff]
        %v2264 = vld [vmem:[%s2116 + $0x498] sm:$0xff]
        %v2265 = vld [vmem:[%s2116 + $0x4a0] sm:$0xff]
        %v2266 = vld [vmem:[%s2116 + $0x4a8] sm:$0xff]
        %v2267 = vld [vmem:[%s2116 + $0x4b0] sm:$0xff]
        %v2268 = vld [vmem:[%s2116 + $0x4b8] sm:$0xff]
        %v2269 = vld [vmem:[%s2116 + $0x4c0] sm:$0xff]
        %v2270 = vld [vmem:[%s2116 + $0x4c8] sm:$0xff]
        %v2271 = vld [vmem:[%s2116 + $0x4d0] sm:$0xff]
        %v2272 = vld [vmem:[%s2116 + $0x4d8] sm:$0xff]
        %v2273 = vld [vmem:[%s2116 + $0x4e0] sm:$0xff]
        %v2274 = vld [vmem:[%s2116 + $0x4e8] sm:$0xff]
        %v2275 = vld [vmem:[%s2116 + $0x4f0] sm:$0xff]
        %v2276 = vld [vmem:[%s2116 + $0x4f8] sm:$0xff]
        %v2437 = vrot.slane %v2117, 1
        %v2438 = vrot.slane %v2118, 1
        %v2439 = vsel %vm507, %v2437, %v2438
        %v2440 = vrot.slane %v2119, 1
        %v2441 = vsel %vm507, %v2438, %v2440
        %v2442 = vrot.slane %v2120, 1
        %v2443 = vsel %vm507, %v2440, %v2442
        %v2444 = vrot.slane %v2121, 1
        %v2445 = vsel %vm507, %v2442, %v2444
        %v2446 = vrot.slane %v2122, 1
        %v2447 = vrot.slane %v2123, 1
        %v2448 = vsel %vm507, %v2446, %v2447
        %v2449 = vrot.slane %v2124, 1
        %v2450 = vsel %vm507, %v2447, %v2449
        %v2451 = vrot.slane %v2125, 1
        %v2452 = vsel %vm507, %v2449, %v2451
        %v2453 = vrot.slane %v2126, 1
        %v2454 = vsel %vm507, %v2451, %v2453
        %v2455 = vrot.slane %v2127, 1
        %v2456 = vrot.slane %v2128, 1
        %v2457 = vsel %vm507, %v2455, %v2456
        %v2458 = vrot.slane %v2129, 1
        %v2459 = vsel %vm507, %v2456, %v2458
        %v2460 = vrot.slane %v2130, 1
        %v2461 = vsel %vm507, %v2458, %v2460
        %v2462 = vrot.slane %v2131, 1
        %v2463 = vsel %vm507, %v2460, %v2462
        %v2464 = vrot.slane %v2132, 1
        %v2465 = vrot.slane %v2133, 1
        %v2466 = vsel %vm507, %v2464, %v2465
        %v2467 = vrot.slane %v2134, 1
        %v2468 = vsel %vm507, %v2465, %v2467
        %v2469 = vrot.slane %v2135, 1
        %v2470 = vsel %vm507, %v2467, %v2469
        %v2471 = vrot.slane %v2136, 1
        %v2472 = vsel %vm507, %v2469, %v2471
        %v2473 = vrot.slane %v2137, 1
        %v2474 = vrot.slane %v2138, 1
        %v2475 = vsel %vm507, %v2473, %v2474
        %v2476 = vrot.slane %v2139, 1
        %v2477 = vsel %vm507, %v2474, %v2476
        %v2478 = vrot.slane %v2140, 1
        %v2479 = vsel %vm507, %v2476, %v2478
        %v2480 = vrot.slane %v2141, 1
        %v2481 = vsel %vm507, %v2478, %v2480
        %v2482 = vrot.slane %v2142, 1
        %v2483 = vrot.slane %v2143, 1
        %v2484 = vsel %vm507, %v2482, %v2483
        %v2485 = vrot.slane %v2144, 1
        %v2486 = vsel %vm507, %v2483, %v2485
        %v2487 = vrot.slane %v2145, 1
        %v2488 = vsel %vm507, %v2485, %v2487
        %v2489 = vrot.slane %v2146, 1
        %v2490 = vsel %vm507, %v2487, %v2489
        %v2491 = vrot.slane %v2147, 1
        %v2492 = vrot.slane %v2148, 1
        %v2493 = vsel %vm507, %v2491, %v2492
        %v2494 = vrot.slane %v2149, 1
        %v2495 = vsel %vm507, %v2492, %v2494
        %v2496 = vrot.slane %v2150, 1
        %v2497 = vsel %vm507, %v2494, %v2496
        %v2498 = vrot.slane %v2151, 1
        %v2499 = vsel %vm507, %v2496, %v2498
        %v2500 = vrot.slane %v2152, 1
        %v2501 = vrot.slane %v2153, 1
        %v2502 = vsel %vm507, %v2500, %v2501
        %v2503 = vrot.slane %v2154, 1
        %v2504 = vsel %vm507, %v2501, %v2503
        %v2505 = vrot.slane %v2155, 1
        %v2506 = vsel %vm507, %v2503, %v2505
        %v2507 = vrot.slane %v2156, 1
        %v2508 = vsel %vm507, %v2505, %v2507
        %v2509 = vrot.slane %v2157, 1
        %v2510 = vrot.slane %v2158, 1
        %v2511 = vsel %vm507, %v2509, %v2510
        %v2512 = vrot.slane %v2159, 1
        %v2513 = vsel %vm507, %v2510, %v2512
        %v2514 = vrot.slane %v2160, 1
        %v2515 = vsel %vm507, %v2512, %v2514
        %v2516 = vrot.slane %v2161, 1
        %v2517 = vsel %vm507, %v2514, %v2516
        %v2518 = vrot.slane %v2162, 1
        %v2519 = vrot.slane %v2163, 1
        %v2520 = vsel %vm507, %v2518, %v2519
        %v2521 = vrot.slane %v2164, 1
        %v2522 = vsel %vm507, %v2519, %v2521
        %v2523 = vrot.slane %v2165, 1
        %v2524 = vsel %vm507, %v2521, %v2523
        %v2525 = vrot.slane %v2166, 1
        %v2526 = vsel %vm507, %v2523, %v2525
        %v2527 = vrot.slane %v2167, 1
        %v2528 = vrot.slane %v2168, 1
        %v2529 = vsel %vm507, %v2527, %v2528
        %v2530 = vrot.slane %v2169, 1
        %v2531 = vsel %vm507, %v2528, %v2530
        %v2532 = vrot.slane %v2170, 1
        %v2533 = vsel %vm507, %v2530, %v2532
        %v2534 = vrot.slane %v2171, 1
        %v2535 = vsel %vm507, %v2532, %v2534
        %v2536 = vrot.slane %v2172, 1
        %v2537 = vrot.slane %v2173, 1
        %v2538 = vsel %vm507, %v2536, %v2537
        %v2539 = vrot.slane %v2174, 1
        %v2540 = vsel %vm507, %v2537, %v2539
        %v2541 = vrot.slane %v2175, 1
        %v2542 = vsel %vm507, %v2539, %v2541
        %v2543 = vrot.slane %v2176, 1
        %v2544 = vsel %vm507, %v2541, %v2543
        %v2545 = vrot.slane %v2177, 1
        %v2546 = vrot.slane %v2178, 1
        %v2547 = vsel %vm507, %v2545, %v2546
        %v2548 = vrot.slane %v2179, 1
        %v2549 = vsel %vm507, %v2546, %v2548
        %v2550 = vrot.slane %v2180, 1
        %v2551 = vsel %vm507, %v2548, %v2550
        %v2552 = vrot.slane %v2181, 1
        %v2553 = vsel %vm507, %v2550, %v2552
        %v2554 = vrot.slane %v2182, 1
        %v2555 = vrot.slane %v2183, 1
        %v2556 = vsel %vm507, %v2554, %v2555
        %v2557 = vrot.slane %v2184, 1
        %v2558 = vsel %vm507, %v2555, %v2557
        %v2559 = vrot.slane %v2185, 1
        %v2560 = vsel %vm507, %v2557, %v2559
        %v2561 = vrot.slane %v2186, 1
        %v2562 = vsel %vm507, %v2559, %v2561
        %v2563 = vrot.slane %v2187, 1
        %v2564 = vrot.slane %v2188, 1
        %v2565 = vsel %vm507, %v2563, %v2564
        %v2566 = vrot.slane %v2189, 1
        %v2567 = vsel %vm507, %v2564, %v2566
        %v2568 = vrot.slane %v2190, 1
        %v2569 = vsel %vm507, %v2566, %v2568
        %v2570 = vrot.slane %v2191, 1
        %v2571 = vsel %vm507, %v2568, %v2570
        %v2572 = vrot.slane %v2192, 1
        %v2573 = vrot.slane %v2193, 1
        %v2574 = vsel %vm507, %v2572, %v2573
        %v2575 = vrot.slane %v2194, 1
        %v2576 = vsel %vm507, %v2573, %v2575
        %v2577 = vrot.slane %v2195, 1
        %v2578 = vsel %vm507, %v2575, %v2577
        %v2579 = vrot.slane %v2196, 1
        %v2580 = vsel %vm507, %v2577, %v2579
        %v2581 = vrot.slane %v2197, 1
        %v2582 = vrot.slane %v2198, 1
        %v2583 = vsel %vm507, %v2581, %v2582
        %v2584 = vrot.slane %v2199, 1
        %v2585 = vsel %vm507, %v2582, %v2584
        %v2586 = vrot.slane %v2200, 1
        %v2587 = vsel %vm507, %v2584, %v2586
        %v2588 = vrot.slane %v2201, 1
        %v2589 = vsel %vm507, %v2586, %v2588
        %v2590 = vrot.slane %v2202, 1
        %v2591 = vrot.slane %v2203, 1
        %v2592 = vsel %vm507, %v2590, %v2591
        %v2593 = vrot.slane %v2204, 1
        %v2594 = vsel %vm507, %v2591, %v2593
        %v2595 = vrot.slane %v2205, 1
        %v2596 = vsel %vm507, %v2593, %v2595
        %v2597 = vrot.slane %v2206, 1
        %v2598 = vsel %vm507, %v2595, %v2597
        %v2599 = vrot.slane %v2207, 1
        %v2600 = vrot.slane %v2208, 1
        %v2601 = vsel %vm507, %v2599, %v2600
        %v2602 = vrot.slane %v2209, 1
        %v2603 = vsel %vm507, %v2600, %v2602
        %v2604 = vrot.slane %v2210, 1
        %v2605 = vsel %vm507, %v2602, %v2604
        %v2606 = vrot.slane %v2211, 1
        %v2607 = vsel %vm507, %v2604, %v2606
        %v2608 = vrot.slane %v2212, 1
        %v2609 = vrot.slane %v2213, 1
        %v2610 = vsel %vm507, %v2608, %v2609
        %v2611 = vrot.slane %v2214, 1
        %v2612 = vsel %vm507, %v2609, %v2611
        %v2613 = vrot.slane %v2215, 1
        %v2614 = vsel %vm507, %v2611, %v2613
        %v2615 = vrot.slane %v2216, 1
        %v2616 = vsel %vm507, %v2613, %v2615
        %v2617 = vrot.slane %v2217, 1
        %v2618 = vrot.slane %v2218, 1
        %v2619 = vsel %vm507, %v2617, %v2618
        %v2620 = vrot.slane %v2219, 1
        %v2621 = vsel %vm507, %v2618, %v2620
        %v2622 = vrot.slane %v2220, 1
        %v2623 = vsel %vm507, %v2620, %v2622
        %v2624 = vrot.slane %v2221, 1
        %v2625 = vsel %vm507, %v2622, %v2624
        %v2626 = vrot.slane %v2222, 1
        %v2627 = vrot.slane %v2223, 1
        %v2628 = vsel %vm507, %v2626, %v2627
        %v2629 = vrot.slane %v2224, 1
        %v2630 = vsel %vm507, %v2627, %v2629
        %v2631 = vrot.slane %v2225, 1
        %v2632 = vsel %vm507, %v2629, %v2631
        %v2633 = vrot.slane %v2226, 1
        %v2634 = vsel %vm507, %v2631, %v2633
        %v2635 = vrot.slane %v2227, 1
        %v2636 = vrot.slane %v2228, 1
        %v2637 = vsel %vm507, %v2635, %v2636
        %v2638 = vrot.slane %v2229, 1
        %v2639 = vsel %vm507, %v2636, %v2638
        %v2640 = vrot.slane %v2230, 1
        %v2641 = vsel %vm507, %v2638, %v2640
        %v2642 = vrot.slane %v2231, 1
        %v2643 = vsel %vm507, %v2640, %v2642
        %v2644 = vrot.slane %v2232, 1
        %v2645 = vrot.slane %v2233, 1
        %v2646 = vsel %vm507, %v2644, %v2645
        %v2647 = vrot.slane %v2234, 1
        %v2648 = vsel %vm507, %v2645, %v2647
        %v2649 = vrot.slane %v2235, 1
        %v2650 = vsel %vm507, %v2647, %v2649
        %v2651 = vrot.slane %v2236, 1
        %v2652 = vsel %vm507, %v2649, %v2651
        %v2653 = vrot.slane %v2237, 1
        %v2654 = vrot.slane %v2238, 1
        %v2655 = vsel %vm507, %v2653, %v2654
        %v2656 = vrot.slane %v2239, 1
        %v2657 = vsel %vm507, %v2654, %v2656
        %v2658 = vrot.slane %v2240, 1
        %v2659 = vsel %vm507, %v2656, %v2658
        %v2660 = vrot.slane %v2241, 1
        %v2661 = vsel %vm507, %v2658, %v2660
        %v2662 = vrot.slane %v2242, 1
        %v2663 = vrot.slane %v2243, 1
        %v2664 = vsel %vm507, %v2662, %v2663
        %v2665 = vrot.slane %v2244, 1
        %v2666 = vsel %vm507, %v2663, %v2665
        %v2667 = vrot.slane %v2245, 1
        %v2668 = vsel %vm507, %v2665, %v2667
        %v2669 = vrot.slane %v2246, 1
        %v2670 = vsel %vm507, %v2667, %v2669
        %v2671 = vrot.slane %v2247, 1
        %v2672 = vrot.slane %v2248, 1
        %v2673 = vsel %vm507, %v2671, %v2672
        %v2674 = vrot.slane %v2249, 1
        %v2675 = vsel %vm507, %v2672, %v2674
        %v2676 = vrot.slane %v2250, 1
        %v2677 = vsel %vm507, %v2674, %v2676
        %v2678 = vrot.slane %v2251, 1
        %v2679 = vsel %vm507, %v2676, %v2678
        %v2680 = vrot.slane %v2252, 1
        %v2681 = vrot.slane %v2253, 1
        %v2682 = vsel %vm507, %v2680, %v2681
        %v2683 = vrot.slane %v2254, 1
        %v2684 = vsel %vm507, %v2681, %v2683
        %v2685 = vrot.slane %v2255, 1
        %v2686 = vsel %vm507, %v2683, %v2685
        %v2687 = vrot.slane %v2256, 1
        %v2688 = vsel %vm507, %v2685, %v2687
        %v2689 = vrot.slane %v2257, 1
        %v2690 = vrot.slane %v2258, 1
        %v2691 = vsel %vm507, %v2689, %v2690
        %v2692 = vrot.slane %v2259, 1
        %v2693 = vsel %vm507, %v2690, %v2692
        %v2694 = vrot.slane %v2260, 1
        %v2695 = vsel %vm507, %v2692, %v2694
        %v2696 = vrot.slane %v2261, 1
        %v2697 = vsel %vm507, %v2694, %v2696
        %v2698 = vrot.slane %v2262, 1
        %v2699 = vrot.slane %v2263, 1
        %v2700 = vsel %vm507, %v2698, %v2699
        %v2701 = vrot.slane %v2264, 1
        %v2702 = vsel %vm507, %v2699, %v2701
        %v2703 = vrot.slane %v2265, 1
        %v2704 = vsel %vm507, %v2701, %v2703
        %v2705 = vrot.slane %v2266, 1
        %v2706 = vsel %vm507, %v2703, %v2705
        %v2707 = vrot.slane %v2267, 1
        %v2708 = vrot.slane %v2268, 1
        %v2709 = vsel %vm507, %v2707, %v2708
        %v2710 = vrot.slane %v2269, 1
        %v2711 = vsel %vm507, %v2708, %v2710
        %v2712 = vrot.slane %v2270, 1
        %v2713 = vsel %vm507, %v2710, %v2712
        %v2714 = vrot.slane %v2271, 1
        %v2715 = vsel %vm507, %v2712, %v2714
        %v2716 = vrot.slane %v2272, 1
        %v2717 = vrot.slane %v2273, 1
        %v2718 = vsel %vm507, %v2716, %v2717
        %v2719 = vrot.slane %v2274, 1
        %v2720 = vsel %vm507, %v2717, %v2719
        %v2721 = vrot.slane %v2275, 1
        %v2722 = vsel %vm507, %v2719, %v2721
        %v2723 = vrot.slane %v2276, 1
        %v2724 = vsel %vm507, %v2721, %v2723
        %2725 = vrot.lane.b32.xlu0 %v2439, 8
        %v2726 = vpop.permute.xlu0 %2725
        %2727 = vrot.lane.b32.xlu0 %v2441, 8
        %v2728 = vpop.permute.xlu0 %2727
        %2729 = vrot.lane.b32.xlu0 %v2443, 8
        %v2730 = vpop.permute.xlu0 %2729
        %2731 = vrot.lane.b32.xlu0 %v2445, 8
        %v2732 = vpop.permute.xlu0 %2731
        %2733 = vrot.lane.b32.xlu0 %v2448, 8
        %v2734 = vpop.permute.xlu0 %2733
        %2735 = vrot.lane.b32.xlu0 %v2450, 8
        %v2736 = vpop.permute.xlu0 %2735
        %2737 = vrot.lane.b32.xlu0 %v2452, 8
        %v2738 = vpop.permute.xlu0 %2737
        %2739 = vrot.lane.b32.xlu0 %v2454, 8
        %v2740 = vpop.permute.xlu0 %2739
        %2741 = vrot.lane.b32.xlu0 %v2457, 8
        %v2742 = vpop.permute.xlu0 %2741
        %2743 = vrot.lane.b32.xlu0 %v2459, 8
        %v2744 = vpop.permute.xlu0 %2743
        %2745 = vrot.lane.b32.xlu0 %v2461, 8
        %v2746 = vpop.permute.xlu0 %2745
        %2747 = vrot.lane.b32.xlu0 %v2463, 8
        %v2748 = vpop.permute.xlu0 %2747
        %2749 = vrot.lane.b32.xlu0 %v2466, 8
        %v2750 = vpop.permute.xlu0 %2749
        %2751 = vrot.lane.b32.xlu0 %v2468, 8
        %v2752 = vpop.permute.xlu0 %2751
        %2753 = vrot.lane.b32.xlu0 %v2470, 8
        %v2754 = vpop.permute.xlu0 %2753
        %2755 = vrot.lane.b32.xlu0 %v2472, 8
        %v2756 = vpop.permute.xlu0 %2755
        %2757 = vrot.lane.b32.xlu0 %v2475, 8
        %v2758 = vpop.permute.xlu0 %2757
        %2759 = vrot.lane.b32.xlu0 %v2477, 8
        %v2760 = vpop.permute.xlu0 %2759
        %2761 = vrot.lane.b32.xlu0 %v2479, 8
        %v2762 = vpop.permute.xlu0 %2761
        %2763 = vrot.lane.b32.xlu0 %v2481, 8
        %v2764 = vpop.permute.xlu0 %2763
        %2765 = vrot.lane.b32.xlu0 %v2484, 8
        %v2766 = vpop.permute.xlu0 %2765
        %2767 = vrot.lane.b32.xlu0 %v2486, 8
        %v2768 = vpop.permute.xlu0 %2767
        %2769 = vrot.lane.b32.xlu0 %v2488, 8
        %v2770 = vpop.permute.xlu0 %2769
        %2771 = vrot.lane.b32.xlu0 %v2490, 8
        %v2772 = vpop.permute.xlu0 %2771
        %2773 = vrot.lane.b32.xlu0 %v2493, 8
        %v2774 = vpop.permute.xlu0 %2773
        %2775 = vrot.lane.b32.xlu0 %v2495, 8
        %v2776 = vpop.permute.xlu0 %2775
        %2777 = vrot.lane.b32.xlu0 %v2497, 8
        %v2778 = vpop.permute.xlu0 %2777
        %2779 = vrot.lane.b32.xlu0 %v2499, 8
        %v2780 = vpop.permute.xlu0 %2779
        %2781 = vrot.lane.b32.xlu0 %v2502, 8
        %v2782 = vpop.permute.xlu0 %2781
        %2783 = vrot.lane.b32.xlu0 %v2504, 8
        %v2784 = vpop.permute.xlu0 %2783
        %2785 = vrot.lane.b32.xlu0 %v2506, 8
        %v2786 = vpop.permute.xlu0 %2785
        %2787 = vrot.lane.b32.xlu0 %v2508, 8
        %v2788 = vpop.permute.xlu0 %2787
        %2789 = vrot.lane.b32.xlu0 %v2511, 8
        %v2790 = vpop.permute.xlu0 %2789
        %2791 = vrot.lane.b32.xlu0 %v2513, 8
        %v2792 = vpop.permute.xlu0 %2791
        %2793 = vrot.lane.b32.xlu0 %v2515, 8
        %v2794 = vpop.permute.xlu0 %2793
        %2795 = vrot.lane.b32.xlu0 %v2517, 8
        %v2796 = vpop.permute.xlu0 %2795
        %2797 = vrot.lane.b32.xlu0 %v2520, 8
        %v2798 = vpop.permute.xlu0 %2797
        %2799 = vrot.lane.b32.xlu0 %v2522, 8
        %v2800 = vpop.permute.xlu0 %2799
        %2801 = vrot.lane.b32.xlu0 %v2524, 8
        %v2802 = vpop.permute.xlu0 %2801
        %2803 = vrot.lane.b32.xlu0 %v2526, 8
        %v2804 = vpop.permute.xlu0 %2803
        %2805 = vrot.lane.b32.xlu0 %v2529, 8
        %v2806 = vpop.permute.xlu0 %2805
        %2807 = vrot.lane.b32.xlu0 %v2531, 8
        %v2808 = vpop.permute.xlu0 %2807
        %2809 = vrot.lane.b32.xlu0 %v2533, 8
        %v2810 = vpop.permute.xlu0 %2809
        %2811 = vrot.lane.b32.xlu0 %v2535, 8
        %v2812 = vpop.permute.xlu0 %2811
        %2813 = vrot.lane.b32.xlu0 %v2538, 8
        %v2814 = vpop.permute.xlu0 %2813
        %2815 = vrot.lane.b32.xlu0 %v2540, 8
        %v2816 = vpop.permute.xlu0 %2815
        %2817 = vrot.lane.b32.xlu0 %v2542, 8
        %v2818 = vpop.permute.xlu0 %2817
        %2819 = vrot.lane.b32.xlu0 %v2544, 8
        %v2820 = vpop.permute.xlu0 %2819
        %2821 = vrot.lane.b32.xlu0 %v2547, 8
        %v2822 = vpop.permute.xlu0 %2821
        %2823 = vrot.lane.b32.xlu0 %v2549, 8
        %v2824 = vpop.permute.xlu0 %2823
        %2825 = vrot.lane.b32.xlu0 %v2551, 8
        %v2826 = vpop.permute.xlu0 %2825
        %2827 = vrot.lane.b32.xlu0 %v2553, 8
        %v2828 = vpop.permute.xlu0 %2827
        %2829 = vrot.lane.b32.xlu0 %v2556, 8
        %v2830 = vpop.permute.xlu0 %2829
        %2831 = vrot.lane.b32.xlu0 %v2558, 8
        %v2832 = vpop.permute.xlu0 %2831
        %2833 = vrot.lane.b32.xlu0 %v2560, 8
        %v2834 = vpop.permute.xlu0 %2833
        %2835 = vrot.lane.b32.xlu0 %v2562, 8
        %v2836 = vpop.permute.xlu0 %2835
        %2837 = vrot.lane.b32.xlu0 %v2565, 8
        %v2838 = vpop.permute.xlu0 %2837
        %2839 = vrot.lane.b32.xlu0 %v2567, 8
        %v2840 = vpop.permute.xlu0 %2839
        %2841 = vrot.lane.b32.xlu0 %v2569, 8
        %v2842 = vpop.permute.xlu0 %2841
        %2843 = vrot.lane.b32.xlu0 %v2571, 8
        %v2844 = vpop.permute.xlu0 %2843
        %2845 = vrot.lane.b32.xlu0 %v2574, 8
        %v2846 = vpop.permute.xlu0 %2845
        %2847 = vrot.lane.b32.xlu0 %v2576, 8
        %v2848 = vpop.permute.xlu0 %2847
        %2849 = vrot.lane.b32.xlu0 %v2578, 8
        %v2850 = vpop.permute.xlu0 %2849
        %2851 = vrot.lane.b32.xlu0 %v2580, 8
        %v2852 = vpop.permute.xlu0 %2851
        %2853 = vrot.lane.b32.xlu0 %v2583, 8
        %v2854 = vpop.permute.xlu0 %2853
        %2855 = vrot.lane.b32.xlu0 %v2585, 8
        %v2856 = vpop.permute.xlu0 %2855
        %2857 = vrot.lane.b32.xlu0 %v2587, 8
        %v2858 = vpop.permute.xlu0 %2857
        %2859 = vrot.lane.b32.xlu0 %v2589, 8
        %v2860 = vpop.permute.xlu0 %2859
        %2861 = vrot.lane.b32.xlu0 %v2592, 8
        %v2862 = vpop.permute.xlu0 %2861
        %2863 = vrot.lane.b32.xlu0 %v2594, 8
        %v2864 = vpop.permute.xlu0 %2863
        %2865 = vrot.lane.b32.xlu0 %v2596, 8
        %v2866 = vpop.permute.xlu0 %2865
        %2867 = vrot.lane.b32.xlu0 %v2598, 8
        %v2868 = vpop.permute.xlu0 %2867
        %2869 = vrot.lane.b32.xlu0 %v2601, 8
        %v2870 = vpop.permute.xlu0 %2869
        %2871 = vrot.lane.b32.xlu0 %v2603, 8
        %v2872 = vpop.permute.xlu0 %2871
        %2873 = vrot.lane.b32.xlu0 %v2605, 8
        %v2874 = vpop.permute.xlu0 %2873
        %2875 = vrot.lane.b32.xlu0 %v2607, 8
        %v2876 = vpop.permute.xlu0 %2875
        %2877 = vrot.lane.b32.xlu0 %v2610, 8
        %v2878 = vpop.permute.xlu0 %2877
        %2879 = vrot.lane.b32.xlu0 %v2612, 8
        %v2880 = vpop.permute.xlu0 %2879
        %2881 = vrot.lane.b32.xlu0 %v2614, 8
        %v2882 = vpop.permute.xlu0 %2881
        %2883 = vrot.lane.b32.xlu0 %v2616, 8
        %v2884 = vpop.permute.xlu0 %2883
        %2885 = vrot.lane.b32.xlu0 %v2619, 8
        %v2886 = vpop.permute.xlu0 %2885
        %2887 = vrot.lane.b32.xlu0 %v2621, 8
        %v2888 = vpop.permute.xlu0 %2887
        %2889 = vrot.lane.b32.xlu0 %v2623, 8
        %v2890 = vpop.permute.xlu0 %2889
        %2891 = vrot.lane.b32.xlu0 %v2625, 8
        %v2892 = vpop.permute.xlu0 %2891
        %2893 = vrot.lane.b32.xlu0 %v2628, 8
        %v2894 = vpop.permute.xlu0 %2893
        %2895 = vrot.lane.b32.xlu0 %v2630, 8
        %v2896 = vpop.permute.xlu0 %2895
        %2897 = vrot.lane.b32.xlu0 %v2632, 8
        %v2898 = vpop.permute.xlu0 %2897
        %2899 = vrot.lane.b32.xlu0 %v2634, 8
        %v2900 = vpop.permute.xlu0 %2899
        %2901 = vrot.lane.b32.xlu0 %v2637, 8
        %v2902 = vpop.permute.xlu0 %2901
        %2903 = vrot.lane.b32.xlu0 %v2639, 8
        %v2904 = vpop.permute.xlu0 %2903
        %2905 = vrot.lane.b32.xlu0 %v2641, 8
        %v2906 = vpop.permute.xlu0 %2905
        %2907 = vrot.lane.b32.xlu0 %v2643, 8
        %v2908 = vpop.permute.xlu0 %2907
        %2909 = vrot.lane.b32.xlu0 %v2646, 8
        %v2910 = vpop.permute.xlu0 %2909
        %2911 = vrot.lane.b32.xlu0 %v2648, 8
        %v2912 = vpop.permute.xlu0 %2911
        %2913 = vrot.lane.b32.xlu0 %v2650, 8
        %v2914 = vpop.permute.xlu0 %2913
        %2915 = vrot.lane.b32.xlu0 %v2652, 8
        %v2916 = vpop.permute.xlu0 %2915
        %2917 = vrot.lane.b32.xlu0 %v2655, 8
        %v2918 = vpop.permute.xlu0 %2917
        %2919 = vrot.lane.b32.xlu0 %v2657, 8
        %v2920 = vpop.permute.xlu0 %2919
        %2921 = vrot.lane.b32.xlu0 %v2659, 8
        %v2922 = vpop.permute.xlu0 %2921
        %2923 = vrot.lane.b32.xlu0 %v2661, 8
        %v2924 = vpop.permute.xlu0 %2923
        %2925 = vrot.lane.b32.xlu0 %v2664, 8
        %v2926 = vpop.permute.xlu0 %2925
        %2927 = vrot.lane.b32.xlu0 %v2666, 8
        %v2928 = vpop.permute.xlu0 %2927
        %2929 = vrot.lane.b32.xlu0 %v2668, 8
        %v2930 = vpop.permute.xlu0 %2929
        %2931 = vrot.lane.b32.xlu0 %v2670, 8
        %v2932 = vpop.permute.xlu0 %2931
        %2933 = vrot.lane.b32.xlu0 %v2673, 8
        %v2934 = vpop.permute.xlu0 %2933
        %2935 = vrot.lane.b32.xlu0 %v2675, 8
        %v2936 = vpop.permute.xlu0 %2935
        %2937 = vrot.lane.b32.xlu0 %v2677, 8
        %v2938 = vpop.permute.xlu0 %2937
        %2939 = vrot.lane.b32.xlu0 %v2679, 8
        %v2940 = vpop.permute.xlu0 %2939
        %2941 = vrot.lane.b32.xlu0 %v2682, 8
        %v2942 = vpop.permute.xlu0 %2941
        %2943 = vrot.lane.b32.xlu0 %v2684, 8
        %v2944 = vpop.permute.xlu0 %2943
        %2945 = vrot.lane.b32.xlu0 %v2686, 8
        %v2946 = vpop.permute.xlu0 %2945
        %2947 = vrot.lane.b32.xlu0 %v2688, 8
        %v2948 = vpop.permute.xlu0 %2947
        %2949 = vrot.lane.b32.xlu0 %v2691, 8
        %v2950 = vpop.permute.xlu0 %2949
        %2951 = vrot.lane.b32.xlu0 %v2693, 8
        %v2952 = vpop.permute.xlu0 %2951
        %2953 = vrot.lane.b32.xlu0 %v2695, 8
        %v2954 = vpop.permute.xlu0 %2953
        %2955 = vrot.lane.b32.xlu0 %v2697, 8
        %v2956 = vpop.permute.xlu0 %2955
        %2957 = vrot.lane.b32.xlu0 %v2700, 8
        %v2958 = vpop.permute.xlu0 %2957
        %2959 = vrot.lane.b32.xlu0 %v2702, 8
        %v2960 = vpop.permute.xlu0 %2959
        %2961 = vrot.lane.b32.xlu0 %v2704, 8
        %v2962 = vpop.permute.xlu0 %2961
        %2963 = vrot.lane.b32.xlu0 %v2706, 8
        %v2964 = vpop.permute.xlu0 %2963
        %2965 = vrot.lane.b32.xlu0 %v2709, 8
        %v2966 = vpop.permute.xlu0 %2965
        %2967 = vrot.lane.b32.xlu0 %v2711, 8
        %v2968 = vpop.permute.xlu0 %2967
        %2969 = vrot.lane.b32.xlu0 %v2713, 8
        %v2970 = vpop.permute.xlu0 %2969
        %2971 = vrot.lane.b32.xlu0 %v2715, 8
        %v2972 = vpop.permute.xlu0 %2971
        %2973 = vrot.lane.b32.xlu0 %v2718, 8
        %v2974 = vpop.permute.xlu0 %2973
        %2975 = vrot.lane.b32.xlu0 %v2720, 8
        %v2976 = vpop.permute.xlu0 %2975
        %2977 = vrot.lane.b32.xlu0 %v2722, 8
        %v2978 = vpop.permute.xlu0 %2977
        %2979 = vrot.lane.b32.xlu0 %v2724, 8
        %v2980 = vpop.permute.xlu0 %2979
        %v3109 = vrot.slane %v2117, 2
        %v3110 = vrot.slane %v2118, 2
        %v3111 = vsel %vm1180, %v3109, %v3110
        %v3112 = vrot.slane %v2119, 2
        %v3113 = vsel %vm1180, %v3110, %v3112
        %v3114 = vrot.slane %v2120, 2
        %v3115 = vsel %vm1180, %v3112, %v3114
        %v3116 = vrot.slane %v2121, 2
        %v3117 = vsel %vm1180, %v3114, %v3116
        %v3118 = vrot.slane %v2122, 2
        %v3119 = vrot.slane %v2123, 2
        %v3120 = vsel %vm1180, %v3118, %v3119
        %v3121 = vrot.slane %v2124, 2
        %v3122 = vsel %vm1180, %v3119, %v3121
        %v3123 = vrot.slane %v2125, 2
        %v3124 = vsel %vm1180, %v3121, %v3123
        %v3125 = vrot.slane %v2126, 2
        %v3126 = vsel %vm1180, %v3123, %v3125
        %v3127 = vrot.slane %v2127, 2
        %v3128 = vrot.slane %v2128, 2
        %v3129 = vsel %vm1180, %v3127, %v3128
        %v3130 = vrot.slane %v2129, 2
        %v3131 = vsel %vm1180, %v3128, %v3130
        %v3132 = vrot.slane %v2130, 2
        %v3133 = vsel %vm1180, %v3130, %v3132
        %v3134 = vrot.slane %v2131, 2
        %v3135 = vsel %vm1180, %v3132, %v3134
        %v3136 = vrot.slane %v2132, 2
        %v3137 = vrot.slane %v2133, 2
        %v3138 = vsel %vm1180, %v3136, %v3137
        %v3139 = vrot.slane %v2134, 2
        %v3140 = vsel %vm1180, %v3137, %v3139
        %v3141 = vrot.slane %v2135, 2
        %v3142 = vsel %vm1180, %v3139, %v3141
        %v3143 = vrot.slane %v2136, 2
        %v3144 = vsel %vm1180, %v3141, %v3143
        %v3145 = vrot.slane %v2137, 2
        %v3146 = vrot.slane %v2138, 2
        %v3147 = vsel %vm1180, %v3145, %v3146
        %v3148 = vrot.slane %v2139, 2
        %v3149 = vsel %vm1180, %v3146, %v3148
        %v3150 = vrot.slane %v2140, 2
        %v3151 = vsel %vm1180, %v3148, %v3150
        %v3152 = vrot.slane %v2141, 2
        %v3153 = vsel %vm1180, %v3150, %v3152
        %v3154 = vrot.slane %v2142, 2
        %v3155 = vrot.slane %v2143, 2
        %v3156 = vsel %vm1180, %v3154, %v3155
        %v3157 = vrot.slane %v2144, 2
        %v3158 = vsel %vm1180, %v3155, %v3157
        %v3159 = vrot.slane %v2145, 2
        %v3160 = vsel %vm1180, %v3157, %v3159
        %v3161 = vrot.slane %v2146, 2
        %v3162 = vsel %vm1180, %v3159, %v3161
        %v3163 = vrot.slane %v2147, 2
        %v3164 = vrot.slane %v2148, 2
        %v3165 = vsel %vm1180, %v3163, %v3164
        %v3166 = vrot.slane %v2149, 2
        %v3167 = vsel %vm1180, %v3164, %v3166
        %v3168 = vrot.slane %v2150, 2
        %v3169 = vsel %vm1180, %v3166, %v3168
        %v3170 = vrot.slane %v2151, 2
        %v3171 = vsel %vm1180, %v3168, %v3170
        %v3172 = vrot.slane %v2152, 2
        %v3173 = vrot.slane %v2153, 2
        %v3174 = vsel %vm1180, %v3172, %v3173
        %v3175 = vrot.slane %v2154, 2
        %v3176 = vsel %vm1180, %v3173, %v3175
        %v3177 = vrot.slane %v2155, 2
        %v3178 = vsel %vm1180, %v3175, %v3177
        %v3179 = vrot.slane %v2156, 2
        %v3180 = vsel %vm1180, %v3177, %v3179
        %v3181 = vrot.slane %v2157, 2
        %v3182 = vrot.slane %v2158, 2
        %v3183 = vsel %vm1180, %v3181, %v3182
        %v3184 = vrot.slane %v2159, 2
        %v3185 = vsel %vm1180, %v3182, %v3184
        %v3186 = vrot.slane %v2160, 2
        %v3187 = vsel %vm1180, %v3184, %v3186
        %v3188 = vrot.slane %v2161, 2
        %v3189 = vsel %vm1180, %v3186, %v3188
        %v3190 = vrot.slane %v2162, 2
        %v3191 = vrot.slane %v2163, 2
        %v3192 = vsel %vm1180, %v3190, %v3191
        %v3193 = vrot.slane %v2164, 2
        %v3194 = vsel %vm1180, %v3191, %v3193
        %v3195 = vrot.slane %v2165, 2
        %v3196 = vsel %vm1180, %v3193, %v3195
        %v3197 = vrot.slane %v2166, 2
        %v3198 = vsel %vm1180, %v3195, %v3197
        %v3199 = vrot.slane %v2167, 2
        %v3200 = vrot.slane %v2168, 2
        %v3201 = vsel %vm1180, %v3199, %v3200
        %v3202 = vrot.slane %v2169, 2
        %v3203 = vsel %vm1180, %v3200, %v3202
        %v3204 = vrot.slane %v2170, 2
        %v3205 = vsel %vm1180, %v3202, %v3204
        %v3206 = vrot.slane %v2171, 2
        %v3207 = vsel %vm1180, %v3204, %v3206
        %v3208 = vrot.slane %v2172, 2
        %v3209 = vrot.slane %v2173, 2
        %v3210 = vsel %vm1180, %v3208, %v3209
        %v3211 = vrot.slane %v2174, 2
        %v3212 = vsel %vm1180, %v3209, %v3211
        %v3213 = vrot.slane %v2175, 2
        %v3214 = vsel %vm1180, %v3211, %v3213
        %v3215 = vrot.slane %v2176, 2
        %v3216 = vsel %vm1180, %v3213, %v3215
        %v3217 = vrot.slane %v2177, 2
        %v3218 = vrot.slane %v2178, 2
        %v3219 = vsel %vm1180, %v3217, %v3218
        %v3220 = vrot.slane %v2179, 2
        %v3221 = vsel %vm1180, %v3218, %v3220
        %v3222 = vrot.slane %v2180, 2
        %v3223 = vsel %vm1180, %v3220, %v3222
        %v3224 = vrot.slane %v2181, 2
        %v3225 = vsel %vm1180, %v3222, %v3224
        %v3226 = vrot.slane %v2182, 2
        %v3227 = vrot.slane %v2183, 2
        %v3228 = vsel %vm1180, %v3226, %v3227
        %v3229 = vrot.slane %v2184, 2
        %v3230 = vsel %vm1180, %v3227, %v3229
        %v3231 = vrot.slane %v2185, 2
        %v3232 = vsel %vm1180, %v3229, %v3231
        %v3233 = vrot.slane %v2186, 2
        %v3234 = vsel %vm1180, %v3231, %v3233
        %v3235 = vrot.slane %v2187, 2
        %v3236 = vrot.slane %v2188, 2
        %v3237 = vsel %vm1180, %v3235, %v3236
        %v3238 = vrot.slane %v2189, 2
        %v3239 = vsel %vm1180, %v3236, %v3238
        %v3240 = vrot.slane %v2190, 2
        %v3241 = vsel %vm1180, %v3238, %v3240
        %v3242 = vrot.slane %v2191, 2
        %v3243 = vsel %vm1180, %v3240, %v3242
        %v3244 = vrot.slane %v2192, 2
        %v3245 = vrot.slane %v2193, 2
        %v3246 = vsel %vm1180, %v3244, %v3245
        %v3247 = vrot.slane %v2194, 2
        %v3248 = vsel %vm1180, %v3245, %v3247
        %v3249 = vrot.slane %v2195, 2
        %v3250 = vsel %vm1180, %v3247, %v3249
        %v3251 = vrot.slane %v2196, 2
        %v3252 = vsel %vm1180, %v3249, %v3251
        %v3253 = vrot.slane %v2197, 2
        %v3254 = vrot.slane %v2198, 2
        %v3255 = vsel %vm1180, %v3253, %v3254
        %v3256 = vrot.slane %v2199, 2
        %v3257 = vsel %vm1180, %v3254, %v3256
        %v3258 = vrot.slane %v2200, 2
        %v3259 = vsel %vm1180, %v3256, %v3258
        %v3260 = vrot.slane %v2201, 2
        %v3261 = vsel %vm1180, %v3258, %v3260
        %v3262 = vrot.slane %v2202, 2
        %v3263 = vrot.slane %v2203, 2
        %v3264 = vsel %vm1180, %v3262, %v3263
        %v3265 = vrot.slane %v2204, 2
        %v3266 = vsel %vm1180, %v3263, %v3265
        %v3267 = vrot.slane %v2205, 2
        %v3268 = vsel %vm1180, %v3265, %v3267
        %v3269 = vrot.slane %v2206, 2
        %v3270 = vsel %vm1180, %v3267, %v3269
        %v3271 = vrot.slane %v2207, 2
        %v3272 = vrot.slane %v2208, 2
        %v3273 = vsel %vm1180, %v3271, %v3272
        %v3274 = vrot.slane %v2209, 2
        %v3275 = vsel %vm1180, %v3272, %v3274
        %v3276 = vrot.slane %v2210, 2
        %v3277 = vsel %vm1180, %v3274, %v3276
        %v3278 = vrot.slane %v2211, 2
        %v3279 = vsel %vm1180, %v3276, %v3278
        %v3280 = vrot.slane %v2212, 2
        %v3281 = vrot.slane %v2213, 2
        %v3282 = vsel %vm1180, %v3280, %v3281
        %v3283 = vrot.slane %v2214, 2
        %v3284 = vsel %vm1180, %v3281, %v3283
        %v3285 = vrot.slane %v2215, 2
        %v3286 = vsel %vm1180, %v3283, %v3285
        %v3287 = vrot.slane %v2216, 2
        %v3288 = vsel %vm1180, %v3285, %v3287
        %v3289 = vrot.slane %v2217, 2
        %v3290 = vrot.slane %v2218, 2
        %v3291 = vsel %vm1180, %v3289, %v3290
        %v3292 = vrot.slane %v2219, 2
        %v3293 = vsel %vm1180, %v3290, %v3292
        %v3294 = vrot.slane %v2220, 2
        %v3295 = vsel %vm1180, %v3292, %v3294
        %v3296 = vrot.slane %v2221, 2
        %v3297 = vsel %vm1180, %v3294, %v3296
        %v3298 = vrot.slane %v2222, 2
        %v3299 = vrot.slane %v2223, 2
        %v3300 = vsel %vm1180, %v3298, %v3299
        %v3301 = vrot.slane %v2224, 2
        %v3302 = vsel %vm1180, %v3299, %v3301
        %v3303 = vrot.slane %v2225, 2
        %v3304 = vsel %vm1180, %v3301, %v3303
        %v3305 = vrot.slane %v2226, 2
        %v3306 = vsel %vm1180, %v3303, %v3305
        %v3307 = vrot.slane %v2227, 2
        %v3308 = vrot.slane %v2228, 2
        %v3309 = vsel %vm1180, %v3307, %v3308
        %v3310 = vrot.slane %v2229, 2
        %v3311 = vsel %vm1180, %v3308, %v3310
        %v3312 = vrot.slane %v2230, 2
        %v3313 = vsel %vm1180, %v3310, %v3312
        %v3314 = vrot.slane %v2231, 2
        %v3315 = vsel %vm1180, %v3312, %v3314
        %v3316 = vrot.slane %v2232, 2
        %v3317 = vrot.slane %v2233, 2
        %v3318 = vsel %vm1180, %v3316, %v3317
        %v3319 = vrot.slane %v2234, 2
        %v3320 = vsel %vm1180, %v3317, %v3319
        %v3321 = vrot.slane %v2235, 2
        %v3322 = vsel %vm1180, %v3319, %v3321
        %v3323 = vrot.slane %v2236, 2
        %v3324 = vsel %vm1180, %v3321, %v3323
        %v3325 = vrot.slane %v2237, 2
        %v3326 = vrot.slane %v2238, 2
        %v3327 = vsel %vm1180, %v3325, %v3326
        %v3328 = vrot.slane %v2239, 2
        %v3329 = vsel %vm1180, %v3326, %v3328
        %v3330 = vrot.slane %v2240, 2
        %v3331 = vsel %vm1180, %v3328, %v3330
        %v3332 = vrot.slane %v2241, 2
        %v3333 = vsel %vm1180, %v3330, %v3332
        %v3334 = vrot.slane %v2242, 2
        %v3335 = vrot.slane %v2243, 2
        %v3336 = vsel %vm1180, %v3334, %v3335
        %v3337 = vrot.slane %v2244, 2
        %v3338 = vsel %vm1180, %v3335, %v3337
        %v3339 = vrot.slane %v2245, 2
        %v3340 = vsel %vm1180, %v3337, %v3339
        %v3341 = vrot.slane %v2246, 2
        %v3342 = vsel %vm1180, %v3339, %v3341
        %v3343 = vrot.slane %v2247, 2
        %v3344 = vrot.slane %v2248, 2
        %v3345 = vsel %vm1180, %v3343, %v3344
        %v3346 = vrot.slane %v2249, 2
        %v3347 = vsel %vm1180, %v3344, %v3346
        %v3348 = vrot.slane %v2250, 2
        %v3349 = vsel %vm1180, %v3346, %v3348
        %v3350 = vrot.slane %v2251, 2
        %v3351 = vsel %vm1180, %v3348, %v3350
        %v3352 = vrot.slane %v2252, 2
        %v3353 = vrot.slane %v2253, 2
        %v3354 = vsel %vm1180, %v3352, %v3353
        %v3355 = vrot.slane %v2254, 2
        %v3356 = vsel %vm1180, %v3353, %v3355
        %v3357 = vrot.slane %v2255, 2
        %v3358 = vsel %vm1180, %v3355, %v3357
        %v3359 = vrot.slane %v2256, 2
        %v3360 = vsel %vm1180, %v3357, %v3359
        %v3361 = vrot.slane %v2257, 2
        %v3362 = vrot.slane %v2258, 2
        %v3363 = vsel %vm1180, %v3361, %v3362
        %v3364 = vrot.slane %v2259, 2
        %v3365 = vsel %vm1180, %v3362, %v3364
        %v3366 = vrot.slane %v2260, 2
        %v3367 = vsel %vm1180, %v3364, %v3366
        %v3368 = vrot.slane %v2261, 2
        %v3369 = vsel %vm1180, %v3366, %v3368
        %v3370 = vrot.slane %v2262, 2
        %v3371 = vrot.slane %v2263, 2
        %v3372 = vsel %vm1180, %v3370, %v3371
        %v3373 = vrot.slane %v2264, 2
        %v3374 = vsel %vm1180, %v3371, %v3373
        %v3375 = vrot.slane %v2265, 2
        %v3376 = vsel %vm1180, %v3373, %v3375
        %v3377 = vrot.slane %v2266, 2
        %v3378 = vsel %vm1180, %v3375, %v3377
        %v3379 = vrot.slane %v2267, 2
        %v3380 = vrot.slane %v2268, 2
        %v3381 = vsel %vm1180, %v3379, %v3380
        %v3382 = vrot.slane %v2269, 2
        %v3383 = vsel %vm1180, %v3380, %v3382
        %v3384 = vrot.slane %v2270, 2
        %v3385 = vsel %vm1180, %v3382, %v3384
        %v3386 = vrot.slane %v2271, 2
        %v3387 = vsel %vm1180, %v3384, %v3386
        %v3388 = vrot.slane %v2272, 2
        %v3389 = vrot.slane %v2273, 2
        %v3390 = vsel %vm1180, %v3388, %v3389
        %v3391 = vrot.slane %v2274, 2
        %v3392 = vsel %vm1180, %v3389, %v3391
        %v3393 = vrot.slane %v2275, 2
        %v3394 = vsel %vm1180, %v3391, %v3393
        %v3395 = vrot.slane %v2276, 2
        %v3396 = vsel %vm1180, %v3393, %v3395
        %3397 = vrot.lane.b32.xlu0 %v3111, 16
        %v3398 = vpop.permute.xlu0 %3397
        %3399 = vrot.lane.b32.xlu0 %v3113, 16
        %v3400 = vpop.permute.xlu0 %3399
        %3401 = vrot.lane.b32.xlu0 %v3115, 16
        %v3402 = vpop.permute.xlu0 %3401
        %3403 = vrot.lane.b32.xlu0 %v3117, 16
        %v3404 = vpop.permute.xlu0 %3403
        %3405 = vrot.lane.b32.xlu0 %v3120, 16
        %v3406 = vpop.permute.xlu0 %3405
        %3407 = vrot.lane.b32.xlu0 %v3122, 16
        %v3408 = vpop.permute.xlu0 %3407
        %3409 = vrot.lane.b32.xlu0 %v3124, 16
        %v3410 = vpop.permute.xlu0 %3409
        %3411 = vrot.lane.b32.xlu0 %v3126, 16
        %v3412 = vpop.permute.xlu0 %3411
        %3413 = vrot.lane.b32.xlu0 %v3129, 16
        %v3414 = vpop.permute.xlu0 %3413
        %3415 = vrot.lane.b32.xlu0 %v3131, 16
        %v3416 = vpop.permute.xlu0 %3415
        %3417 = vrot.lane.b32.xlu0 %v3133, 16
        %v3418 = vpop.permute.xlu0 %3417
        %3419 = vrot.lane.b32.xlu0 %v3135, 16
        %v3420 = vpop.permute.xlu0 %3419
        %3421 = vrot.lane.b32.xlu0 %v3138, 16
        %v3422 = vpop.permute.xlu0 %3421
        %3423 = vrot.lane.b32.xlu0 %v3140, 16
        %v3424 = vpop.permute.xlu0 %3423
        %3425 = vrot.lane.b32.xlu0 %v3142, 16
        %v3426 = vpop.permute.xlu0 %3425
        %3427 = vrot.lane.b32.xlu0 %v3144, 16
        %v3428 = vpop.permute.xlu0 %3427
        %3429 = vrot.lane.b32.xlu0 %v3147, 16
        %v3430 = vpop.permute.xlu0 %3429
        %3431 = vrot.lane.b32.xlu0 %v3149, 16
        %v3432 = vpop.permute.xlu0 %3431
        %3433 = vrot.lane.b32.xlu0 %v3151, 16
        %v3434 = vpop.permute.xlu0 %3433
        %3435 = vrot.lane.b32.xlu0 %v3153, 16
        %v3436 = vpop.permute.xlu0 %3435
        %3437 = vrot.lane.b32.xlu0 %v3156, 16
        %v3438 = vpop.permute.xlu0 %3437
        %3439 = vrot.lane.b32.xlu0 %v3158, 16
        %v3440 = vpop.permute.xlu0 %3439
        %3441 = vrot.lane.b32.xlu0 %v3160, 16
        %v3442 = vpop.permute.xlu0 %3441
        %3443 = vrot.lane.b32.xlu0 %v3162, 16
        %v3444 = vpop.permute.xlu0 %3443
        %3445 = vrot.lane.b32.xlu0 %v3165, 16
        %v3446 = vpop.permute.xlu0 %3445
        %3447 = vrot.lane.b32.xlu0 %v3167, 16
        %v3448 = vpop.permute.xlu0 %3447
        %3449 = vrot.lane.b32.xlu0 %v3169, 16
        %v3450 = vpop.permute.xlu0 %3449
        %3451 = vrot.lane.b32.xlu0 %v3171, 16
        %v3452 = vpop.permute.xlu0 %3451
        %3453 = vrot.lane.b32.xlu0 %v3174, 16
        %v3454 = vpop.permute.xlu0 %3453
        %3455 = vrot.lane.b32.xlu0 %v3176, 16
        %v3456 = vpop.permute.xlu0 %3455
        %3457 = vrot.lane.b32.xlu0 %v3178, 16
        %v3458 = vpop.permute.xlu0 %3457
        %3459 = vrot.lane.b32.xlu0 %v3180, 16
        %v3460 = vpop.permute.xlu0 %3459
        %3461 = vrot.lane.b32.xlu0 %v3183, 16
        %v3462 = vpop.permute.xlu0 %3461
        %3463 = vrot.lane.b32.xlu0 %v3185, 16
        %v3464 = vpop.permute.xlu0 %3463
        %3465 = vrot.lane.b32.xlu0 %v3187, 16
        %v3466 = vpop.permute.xlu0 %3465
        %3467 = vrot.lane.b32.xlu0 %v3189, 16
        %v3468 = vpop.permute.xlu0 %3467
        %3469 = vrot.lane.b32.xlu0 %v3192, 16
        %v3470 = vpop.permute.xlu0 %3469
        %3471 = vrot.lane.b32.xlu0 %v3194, 16
        %v3472 = vpop.permute.xlu0 %3471
        %3473 = vrot.lane.b32.xlu0 %v3196, 16
        %v3474 = vpop.permute.xlu0 %3473
        %3475 = vrot.lane.b32.xlu0 %v3198, 16
        %v3476 = vpop.permute.xlu0 %3475
        %3477 = vrot.lane.b32.xlu0 %v3201, 16
        %v3478 = vpop.permute.xlu0 %3477
        %3479 = vrot.lane.b32.xlu0 %v3203, 16
        %v3480 = vpop.permute.xlu0 %3479
        %3481 = vrot.lane.b32.xlu0 %v3205, 16
        %v3482 = vpop.permute.xlu0 %3481
        %3483 = vrot.lane.b32.xlu0 %v3207, 16
        %v3484 = vpop.permute.xlu0 %3483
        %3485 = vrot.lane.b32.xlu0 %v3210, 16
        %v3486 = vpop.permute.xlu0 %3485
        %3487 = vrot.lane.b32.xlu0 %v3212, 16
        %v3488 = vpop.permute.xlu0 %3487
        %3489 = vrot.lane.b32.xlu0 %v3214, 16
        %v3490 = vpop.permute.xlu0 %3489
        %3491 = vrot.lane.b32.xlu0 %v3216, 16
        %v3492 = vpop.permute.xlu0 %3491
        %3493 = vrot.lane.b32.xlu0 %v3219, 16
        %v3494 = vpop.permute.xlu0 %3493
        %3495 = vrot.lane.b32.xlu0 %v3221, 16
        %v3496 = vpop.permute.xlu0 %3495
        %3497 = vrot.lane.b32.xlu0 %v3223, 16
        %v3498 = vpop.permute.xlu0 %3497
        %3499 = vrot.lane.b32.xlu0 %v3225, 16
        %v3500 = vpop.permute.xlu0 %3499
        %3501 = vrot.lane.b32.xlu0 %v3228, 16
        %v3502 = vpop.permute.xlu0 %3501
        %3503 = vrot.lane.b32.xlu0 %v3230, 16
        %v3504 = vpop.permute.xlu0 %3503
        %3505 = vrot.lane.b32.xlu0 %v3232, 16
        %v3506 = vpop.permute.xlu0 %3505
        %3507 = vrot.lane.b32.xlu0 %v3234, 16
        %v3508 = vpop.permute.xlu0 %3507
        %3509 = vrot.lane.b32.xlu0 %v3237, 16
        %v3510 = vpop.permute.xlu0 %3509
        %3511 = vrot.lane.b32.xlu0 %v3239, 16
        %v3512 = vpop.permute.xlu0 %3511
        %3513 = vrot.lane.b32.xlu0 %v3241, 16
        %v3514 = vpop.permute.xlu0 %3513
        %3515 = vrot.lane.b32.xlu0 %v3243, 16
        %v3516 = vpop.permute.xlu0 %3515
        %3517 = vrot.lane.b32.xlu0 %v3246, 16
        %v3518 = vpop.permute.xlu0 %3517
        %3519 = vrot.lane.b32.xlu0 %v3248, 16
        %v3520 = vpop.permute.xlu0 %3519
        %3521 = vrot.lane.b32.xlu0 %v3250, 16
        %v3522 = vpop.permute.xlu0 %3521
        %3523 = vrot.lane.b32.xlu0 %v3252, 16
        %v3524 = vpop.permute.xlu0 %3523
        %3525 = vrot.lane.b32.xlu0 %v3255, 16
        %v3526 = vpop.permute.xlu0 %3525
        %3527 = vrot.lane.b32.xlu0 %v3257, 16
        %v3528 = vpop.permute.xlu0 %3527
        %3529 = vrot.lane.b32.xlu0 %v3259, 16
        %v3530 = vpop.permute.xlu0 %3529
        %3531 = vrot.lane.b32.xlu0 %v3261, 16
        %v3532 = vpop.permute.xlu0 %3531
        %3533 = vrot.lane.b32.xlu0 %v3264, 16
        %v3534 = vpop.permute.xlu0 %3533
        %3535 = vrot.lane.b32.xlu0 %v3266, 16
        %v3536 = vpop.permute.xlu0 %3535
        %3537 = vrot.lane.b32.xlu0 %v3268, 16
        %v3538 = vpop.permute.xlu0 %3537
        %3539 = vrot.lane.b32.xlu0 %v3270, 16
        %v3540 = vpop.permute.xlu0 %3539
        %3541 = vrot.lane.b32.xlu0 %v3273, 16
        %v3542 = vpop.permute.xlu0 %3541
        %3543 = vrot.lane.b32.xlu0 %v3275, 16
        %v3544 = vpop.permute.xlu0 %3543
        %3545 = vrot.lane.b32.xlu0 %v3277, 16
        %v3546 = vpop.permute.xlu0 %3545
        %3547 = vrot.lane.b32.xlu0 %v3279, 16
        %v3548 = vpop.permute.xlu0 %3547
        %3549 = vrot.lane.b32.xlu0 %v3282, 16
        %v3550 = vpop.permute.xlu0 %3549
        %3551 = vrot.lane.b32.xlu0 %v3284, 16
        %v3552 = vpop.permute.xlu0 %3551
        %3553 = vrot.lane.b32.xlu0 %v3286, 16
        %v3554 = vpop.permute.xlu0 %3553
        %3555 = vrot.lane.b32.xlu0 %v3288, 16
        %v3556 = vpop.permute.xlu0 %3555
        %3557 = vrot.lane.b32.xlu0 %v3291, 16
        %v3558 = vpop.permute.xlu0 %3557
        %3559 = vrot.lane.b32.xlu0 %v3293, 16
        %v3560 = vpop.permute.xlu0 %3559
        %3561 = vrot.lane.b32.xlu0 %v3295, 16
        %v3562 = vpop.permute.xlu0 %3561
        %3563 = vrot.lane.b32.xlu0 %v3297, 16
        %v3564 = vpop.permute.xlu0 %3563
        %3565 = vrot.lane.b32.xlu0 %v3300, 16
        %v3566 = vpop.permute.xlu0 %3565
        %3567 = vrot.lane.b32.xlu0 %v3302, 16
        %v3568 = vpop.permute.xlu0 %3567
        %3569 = vrot.lane.b32.xlu0 %v3304, 16
        %v3570 = vpop.permute.xlu0 %3569
        %3571 = vrot.lane.b32.xlu0 %v3306, 16
        %v3572 = vpop.permute.xlu0 %3571
        %3573 = vrot.lane.b32.xlu0 %v3309, 16
        %v3574 = vpop.permute.xlu0 %3573
        %3575 = vrot.lane.b32.xlu0 %v3311, 16
        %v3576 = vpop.permute.xlu0 %3575
        %3577 = vrot.lane.b32.xlu0 %v3313, 16
        %v3578 = vpop.permute.xlu0 %3577
        %3579 = vrot.lane.b32.xlu0 %v3315, 16
        %v3580 = vpop.permute.xlu0 %3579
        %3581 = vrot.lane.b32.xlu0 %v3318, 16
        %v3582 = vpop.permute.xlu0 %3581
        %3583 = vrot.lane.b32.xlu0 %v3320, 16
        %v3584 = vpop.permute.xlu0 %3583
        %3585 = vrot.lane.b32.xlu0 %v3322, 16
        %v3586 = vpop.permute.xlu0 %3585
        %3587 = vrot.lane.b32.xlu0 %v3324, 16
        %v3588 = vpop.permute.xlu0 %3587
        %3589 = vrot.lane.b32.xlu0 %v3327, 16
        %v3590 = vpop.permute.xlu0 %3589
        %3591 = vrot.lane.b32.xlu0 %v3329, 16
        %v3592 = vpop.permute.xlu0 %3591
        %3593 = vrot.lane.b32.xlu0 %v3331, 16
        %v3594 = vpop.permute.xlu0 %3593
        %3595 = vrot.lane.b32.xlu0 %v3333, 16
        %v3596 = vpop.permute.xlu0 %3595
        %3597 = vrot.lane.b32.xlu0 %v3336, 16
        %v3598 = vpop.permute.xlu0 %3597
        %3599 = vrot.lane.b32.xlu0 %v3338, 16
        %v3600 = vpop.permute.xlu0 %3599
        %3601 = vrot.lane.b32.xlu0 %v3340, 16
        %v3602 = vpop.permute.xlu0 %3601
        %3603 = vrot.lane.b32.xlu0 %v3342, 16
        %v3604 = vpop.permute.xlu0 %3603
        %3605 = vrot.lane.b32.xlu0 %v3345, 16
        %v3606 = vpop.permute.xlu0 %3605
        %3607 = vrot.lane.b32.xlu0 %v3347, 16
        %v3608 = vpop.permute.xlu0 %3607
        %3609 = vrot.lane.b32.xlu0 %v3349, 16
        %v3610 = vpop.permute.xlu0 %3609
        %3611 = vrot.lane.b32.xlu0 %v3351, 16
        %v3612 = vpop.permute.xlu0 %3611
        %3613 = vrot.lane.b32.xlu0 %v3354, 16
        %v3614 = vpop.permute.xlu0 %3613
        %3615 = vrot.lane.b32.xlu0 %v3356, 16
        %v3616 = vpop.permute.xlu0 %3615
        %3617 = vrot.lane.b32.xlu0 %v3358, 16
        %v3618 = vpop.permute.xlu0 %3617
        %3619 = vrot.lane.b32.xlu0 %v3360, 16
        %v3620 = vpop.permute.xlu0 %3619
        %3621 = vrot.lane.b32.xlu0 %v3363, 16
        %v3622 = vpop.permute.xlu0 %3621
        %3623 = vrot.lane.b32.xlu0 %v3365, 16
        %v3624 = vpop.permute.xlu0 %3623
        %3625 = vrot.lane.b32.xlu0 %v3367, 16
        %v3626 = vpop.permute.xlu0 %3625
        %3627 = vrot.lane.b32.xlu0 %v3369, 16
        %v3628 = vpop.permute.xlu0 %3627
        %3629 = vrot.lane.b32.xlu0 %v3372, 16
        %v3630 = vpop.permute.xlu0 %3629
        %3631 = vrot.lane.b32.xlu0 %v3374, 16
        %v3632 = vpop.permute.xlu0 %3631
        %3633 = vrot.lane.b32.xlu0 %v3376, 16
        %v3634 = vpop.permute.xlu0 %3633
        %3635 = vrot.lane.b32.xlu0 %v3378, 16
        %v3636 = vpop.permute.xlu0 %3635
        %3637 = vrot.lane.b32.xlu0 %v3381, 16
        %v3638 = vpop.permute.xlu0 %3637
        %3639 = vrot.lane.b32.xlu0 %v3383, 16
        %v3640 = vpop.permute.xlu0 %3639
        %3641 = vrot.lane.b32.xlu0 %v3385, 16
        %v3642 = vpop.permute.xlu0 %3641
        %3643 = vrot.lane.b32.xlu0 %v3387, 16
        %v3644 = vpop.permute.xlu0 %3643
        %3645 = vrot.lane.b32.xlu0 %v3390, 16
        %v3646 = vpop.permute.xlu0 %3645
        %3647 = vrot.lane.b32.xlu0 %v3392, 16
        %v3648 = vpop.permute.xlu0 %3647
        %3649 = vrot.lane.b32.xlu0 %v3394, 16
        %v3650 = vpop.permute.xlu0 %3649
        %3651 = vrot.lane.b32.xlu0 %v3396, 16
        %v3652 = vpop.permute.xlu0 %3651
        %v3781 = vsel %vm1853, %v2117, %v2726
        %v3782 = vsel %vm1853, %v2118, %v2728
        %v3783 = vsel %vm1853, %v2119, %v2730
        %v3784 = vsel %vm1853, %v2120, %v2732
        %v3785 = vsel %vm1853, %v2122, %v2734
        %v3786 = vsel %vm1853, %v2123, %v2736
        %v3787 = vsel %vm1853, %v2124, %v2738
        %v3788 = vsel %vm1853, %v2125, %v2740
        %v3789 = vsel %vm1853, %v2127, %v2742
        %v3790 = vsel %vm1853, %v2128, %v2744
        %v3791 = vsel %vm1853, %v2129, %v2746
        %v3792 = vsel %vm1853, %v2130, %v2748
        %v3793 = vsel %vm1853, %v2132, %v2750
        %v3794 = vsel %vm1853, %v2133, %v2752
        %v3795 = vsel %vm1853, %v2134, %v2754
        %v3796 = vsel %vm1853, %v2135, %v2756
        %v3797 = vsel %vm1853, %v2137, %v2758
        %v3798 = vsel %vm1853, %v2138, %v2760
        %v3799 = vsel %vm1853, %v2139, %v2762
        %v3800 = vsel %vm1853, %v2140, %v2764
        %v3801 = vsel %vm1853, %v2142, %v2766
        %v3802 = vsel %vm1853, %v2143, %v2768
        %v3803 = vsel %vm1853, %v2144, %v2770
        %v3804 = vsel %vm1853, %v2145, %v2772
        %v3805 = vsel %vm1853, %v2147, %v2774
        %v3806 = vsel %vm1853, %v2148, %v2776
        %v3807 = vsel %vm1853, %v2149, %v2778
        %v3808 = vsel %vm1853, %v2150, %v2780
        %v3809 = vsel %vm1853, %v2152, %v2782
        %v3810 = vsel %vm1853, %v2153, %v2784
        %v3811 = vsel %vm1853, %v2154, %v2786
        %v3812 = vsel %vm1853, %v2155, %v2788
        %v3813 = vsel %vm1853, %v2157, %v2790
        %v3814 = vsel %vm1853, %v2158, %v2792
        %v3815 = vsel %vm1853, %v2159, %v2794
        %v3816 = vsel %vm1853, %v2160, %v2796
        %v3817 = vsel %vm1853, %v2162, %v2798
        %v3818 = vsel %vm1853, %v2163, %v2800
        %v3819 = vsel %vm1853, %v2164, %v2802
        %v3820 = vsel %vm1853, %v2165, %v2804
        %v3821 = vsel %vm1853, %v2167, %v2806
        %v3822 = vsel %vm1853, %v2168, %v2808
        %v3823 = vsel %vm1853, %v2169, %v2810
        %v3824 = vsel %vm1853, %v2170, %v2812
        %v3825 = vsel %vm1853, %v2172, %v2814
        %v3826 = vsel %vm1853, %v2173, %v2816
        %v3827 = vsel %vm1853, %v2174, %v2818
        %v3828 = vsel %vm1853, %v2175, %v2820
        %v3829 = vsel %vm1853, %v2177, %v2822
        %v3830 = vsel %vm1853, %v2178, %v2824
        %v3831 = vsel %vm1853, %v2179, %v2826
        %v3832 = vsel %vm1853, %v2180, %v2828
        %v3833 = vsel %vm1853, %v2182, %v2830
        %v3834 = vsel %vm1853, %v2183, %v2832
        %v3835 = vsel %vm1853, %v2184, %v2834
        %v3836 = vsel %vm1853, %v2185, %v2836
        %v3837 = vsel %vm1853, %v2187, %v2838
        %v3838 = vsel %vm1853, %v2188, %v2840
        %v3839 = vsel %vm1853, %v2189, %v2842
        %v3840 = vsel %vm1853, %v2190, %v2844
        %v3841 = vsel %vm1853, %v2192, %v2846
        %v3842 = vsel %vm1853, %v2193, %v2848
        %v3843 = vsel %vm1853, %v2194, %v2850
        %v3844 = vsel %vm1853, %v2195, %v2852
        %v3845 = vsel %vm1853, %v2197, %v2854
        %v3846 = vsel %vm1853, %v2198, %v2856
        %v3847 = vsel %vm1853, %v2199, %v2858
        %v3848 = vsel %vm1853, %v2200, %v2860
        %v3849 = vsel %vm1853, %v2202, %v2862
        %v3850 = vsel %vm1853, %v2203, %v2864
        %v3851 = vsel %vm1853, %v2204, %v2866
        %v3852 = vsel %vm1853, %v2205, %v2868
        %v3853 = vsel %vm1853, %v2207, %v2870
        %v3854 = vsel %vm1853, %v2208, %v2872
        %v3855 = vsel %vm1853, %v2209, %v2874
        %v3856 = vsel %vm1853, %v2210, %v2876
        %v3857 = vsel %vm1853, %v2212, %v2878
        %v3858 = vsel %vm1853, %v2213, %v2880
        %v3859 = vsel %vm1853, %v2214, %v2882
        %v3860 = vsel %vm1853, %v2215, %v2884
        %v3861 = vsel %vm1853, %v2217, %v2886
        %v3862 = vsel %vm1853, %v2218, %v2888
        %v3863 = vsel %vm1853, %v2219, %v2890
        %v3864 = vsel %vm1853, %v2220, %v2892
        %v3865 = vsel %vm1853, %v2222, %v2894
        %v3866 = vsel %vm1853, %v2223, %v2896
        %v3867 = vsel %vm1853, %v2224, %v2898
        %v3868 = vsel %vm1853, %v2225, %v2900
        %v3869 = vsel %vm1853, %v2227, %v2902
        %v3870 = vsel %vm1853, %v2228, %v2904
        %v3871 = vsel %vm1853, %v2229, %v2906
        %v3872 = vsel %vm1853, %v2230, %v2908
        %v3873 = vsel %vm1853, %v2232, %v2910
        %v3874 = vsel %vm1853, %v2233, %v2912
        %v3875 = vsel %vm1853, %v2234, %v2914
        %v3876 = vsel %vm1853, %v2235, %v2916
        %v3877 = vsel %vm1853, %v2237, %v2918
        %v3878 = vsel %vm1853, %v2238, %v2920
        %v3879 = vsel %vm1853, %v2239, %v2922
        %v3880 = vsel %vm1853, %v2240, %v2924
        %v3881 = vsel %vm1853, %v2242, %v2926
        %v3882 = vsel %vm1853, %v2243, %v2928
        %v3883 = vsel %vm1853, %v2244, %v2930
        %v3884 = vsel %vm1853, %v2245, %v2932
        %v3885 = vsel %vm1853, %v2247, %v2934
        %v3886 = vsel %vm1853, %v2248, %v2936
        %v3887 = vsel %vm1853, %v2249, %v2938
        %v3888 = vsel %vm1853, %v2250, %v2940
        %v3889 = vsel %vm1853, %v2252, %v2942
        %v3890 = vsel %vm1853, %v2253, %v2944
        %v3891 = vsel %vm1853, %v2254, %v2946
        %v3892 = vsel %vm1853, %v2255, %v2948
        %v3893 = vsel %vm1853, %v2257, %v2950
        %v3894 = vsel %vm1853, %v2258, %v2952
        %v3895 = vsel %vm1853, %v2259, %v2954
        %v3896 = vsel %vm1853, %v2260, %v2956
        %v3897 = vsel %vm1853, %v2262, %v2958
        %v3898 = vsel %vm1853, %v2263, %v2960
        %v3899 = vsel %vm1853, %v2264, %v2962
        %v3900 = vsel %vm1853, %v2265, %v2964
        %v3901 = vsel %vm1853, %v2267, %v2966
        %v3902 = vsel %vm1853, %v2268, %v2968
        %v3903 = vsel %vm1853, %v2269, %v2970
        %v3904 = vsel %vm1853, %v2270, %v2972
        %v3905 = vsel %vm1853, %v2272, %v2974
        %v3906 = vsel %vm1853, %v2273, %v2976
        %v3907 = vsel %vm1853, %v2274, %v2978
        %v3908 = vsel %vm1853, %v2275, %v2980
        %v3909 = vsel %vm1982, %v3781, %v3398
        %v3910 = vsel %vm1982, %v3782, %v3400
        %v3911 = vsel %vm1982, %v3783, %v3402
        %v3912 = vsel %vm1982, %v3784, %v3404
        %v3913 = vsel %vm1982, %v3785, %v3406
        %v3914 = vsel %vm1982, %v3786, %v3408
        %v3915 = vsel %vm1982, %v3787, %v3410
        %v3916 = vsel %vm1982, %v3788, %v3412
        %v3917 = vsel %vm1982, %v3789, %v3414
        %v3918 = vsel %vm1982, %v3790, %v3416
        %v3919 = vsel %vm1982, %v3791, %v3418
        %v3920 = vsel %vm1982, %v3792, %v3420
        %v3921 = vsel %vm1982, %v3793, %v3422
        %v3922 = vsel %vm1982, %v3794, %v3424
        %v3923 = vsel %vm1982, %v3795, %v3426
        %v3924 = vsel %vm1982, %v3796, %v3428
        %v3925 = vsel %vm1982, %v3797, %v3430
        %v3926 = vsel %vm1982, %v3798, %v3432
        %v3927 = vsel %vm1982, %v3799, %v3434
        %v3928 = vsel %vm1982, %v3800, %v3436
        %v3929 = vsel %vm1982, %v3801, %v3438
        %v3930 = vsel %vm1982, %v3802, %v3440
        %v3931 = vsel %vm1982, %v3803, %v3442
        %v3932 = vsel %vm1982, %v3804, %v3444
        %v3933 = vsel %vm1982, %v3805, %v3446
        %v3934 = vsel %vm1982, %v3806, %v3448
        %v3935 = vsel %vm1982, %v3807, %v3450
        %v3936 = vsel %vm1982, %v3808, %v3452
        %v3937 = vsel %vm1982, %v3809, %v3454
        %v3938 = vsel %vm1982, %v3810, %v3456
        %v3939 = vsel %vm1982, %v3811, %v3458
        %v3940 = vsel %vm1982, %v3812, %v3460
        %v3941 = vsel %vm1982, %v3813, %v3462
        %v3942 = vsel %vm1982, %v3814, %v3464
        %v3943 = vsel %vm1982, %v3815, %v3466
        %v3944 = vsel %vm1982, %v3816, %v3468
        %v3945 = vsel %vm1982, %v3817, %v3470
        %v3946 = vsel %vm1982, %v3818, %v3472
        %v3947 = vsel %vm1982, %v3819, %v3474
        %v3948 = vsel %vm1982, %v3820, %v3476
        %v3949 = vsel %vm1982, %v3821, %v3478
        %v3950 = vsel %vm1982, %v3822, %v3480
        %v3951 = vsel %vm1982, %v3823, %v3482
        %v3952 = vsel %vm1982, %v3824, %v3484
        %v3953 = vsel %vm1982, %v3825, %v3486
        %v3954 = vsel %vm1982, %v3826, %v3488
        %v3955 = vsel %vm1982, %v3827, %v3490
        %v3956 = vsel %vm1982, %v3828, %v3492
        %v3957 = vsel %vm1982, %v3829, %v3494
        %v3958 = vsel %vm1982, %v3830, %v3496
        %v3959 = vsel %vm1982, %v3831, %v3498
        %v3960 = vsel %vm1982, %v3832, %v3500
        %v3961 = vsel %vm1982, %v3833, %v3502
        %v3962 = vsel %vm1982, %v3834, %v3504
        %v3963 = vsel %vm1982, %v3835, %v3506
        %v3964 = vsel %vm1982, %v3836, %v3508
        %v3965 = vsel %vm1982, %v3837, %v3510
        %v3966 = vsel %vm1982, %v3838, %v3512
        %v3967 = vsel %vm1982, %v3839, %v3514
        %v3968 = vsel %vm1982, %v3840, %v3516
        %v3969 = vsel %vm1982, %v3841, %v3518
        %v3970 = vsel %vm1982, %v3842, %v3520
        %v3971 = vsel %vm1982, %v3843, %v3522
        %v3972 = vsel %vm1982, %v3844, %v3524
        %v3973 = vsel %vm1982, %v3845, %v3526
        %v3974 = vsel %vm1982, %v3846, %v3528
        %v3975 = vsel %vm1982, %v3847, %v3530
        %v3976 = vsel %vm1982, %v3848, %v3532
        %v3977 = vsel %vm1982, %v3849, %v3534
        %v3978 = vsel %vm1982, %v3850, %v3536
        %v3979 = vsel %vm1982, %v3851, %v3538
        %v3980 = vsel %vm1982, %v3852, %v3540
        %v3981 = vsel %vm1982, %v3853, %v3542
        %v3982 = vsel %vm1982, %v3854, %v3544
        %v3983 = vsel %vm1982, %v3855, %v3546
        %v3984 = vsel %vm1982, %v3856, %v3548
        %v3985 = vsel %vm1982, %v3857, %v3550
        %v3986 = vsel %vm1982, %v3858, %v3552
        %v3987 = vsel %vm1982, %v3859, %v3554
        %v3988 = vsel %vm1982, %v3860, %v3556
        %v3989 = vsel %vm1982, %v3861, %v3558
        %v3990 = vsel %vm1982, %v3862, %v3560
        %v3991 = vsel %vm1982, %v3863, %v3562
        %v3992 = vsel %vm1982, %v3864, %v3564
        %v3993 = vsel %vm1982, %v3865, %v3566
        %v3994 = vsel %vm1982, %v3866, %v3568
        %v3995 = vsel %vm1982, %v3867, %v3570
        %v3996 = vsel %vm1982, %v3868, %v3572
        %v3997 = vsel %vm1982, %v3869, %v3574
        %v3998 = vsel %vm1982, %v3870, %v3576
        %v3999 = vsel %vm1982, %v3871, %v3578
        %v4000 = vsel %vm1982, %v3872, %v3580
        %v4001 = vsel %vm1982, %v3873, %v3582
        %v4002 = vsel %vm1982, %v3874, %v3584
        %v4003 = vsel %vm1982, %v3875, %v3586
        %v4004 = vsel %vm1982, %v3876, %v3588
        %v4005 = vsel %vm1982, %v3877, %v3590
        %v4006 = vsel %vm1982, %v3878, %v3592
        %v4007 = vsel %vm1982, %v3879, %v3594
        %v4008 = vsel %vm1982, %v3880, %v3596
        %v4009 = vsel %vm1982, %v3881, %v3598
        %v4010 = vsel %vm1982, %v3882, %v3600
        %v4011 = vsel %vm1982, %v3883, %v3602
        %v4012 = vsel %vm1982, %v3884, %v3604
        %v4013 = vsel %vm1982, %v3885, %v3606
        %v4014 = vsel %vm1982, %v3886, %v3608
        %v4015 = vsel %vm1982, %v3887, %v3610
        %v4016 = vsel %vm1982, %v3888, %v3612
        %v4017 = vsel %vm1982, %v3889, %v3614
        %v4018 = vsel %vm1982, %v3890, %v3616
        %v4019 = vsel %vm1982, %v3891, %v3618
        %v4020 = vsel %vm1982, %v3892, %v3620
        %v4021 = vsel %vm1982, %v3893, %v3622
        %v4022 = vsel %vm1982, %v3894, %v3624
        %v4023 = vsel %vm1982, %v3895, %v3626
        %v4024 = vsel %vm1982, %v3896, %v3628
        %v4025 = vsel %vm1982, %v3897, %v3630
        %v4026 = vsel %vm1982, %v3898, %v3632
        %v4027 = vsel %vm1982, %v3899, %v3634
        %v4028 = vsel %vm1982, %v3900, %v3636
        %v4029 = vsel %vm1982, %v3901, %v3638
        %v4030 = vsel %vm1982, %v3902, %v3640
        %v4031 = vsel %vm1982, %v3903, %v3642
        %v4032 = vsel %vm1982, %v3904, %v3644
        %v4033 = vsel %vm1982, %v3905, %v3646
        %v4034 = vsel %vm1982, %v3906, %v3648
        %v4035 = vsel %vm1982, %v3907, %v3650
        %v4036 = vsel %vm1982, %v3908, %v3652
        %s4037 = scalar_lea.vmem %s1, 24
        %v4038 = vld [vmem:[%s4037] sm:$0xff]
        %v4039 = vld [vmem:[%s4037 + $0x8] sm:$0xff]
        %v4040 = vld [vmem:[%s4037 + $0x10] sm:$0xff]
        %vm4041 = vcmask 195584
        %v4043 = vsel %vm4041, %v3909, 0
        %v4046 = vsel %vm4041, %v3910, 0
        %v4049 = vsel %vm4041, %v3911, 0
        %v4052 = vsel %vm4041, %v3912, 0
        %v4055 = vsel %vm4041, %v3913, 0
        %v4058 = vsel %vm4041, %v3914, 0
        %v4061 = vsel %vm4041, %v3915, 0
        %v4064 = vsel %vm4041, %v3916, 0
        %v4067 = vsel %vm4041, %v3917, 0
        %v4070 = vsel %vm4041, %v3918, 0
        %v4073 = vsel %vm4041, %v3919, 0
        %v4076 = vsel %vm4041, %v3920, 0
        %v4079 = vsel %vm4041, %v3921, 0
        %v4082 = vsel %vm4041, %v3922, 0
        %v4085 = vsel %vm4041, %v3923, 0
        %v4088 = vsel %vm4041, %v3924, 0
        %v4091 = vsel %vm4041, %v3925, 0
        %v4094 = vsel %vm4041, %v3926, 0
        %v4097 = vsel %vm4041, %v3927, 0
        %v4100 = vsel %vm4041, %v3928, 0
        %v4103 = vsel %vm4041, %v3929, 0
        %v4106 = vsel %vm4041, %v3930, 0
        %v4109 = vsel %vm4041, %v3931, 0
        %v4112 = vsel %vm4041, %v3932, 0
        %v4115 = vsel %vm4041, %v3933, 0
        %v4118 = vsel %vm4041, %v3934, 0
        %v4121 = vsel %vm4041, %v3935, 0
        %v4124 = vsel %vm4041, %v3936, 0
        %v4127 = vsel %vm4041, %v3937, 0
        %v4130 = vsel %vm4041, %v3938, 0
        %v4133 = vsel %vm4041, %v3939, 0
        %v4136 = vsel %vm4041, %v3940, 0
        %v4139 = vsel %vm4041, %v3941, 0
        %v4142 = vsel %vm4041, %v3942, 0
        %v4145 = vsel %vm4041, %v3943, 0
        %v4148 = vsel %vm4041, %v3944, 0
        %v4151 = vsel %vm4041, %v3945, 0
        %v4154 = vsel %vm4041, %v3946, 0
        %v4157 = vsel %vm4041, %v3947, 0
        %v4160 = vsel %vm4041, %v3948, 0
        %v4163 = vsel %vm4041, %v3949, 0
        %v4166 = vsel %vm4041, %v3950, 0
        %v4169 = vsel %vm4041, %v3951, 0
        %v4172 = vsel %vm4041, %v3952, 0
        %v4175 = vsel %vm4041, %v3953, 0
        %v4178 = vsel %vm4041, %v3954, 0
        %v4181 = vsel %vm4041, %v3955, 0
        %v4184 = vsel %vm4041, %v3956, 0
        %v4187 = vsel %vm4041, %v3957, 0
        %v4190 = vsel %vm4041, %v3958, 0
        %v4193 = vsel %vm4041, %v3959, 0
        %v4196 = vsel %vm4041, %v3960, 0
        %v4199 = vsel %vm4041, %v3961, 0
        %v4202 = vsel %vm4041, %v3962, 0
        %v4205 = vsel %vm4041, %v3963, 0
        %v4208 = vsel %vm4041, %v3964, 0
        %v4211 = vsel %vm4041, %v3965, 0
        %v4214 = vsel %vm4041, %v3966, 0
        %v4217 = vsel %vm4041, %v3967, 0
        %v4220 = vsel %vm4041, %v3968, 0
        %v4223 = vsel %vm4041, %v3969, 0
        %v4226 = vsel %vm4041, %v3970, 0
        %v4229 = vsel %vm4041, %v3971, 0
        %v4232 = vsel %vm4041, %v3972, 0
        %v4235 = vsel %vm4041, %v3973, 0
        %v4238 = vsel %vm4041, %v3974, 0
        %v4241 = vsel %vm4041, %v3975, 0
        %v4244 = vsel %vm4041, %v3976, 0
        %v4247 = vsel %vm4041, %v3977, 0
        %v4250 = vsel %vm4041, %v3978, 0
        %v4253 = vsel %vm4041, %v3979, 0
        %v4256 = vsel %vm4041, %v3980, 0
        %v4259 = vsel %vm4041, %v3981, 0
        %v4262 = vsel %vm4041, %v3982, 0
        %v4265 = vsel %vm4041, %v3983, 0
        %v4268 = vsel %vm4041, %v3984, 0
        %v4271 = vsel %vm4041, %v3985, 0
        %v4274 = vsel %vm4041, %v3986, 0
        %v4277 = vsel %vm4041, %v3987, 0
        %v4280 = vsel %vm4041, %v3988, 0
        %v4283 = vsel %vm4041, %v3989, 0
        %v4286 = vsel %vm4041, %v3990, 0
        %v4289 = vsel %vm4041, %v3991, 0
        %v4292 = vsel %vm4041, %v3992, 0
        %v4295 = vsel %vm4041, %v3993, 0
        %v4298 = vsel %vm4041, %v3994, 0
        %v4301 = vsel %vm4041, %v3995, 0
        %v4304 = vsel %vm4041, %v3996, 0
        %v4307 = vsel %vm4041, %v3997, 0
        %v4310 = vsel %vm4041, %v3998, 0
        %v4313 = vsel %vm4041, %v3999, 0
        %v4316 = vsel %vm4041, %v4000, 0
        %v4319 = vsel %vm4041, %v4001, 0
        %v4322 = vsel %vm4041, %v4002, 0
        %v4325 = vsel %vm4041, %v4003, 0
        %v4328 = vsel %vm4041, %v4004, 0
        %v4331 = vsel %vm4041, %v4005, 0
        %v4334 = vsel %vm4041, %v4006, 0
        %v4337 = vsel %vm4041, %v4007, 0
        %v4340 = vsel %vm4041, %v4008, 0
        %v4343 = vsel %vm4041, %v4009, 0
        %v4346 = vsel %vm4041, %v4010, 0
        %v4349 = vsel %vm4041, %v4011, 0
        %v4352 = vsel %vm4041, %v4012, 0
        %v4355 = vsel %vm4041, %v4013, 0
        %v4358 = vsel %vm4041, %v4014, 0
        %v4361 = vsel %vm4041, %v4015, 0
        %v4364 = vsel %vm4041, %v4016, 0
        %v4367 = vsel %vm4041, %v4017, 0
        %v4370 = vsel %vm4041, %v4018, 0
        %v4373 = vsel %vm4041, %v4019, 0
        %v4376 = vsel %vm4041, %v4020, 0
        %v4379 = vsel %vm4041, %v4021, 0
        %v4382 = vsel %vm4041, %v4022, 0
        %v4385 = vsel %vm4041, %v4023, 0
        %v4388 = vsel %vm4041, %v4024, 0
        %v4391 = vsel %vm4041, %v4025, 0
        %v4394 = vsel %vm4041, %v4026, 0
        %v4397 = vsel %vm4041, %v4027, 0
        %v4400 = vsel %vm4041, %v4028, 0
        %v4403 = vsel %vm4041, %v4029, 0
        %v4406 = vsel %vm4041, %v4030, 0
        %v4409 = vsel %vm4041, %v4031, 0
        %v4412 = vsel %vm4041, %v4032, 0
        %v4415 = vsel %vm4041, %v4033, 0
        %v4418 = vsel %vm4041, %v4034, 0
        %v4421 = vsel %vm4041, %v4035, 0
        %v4424 = vsel %vm4041, %v4036, 0
        %4426 = vmatprep.subr.mxu0 0.0
        %4427 = vmatpush1.msra.mxu0 %v4038
        %4428 = vmatprep.subr.mxu0 0.0
        %4429 = vmatpush1.msra.mxu0 %v4039
        %4430 = vmatprep.subr.mxu0 0.0
        %4431 = vmatpush1.msra.mxu0 %v4040
        %4432 = vmatprep.subr.mxu0 0.0
        %4433 = vmatpush1.msra.mxu0 0.0
        %4434 = vmatprep.subr.mxu0 0.0
        %4435 = vmatpush1.msra.mxu0 0.0
        %4436 = vmatprep.subr.mxu0 0.0
        %4437 = vmatpush1.msra.mxu0 0.0
        %4438 = vmatprep.subr.mxu0 0.0
        %4439 = vmatpush1.msra.mxu0 0.0
        %4440 = vmatprep.subr.mxu0 0.0
        %4441 = vmatpush1.msra.mxu0 0.0
        %4442 = vmatprep.subr.mxu0 0.0
        %4443 = vmatpush1.msra.mxu0 0.0
        %4444 = vmatprep.subr.mxu0 0.0
        %4445 = vmatpush1.msra.mxu0 0.0
        %4446 = vmatprep.subr.mxu0 0.0
        %4447 = vmatpush1.msra.mxu0 0.0
        %4448 = vmatprep.subr.mxu0 0.0
        %4449 = vmatpush1.msra.mxu0 0.0
        %4450 = vmatprep.subr.mxu0 0.0
        %4451 = vmatpush1.msra.mxu0 0.0
        %4452 = vmatprep.subr.mxu0 0.0
        %4453 = vmatpush1.msra.mxu0 0.0
        %4454 = vmatprep.subr.mxu0 0.0
        %4455 = vmatpush1.msra.mxu0 0.0
        %4456 = vmatprep.subr.mxu0 0.0
        %4457 = vmatpush1.msra.mxu0 0.0
        %4458 = vmatprep.subr.mxu0 0.0
        %4459 = vmatpush1.msra.mxu0 0.0
        %4460 = vmatprep.subr.mxu0 0.0
        %4461 = vmatpush1.msra.mxu0 0.0
        %4462 = vmatprep.subr.mxu0 0.0
        %4463 = vmatpush1.msra.mxu0 0.0
        %4464 = vmatprep.subr.mxu0 0.0
        %4465 = vmatpush1.msra.mxu0 0.0
        %4466 = vmatprep.subr.mxu0 0.0
        %4467 = vmatpush1.msra.mxu0 0.0
        %4468 = vmatprep.subr.mxu0 0.0
        %4469 = vmatpush1.msra.mxu0 0.0
        %4470 = vmatprep.subr.mxu0 0.0
        %4471 = vmatpush1.msra.mxu0 0.0
        %4472 = vmatprep.subr.mxu0 0.0
        %4473 = vmatpush1.msra.mxu0 0.0
        %4474 = vmatprep.subr.mxu0 0.0
        %4475 = vmatpush1.msra.mxu0 0.0
        %4476 = vmatprep.subr.mxu0 0.0
        %4477 = vmatpush1.msra.mxu0 0.0
        %4478 = vmatprep.subr.mxu0 0.0
        %4479 = vmatpush1.msra.mxu0 0.0
        %4480 = vmatprep.subr.mxu0 0.0
        %4481 = vmatpush1.msra.mxu0 0.0
        %4482 = vmatprep.subr.mxu0 0.0
        %4483 = vmatpush1.msra.mxu0 0.0
        %4484 = vmatprep.subr.mxu0 0.0
        %4485 = vmatpush1.msra.mxu0 0.0
        %4486 = vmatprep.subr.mxu0 0.0
        %4487 = vmatpush1.msra.mxu0 0.0
        %4488 = vmatprep.subr.mxu0 0.0
        %4489 = vmatpush1.msra.mxu0 0.0
        %4490 = vmatprep.mubr.f32.mxu0 0.0
        %4491 = vmatmul.mubr.f32.gmra.mrb[0].mxu0 %v4043
        %v4492 = vpop.f32.mrb[0].mxu0
        %v4493 = vadd.f32 0.0, %v4492
        %v4494 = vpop.f32.mrb[0].mxu0
        %4495 = vmatprep.mubr.f32.mxu0 0.0
        %4496 = vmatmul.mubr.f32.gmra.mrb[0].mxu0 %v4046
        %v4497 = vpop.f32.mrb[0].mxu0
        %v4498 = vadd.f32 0.0, %v4497
        %v4499 = vpop.f32.mrb[0].mxu0
        %4500 = vmatprep.mubr.f32.mxu0 0.0
        %4501 = vmatmul.mubr.f32.gmra.mrb[0].mxu0 %v4049
        %v4502 = vpop.f32.mrb[0].mxu0
        %v4503 = vadd.f32 0.0, %v4502
        %v4504 = vpop.f32.mrb[0].mxu0
        %4505 = vmatprep.mubr.f32.mxu0 0.0
        %4506 = vmatmul.mubr.f32.gmra.mrb[0].mxu0 %v4052
        %v4507 = vpop.f32.mrb[0].mxu0
        %v4508 = vadd.f32 0.0, %v4507
        %v4509 = vpop.f32.mrb[0].mxu0
        %4510 = vmatprep.mubr.f32.mxu0 0.0
        %4511 = vmatmul.mubr.f32.gmra.mrb[0].mxu0 %v4055
        %v4512 = vpop.f32.mrb[0].mxu0
        %v4513 = vadd.f32 0.0, %v4512
        %v4514 = vpop.f32.mrb[0].mxu0
        %4515 = vmatprep.mubr.f32.mxu0 0.0
        %4516 = vmatmul.mubr.f32.gmra.mrb[0].mxu0 %v4058
        %v4517 = vpop.f32.mrb[0].mxu0
        %v4518 = vadd.f32 0.0, %v4517
        %v4519 = vpop.f32.mrb[0].mxu0
        %4520 = vmatprep.mubr.f32.mxu0 0.0
        %4521 = vmatmul.mubr.f32.gmra.mrb[0].mxu0 %v4061
        %v4522 = vpop.f32.mrb[0].mxu0
        %v4523 = vadd.f32 0.0, %v4522
        %v4524 = vpop.f32.mrb[0].mxu0
        %4525 = vmatprep.mubr.f32.mxu0 0.0
        %4526 = vmatmul.mubr.f32.gmra.mrb[0].mxu0 %v4064
        %v4527 = vpop.f32.mrb[0].mxu0
        %v4528 = vadd.f32 0.0, %v4527
        %v4529 = vpop.f32.mrb[0].mxu0
        %4530 = vmatprep.mubr.f32.mxu0 0.0
        %4531 = vmatmul.mubr.f32.gmra.mrb[0].mxu0 %v4067
        %v4532 = vpop.f32.mrb[0].mxu0
        %v4533 = vadd.f32 0.0, %v4532
        %v4534 = vpop.f32.mrb[0].mxu0
        %4535 = vmatprep.mubr.f32.mxu0 0.0
        %4536 = vmatmul.mubr.f32.gmra.mrb[0].mxu0 %v4070
        %v4537 = vpop.f32.mrb[0].mxu0
        %v4538 = vadd.f32 0.0, %v4537
        %v4539 = vpop.f32.mrb[0].mxu0
        %4540 = vmatprep.mubr.f32.mxu0 0.0
        %4541 = vmatmul.mubr.f32.gmra.mrb[0].mxu0 %v4073
        %v4542 = vpop.f32.mrb[0].mxu0
        %v4543 = vadd.f32 0.0, %v4542
        %v4544 = vpop.f32.mrb[0].mxu0
        %4545 = vmatprep.mubr.f32.mxu0 0.0
        %4546 = vmatmul.mubr.f32.gmra.mrb[0].mxu0 %v4076
        %v4547 = vpop.f32.mrb[0].mxu0
        %v4548 = vadd.f32 0.0, %v4547
        %v4549 = vpop.f32.mrb[0].mxu0
        %4550 = vmatprep.mubr.f32.mxu0 0.0
        %4551 = vmatmul.mubr.f32.gmra.mrb[0].mxu0 %v4079
        %v4552 = vpop.f32.mrb[0].mxu0
        %v4553 = vadd.f32 0.0, %v4552
        %v4554 = vpop.f32.mrb[0].mxu0
        %4555 = vmatprep.mubr.f32.mxu0 0.0
        %4556 = vmatmul.mubr.f32.gmra.mrb[0].mxu0 %v4082
        %v4557 = vpop.f32.mrb[0].mxu0
        %v4558 = vadd.f32 0.0, %v4557
        %v4559 = vpop.f32.mrb[0].mxu0
        %4560 = vmatprep.mubr.f32.mxu0 0.0
        %4561 = vmatmul.mubr.f32.gmra.mrb[0].mxu0 %v4085
        %v4562 = vpop.f32.mrb[0].mxu0
        %v4563 = vadd.f32 0.0, %v4562
        %v4564 = vpop.f32.mrb[0].mxu0
        %4565 = vmatprep.mubr.f32.mxu0 0.0
        %4566 = vmatmul.mubr.f32.gmra.mrb[0].mxu0 %v4088
        %v4567 = vpop.f32.mrb[0].mxu0
        %v4568 = vadd.f32 0.0, %v4567
        %v4569 = vpop.f32.mrb[0].mxu0
        %4570 = vmatprep.mubr.f32.mxu0 0.0
        %4571 = vmatmul.mubr.f32.gmra.mrb[0].mxu0 %v4091
        %v4572 = vpop.f32.mrb[0].mxu0
        %v4573 = vadd.f32 0.0, %v4572
        %v4574 = vpop.f32.mrb[0].mxu0
        %4575 = vmatprep.mubr.f32.mxu0 0.0
        %4576 = vmatmul.mubr.f32.gmra.mrb[0].mxu0 %v4094
        %v4577 = vpop.f32.mrb[0].mxu0
        %v4578 = vadd.f32 0.0, %v4577
        %v4579 = vpop.f32.mrb[0].mxu0
        %4580 = vmatprep.mubr.f32.mxu0 0.0
        %4581 = vmatmul.mubr.f32.gmra.mrb[0].mxu0 %v4097
        %v4582 = vpop.f32.mrb[0].mxu0
        %v4583 = vadd.f32 0.0, %v4582
        %v4584 = vpop.f32.mrb[0].mxu0
        %4585 = vmatprep.mubr.f32.mxu0 0.0
        %4586 = vmatmul.mubr.f32.gmra.mrb[0].mxu0 %v4100
        %v4587 = vpop.f32.mrb[0].mxu0
        %v4588 = vadd.f32 0.0, %v4587
        %v4589 = vpop.f32.mrb[0].mxu0
        %4590 = vmatprep.mubr.f32.mxu0 0.0
        %4591 = vmatmul.mubr.f32.gmra.mrb[0].mxu0 %v4103
        %v4592 = vpop.f32.mrb[0].mxu0
        %v4593 = vadd.f32 0.0, %v4592
        %v4594 = vpop.f32.mrb[0].mxu0
        %4595 = vmatprep.mubr.f32.mxu0 0.0
        %4596 = vmatmul.mubr.f32.gmra.mrb[0].mxu0 %v4106
        %v4597 = vpop.f32.mrb[0].mxu0
        %v4598 = vadd.f32 0.0, %v4597
        %v4599 = vpop.f32.mrb[0].mxu0
        %4600 = vmatprep.mubr.f32.mxu0 0.0
        %4601 = vmatmul.mubr.f32.gmra.mrb[0].mxu0 %v4109
        %v4602 = vpop.f32.mrb[0].mxu0
        %v4603 = vadd.f32 0.0, %v4602
        %v4604 = vpop.f32.mrb[0].mxu0
        %4605 = vmatprep.mubr.f32.mxu0 0.0
        %4606 = vmatmul.mubr.f32.gmra.mrb[0].mxu0 %v4112
        %v4607 = vpop.f32.mrb[0].mxu0
        %v4608 = vadd.f32 0.0, %v4607
        %v4609 = vpop.f32.mrb[0].mxu0
        %4610 = vmatprep.mubr.f32.mxu0 0.0
        %4611 = vmatmul.mubr.f32.gmra.mrb[0].mxu0 %v4115
        %v4612 = vpop.f32.mrb[0].mxu0
        %v4613 = vadd.f32 0.0, %v4612
        %v4614 = vpop.f32.mrb[0].mxu0
        %4615 = vmatprep.mubr.f32.mxu0 0.0
        %4616 = vmatmul.mubr.f32.gmra.mrb[0].mxu0 %v4118
        %v4617 = vpop.f32.mrb[0].mxu0
        %v4618 = vadd.f32 0.0, %v4617
        %v4619 = vpop.f32.mrb[0].mxu0
        %4620 = vmatprep.mubr.f32.mxu0 0.0
        %4621 = vmatmul.mubr.f32.gmra.mrb[0].mxu0 %v4121
        %v4622 = vpop.f32.mrb[0].mxu0
        %v4623 = vadd.f32 0.0, %v4622
        %v4624 = vpop.f32.mrb[0].mxu0
        %4625 = vmatprep.mubr.f32.mxu0 0.0
        %4626 = vmatmul.mubr.f32.gmra.mrb[0].mxu0 %v4124
        %v4627 = vpop.f32.mrb[0].mxu0
        %v4628 = vadd.f32 0.0, %v4627
        %v4629 = vpop.f32.mrb[0].mxu0
        %4630 = vmatprep.mubr.f32.mxu0 0.0
        %4631 = vmatmul.mubr.f32.gmra.mrb[0].mxu0 %v4127
        %v4632 = vpop.f32.mrb[0].mxu0
        %v4633 = vadd.f32 0.0, %v4632
        %v4634 = vpop.f32.mrb[0].mxu0
        %4635 = vmatprep.mubr.f32.mxu0 0.0
        %4636 = vmatmul.mubr.f32.gmra.mrb[0].mxu0 %v4130
        %v4637 = vpop.f32.mrb[0].mxu0
        %v4638 = vadd.f32 0.0, %v4637
        %v4639 = vpop.f32.mrb[0].mxu0
        %4640 = vmatprep.mubr.f32.mxu0 0.0
        %4641 = vmatmul.mubr.f32.gmra.mrb[0].mxu0 %v4133
        %v4642 = vpop.f32.mrb[0].mxu0
        %v4643 = vadd.f32 0.0, %v4642
        %v4644 = vpop.f32.mrb[0].mxu0
        %4645 = vmatprep.mubr.f32.mxu0 0.0
        %4646 = vmatmul.mubr.f32.gmra.mrb[0].mxu0 %v4136
        %v4647 = vpop.f32.mrb[0].mxu0
        %v4648 = vadd.f32 0.0, %v4647
        %v4649 = vpop.f32.mrb[0].mxu0
        %4650 = vmatprep.mubr.f32.mxu0 0.0
        %4651 = vmatmul.mubr.f32.gmra.mrb[0].mxu0 %v4139
        %v4652 = vpop.f32.mrb[0].mxu0
        %v4653 = vadd.f32 0.0, %v4652
        %v4654 = vpop.f32.mrb[0].mxu0
        %4655 = vmatprep.mubr.f32.mxu0 0.0
        %4656 = vmatmul.mubr.f32.gmra.mrb[0].mxu0 %v4142
        %v4657 = vpop.f32.mrb[0].mxu0
        %v4658 = vadd.f32 0.0, %v4657
        %v4659 = vpop.f32.mrb[0].mxu0
        %4660 = vmatprep.mubr.f32.mxu0 0.0
        %4661 = vmatmul.mubr.f32.gmra.mrb[0].mxu0 %v4145
        %v4662 = vpop.f32.mrb[0].mxu0
        %v4663 = vadd.f32 0.0, %v4662
        %v4664 = vpop.f32.mrb[0].mxu0
        %4665 = vmatprep.mubr.f32.mxu0 0.0
        %4666 = vmatmul.mubr.f32.gmra.mrb[0].mxu0 %v4148
        %v4667 = vpop.f32.mrb[0].mxu0
        %v4668 = vadd.f32 0.0, %v4667
        %v4669 = vpop.f32.mrb[0].mxu0
        %4670 = vmatprep.mubr.f32.mxu0 0.0
        %4671 = vmatmul.mubr.f32.gmra.mrb[0].mxu0 %v4151
        %v4672 = vpop.f32.mrb[0].mxu0
        %v4673 = vadd.f32 0.0, %v4672
        %v4674 = vpop.f32.mrb[0].mxu0
        %4675 = vmatprep.mubr.f32.mxu0 0.0
        %4676 = vmatmul.mubr.f32.gmra.mrb[0].mxu0 %v4154
        %v4677 = vpop.f32.mrb[0].mxu0
        %v4678 = vadd.f32 0.0, %v4677
        %v4679 = vpop.f32.mrb[0].mxu0
        %4680 = vmatprep.mubr.f32.mxu0 0.0
        %4681 = vmatmul.mubr.f32.gmra.mrb[0].mxu0 %v4157
        %v4682 = vpop.f32.mrb[0].mxu0
        %v4683 = vadd.f32 0.0, %v4682
        %v4684 = vpop.f32.mrb[0].mxu0
        %4685 = vmatprep.mubr.f32.mxu0 0.0
        %4686 = vmatmul.mubr.f32.gmra.mrb[0].mxu0 %v4160
        %v4687 = vpop.f32.mrb[0].mxu0
        %v4688 = vadd.f32 0.0, %v4687
        %v4689 = vpop.f32.mrb[0].mxu0
        %4690 = vmatprep.mubr.f32.mxu0 0.0
        %4691 = vmatmul.mubr.f32.gmra.mrb[0].mxu0 %v4163
        %v4692 = vpop.f32.mrb[0].mxu0
        %v4693 = vadd.f32 0.0, %v4692
        %v4694 = vpop.f32.mrb[0].mxu0
        %4695 = vmatprep.mubr.f32.mxu0 0.0
        %4696 = vmatmul.mubr.f32.gmra.mrb[0].mxu0 %v4166
        %v4697 = vpop.f32.mrb[0].mxu0
        %v4698 = vadd.f32 0.0, %v4697
        %v4699 = vpop.f32.mrb[0].mxu0
        %4700 = vmatprep.mubr.f32.mxu0 0.0
        %4701 = vmatmul.mubr.f32.gmra.mrb[0].mxu0 %v4169
        %v4702 = vpop.f32.mrb[0].mxu0
        %v4703 = vadd.f32 0.0, %v4702
        %v4704 = vpop.f32.mrb[0].mxu0
        %4705 = vmatprep.mubr.f32.mxu0 0.0
        %4706 = vmatmul.mubr.f32.gmra.mrb[0].mxu0 %v4172
        %v4707 = vpop.f32.mrb[0].mxu0
        %v4708 = vadd.f32 0.0, %v4707
        %v4709 = vpop.f32.mrb[0].mxu0
        %4710 = vmatprep.mubr.f32.mxu0 0.0
        %4711 = vmatmul.mubr.f32.gmra.mrb[0].mxu0 %v4175
        %v4712 = vpop.f32.mrb[0].mxu0
        %v4713 = vadd.f32 0.0, %v4712
        %v4714 = vpop.f32.mrb[0].mxu0
        %4715 = vmatprep.mubr.f32.mxu0 0.0
        %4716 = vmatmul.mubr.f32.gmra.mrb[0].mxu0 %v4178
        %v4717 = vpop.f32.mrb[0].mxu0
        %v4718 = vadd.f32 0.0, %v4717
        %v4719 = vpop.f32.mrb[0].mxu0
        %4720 = vmatprep.mubr.f32.mxu0 0.0
        %4721 = vmatmul.mubr.f32.gmra.mrb[0].mxu0 %v4181
        %v4722 = vpop.f32.mrb[0].mxu0
        %v4723 = vadd.f32 0.0, %v4722
        %v4724 = vpop.f32.mrb[0].mxu0
        %4725 = vmatprep.mubr.f32.mxu0 0.0
        %4726 = vmatmul.mubr.f32.gmra.mrb[0].mxu0 %v4184
        %v4727 = vpop.f32.mrb[0].mxu0
        %v4728 = vadd.f32 0.0, %v4727
        %v4729 = vpop.f32.mrb[0].mxu0
        %4730 = vmatprep.mubr.f32.mxu0 0.0
        %4731 = vmatmul.mubr.f32.gmra.mrb[0].mxu0 %v4187
        %v4732 = vpop.f32.mrb[0].mxu0
        %v4733 = vadd.f32 0.0, %v4732
        %v4734 = vpop.f32.mrb[0].mxu0
        %4735 = vmatprep.mubr.f32.mxu0 0.0
        %4736 = vmatmul.mubr.f32.gmra.mrb[0].mxu0 %v4190
        %v4737 = vpop.f32.mrb[0].mxu0
        %v4738 = vadd.f32 0.0, %v4737
        %v4739 = vpop.f32.mrb[0].mxu0
        %4740 = vmatprep.mubr.f32.mxu0 0.0
        %4741 = vmatmul.mubr.f32.gmra.mrb[0].mxu0 %v4193
        %v4742 = vpop.f32.mrb[0].mxu0
        %v4743 = vadd.f32 0.0, %v4742
        %v4744 = vpop.f32.mrb[0].mxu0
        %4745 = vmatprep.mubr.f32.mxu0 0.0
        %4746 = vmatmul.mubr.f32.gmra.mrb[0].mxu0 %v4196
        %v4747 = vpop.f32.mrb[0].mxu0
        %v4748 = vadd.f32 0.0, %v4747
        %v4749 = vpop.f32.mrb[0].mxu0
        %4750 = vmatprep.mubr.f32.mxu0 0.0
        %4751 = vmatmul.mubr.f32.gmra.mrb[0].mxu0 %v4199
        %v4752 = vpop.f32.mrb[0].mxu0
        %v4753 = vadd.f32 0.0, %v4752
        %v4754 = vpop.f32.mrb[0].mxu0
        %4755 = vmatprep.mubr.f32.mxu0 0.0
        %4756 = vmatmul.mubr.f32.gmra.mrb[0].mxu0 %v4202
        %v4757 = vpop.f32.mrb[0].mxu0
        %v4758 = vadd.f32 0.0, %v4757
        %v4759 = vpop.f32.mrb[0].mxu0
        %4760 = vmatprep.mubr.f32.mxu0 0.0
        %4761 = vmatmul.mubr.f32.gmra.mrb[0].mxu0 %v4205
        %v4762 = vpop.f32.mrb[0].mxu0
        %v4763 = vadd.f32 0.0, %v4762
        %v4764 = vpop.f32.mrb[0].mxu0
        %4765 = vmatprep.mubr.f32.mxu0 0.0
        %4766 = vmatmul.mubr.f32.gmra.mrb[0].mxu0 %v4208
        %v4767 = vpop.f32.mrb[0].mxu0
        %v4768 = vadd.f32 0.0, %v4767
        %v4769 = vpop.f32.mrb[0].mxu0
        %4770 = vmatprep.mubr.f32.mxu0 0.0
        %4771 = vmatmul.mubr.f32.gmra.mrb[0].mxu0 %v4211
        %v4772 = vpop.f32.mrb[0].mxu0
        %v4773 = vadd.f32 0.0, %v4772
        %v4774 = vpop.f32.mrb[0].mxu0
        %4775 = vmatprep.mubr.f32.mxu0 0.0
        %4776 = vmatmul.mubr.f32.gmra.mrb[0].mxu0 %v4214
        %v4777 = vpop.f32.mrb[0].mxu0
        %v4778 = vadd.f32 0.0, %v4777
        %v4779 = vpop.f32.mrb[0].mxu0
        %4780 = vmatprep.mubr.f32.mxu0 0.0
        %4781 = vmatmul.mubr.f32.gmra.mrb[0].mxu0 %v4217
        %v4782 = vpop.f32.mrb[0].mxu0
        %v4783 = vadd.f32 0.0, %v4782
        %v4784 = vpop.f32.mrb[0].mxu0
        %4785 = vmatprep.mubr.f32.mxu0 0.0
        %4786 = vmatmul.mubr.f32.gmra.mrb[0].mxu0 %v4220
        %v4787 = vpop.f32.mrb[0].mxu0
        %v4788 = vadd.f32 0.0, %v4787
        %v4789 = vpop.f32.mrb[0].mxu0
        %4790 = vmatprep.mubr.f32.mxu0 0.0
        %4791 = vmatmul.mubr.f32.gmra.mrb[0].mxu0 %v4223
        %v4792 = vpop.f32.mrb[0].mxu0
        %v4793 = vadd.f32 0.0, %v4792
        %v4794 = vpop.f32.mrb[0].mxu0
        %4795 = vmatprep.mubr.f32.mxu0 0.0
        %4796 = vmatmul.mubr.f32.gmra.mrb[0].mxu0 %v4226
        %v4797 = vpop.f32.mrb[0].mxu0
        %v4798 = vadd.f32 0.0, %v4797
        %v4799 = vpop.f32.mrb[0].mxu0
        %4800 = vmatprep.mubr.f32.mxu0 0.0
        %4801 = vmatmul.mubr.f32.gmra.mrb[0].mxu0 %v4229
        %v4802 = vpop.f32.mrb[0].mxu0
        %v4803 = vadd.f32 0.0, %v4802
        %v4804 = vpop.f32.mrb[0].mxu0
        %4805 = vmatprep.mubr.f32.mxu0 0.0
        %4806 = vmatmul.mubr.f32.gmra.mrb[0].mxu0 %v4232
        %v4807 = vpop.f32.mrb[0].mxu0
        %v4808 = vadd.f32 0.0, %v4807
        %v4809 = vpop.f32.mrb[0].mxu0
        %4810 = vmatprep.mubr.f32.mxu0 0.0
        %4811 = vmatmul.mubr.f32.gmra.mrb[0].mxu0 %v4235
        %v4812 = vpop.f32.mrb[0].mxu0
        %v4813 = vadd.f32 0.0, %v4812
        %v4814 = vpop.f32.mrb[0].mxu0
        %4815 = vmatprep.mubr.f32.mxu0 0.0
        %4816 = vmatmul.mubr.f32.gmra.mrb[0].mxu0 %v4238
        %v4817 = vpop.f32.mrb[0].mxu0
        %v4818 = vadd.f32 0.0, %v4817
        %v4819 = vpop.f32.mrb[0].mxu0
        %4820 = vmatprep.mubr.f32.mxu0 0.0
        %4821 = vmatmul.mubr.f32.gmra.mrb[0].mxu0 %v4241
        %v4822 = vpop.f32.mrb[0].mxu0
        %v4823 = vadd.f32 0.0, %v4822
        %v4824 = vpop.f32.mrb[0].mxu0
        %4825 = vmatprep.mubr.f32.mxu0 0.0
        %4826 = vmatmul.mubr.f32.gmra.mrb[0].mxu0 %v4244
        %v4827 = vpop.f32.mrb[0].mxu0
        %v4828 = vadd.f32 0.0, %v4827
        %v4829 = vpop.f32.mrb[0].mxu0
        %4830 = vmatprep.mubr.f32.mxu0 0.0
        %4831 = vmatmul.mubr.f32.gmra.mrb[0].mxu0 %v4247
        %v4832 = vpop.f32.mrb[0].mxu0
        %v4833 = vadd.f32 0.0, %v4832
        %v4834 = vpop.f32.mrb[0].mxu0
        %4835 = vmatprep.mubr.f32.mxu0 0.0
        %4836 = vmatmul.mubr.f32.gmra.mrb[0].mxu0 %v4250
        %v4837 = vpop.f32.mrb[0].mxu0
        %v4838 = vadd.f32 0.0, %v4837
        %v4839 = vpop.f32.mrb[0].mxu0
        %4840 = vmatprep.mubr.f32.mxu0 0.0
        %4841 = vmatmul.mubr.f32.gmra.mrb[0].mxu0 %v4253
        %v4842 = vpop.f32.mrb[0].mxu0
        %v4843 = vadd.f32 0.0, %v4842
        %v4844 = vpop.f32.mrb[0].mxu0
        %4845 = vmatprep.mubr.f32.mxu0 0.0
        %4846 = vmatmul.mubr.f32.gmra.mrb[0].mxu0 %v4256
        %v4847 = vpop.f32.mrb[0].mxu0
        %v4848 = vadd.f32 0.0, %v4847
        %v4849 = vpop.f32.mrb[0].mxu0
        %4850 = vmatprep.mubr.f32.mxu0 0.0
        %4851 = vmatmul.mubr.f32.gmra.mrb[0].mxu0 %v4259
        %v4852 = vpop.f32.mrb[0].mxu0
        %v4853 = vadd.f32 0.0, %v4852
        %v4854 = vpop.f32.mrb[0].mxu0
        %4855 = vmatprep.mubr.f32.mxu0 0.0
        %4856 = vmatmul.mubr.f32.gmra.mrb[0].mxu0 %v4262
        %v4857 = vpop.f32.mrb[0].mxu0
        %v4858 = vadd.f32 0.0, %v4857
        %v4859 = vpop.f32.mrb[0].mxu0
        %4860 = vmatprep.mubr.f32.mxu0 0.0
        %4861 = vmatmul.mubr.f32.gmra.mrb[0].mxu0 %v4265
        %v4862 = vpop.f32.mrb[0].mxu0
        %v4863 = vadd.f32 0.0, %v4862
        %v4864 = vpop.f32.mrb[0].mxu0
        %4865 = vmatprep.mubr.f32.mxu0 0.0
        %4866 = vmatmul.mubr.f32.gmra.mrb[0].mxu0 %v4268
        %v4867 = vpop.f32.mrb[0].mxu0
        %v4868 = vadd.f32 0.0, %v4867
        %v4869 = vpop.f32.mrb[0].mxu0
        %4870 = vmatprep.mubr.f32.mxu0 0.0
        %4871 = vmatmul.mubr.f32.gmra.mrb[0].mxu0 %v4271
        %v4872 = vpop.f32.mrb[0].mxu0
        %v4873 = vadd.f32 0.0, %v4872
        %v4874 = vpop.f32.mrb[0].mxu0
        %4875 = vmatprep.mubr.f32.mxu0 0.0
        %4876 = vmatmul.mubr.f32.gmra.mrb[0].mxu0 %v4274
        %v4877 = vpop.f32.mrb[0].mxu0
        %v4878 = vadd.f32 0.0, %v4877
        %v4879 = vpop.f32.mrb[0].mxu0
        %4880 = vmatprep.mubr.f32.mxu0 0.0
        %4881 = vmatmul.mubr.f32.gmra.mrb[0].mxu0 %v4277
        %v4882 = vpop.f32.mrb[0].mxu0
        %v4883 = vadd.f32 0.0, %v4882
        %v4884 = vpop.f32.mrb[0].mxu0
        %4885 = vmatprep.mubr.f32.mxu0 0.0
        %4886 = vmatmul.mubr.f32.gmra.mrb[0].mxu0 %v4280
        %v4887 = vpop.f32.mrb[0].mxu0
        %v4888 = vadd.f32 0.0, %v4887
        %v4889 = vpop.f32.mrb[0].mxu0
        %4890 = vmatprep.mubr.f32.mxu0 0.0
        %4891 = vmatmul.mubr.f32.gmra.mrb[0].mxu0 %v4283
        %v4892 = vpop.f32.mrb[0].mxu0
        %v4893 = vadd.f32 0.0, %v4892
        %v4894 = vpop.f32.mrb[0].mxu0
        %4895 = vmatprep.mubr.f32.mxu0 0.0
        %4896 = vmatmul.mubr.f32.gmra.mrb[0].mxu0 %v4286
        %v4897 = vpop.f32.mrb[0].mxu0
        %v4898 = vadd.f32 0.0, %v4897
        %v4899 = vpop.f32.mrb[0].mxu0
        %4900 = vmatprep.mubr.f32.mxu0 0.0
        %4901 = vmatmul.mubr.f32.gmra.mrb[0].mxu0 %v4289
        %v4902 = vpop.f32.mrb[0].mxu0
        %v4903 = vadd.f32 0.0, %v4902
        %v4904 = vpop.f32.mrb[0].mxu0
        %4905 = vmatprep.mubr.f32.mxu0 0.0
        %4906 = vmatmul.mubr.f32.gmra.mrb[0].mxu0 %v4292
        %v4907 = vpop.f32.mrb[0].mxu0
        %v4908 = vadd.f32 0.0, %v4907
        %v4909 = vpop.f32.mrb[0].mxu0
        %4910 = vmatprep.mubr.f32.mxu0 0.0
        %4911 = vmatmul.mubr.f32.gmra.mrb[0].mxu0 %v4295
        %v4912 = vpop.f32.mrb[0].mxu0
        %v4913 = vadd.f32 0.0, %v4912
        %v4914 = vpop.f32.mrb[0].mxu0
        %4915 = vmatprep.mubr.f32.mxu0 0.0
        %4916 = vmatmul.mubr.f32.gmra.mrb[0].mxu0 %v4298
        %v4917 = vpop.f32.mrb[0].mxu0
        %v4918 = vadd.f32 0.0, %v4917
        %v4919 = vpop.f32.mrb[0].mxu0
        %4920 = vmatprep.mubr.f32.mxu0 0.0
        %4921 = vmatmul.mubr.f32.gmra.mrb[0].mxu0 %v4301
        %v4922 = vpop.f32.mrb[0].mxu0
        %v4923 = vadd.f32 0.0, %v4922
        %v4924 = vpop.f32.mrb[0].mxu0
        %4925 = vmatprep.mubr.f32.mxu0 0.0
        %4926 = vmatmul.mubr.f32.gmra.mrb[0].mxu0 %v4304
        %v4927 = vpop.f32.mrb[0].mxu0
        %v4928 = vadd.f32 0.0, %v4927
        %v4929 = vpop.f32.mrb[0].mxu0
        %4930 = vmatprep.mubr.f32.mxu0 0.0
        %4931 = vmatmul.mubr.f32.gmra.mrb[0].mxu0 %v4307
        %v4932 = vpop.f32.mrb[0].mxu0
        %v4933 = vadd.f32 0.0, %v4932
        %v4934 = vpop.f32.mrb[0].mxu0
        %4935 = vmatprep.mubr.f32.mxu0 0.0
        %4936 = vmatmul.mubr.f32.gmra.mrb[0].mxu0 %v4310
        %v4937 = vpop.f32.mrb[0].mxu0
        %v4938 = vadd.f32 0.0, %v4937
        %v4939 = vpop.f32.mrb[0].mxu0
        %4940 = vmatprep.mubr.f32.mxu0 0.0
        %4941 = vmatmul.mubr.f32.gmra.mrb[0].mxu0 %v4313
        %v4942 = vpop.f32.mrb[0].mxu0
        %v4943 = vadd.f32 0.0, %v4942
        %v4944 = vpop.f32.mrb[0].mxu0
        %4945 = vmatprep.mubr.f32.mxu0 0.0
        %4946 = vmatmul.mubr.f32.gmra.mrb[0].mxu0 %v4316
        %v4947 = vpop.f32.mrb[0].mxu0
        %v4948 = vadd.f32 0.0, %v4947
        %v4949 = vpop.f32.mrb[0].mxu0
        %4950 = vmatprep.mubr.f32.mxu0 0.0
        %4951 = vmatmul.mubr.f32.gmra.mrb[0].mxu0 %v4319
        %v4952 = vpop.f32.mrb[0].mxu0
        %v4953 = vadd.f32 0.0, %v4952
        %v4954 = vpop.f32.mrb[0].mxu0
        %4955 = vmatprep.mubr.f32.mxu0 0.0
        %4956 = vmatmul.mubr.f32.gmra.mrb[0].mxu0 %v4322
        %v4957 = vpop.f32.mrb[0].mxu0
        %v4958 = vadd.f32 0.0, %v4957
        %v4959 = vpop.f32.mrb[0].mxu0
        %4960 = vmatprep.mubr.f32.mxu0 0.0
        %4961 = vmatmul.mubr.f32.gmra.mrb[0].mxu0 %v4325
        %v4962 = vpop.f32.mrb[0].mxu0
        %v4963 = vadd.f32 0.0, %v4962
        %v4964 = vpop.f32.mrb[0].mxu0
        %4965 = vmatprep.mubr.f32.mxu0 0.0
        %4966 = vmatmul.mubr.f32.gmra.mrb[0].mxu0 %v4328
        %v4967 = vpop.f32.mrb[0].mxu0
        %v4968 = vadd.f32 0.0, %v4967
        %v4969 = vpop.f32.mrb[0].mxu0
        %4970 = vmatprep.mubr.f32.mxu0 0.0
        %4971 = vmatmul.mubr.f32.gmra.mrb[0].mxu0 %v4331
        %v4972 = vpop.f32.mrb[0].mxu0
        %v4973 = vadd.f32 0.0, %v4972
        %v4974 = vpop.f32.mrb[0].mxu0
        %4975 = vmatprep.mubr.f32.mxu0 0.0
        %4976 = vmatmul.mubr.f32.gmra.mrb[0].mxu0 %v4334
        %v4977 = vpop.f32.mrb[0].mxu0
        %v4978 = vadd.f32 0.0, %v4977
        %v4979 = vpop.f32.mrb[0].mxu0
        %4980 = vmatprep.mubr.f32.mxu0 0.0
        %4981 = vmatmul.mubr.f32.gmra.mrb[0].mxu0 %v4337
        %v4982 = vpop.f32.mrb[0].mxu0
        %v4983 = vadd.f32 0.0, %v4982
        %v4984 = vpop.f32.mrb[0].mxu0
        %4985 = vmatprep.mubr.f32.mxu0 0.0
        %4986 = vmatmul.mubr.f32.gmra.mrb[0].mxu0 %v4340
        %v4987 = vpop.f32.mrb[0].mxu0
        %v4988 = vadd.f32 0.0, %v4987
        %v4989 = vpop.f32.mrb[0].mxu0
        %4990 = vmatprep.mubr.f32.mxu0 0.0
        %4991 = vmatmul.mubr.f32.gmra.mrb[0].mxu0 %v4343
        %v4992 = vpop.f32.mrb[0].mxu0
        %v4993 = vadd.f32 0.0, %v4992
        %v4994 = vpop.f32.mrb[0].mxu0
        %4995 = vmatprep.mubr.f32.mxu0 0.0
        %4996 = vmatmul.mubr.f32.gmra.mrb[0].mxu0 %v4346
        %v4997 = vpop.f32.mrb[0].mxu0
        %v4998 = vadd.f32 0.0, %v4997
        %v4999 = vpop.f32.mrb[0].mxu0
        %5000 = vmatprep.mubr.f32.mxu0 0.0
        %5001 = vmatmul.mubr.f32.gmra.mrb[0].mxu0 %v4349
        %v5002 = vpop.f32.mrb[0].mxu0
        %v5003 = vadd.f32 0.0, %v5002
        %v5004 = vpop.f32.mrb[0].mxu0
        %5005 = vmatprep.mubr.f32.mxu0 0.0
        %5006 = vmatmul.mubr.f32.gmra.mrb[0].mxu0 %v4352
        %v5007 = vpop.f32.mrb[0].mxu0
        %v5008 = vadd.f32 0.0, %v5007
        %v5009 = vpop.f32.mrb[0].mxu0
        %5010 = vmatprep.mubr.f32.mxu0 0.0
        %5011 = vmatmul.mubr.f32.gmra.mrb[0].mxu0 %v4355
        %v5012 = vpop.f32.mrb[0].mxu0
        %v5013 = vadd.f32 0.0, %v5012
        %v5014 = vpop.f32.mrb[0].mxu0
        %5015 = vmatprep.mubr.f32.mxu0 0.0
        %5016 = vmatmul.mubr.f32.gmra.mrb[0].mxu0 %v4358
        %v5017 = vpop.f32.mrb[0].mxu0
        %v5018 = vadd.f32 0.0, %v5017
        %v5019 = vpop.f32.mrb[0].mxu0
        %5020 = vmatprep.mubr.f32.mxu0 0.0
        %5021 = vmatmul.mubr.f32.gmra.mrb[0].mxu0 %v4361
        %v5022 = vpop.f32.mrb[0].mxu0
        %v5023 = vadd.f32 0.0, %v5022
        %v5024 = vpop.f32.mrb[0].mxu0
        %5025 = vmatprep.mubr.f32.mxu0 0.0
        %5026 = vmatmul.mubr.f32.gmra.mrb[0].mxu0 %v4364
        %v5027 = vpop.f32.mrb[0].mxu0
        %v5028 = vadd.f32 0.0, %v5027
        %v5029 = vpop.f32.mrb[0].mxu0
        %5030 = vmatprep.mubr.f32.mxu0 0.0
        %5031 = vmatmul.mubr.f32.gmra.mrb[0].mxu0 %v4367
        %v5032 = vpop.f32.mrb[0].mxu0
        %v5033 = vadd.f32 0.0, %v5032
        %v5034 = vpop.f32.mrb[0].mxu0
        %5035 = vmatprep.mubr.f32.mxu0 0.0
        %5036 = vmatmul.mubr.f32.gmra.mrb[0].mxu0 %v4370
        %v5037 = vpop.f32.mrb[0].mxu0
        %v5038 = vadd.f32 0.0, %v5037
        %v5039 = vpop.f32.mrb[0].mxu0
        %5040 = vmatprep.mubr.f32.mxu0 0.0
        %5041 = vmatmul.mubr.f32.gmra.mrb[0].mxu0 %v4373
        %v5042 = vpop.f32.mrb[0].mxu0
        %v5043 = vadd.f32 0.0, %v5042
        %v5044 = vpop.f32.mrb[0].mxu0
        %5045 = vmatprep.mubr.f32.mxu0 0.0
        %5046 = vmatmul.mubr.f32.gmra.mrb[0].mxu0 %v4376
        %v5047 = vpop.f32.mrb[0].mxu0
        %v5048 = vadd.f32 0.0, %v5047
        %v5049 = vpop.f32.mrb[0].mxu0
        %5050 = vmatprep.mubr.f32.mxu0 0.0
        %5051 = vmatmul.mubr.f32.gmra.mrb[0].mxu0 %v4379
        %v5052 = vpop.f32.mrb[0].mxu0
        %v5053 = vadd.f32 0.0, %v5052
        %v5054 = vpop.f32.mrb[0].mxu0
        %5055 = vmatprep.mubr.f32.mxu0 0.0
        %5056 = vmatmul.mubr.f32.gmra.mrb[0].mxu0 %v4382
        %v5057 = vpop.f32.mrb[0].mxu0
        %v5058 = vadd.f32 0.0, %v5057
        %v5059 = vpop.f32.mrb[0].mxu0
        %5060 = vmatprep.mubr.f32.mxu0 0.0
        %5061 = vmatmul.mubr.f32.gmra.mrb[0].mxu0 %v4385
        %v5062 = vpop.f32.mrb[0].mxu0
        %v5063 = vadd.f32 0.0, %v5062
        %v5064 = vpop.f32.mrb[0].mxu0
        %5065 = vmatprep.mubr.f32.mxu0 0.0
        %5066 = vmatmul.mubr.f32.gmra.mrb[0].mxu0 %v4388
        %v5067 = vpop.f32.mrb[0].mxu0
        %v5068 = vadd.f32 0.0, %v5067
        %v5069 = vpop.f32.mrb[0].mxu0
        %5070 = vmatprep.mubr.f32.mxu0 0.0
        %5071 = vmatmul.mubr.f32.gmra.mrb[0].mxu0 %v4391
        %v5072 = vpop.f32.mrb[0].mxu0
        %v5073 = vadd.f32 0.0, %v5072
        %v5074 = vpop.f32.mrb[0].mxu0
        %5075 = vmatprep.mubr.f32.mxu0 0.0
        %5076 = vmatmul.mubr.f32.gmra.mrb[0].mxu0 %v4394
        %v5077 = vpop.f32.mrb[0].mxu0
        %v5078 = vadd.f32 0.0, %v5077
        %v5079 = vpop.f32.mrb[0].mxu0
        %5080 = vmatprep.mubr.f32.mxu0 0.0
        %5081 = vmatmul.mubr.f32.gmra.mrb[0].mxu0 %v4397
        %v5082 = vpop.f32.mrb[0].mxu0
        %v5083 = vadd.f32 0.0, %v5082
        %v5084 = vpop.f32.mrb[0].mxu0
        %5085 = vmatprep.mubr.f32.mxu0 0.0
        %5086 = vmatmul.mubr.f32.gmra.mrb[0].mxu0 %v4400
        %v5087 = vpop.f32.mrb[0].mxu0
        %v5088 = vadd.f32 0.0, %v5087
        %v5089 = vpop.f32.mrb[0].mxu0
        %5090 = vmatprep.mubr.f32.mxu0 0.0
        %5091 = vmatmul.mubr.f32.gmra.mrb[0].mxu0 %v4403
        %v5092 = vpop.f32.mrb[0].mxu0
        %v5093 = vadd.f32 0.0, %v5092
        %v5094 = vpop.f32.mrb[0].mxu0
        %5095 = vmatprep.mubr.f32.mxu0 0.0
        %5096 = vmatmul.mubr.f32.gmra.mrb[0].mxu0 %v4406
        %v5097 = vpop.f32.mrb[0].mxu0
        %v5098 = vadd.f32 0.0, %v5097
        %v5099 = vpop.f32.mrb[0].mxu0
        %5100 = vmatprep.mubr.f32.mxu0 0.0
        %5101 = vmatmul.mubr.f32.gmra.mrb[0].mxu0 %v4409
        %v5102 = vpop.f32.mrb[0].mxu0
        %v5103 = vadd.f32 0.0, %v5102
        %v5104 = vpop.f32.mrb[0].mxu0
        %5105 = vmatprep.mubr.f32.mxu0 0.0
        %5106 = vmatmul.mubr.f32.gmra.mrb[0].mxu0 %v4412
        %v5107 = vpop.f32.mrb[0].mxu0
        %v5108 = vadd.f32 0.0, %v5107
        %v5109 = vpop.f32.mrb[0].mxu0
        %5110 = vmatprep.mubr.f32.mxu0 0.0
        %5111 = vmatmul.mubr.f32.gmra.mrb[0].mxu0 %v4415
        %v5112 = vpop.f32.mrb[0].mxu0
        %v5113 = vadd.f32 0.0, %v5112
        %v5114 = vpop.f32.mrb[0].mxu0
        %5115 = vmatprep.mubr.f32.mxu0 0.0
        %5116 = vmatmul.mubr.f32.gmra.mrb[0].mxu0 %v4418
        %v5117 = vpop.f32.mrb[0].mxu0
        %v5118 = vadd.f32 0.0, %v5117
        %v5119 = vpop.f32.mrb[0].mxu0
        %5120 = vmatprep.mubr.f32.mxu0 0.0
        %5121 = vmatmul.mubr.f32.gmra.mrb[0].mxu0 %v4421
        %v5122 = vpop.f32.mrb[0].mxu0
        %v5123 = vadd.f32 0.0, %v5122
        %v5124 = vpop.f32.mrb[0].mxu0
        %5125 = vmatprep.mubr.f32.mxu0 0.0
        %5126 = vmatmul.mubr.f32.gmra.mrb[0].mxu0 %v4424
        %v5127 = vpop.f32.mrb[0].mxu0
        %v5128 = vadd.f32 0.0, %v5127
        %v5129 = vpop.f32.mrb[0].mxu0
        %5130 = vdwg.mxu0
        %v5132 = vsel %vm4041, %v1983, 0
        %v5135 = vsel %vm4041, %v1984, 0
        %v5138 = vsel %vm4041, %v1985, 0
        %v5141 = vsel %vm4041, %v1986, 0
        %v5144 = vsel %vm4041, %v1987, 0
        %v5147 = vsel %vm4041, %v1988, 0
        %v5150 = vsel %vm4041, %v1989, 0
        %v5153 = vsel %vm4041, %v1990, 0
        %v5156 = vsel %vm4041, %v1991, 0
        %v5159 = vsel %vm4041, %v1992, 0
        %v5162 = vsel %vm4041, %v1993, 0
        %v5165 = vsel %vm4041, %v1994, 0
        %v5168 = vsel %vm4041, %v1995, 0
        %v5171 = vsel %vm4041, %v1996, 0
        %v5174 = vsel %vm4041, %v1997, 0
        %v5177 = vsel %vm4041, %v1998, 0
        %v5180 = vsel %vm4041, %v1999, 0
        %v5183 = vsel %vm4041, %v2000, 0
        %v5186 = vsel %vm4041, %v2001, 0
        %v5189 = vsel %vm4041, %v2002, 0
        %v5192 = vsel %vm4041, %v2003, 0
        %v5195 = vsel %vm4041, %v2004, 0
        %v5198 = vsel %vm4041, %v2005, 0
        %v5201 = vsel %vm4041, %v2006, 0
        %v5204 = vsel %vm4041, %v2007, 0
        %v5207 = vsel %vm4041, %v2008, 0
        %v5210 = vsel %vm4041, %v2009, 0
        %v5213 = vsel %vm4041, %v2010, 0
        %v5216 = vsel %vm4041, %v2011, 0
        %v5219 = vsel %vm4041, %v2012, 0
        %v5222 = vsel %vm4041, %v2013, 0
        %v5225 = vsel %vm4041, %v2014, 0
        %v5228 = vsel %vm4041, %v2015, 0
        %v5231 = vsel %vm4041, %v2016, 0
        %v5234 = vsel %vm4041, %v2017, 0
        %v5237 = vsel %vm4041, %v2018, 0
        %v5240 = vsel %vm4041, %v2019, 0
        %v5243 = vsel %vm4041, %v2020, 0
        %v5246 = vsel %vm4041, %v2021, 0
        %v5249 = vsel %vm4041, %v2022, 0
        %v5252 = vsel %vm4041, %v2023, 0
        %v5255 = vsel %vm4041, %v2024, 0
        %v5258 = vsel %vm4041, %v2025, 0
        %v5261 = vsel %vm4041, %v2026, 0
        %v5264 = vsel %vm4041, %v2027, 0
        %v5267 = vsel %vm4041, %v2028, 0
        %v5270 = vsel %vm4041, %v2029, 0
        %v5273 = vsel %vm4041, %v2030, 0
        %v5276 = vsel %vm4041, %v2031, 0
        %v5279 = vsel %vm4041, %v2032, 0
        %v5282 = vsel %vm4041, %v2033, 0
        %v5285 = vsel %vm4041, %v2034, 0
        %v5288 = vsel %vm4041, %v2035, 0
        %v5291 = vsel %vm4041, %v2036, 0
        %v5294 = vsel %vm4041, %v2037, 0
        %v5297 = vsel %vm4041, %v2038, 0
        %v5300 = vsel %vm4041, %v2039, 0
        %v5303 = vsel %vm4041, %v2040, 0
        %v5306 = vsel %vm4041, %v2041, 0
        %v5309 = vsel %vm4041, %v2042, 0
        %v5312 = vsel %vm4041, %v2043, 0
        %v5315 = vsel %vm4041, %v2044, 0
        %v5318 = vsel %vm4041, %v2045, 0
        %v5321 = vsel %vm4041, %v2046, 0
        %v5324 = vsel %vm4041, %v2047, 0
        %v5327 = vsel %vm4041, %v2048, 0
        %v5330 = vsel %vm4041, %v2049, 0
        %v5333 = vsel %vm4041, %v2050, 0
        %v5336 = vsel %vm4041, %v2051, 0
        %v5339 = vsel %vm4041, %v2052, 0
        %v5342 = vsel %vm4041, %v2053, 0
        %v5345 = vsel %vm4041, %v2054, 0
        %v5348 = vsel %vm4041, %v2055, 0
        %v5351 = vsel %vm4041, %v2056, 0
        %v5354 = vsel %vm4041, %v2057, 0
        %v5357 = vsel %vm4041, %v2058, 0
        %v5360 = vsel %vm4041, %v2059, 0
        %v5363 = vsel %vm4041, %v2060, 0
        %v5366 = vsel %vm4041, %v2061, 0
        %v5369 = vsel %vm4041, %v2062, 0
        %v5372 = vsel %vm4041, %v2063, 0
        %v5375 = vsel %vm4041, %v2064, 0
        %v5378 = vsel %vm4041, %v2065, 0
        %v5381 = vsel %vm4041, %v2066, 0
        %v5384 = vsel %vm4041, %v2067, 0
        %v5387 = vsel %vm4041, %v2068, 0
        %v5390 = vsel %vm4041, %v2069, 0
        %v5393 = vsel %vm4041, %v2070, 0
        %v5396 = vsel %vm4041, %v2071, 0
        %v5399 = vsel %vm4041, %v2072, 0
        %v5402 = vsel %vm4041, %v2073, 0
        %v5405 = vsel %vm4041, %v2074, 0
        %v5408 = vsel %vm4041, %v2075, 0
        %v5411 = vsel %vm4041, %v2076, 0
        %v5414 = vsel %vm4041, %v2077, 0
        %v5417 = vsel %vm4041, %v2078, 0
        %v5420 = vsel %vm4041, %v2079, 0
        %v5423 = vsel %vm4041, %v2080, 0
        %v5426 = vsel %vm4041, %v2081, 0
        %v5429 = vsel %vm4041, %v2082, 0
        %v5432 = vsel %vm4041, %v2083, 0
        %v5435 = vsel %vm4041, %v2084, 0
        %v5438 = vsel %vm4041, %v2085, 0
        %v5441 = vsel %vm4041, %v2086, 0
        %v5444 = vsel %vm4041, %v2087, 0
        %v5447 = vsel %vm4041, %v2088, 0
        %v5450 = vsel %vm4041, %v2089, 0
        %v5453 = vsel %vm4041, %v2090, 0
        %v5456 = vsel %vm4041, %v2091, 0
        %v5459 = vsel %vm4041, %v2092, 0
        %v5462 = vsel %vm4041, %v2093, 0
        %v5465 = vsel %vm4041, %v2094, 0
        %v5468 = vsel %vm4041, %v2095, 0
        %v5471 = vsel %vm4041, %v2096, 0
        %v5474 = vsel %vm4041, %v2097, 0
        %v5477 = vsel %vm4041, %v2098, 0
        %v5480 = vsel %vm4041, %v2099, 0
        %v5483 = vsel %vm4041, %v2100, 0
        %v5486 = vsel %vm4041, %v2101, 0
        %v5489 = vsel %vm4041, %v2102, 0
        %v5492 = vsel %vm4041, %v2103, 0
        %v5495 = vsel %vm4041, %v2104, 0
        %v5498 = vsel %vm4041, %v2105, 0
        %v5501 = vsel %vm4041, %v2106, 0
        %v5504 = vsel %vm4041, %v2107, 0
        %v5507 = vsel %vm4041, %v2108, 0
        %v5510 = vsel %vm4041, %v2109, 0
        %v5513 = vsel %vm4041, %v2110, 0
        %5515 = vmatprep.subr.mxu0 0.0
        %5516 = vmatpush1.msra.mxu0 %v2111
        %5517 = vmatprep.subr.mxu0 0.0
        %5518 = vmatpush1.msra.mxu0 %v2112
        %5519 = vmatprep.subr.mxu0 0.0
        %5520 = vmatpush1.msra.mxu0 %v2113
        %5521 = vmatprep.subr.mxu0 0.0
        %5522 = vmatpush1.msra.mxu0 0.0
        %5523 = vmatprep.subr.mxu0 0.0
        %5524 = vmatpush1.msra.mxu0 0.0
        %5525 = vmatprep.subr.mxu0 0.0
        %5526 = vmatpush1.msra.mxu0 0.0
        %5527 = vmatprep.subr.mxu0 0.0
        %5528 = vmatpush1.msra.mxu0 0.0
        %5529 = vmatprep.subr.mxu0 0.0
        %5530 = vmatpush1.msra.mxu0 0.0
        %5531 = vmatprep.subr.mxu0 0.0
        %5532 = vmatpush1.msra.mxu0 0.0
        %5533 = vmatprep.subr.mxu0 0.0
        %5534 = vmatpush1.msra.mxu0 0.0
        %5535 = vmatprep.subr.mxu0 0.0
        %5536 = vmatpush1.msra.mxu0 0.0
        %5537 = vmatprep.subr.mxu0 0.0
        %5538 = vmatpush1.msra.mxu0 0.0
        %5539 = vmatprep.subr.mxu0 0.0
        %5540 = vmatpush1.msra.mxu0 0.0
        %5541 = vmatprep.subr.mxu0 0.0
        %5542 = vmatpush1.msra.mxu0 0.0
        %5543 = vmatprep.subr.mxu0 0.0
        %5544 = vmatpush1.msra.mxu0 0.0
        %5545 = vmatprep.subr.mxu0 0.0
        %5546 = vmatpush1.msra.mxu0 0.0
        %5547 = vmatprep.subr.mxu0 0.0
        %5548 = vmatpush1.msra.mxu0 0.0
        %5549 = vmatprep.subr.mxu0 0.0
        %5550 = vmatpush1.msra.mxu0 0.0
        %5551 = vmatprep.subr.mxu0 0.0
        %5552 = vmatpush1.msra.mxu0 0.0
        %5553 = vmatprep.subr.mxu0 0.0
        %5554 = vmatpush1.msra.mxu0 0.0
        %5555 = vmatprep.subr.mxu0 0.0
        %5556 = vmatpush1.msra.mxu0 0.0
        %5557 = vmatprep.subr.mxu0 0.0
        %5558 = vmatpush1.msra.mxu0 0.0
        %5559 = vmatprep.subr.mxu0 0.0
        %5560 = vmatpush1.msra.mxu0 0.0
        %5561 = vmatprep.subr.mxu0 0.0
        %5562 = vmatpush1.msra.mxu0 0.0
        %5563 = vmatprep.subr.mxu0 0.0
        %5564 = vmatpush1.msra.mxu0 0.0
        %5565 = vmatprep.subr.mxu0 0.0
        %5566 = vmatpush1.msra.mxu0 0.0
        %5567 = vmatprep.subr.mxu0 0.0
        %5568 = vmatpush1.msra.mxu0 0.0
        %5569 = vmatprep.subr.mxu0 0.0
        %5570 = vmatpush1.msra.mxu0 0.0
        %5571 = vmatprep.subr.mxu0 0.0
        %5572 = vmatpush1.msra.mxu0 0.0
        %5573 = vmatprep.subr.mxu0 0.0
        %5574 = vmatpush1.msra.mxu0 0.0
        %5575 = vmatprep.subr.mxu0 0.0
        %5576 = vmatpush1.msra.mxu0 0.0
        %5577 = vmatprep.subr.mxu0 0.0
        %5578 = vmatpush1.msra.mxu0 0.0
        %5579 = vmatprep.mubr.f32.mxu0 0.0
        %5580 = vmatmul.mubr.f32.gmra.mrb[0].mxu0 %v5132
        %v5581 = vpop.f32.mrb[0].mxu0
        %v5582 = vadd.f32 %v4493, %v5581
        %v5583 = vpop.f32.mrb[0].mxu0
        %5584 = vmatprep.mubr.f32.mxu0 0.0
        %5585 = vmatmul.mubr.f32.gmra.mrb[0].mxu0 %v5135
        %v5586 = vpop.f32.mrb[0].mxu0
        %v5587 = vadd.f32 %v4498, %v5586
        %v5588 = vpop.f32.mrb[0].mxu0
        %5589 = vmatprep.mubr.f32.mxu0 0.0
        %5590 = vmatmul.mubr.f32.gmra.mrb[0].mxu0 %v5138
        %v5591 = vpop.f32.mrb[0].mxu0
        %v5592 = vadd.f32 %v4503, %v5591
        %v5593 = vpop.f32.mrb[0].mxu0
        %5594 = vmatprep.mubr.f32.mxu0 0.0
        %5595 = vmatmul.mubr.f32.gmra.mrb[0].mxu0 %v5141
        %v5596 = vpop.f32.mrb[0].mxu0
        %v5597 = vadd.f32 %v4508, %v5596
        %v5598 = vpop.f32.mrb[0].mxu0
        %5599 = vmatprep.mubr.f32.mxu0 0.0
        %5600 = vmatmul.mubr.f32.gmra.mrb[0].mxu0 %v5144
        %v5601 = vpop.f32.mrb[0].mxu0
        %v5602 = vadd.f32 %v4513, %v5601
        %v5603 = vpop.f32.mrb[0].mxu0
        %5604 = vmatprep.mubr.f32.mxu0 0.0
        %5605 = vmatmul.mubr.f32.gmra.mrb[0].mxu0 %v5147
        %v5606 = vpop.f32.mrb[0].mxu0
        %v5607 = vadd.f32 %v4518, %v5606
        %v5608 = vpop.f32.mrb[0].mxu0
        %5609 = vmatprep.mubr.f32.mxu0 0.0
        %5610 = vmatmul.mubr.f32.gmra.mrb[0].mxu0 %v5150
        %v5611 = vpop.f32.mrb[0].mxu0
        %v5612 = vadd.f32 %v4523, %v5611
        %v5613 = vpop.f32.mrb[0].mxu0
        %5614 = vmatprep.mubr.f32.mxu0 0.0
        %5615 = vmatmul.mubr.f32.gmra.mrb[0].mxu0 %v5153
        %v5616 = vpop.f32.mrb[0].mxu0
        %v5617 = vadd.f32 %v4528, %v5616
        %v5618 = vpop.f32.mrb[0].mxu0
        %5619 = vmatprep.mubr.f32.mxu0 0.0
        %5620 = vmatmul.mubr.f32.gmra.mrb[0].mxu0 %v5156
        %v5621 = vpop.f32.mrb[0].mxu0
        %v5622 = vadd.f32 %v4533, %v5621
        %v5623 = vpop.f32.mrb[0].mxu0
        %5624 = vmatprep.mubr.f32.mxu0 0.0
        %5625 = vmatmul.mubr.f32.gmra.mrb[0].mxu0 %v5159
        %v5626 = vpop.f32.mrb[0].mxu0
        %v5627 = vadd.f32 %v4538, %v5626
        %v5628 = vpop.f32.mrb[0].mxu0
        %5629 = vmatprep.mubr.f32.mxu0 0.0
        %5630 = vmatmul.mubr.f32.gmra.mrb[0].mxu0 %v5162
        %v5631 = vpop.f32.mrb[0].mxu0
        %v5632 = vadd.f32 %v4543, %v5631
        %v5633 = vpop.f32.mrb[0].mxu0
        %5634 = vmatprep.mubr.f32.mxu0 0.0
        %5635 = vmatmul.mubr.f32.gmra.mrb[0].mxu0 %v5165
        %v5636 = vpop.f32.mrb[0].mxu0
        %v5637 = vadd.f32 %v4548, %v5636
        %v5638 = vpop.f32.mrb[0].mxu0
        %5639 = vmatprep.mubr.f32.mxu0 0.0
        %5640 = vmatmul.mubr.f32.gmra.mrb[0].mxu0 %v5168
        %v5641 = vpop.f32.mrb[0].mxu0
        %v5642 = vadd.f32 %v4553, %v5641
        %v5643 = vpop.f32.mrb[0].mxu0
        %5644 = vmatprep.mubr.f32.mxu0 0.0
        %5645 = vmatmul.mubr.f32.gmra.mrb[0].mxu0 %v5171
        %v5646 = vpop.f32.mrb[0].mxu0
        %v5647 = vadd.f32 %v4558, %v5646
        %v5648 = vpop.f32.mrb[0].mxu0
        %5649 = vmatprep.mubr.f32.mxu0 0.0
        %5650 = vmatmul.mubr.f32.gmra.mrb[0].mxu0 %v5174
        %v5651 = vpop.f32.mrb[0].mxu0
        %v5652 = vadd.f32 %v4563, %v5651
        %v5653 = vpop.f32.mrb[0].mxu0
        %5654 = vmatprep.mubr.f32.mxu0 0.0
        %5655 = vmatmul.mubr.f32.gmra.mrb[0].mxu0 %v5177
        %v5656 = vpop.f32.mrb[0].mxu0
        %v5657 = vadd.f32 %v4568, %v5656
        %v5658 = vpop.f32.mrb[0].mxu0
        %5659 = vmatprep.mubr.f32.mxu0 0.0
        %5660 = vmatmul.mubr.f32.gmra.mrb[0].mxu0 %v5180
        %v5661 = vpop.f32.mrb[0].mxu0
        %v5662 = vadd.f32 %v4573, %v5661
        %v5663 = vpop.f32.mrb[0].mxu0
        %5664 = vmatprep.mubr.f32.mxu0 0.0
        %5665 = vmatmul.mubr.f32.gmra.mrb[0].mxu0 %v5183
        %v5666 = vpop.f32.mrb[0].mxu0
        %v5667 = vadd.f32 %v4578, %v5666
        %v5668 = vpop.f32.mrb[0].mxu0
        %5669 = vmatprep.mubr.f32.mxu0 0.0
        %5670 = vmatmul.mubr.f32.gmra.mrb[0].mxu0 %v5186
        %v5671 = vpop.f32.mrb[0].mxu0
        %v5672 = vadd.f32 %v4583, %v5671
        %v5673 = vpop.f32.mrb[0].mxu0
        %5674 = vmatprep.mubr.f32.mxu0 0.0
        %5675 = vmatmul.mubr.f32.gmra.mrb[0].mxu0 %v5189
        %v5676 = vpop.f32.mrb[0].mxu0
        %v5677 = vadd.f32 %v4588, %v5676
        %v5678 = vpop.f32.mrb[0].mxu0
        %5679 = vmatprep.mubr.f32.mxu0 0.0
        %5680 = vmatmul.mubr.f32.gmra.mrb[0].mxu0 %v5192
        %v5681 = vpop.f32.mrb[0].mxu0
        %v5682 = vadd.f32 %v4593, %v5681
        %v5683 = vpop.f32.mrb[0].mxu0
        %5684 = vmatprep.mubr.f32.mxu0 0.0
        %5685 = vmatmul.mubr.f32.gmra.mrb[0].mxu0 %v5195
        %v5686 = vpop.f32.mrb[0].mxu0
        %v5687 = vadd.f32 %v4598, %v5686
        %v5688 = vpop.f32.mrb[0].mxu0
        %5689 = vmatprep.mubr.f32.mxu0 0.0
        %5690 = vmatmul.mubr.f32.gmra.mrb[0].mxu0 %v5198
        %v5691 = vpop.f32.mrb[0].mxu0
        %v5692 = vadd.f32 %v4603, %v5691
        %v5693 = vpop.f32.mrb[0].mxu0
        %5694 = vmatprep.mubr.f32.mxu0 0.0
        %5695 = vmatmul.mubr.f32.gmra.mrb[0].mxu0 %v5201
        %v5696 = vpop.f32.mrb[0].mxu0
        %v5697 = vadd.f32 %v4608, %v5696
        %v5698 = vpop.f32.mrb[0].mxu0
        %5699 = vmatprep.mubr.f32.mxu0 0.0
        %5700 = vmatmul.mubr.f32.gmra.mrb[0].mxu0 %v5204
        %v5701 = vpop.f32.mrb[0].mxu0
        %v5702 = vadd.f32 %v4613, %v5701
        %v5703 = vpop.f32.mrb[0].mxu0
        %5704 = vmatprep.mubr.f32.mxu0 0.0
        %5705 = vmatmul.mubr.f32.gmra.mrb[0].mxu0 %v5207
        %v5706 = vpop.f32.mrb[0].mxu0
        %v5707 = vadd.f32 %v4618, %v5706
        %v5708 = vpop.f32.mrb[0].mxu0
        %5709 = vmatprep.mubr.f32.mxu0 0.0
        %5710 = vmatmul.mubr.f32.gmra.mrb[0].mxu0 %v5210
        %v5711 = vpop.f32.mrb[0].mxu0
        %v5712 = vadd.f32 %v4623, %v5711
        %v5713 = vpop.f32.mrb[0].mxu0
        %5714 = vmatprep.mubr.f32.mxu0 0.0
        %5715 = vmatmul.mubr.f32.gmra.mrb[0].mxu0 %v5213
        %v5716 = vpop.f32.mrb[0].mxu0
        %v5717 = vadd.f32 %v4628, %v5716
        %v5718 = vpop.f32.mrb[0].mxu0
        %5719 = vmatprep.mubr.f32.mxu0 0.0
        %5720 = vmatmul.mubr.f32.gmra.mrb[0].mxu0 %v5216
        %v5721 = vpop.f32.mrb[0].mxu0
        %v5722 = vadd.f32 %v4633, %v5721
        %v5723 = vpop.f32.mrb[0].mxu0
        %5724 = vmatprep.mubr.f32.mxu0 0.0
        %5725 = vmatmul.mubr.f32.gmra.mrb[0].mxu0 %v5219
        %v5726 = vpop.f32.mrb[0].mxu0
        %v5727 = vadd.f32 %v4638, %v5726
        %v5728 = vpop.f32.mrb[0].mxu0
        %5729 = vmatprep.mubr.f32.mxu0 0.0
        %5730 = vmatmul.mubr.f32.gmra.mrb[0].mxu0 %v5222
        %v5731 = vpop.f32.mrb[0].mxu0
        %v5732 = vadd.f32 %v4643, %v5731
        %v5733 = vpop.f32.mrb[0].mxu0
        %5734 = vmatprep.mubr.f32.mxu0 0.0
        %5735 = vmatmul.mubr.f32.gmra.mrb[0].mxu0 %v5225
        %v5736 = vpop.f32.mrb[0].mxu0
        %v5737 = vadd.f32 %v4648, %v5736
        %v5738 = vpop.f32.mrb[0].mxu0
        %5739 = vmatprep.mubr.f32.mxu0 0.0
        %5740 = vmatmul.mubr.f32.gmra.mrb[0].mxu0 %v5228
        %v5741 = vpop.f32.mrb[0].mxu0
        %v5742 = vadd.f32 %v4653, %v5741
        %v5743 = vpop.f32.mrb[0].mxu0
        %5744 = vmatprep.mubr.f32.mxu0 0.0
        %5745 = vmatmul.mubr.f32.gmra.mrb[0].mxu0 %v5231
        %v5746 = vpop.f32.mrb[0].mxu0
        %v5747 = vadd.f32 %v4658, %v5746
        %v5748 = vpop.f32.mrb[0].mxu0
        %5749 = vmatprep.mubr.f32.mxu0 0.0
        %5750 = vmatmul.mubr.f32.gmra.mrb[0].mxu0 %v5234
        %v5751 = vpop.f32.mrb[0].mxu0
        %v5752 = vadd.f32 %v4663, %v5751
        %v5753 = vpop.f32.mrb[0].mxu0
        %5754 = vmatprep.mubr.f32.mxu0 0.0
        %5755 = vmatmul.mubr.f32.gmra.mrb[0].mxu0 %v5237
        %v5756 = vpop.f32.mrb[0].mxu0
        %v5757 = vadd.f32 %v4668, %v5756
        %v5758 = vpop.f32.mrb[0].mxu0
        %5759 = vmatprep.mubr.f32.mxu0 0.0
        %5760 = vmatmul.mubr.f32.gmra.mrb[0].mxu0 %v5240
        %v5761 = vpop.f32.mrb[0].mxu0
        %v5762 = vadd.f32 %v4673, %v5761
        %v5763 = vpop.f32.mrb[0].mxu0
        %5764 = vmatprep.mubr.f32.mxu0 0.0
        %5765 = vmatmul.mubr.f32.gmra.mrb[0].mxu0 %v5243
        %v5766 = vpop.f32.mrb[0].mxu0
        %v5767 = vadd.f32 %v4678, %v5766
        %v5768 = vpop.f32.mrb[0].mxu0
        %5769 = vmatprep.mubr.f32.mxu0 0.0
        %5770 = vmatmul.mubr.f32.gmra.mrb[0].mxu0 %v5246
        %v5771 = vpop.f32.mrb[0].mxu0
        %v5772 = vadd.f32 %v4683, %v5771
        %v5773 = vpop.f32.mrb[0].mxu0
        %5774 = vmatprep.mubr.f32.mxu0 0.0
        %5775 = vmatmul.mubr.f32.gmra.mrb[0].mxu0 %v5249
        %v5776 = vpop.f32.mrb[0].mxu0
        %v5777 = vadd.f32 %v4688, %v5776
        %v5778 = vpop.f32.mrb[0].mxu0
        %5779 = vmatprep.mubr.f32.mxu0 0.0
        %5780 = vmatmul.mubr.f32.gmra.mrb[0].mxu0 %v5252
        %v5781 = vpop.f32.mrb[0].mxu0
        %v5782 = vadd.f32 %v4693, %v5781
        %v5783 = vpop.f32.mrb[0].mxu0
        %5784 = vmatprep.mubr.f32.mxu0 0.0
        %5785 = vmatmul.mubr.f32.gmra.mrb[0].mxu0 %v5255
        %v5786 = vpop.f32.mrb[0].mxu0
        %v5787 = vadd.f32 %v4698, %v5786
        %v5788 = vpop.f32.mrb[0].mxu0
        %5789 = vmatprep.mubr.f32.mxu0 0.0
        %5790 = vmatmul.mubr.f32.gmra.mrb[0].mxu0 %v5258
        %v5791 = vpop.f32.mrb[0].mxu0
        %v5792 = vadd.f32 %v4703, %v5791
        %v5793 = vpop.f32.mrb[0].mxu0
        %5794 = vmatprep.mubr.f32.mxu0 0.0
        %5795 = vmatmul.mubr.f32.gmra.mrb[0].mxu0 %v5261
        %v5796 = vpop.f32.mrb[0].mxu0
        %v5797 = vadd.f32 %v4708, %v5796
        %v5798 = vpop.f32.mrb[0].mxu0
        %5799 = vmatprep.mubr.f32.mxu0 0.0
        %5800 = vmatmul.mubr.f32.gmra.mrb[0].mxu0 %v5264
        %v5801 = vpop.f32.mrb[0].mxu0
        %v5802 = vadd.f32 %v4713, %v5801
        %v5803 = vpop.f32.mrb[0].mxu0
        %5804 = vmatprep.mubr.f32.mxu0 0.0
        %5805 = vmatmul.mubr.f32.gmra.mrb[0].mxu0 %v5267
        %v5806 = vpop.f32.mrb[0].mxu0
        %v5807 = vadd.f32 %v4718, %v5806
        %v5808 = vpop.f32.mrb[0].mxu0
        %5809 = vmatprep.mubr.f32.mxu0 0.0
        %5810 = vmatmul.mubr.f32.gmra.mrb[0].mxu0 %v5270
        %v5811 = vpop.f32.mrb[0].mxu0
        %v5812 = vadd.f32 %v4723, %v5811
        %v5813 = vpop.f32.mrb[0].mxu0
        %5814 = vmatprep.mubr.f32.mxu0 0.0
        %5815 = vmatmul.mubr.f32.gmra.mrb[0].mxu0 %v5273
        %v5816 = vpop.f32.mrb[0].mxu0
        %v5817 = vadd.f32 %v4728, %v5816
        %v5818 = vpop.f32.mrb[0].mxu0
        %5819 = vmatprep.mubr.f32.mxu0 0.0
        %5820 = vmatmul.mubr.f32.gmra.mrb[0].mxu0 %v5276
        %v5821 = vpop.f32.mrb[0].mxu0
        %v5822 = vadd.f32 %v4733, %v5821
        %v5823 = vpop.f32.mrb[0].mxu0
        %5824 = vmatprep.mubr.f32.mxu0 0.0
        %5825 = vmatmul.mubr.f32.gmra.mrb[0].mxu0 %v5279
        %v5826 = vpop.f32.mrb[0].mxu0
        %v5827 = vadd.f32 %v4738, %v5826
        %v5828 = vpop.f32.mrb[0].mxu0
        %5829 = vmatprep.mubr.f32.mxu0 0.0
        %5830 = vmatmul.mubr.f32.gmra.mrb[0].mxu0 %v5282
        %v5831 = vpop.f32.mrb[0].mxu0
        %v5832 = vadd.f32 %v4743, %v5831
        %v5833 = vpop.f32.mrb[0].mxu0
        %5834 = vmatprep.mubr.f32.mxu0 0.0
        %5835 = vmatmul.mubr.f32.gmra.mrb[0].mxu0 %v5285
        %v5836 = vpop.f32.mrb[0].mxu0
        %v5837 = vadd.f32 %v4748, %v5836
        %v5838 = vpop.f32.mrb[0].mxu0
        %5839 = vmatprep.mubr.f32.mxu0 0.0
        %5840 = vmatmul.mubr.f32.gmra.mrb[0].mxu0 %v5288
        %v5841 = vpop.f32.mrb[0].mxu0
        %v5842 = vadd.f32 %v4753, %v5841
        %v5843 = vpop.f32.mrb[0].mxu0
        %5844 = vmatprep.mubr.f32.mxu0 0.0
        %5845 = vmatmul.mubr.f32.gmra.mrb[0].mxu0 %v5291
        %v5846 = vpop.f32.mrb[0].mxu0
        %v5847 = vadd.f32 %v4758, %v5846
        %v5848 = vpop.f32.mrb[0].mxu0
        %5849 = vmatprep.mubr.f32.mxu0 0.0
        %5850 = vmatmul.mubr.f32.gmra.mrb[0].mxu0 %v5294
        %v5851 = vpop.f32.mrb[0].mxu0
        %v5852 = vadd.f32 %v4763, %v5851
        %v5853 = vpop.f32.mrb[0].mxu0
        %5854 = vmatprep.mubr.f32.mxu0 0.0
        %5855 = vmatmul.mubr.f32.gmra.mrb[0].mxu0 %v5297
        %v5856 = vpop.f32.mrb[0].mxu0
        %v5857 = vadd.f32 %v4768, %v5856
        %v5858 = vpop.f32.mrb[0].mxu0
        %5859 = vmatprep.mubr.f32.mxu0 0.0
        %5860 = vmatmul.mubr.f32.gmra.mrb[0].mxu0 %v5300
        %v5861 = vpop.f32.mrb[0].mxu0
        %v5862 = vadd.f32 %v4773, %v5861
        %v5863 = vpop.f32.mrb[0].mxu0
        %5864 = vmatprep.mubr.f32.mxu0 0.0
        %5865 = vmatmul.mubr.f32.gmra.mrb[0].mxu0 %v5303
        %v5866 = vpop.f32.mrb[0].mxu0
        %v5867 = vadd.f32 %v4778, %v5866
        %v5868 = vpop.f32.mrb[0].mxu0
        %5869 = vmatprep.mubr.f32.mxu0 0.0
        %5870 = vmatmul.mubr.f32.gmra.mrb[0].mxu0 %v5306
        %v5871 = vpop.f32.mrb[0].mxu0
        %v5872 = vadd.f32 %v4783, %v5871
        %v5873 = vpop.f32.mrb[0].mxu0
        %5874 = vmatprep.mubr.f32.mxu0 0.0
        %5875 = vmatmul.mubr.f32.gmra.mrb[0].mxu0 %v5309
        %v5876 = vpop.f32.mrb[0].mxu0
        %v5877 = vadd.f32 %v4788, %v5876
        %v5878 = vpop.f32.mrb[0].mxu0
        %5879 = vmatprep.mubr.f32.mxu0 0.0
        %5880 = vmatmul.mubr.f32.gmra.mrb[0].mxu0 %v5312
        %v5881 = vpop.f32.mrb[0].mxu0
        %v5882 = vadd.f32 %v4793, %v5881
        %v5883 = vpop.f32.mrb[0].mxu0
        %5884 = vmatprep.mubr.f32.mxu0 0.0
        %5885 = vmatmul.mubr.f32.gmra.mrb[0].mxu0 %v5315
        %v5886 = vpop.f32.mrb[0].mxu0
        %v5887 = vadd.f32 %v4798, %v5886
        %v5888 = vpop.f32.mrb[0].mxu0
        %5889 = vmatprep.mubr.f32.mxu0 0.0
        %5890 = vmatmul.mubr.f32.gmra.mrb[0].mxu0 %v5318
        %v5891 = vpop.f32.mrb[0].mxu0
        %v5892 = vadd.f32 %v4803, %v5891
        %v5893 = vpop.f32.mrb[0].mxu0
        %5894 = vmatprep.mubr.f32.mxu0 0.0
        %5895 = vmatmul.mubr.f32.gmra.mrb[0].mxu0 %v5321
        %v5896 = vpop.f32.mrb[0].mxu0
        %v5897 = vadd.f32 %v4808, %v5896
        %v5898 = vpop.f32.mrb[0].mxu0
        %5899 = vmatprep.mubr.f32.mxu0 0.0
        %5900 = vmatmul.mubr.f32.gmra.mrb[0].mxu0 %v5324
        %v5901 = vpop.f32.mrb[0].mxu0
        %v5902 = vadd.f32 %v4813, %v5901
        %v5903 = vpop.f32.mrb[0].mxu0
        %5904 = vmatprep.mubr.f32.mxu0 0.0
        %5905 = vmatmul.mubr.f32.gmra.mrb[0].mxu0 %v5327
        %v5906 = vpop.f32.mrb[0].mxu0
        %v5907 = vadd.f32 %v4818, %v5906
        %v5908 = vpop.f32.mrb[0].mxu0
        %5909 = vmatprep.mubr.f32.mxu0 0.0
        %5910 = vmatmul.mubr.f32.gmra.mrb[0].mxu0 %v5330
        %v5911 = vpop.f32.mrb[0].mxu0
        %v5912 = vadd.f32 %v4823, %v5911
        %v5913 = vpop.f32.mrb[0].mxu0
        %5914 = vmatprep.mubr.f32.mxu0 0.0
        %5915 = vmatmul.mubr.f32.gmra.mrb[0].mxu0 %v5333
        %v5916 = vpop.f32.mrb[0].mxu0
        %v5917 = vadd.f32 %v4828, %v5916
        %v5918 = vpop.f32.mrb[0].mxu0
        %5919 = vmatprep.mubr.f32.mxu0 0.0
        %5920 = vmatmul.mubr.f32.gmra.mrb[0].mxu0 %v5336
        %v5921 = vpop.f32.mrb[0].mxu0
        %v5922 = vadd.f32 %v4833, %v5921
        %v5923 = vpop.f32.mrb[0].mxu0
        %5924 = vmatprep.mubr.f32.mxu0 0.0
        %5925 = vmatmul.mubr.f32.gmra.mrb[0].mxu0 %v5339
        %v5926 = vpop.f32.mrb[0].mxu0
        %v5927 = vadd.f32 %v4838, %v5926
        %v5928 = vpop.f32.mrb[0].mxu0
        %5929 = vmatprep.mubr.f32.mxu0 0.0
        %5930 = vmatmul.mubr.f32.gmra.mrb[0].mxu0 %v5342
        %v5931 = vpop.f32.mrb[0].mxu0
        %v5932 = vadd.f32 %v4843, %v5931
        %v5933 = vpop.f32.mrb[0].mxu0
        %5934 = vmatprep.mubr.f32.mxu0 0.0
        %5935 = vmatmul.mubr.f32.gmra.mrb[0].mxu0 %v5345
        %v5936 = vpop.f32.mrb[0].mxu0
        %v5937 = vadd.f32 %v4848, %v5936
        %v5938 = vpop.f32.mrb[0].mxu0
        %5939 = vmatprep.mubr.f32.mxu0 0.0
        %5940 = vmatmul.mubr.f32.gmra.mrb[0].mxu0 %v5348
        %v5941 = vpop.f32.mrb[0].mxu0
        %v5942 = vadd.f32 %v4853, %v5941
        %v5943 = vpop.f32.mrb[0].mxu0
        %5944 = vmatprep.mubr.f32.mxu0 0.0
        %5945 = vmatmul.mubr.f32.gmra.mrb[0].mxu0 %v5351
        %v5946 = vpop.f32.mrb[0].mxu0
        %v5947 = vadd.f32 %v4858, %v5946
        %v5948 = vpop.f32.mrb[0].mxu0
        %5949 = vmatprep.mubr.f32.mxu0 0.0
        %5950 = vmatmul.mubr.f32.gmra.mrb[0].mxu0 %v5354
        %v5951 = vpop.f32.mrb[0].mxu0
        %v5952 = vadd.f32 %v4863, %v5951
        %v5953 = vpop.f32.mrb[0].mxu0
        %5954 = vmatprep.mubr.f32.mxu0 0.0
        %5955 = vmatmul.mubr.f32.gmra.mrb[0].mxu0 %v5357
        %v5956 = vpop.f32.mrb[0].mxu0
        %v5957 = vadd.f32 %v4868, %v5956
        %v5958 = vpop.f32.mrb[0].mxu0
        %5959 = vmatprep.mubr.f32.mxu0 0.0
        %5960 = vmatmul.mubr.f32.gmra.mrb[0].mxu0 %v5360
        %v5961 = vpop.f32.mrb[0].mxu0
        %v5962 = vadd.f32 %v4873, %v5961
        %v5963 = vpop.f32.mrb[0].mxu0
        %5964 = vmatprep.mubr.f32.mxu0 0.0
        %5965 = vmatmul.mubr.f32.gmra.mrb[0].mxu0 %v5363
        %v5966 = vpop.f32.mrb[0].mxu0
        %v5967 = vadd.f32 %v4878, %v5966
        %v5968 = vpop.f32.mrb[0].mxu0
        %5969 = vmatprep.mubr.f32.mxu0 0.0
        %5970 = vmatmul.mubr.f32.gmra.mrb[0].mxu0 %v5366
        %v5971 = vpop.f32.mrb[0].mxu0
        %v5972 = vadd.f32 %v4883, %v5971
        %v5973 = vpop.f32.mrb[0].mxu0
        %5974 = vmatprep.mubr.f32.mxu0 0.0
        %5975 = vmatmul.mubr.f32.gmra.mrb[0].mxu0 %v5369
        %v5976 = vpop.f32.mrb[0].mxu0
        %v5977 = vadd.f32 %v4888, %v5976
        %v5978 = vpop.f32.mrb[0].mxu0
        %5979 = vmatprep.mubr.f32.mxu0 0.0
        %5980 = vmatmul.mubr.f32.gmra.mrb[0].mxu0 %v5372
        %v5981 = vpop.f32.mrb[0].mxu0
        %v5982 = vadd.f32 %v4893, %v5981
        %v5983 = vpop.f32.mrb[0].mxu0
        %5984 = vmatprep.mubr.f32.mxu0 0.0
        %5985 = vmatmul.mubr.f32.gmra.mrb[0].mxu0 %v5375
        %v5986 = vpop.f32.mrb[0].mxu0
        %v5987 = vadd.f32 %v4898, %v5986
        %v5988 = vpop.f32.mrb[0].mxu0
        %5989 = vmatprep.mubr.f32.mxu0 0.0
        %5990 = vmatmul.mubr.f32.gmra.mrb[0].mxu0 %v5378
        %v5991 = vpop.f32.mrb[0].mxu0
        %v5992 = vadd.f32 %v4903, %v5991
        %v5993 = vpop.f32.mrb[0].mxu0
        %5994 = vmatprep.mubr.f32.mxu0 0.0
        %5995 = vmatmul.mubr.f32.gmra.mrb[0].mxu0 %v5381
        %v5996 = vpop.f32.mrb[0].mxu0
        %v5997 = vadd.f32 %v4908, %v5996
        %v5998 = vpop.f32.mrb[0].mxu0
        %5999 = vmatprep.mubr.f32.mxu0 0.0
        %6000 = vmatmul.mubr.f32.gmra.mrb[0].mxu0 %v5384
        %v6001 = vpop.f32.mrb[0].mxu0
        %v6002 = vadd.f32 %v4913, %v6001
        %v6003 = vpop.f32.mrb[0].mxu0
        %6004 = vmatprep.mubr.f32.mxu0 0.0
        %6005 = vmatmul.mubr.f32.gmra.mrb[0].mxu0 %v5387
        %v6006 = vpop.f32.mrb[0].mxu0
        %v6007 = vadd.f32 %v4918, %v6006
        %v6008 = vpop.f32.mrb[0].mxu0
        %6009 = vmatprep.mubr.f32.mxu0 0.0
        %6010 = vmatmul.mubr.f32.gmra.mrb[0].mxu0 %v5390
        %v6011 = vpop.f32.mrb[0].mxu0
        %v6012 = vadd.f32 %v4923, %v6011
        %v6013 = vpop.f32.mrb[0].mxu0
        %6014 = vmatprep.mubr.f32.mxu0 0.0
        %6015 = vmatmul.mubr.f32.gmra.mrb[0].mxu0 %v5393
        %v6016 = vpop.f32.mrb[0].mxu0
        %v6017 = vadd.f32 %v4928, %v6016
        %v6018 = vpop.f32.mrb[0].mxu0
        %6019 = vmatprep.mubr.f32.mxu0 0.0
        %6020 = vmatmul.mubr.f32.gmra.mrb[0].mxu0 %v5396
        %v6021 = vpop.f32.mrb[0].mxu0
        %v6022 = vadd.f32 %v4933, %v6021
        %v6023 = vpop.f32.mrb[0].mxu0
        %6024 = vmatprep.mubr.f32.mxu0 0.0
        %6025 = vmatmul.mubr.f32.gmra.mrb[0].mxu0 %v5399
        %v6026 = vpop.f32.mrb[0].mxu0
        %v6027 = vadd.f32 %v4938, %v6026
        %v6028 = vpop.f32.mrb[0].mxu0
        %6029 = vmatprep.mubr.f32.mxu0 0.0
        %6030 = vmatmul.mubr.f32.gmra.mrb[0].mxu0 %v5402
        %v6031 = vpop.f32.mrb[0].mxu0
        %v6032 = vadd.f32 %v4943, %v6031
        %v6033 = vpop.f32.mrb[0].mxu0
        %6034 = vmatprep.mubr.f32.mxu0 0.0
        %6035 = vmatmul.mubr.f32.gmra.mrb[0].mxu0 %v5405
        %v6036 = vpop.f32.mrb[0].mxu0
        %v6037 = vadd.f32 %v4948, %v6036
        %v6038 = vpop.f32.mrb[0].mxu0
        %6039 = vmatprep.mubr.f32.mxu0 0.0
        %6040 = vmatmul.mubr.f32.gmra.mrb[0].mxu0 %v5408
        %v6041 = vpop.f32.mrb[0].mxu0
        %v6042 = vadd.f32 %v4953, %v6041
        %v6043 = vpop.f32.mrb[0].mxu0
        %6044 = vmatprep.mubr.f32.mxu0 0.0
        %6045 = vmatmul.mubr.f32.gmra.mrb[0].mxu0 %v5411
        %v6046 = vpop.f32.mrb[0].mxu0
        %v6047 = vadd.f32 %v4958, %v6046
        %v6048 = vpop.f32.mrb[0].mxu0
        %6049 = vmatprep.mubr.f32.mxu0 0.0
        %6050 = vmatmul.mubr.f32.gmra.mrb[0].mxu0 %v5414
        %v6051 = vpop.f32.mrb[0].mxu0
        %v6052 = vadd.f32 %v4963, %v6051
        %v6053 = vpop.f32.mrb[0].mxu0
        %6054 = vmatprep.mubr.f32.mxu0 0.0
        %6055 = vmatmul.mubr.f32.gmra.mrb[0].mxu0 %v5417
        %v6056 = vpop.f32.mrb[0].mxu0
        %v6057 = vadd.f32 %v4968, %v6056
        %v6058 = vpop.f32.mrb[0].mxu0
        %6059 = vmatprep.mubr.f32.mxu0 0.0
        %6060 = vmatmul.mubr.f32.gmra.mrb[0].mxu0 %v5420
        %v6061 = vpop.f32.mrb[0].mxu0
        %v6062 = vadd.f32 %v4973, %v6061
        %v6063 = vpop.f32.mrb[0].mxu0
        %6064 = vmatprep.mubr.f32.mxu0 0.0
        %6065 = vmatmul.mubr.f32.gmra.mrb[0].mxu0 %v5423
        %v6066 = vpop.f32.mrb[0].mxu0
        %v6067 = vadd.f32 %v4978, %v6066
        %v6068 = vpop.f32.mrb[0].mxu0
        %6069 = vmatprep.mubr.f32.mxu0 0.0
        %6070 = vmatmul.mubr.f32.gmra.mrb[0].mxu0 %v5426
        %v6071 = vpop.f32.mrb[0].mxu0
        %v6072 = vadd.f32 %v4983, %v6071
        %v6073 = vpop.f32.mrb[0].mxu0
        %6074 = vmatprep.mubr.f32.mxu0 0.0
        %6075 = vmatmul.mubr.f32.gmra.mrb[0].mxu0 %v5429
        %v6076 = vpop.f32.mrb[0].mxu0
        %v6077 = vadd.f32 %v4988, %v6076
        %v6078 = vpop.f32.mrb[0].mxu0
        %6079 = vmatprep.mubr.f32.mxu0 0.0
        %6080 = vmatmul.mubr.f32.gmra.mrb[0].mxu0 %v5432
        %v6081 = vpop.f32.mrb[0].mxu0
        %v6082 = vadd.f32 %v4993, %v6081
        %v6083 = vpop.f32.mrb[0].mxu0
        %6084 = vmatprep.mubr.f32.mxu0 0.0
        %6085 = vmatmul.mubr.f32.gmra.mrb[0].mxu0 %v5435
        %v6086 = vpop.f32.mrb[0].mxu0
        %v6087 = vadd.f32 %v4998, %v6086
        %v6088 = vpop.f32.mrb[0].mxu0
        %6089 = vmatprep.mubr.f32.mxu0 0.0
        %6090 = vmatmul.mubr.f32.gmra.mrb[0].mxu0 %v5438
        %v6091 = vpop.f32.mrb[0].mxu0
        %v6092 = vadd.f32 %v5003, %v6091
        %v6093 = vpop.f32.mrb[0].mxu0
        %6094 = vmatprep.mubr.f32.mxu0 0.0
        %6095 = vmatmul.mubr.f32.gmra.mrb[0].mxu0 %v5441
        %v6096 = vpop.f32.mrb[0].mxu0
        %v6097 = vadd.f32 %v5008, %v6096
        %v6098 = vpop.f32.mrb[0].mxu0
        %6099 = vmatprep.mubr.f32.mxu0 0.0
        %6100 = vmatmul.mubr.f32.gmra.mrb[0].mxu0 %v5444
        %v6101 = vpop.f32.mrb[0].mxu0
        %v6102 = vadd.f32 %v5013, %v6101
        %v6103 = vpop.f32.mrb[0].mxu0
        %6104 = vmatprep.mubr.f32.mxu0 0.0
        %6105 = vmatmul.mubr.f32.gmra.mrb[0].mxu0 %v5447
        %v6106 = vpop.f32.mrb[0].mxu0
        %v6107 = vadd.f32 %v5018, %v6106
        %v6108 = vpop.f32.mrb[0].mxu0
        %6109 = vmatprep.mubr.f32.mxu0 0.0
        %6110 = vmatmul.mubr.f32.gmra.mrb[0].mxu0 %v5450
        %v6111 = vpop.f32.mrb[0].mxu0
        %v6112 = vadd.f32 %v5023, %v6111
        %v6113 = vpop.f32.mrb[0].mxu0
        %6114 = vmatprep.mubr.f32.mxu0 0.0
        %6115 = vmatmul.mubr.f32.gmra.mrb[0].mxu0 %v5453
        %v6116 = vpop.f32.mrb[0].mxu0
        %v6117 = vadd.f32 %v5028, %v6116
        %v6118 = vpop.f32.mrb[0].mxu0
        %6119 = vmatprep.mubr.f32.mxu0 0.0
        %6120 = vmatmul.mubr.f32.gmra.mrb[0].mxu0 %v5456
        %v6121 = vpop.f32.mrb[0].mxu0
        %v6122 = vadd.f32 %v5033, %v6121
        %v6123 = vpop.f32.mrb[0].mxu0
        %6124 = vmatprep.mubr.f32.mxu0 0.0
        %6125 = vmatmul.mubr.f32.gmra.mrb[0].mxu0 %v5459
        %v6126 = vpop.f32.mrb[0].mxu0
        %v6127 = vadd.f32 %v5038, %v6126
        %v6128 = vpop.f32.mrb[0].mxu0
        %6129 = vmatprep.mubr.f32.mxu0 0.0
        %6130 = vmatmul.mubr.f32.gmra.mrb[0].mxu0 %v5462
        %v6131 = vpop.f32.mrb[0].mxu0
        %v6132 = vadd.f32 %v5043, %v6131
        %v6133 = vpop.f32.mrb[0].mxu0
        %6134 = vmatprep.mubr.f32.mxu0 0.0
        %6135 = vmatmul.mubr.f32.gmra.mrb[0].mxu0 %v5465
        %v6136 = vpop.f32.mrb[0].mxu0
        %v6137 = vadd.f32 %v5048, %v6136
        %v6138 = vpop.f32.mrb[0].mxu0
        %6139 = vmatprep.mubr.f32.mxu0 0.0
        %6140 = vmatmul.mubr.f32.gmra.mrb[0].mxu0 %v5468
        %v6141 = vpop.f32.mrb[0].mxu0
        %v6142 = vadd.f32 %v5053, %v6141
        %v6143 = vpop.f32.mrb[0].mxu0
        %6144 = vmatprep.mubr.f32.mxu0 0.0
        %6145 = vmatmul.mubr.f32.gmra.mrb[0].mxu0 %v5471
        %v6146 = vpop.f32.mrb[0].mxu0
        %v6147 = vadd.f32 %v5058, %v6146
        %v6148 = vpop.f32.mrb[0].mxu0
        %6149 = vmatprep.mubr.f32.mxu0 0.0
        %6150 = vmatmul.mubr.f32.gmra.mrb[0].mxu0 %v5474
        %v6151 = vpop.f32.mrb[0].mxu0
        %v6152 = vadd.f32 %v5063, %v6151
        %v6153 = vpop.f32.mrb[0].mxu0
        %6154 = vmatprep.mubr.f32.mxu0 0.0
        %6155 = vmatmul.mubr.f32.gmra.mrb[0].mxu0 %v5477
        %v6156 = vpop.f32.mrb[0].mxu0
        %v6157 = vadd.f32 %v5068, %v6156
        %v6158 = vpop.f32.mrb[0].mxu0
        %6159 = vmatprep.mubr.f32.mxu0 0.0
        %6160 = vmatmul.mubr.f32.gmra.mrb[0].mxu0 %v5480
        %v6161 = vpop.f32.mrb[0].mxu0
        %v6162 = vadd.f32 %v5073, %v6161
        %v6163 = vpop.f32.mrb[0].mxu0
        %6164 = vmatprep.mubr.f32.mxu0 0.0
        %6165 = vmatmul.mubr.f32.gmra.mrb[0].mxu0 %v5483
        %v6166 = vpop.f32.mrb[0].mxu0
        %v6167 = vadd.f32 %v5078, %v6166
        %v6168 = vpop.f32.mrb[0].mxu0
        %6169 = vmatprep.mubr.f32.mxu0 0.0
        %6170 = vmatmul.mubr.f32.gmra.mrb[0].mxu0 %v5486
        %v6171 = vpop.f32.mrb[0].mxu0
        %v6172 = vadd.f32 %v5083, %v6171
        %v6173 = vpop.f32.mrb[0].mxu0
        %6174 = vmatprep.mubr.f32.mxu0 0.0
        %6175 = vmatmul.mubr.f32.gmra.mrb[0].mxu0 %v5489
        %v6176 = vpop.f32.mrb[0].mxu0
        %v6177 = vadd.f32 %v5088, %v6176
        %v6178 = vpop.f32.mrb[0].mxu0
        %6179 = vmatprep.mubr.f32.mxu0 0.0
        %6180 = vmatmul.mubr.f32.gmra.mrb[0].mxu0 %v5492
        %v6181 = vpop.f32.mrb[0].mxu0
        %v6182 = vadd.f32 %v5093, %v6181
        %v6183 = vpop.f32.mrb[0].mxu0
        %6184 = vmatprep.mubr.f32.mxu0 0.0
        %6185 = vmatmul.mubr.f32.gmra.mrb[0].mxu0 %v5495
        %v6186 = vpop.f32.mrb[0].mxu0
        %v6187 = vadd.f32 %v5098, %v6186
        %v6188 = vpop.f32.mrb[0].mxu0
        %6189 = vmatprep.mubr.f32.mxu0 0.0
        %6190 = vmatmul.mubr.f32.gmra.mrb[0].mxu0 %v5498
        %v6191 = vpop.f32.mrb[0].mxu0
        %v6192 = vadd.f32 %v5103, %v6191
        %v6193 = vpop.f32.mrb[0].mxu0
        %6194 = vmatprep.mubr.f32.mxu0 0.0
        %6195 = vmatmul.mubr.f32.gmra.mrb[0].mxu0 %v5501
        %v6196 = vpop.f32.mrb[0].mxu0
        %v6197 = vadd.f32 %v5108, %v6196
        %v6198 = vpop.f32.mrb[0].mxu0
        %6199 = vmatprep.mubr.f32.mxu0 0.0
        %6200 = vmatmul.mubr.f32.gmra.mrb[0].mxu0 %v5504
        %v6201 = vpop.f32.mrb[0].mxu0
        %v6202 = vadd.f32 %v5113, %v6201
        %v6203 = vpop.f32.mrb[0].mxu0
        %6204 = vmatprep.mubr.f32.mxu0 0.0
        %6205 = vmatmul.mubr.f32.gmra.mrb[0].mxu0 %v5507
        %v6206 = vpop.f32.mrb[0].mxu0
        %v6207 = vadd.f32 %v5118, %v6206
        %v6208 = vpop.f32.mrb[0].mxu0
        %6209 = vmatprep.mubr.f32.mxu0 0.0
        %6210 = vmatmul.mubr.f32.gmra.mrb[0].mxu0 %v5510
        %v6211 = vpop.f32.mrb[0].mxu0
        %v6212 = vadd.f32 %v5123, %v6211
        %v6213 = vpop.f32.mrb[0].mxu0
        %6214 = vmatprep.mubr.f32.mxu0 0.0
        %6215 = vmatmul.mubr.f32.gmra.mrb[0].mxu0 %v5513
        %v6216 = vpop.f32.mrb[0].mxu0
        %v6217 = vadd.f32 %v5128, %v6216
        %v6218 = vpop.f32.mrb[0].mxu0
        %6219 = vdwg.mxu0
        %s6220 = sadd.s32 %s184, 2
        %s6221 = smul.u32 %s6220, 40
        %s6222 = scalar_lea.vmem %s182, %s6221
        %v6223 = vld [vmem:[%s6222] sm:$0xff]
        %v6224 = vld [vmem:[%s6222 + $0x8] sm:$0xff]
        %v6225 = vld [vmem:[%s6222 + $0x10] sm:$0xff]
        %v6226 = vld [vmem:[%s6222 + $0x18] sm:$0xff]
        %v6227 = vld [vmem:[%s6222 + $0x20] sm:$0xff]
        %v6228 = vld [vmem:[%s6222 + $0x28] sm:$0xff]
        %v6229 = vld [vmem:[%s6222 + $0x30] sm:$0xff]
        %v6230 = vld [vmem:[%s6222 + $0x38] sm:$0xff]
        %v6231 = vld [vmem:[%s6222 + $0x40] sm:$0xff]
        %v6232 = vld [vmem:[%s6222 + $0x48] sm:$0xff]
        %v6233 = vld [vmem:[%s6222 + $0x50] sm:$0xff]
        %v6234 = vld [vmem:[%s6222 + $0x58] sm:$0xff]
        %v6235 = vld [vmem:[%s6222 + $0x60] sm:$0xff]
        %v6236 = vld [vmem:[%s6222 + $0x68] sm:$0xff]
        %v6237 = vld [vmem:[%s6222 + $0x70] sm:$0xff]
        %v6238 = vld [vmem:[%s6222 + $0x78] sm:$0xff]
        %v6239 = vld [vmem:[%s6222 + $0x80] sm:$0xff]
        %v6240 = vld [vmem:[%s6222 + $0x88] sm:$0xff]
        %v6241 = vld [vmem:[%s6222 + $0x90] sm:$0xff]
        %v6242 = vld [vmem:[%s6222 + $0x98] sm:$0xff]
        %v6243 = vld [vmem:[%s6222 + $0xa0] sm:$0xff]
        %v6244 = vld [vmem:[%s6222 + $0xa8] sm:$0xff]
        %v6245 = vld [vmem:[%s6222 + $0xb0] sm:$0xff]
        %v6246 = vld [vmem:[%s6222 + $0xb8] sm:$0xff]
        %v6247 = vld [vmem:[%s6222 + $0xc0] sm:$0xff]
        %v6248 = vld [vmem:[%s6222 + $0xc8] sm:$0xff]
        %v6249 = vld [vmem:[%s6222 + $0xd0] sm:$0xff]
        %v6250 = vld [vmem:[%s6222 + $0xd8] sm:$0xff]
        %v6251 = vld [vmem:[%s6222 + $0xe0] sm:$0xff]
        %v6252 = vld [vmem:[%s6222 + $0xe8] sm:$0xff]
        %v6253 = vld [vmem:[%s6222 + $0xf0] sm:$0xff]
        %v6254 = vld [vmem:[%s6222 + $0xf8] sm:$0xff]
        %v6255 = vld [vmem:[%s6222 + $0x100] sm:$0xff]
        %v6256 = vld [vmem:[%s6222 + $0x108] sm:$0xff]
        %v6257 = vld [vmem:[%s6222 + $0x110] sm:$0xff]
        %v6258 = vld [vmem:[%s6222 + $0x118] sm:$0xff]
        %v6259 = vld [vmem:[%s6222 + $0x120] sm:$0xff]
        %v6260 = vld [vmem:[%s6222 + $0x128] sm:$0xff]
        %v6261 = vld [vmem:[%s6222 + $0x130] sm:$0xff]
        %v6262 = vld [vmem:[%s6222 + $0x138] sm:$0xff]
        %v6263 = vld [vmem:[%s6222 + $0x140] sm:$0xff]
        %v6264 = vld [vmem:[%s6222 + $0x148] sm:$0xff]
        %v6265 = vld [vmem:[%s6222 + $0x150] sm:$0xff]
        %v6266 = vld [vmem:[%s6222 + $0x158] sm:$0xff]
        %v6267 = vld [vmem:[%s6222 + $0x160] sm:$0xff]
        %v6268 = vld [vmem:[%s6222 + $0x168] sm:$0xff]
        %v6269 = vld [vmem:[%s6222 + $0x170] sm:$0xff]
        %v6270 = vld [vmem:[%s6222 + $0x178] sm:$0xff]
        %v6271 = vld [vmem:[%s6222 + $0x180] sm:$0xff]
        %v6272 = vld [vmem:[%s6222 + $0x188] sm:$0xff]
        %v6273 = vld [vmem:[%s6222 + $0x190] sm:$0xff]
        %v6274 = vld [vmem:[%s6222 + $0x198] sm:$0xff]
        %v6275 = vld [vmem:[%s6222 + $0x1a0] sm:$0xff]
        %v6276 = vld [vmem:[%s6222 + $0x1a8] sm:$0xff]
        %v6277 = vld [vmem:[%s6222 + $0x1b0] sm:$0xff]
        %v6278 = vld [vmem:[%s6222 + $0x1b8] sm:$0xff]
        %v6279 = vld [vmem:[%s6222 + $0x1c0] sm:$0xff]
        %v6280 = vld [vmem:[%s6222 + $0x1c8] sm:$0xff]
        %v6281 = vld [vmem:[%s6222 + $0x1d0] sm:$0xff]
        %v6282 = vld [vmem:[%s6222 + $0x1d8] sm:$0xff]
        %v6283 = vld [vmem:[%s6222 + $0x1e0] sm:$0xff]
        %v6284 = vld [vmem:[%s6222 + $0x1e8] sm:$0xff]
        %v6285 = vld [vmem:[%s6222 + $0x1f0] sm:$0xff]
        %v6286 = vld [vmem:[%s6222 + $0x1f8] sm:$0xff]
        %v6287 = vld [vmem:[%s6222 + $0x200] sm:$0xff]
        %v6288 = vld [vmem:[%s6222 + $0x208] sm:$0xff]
        %v6289 = vld [vmem:[%s6222 + $0x210] sm:$0xff]
        %v6290 = vld [vmem:[%s6222 + $0x218] sm:$0xff]
        %v6291 = vld [vmem:[%s6222 + $0x220] sm:$0xff]
        %v6292 = vld [vmem:[%s6222 + $0x228] sm:$0xff]
        %v6293 = vld [vmem:[%s6222 + $0x230] sm:$0xff]
        %v6294 = vld [vmem:[%s6222 + $0x238] sm:$0xff]
        %v6295 = vld [vmem:[%s6222 + $0x240] sm:$0xff]
        %v6296 = vld [vmem:[%s6222 + $0x248] sm:$0xff]
        %v6297 = vld [vmem:[%s6222 + $0x250] sm:$0xff]
        %v6298 = vld [vmem:[%s6222 + $0x258] sm:$0xff]
        %v6299 = vld [vmem:[%s6222 + $0x260] sm:$0xff]
        %v6300 = vld [vmem:[%s6222 + $0x268] sm:$0xff]
        %v6301 = vld [vmem:[%s6222 + $0x270] sm:$0xff]
        %v6302 = vld [vmem:[%s6222 + $0x278] sm:$0xff]
        %v6303 = vld [vmem:[%s6222 + $0x280] sm:$0xff]
        %v6304 = vld [vmem:[%s6222 + $0x288] sm:$0xff]
        %v6305 = vld [vmem:[%s6222 + $0x290] sm:$0xff]
        %v6306 = vld [vmem:[%s6222 + $0x298] sm:$0xff]
        %v6307 = vld [vmem:[%s6222 + $0x2a0] sm:$0xff]
        %v6308 = vld [vmem:[%s6222 + $0x2a8] sm:$0xff]
        %v6309 = vld [vmem:[%s6222 + $0x2b0] sm:$0xff]
        %v6310 = vld [vmem:[%s6222 + $0x2b8] sm:$0xff]
        %v6311 = vld [vmem:[%s6222 + $0x2c0] sm:$0xff]
        %v6312 = vld [vmem:[%s6222 + $0x2c8] sm:$0xff]
        %v6313 = vld [vmem:[%s6222 + $0x2d0] sm:$0xff]
        %v6314 = vld [vmem:[%s6222 + $0x2d8] sm:$0xff]
        %v6315 = vld [vmem:[%s6222 + $0x2e0] sm:$0xff]
        %v6316 = vld [vmem:[%s6222 + $0x2e8] sm:$0xff]
        %v6317 = vld [vmem:[%s6222 + $0x2f0] sm:$0xff]
        %v6318 = vld [vmem:[%s6222 + $0x2f8] sm:$0xff]
        %v6319 = vld [vmem:[%s6222 + $0x300] sm:$0xff]
        %v6320 = vld [vmem:[%s6222 + $0x308] sm:$0xff]
        %v6321 = vld [vmem:[%s6222 + $0x310] sm:$0xff]
        %v6322 = vld [vmem:[%s6222 + $0x318] sm:$0xff]
        %v6323 = vld [vmem:[%s6222 + $0x320] sm:$0xff]
        %v6324 = vld [vmem:[%s6222 + $0x328] sm:$0xff]
        %v6325 = vld [vmem:[%s6222 + $0x330] sm:$0xff]
        %v6326 = vld [vmem:[%s6222 + $0x338] sm:$0xff]
        %v6327 = vld [vmem:[%s6222 + $0x340] sm:$0xff]
        %v6328 = vld [vmem:[%s6222 + $0x348] sm:$0xff]
        %v6329 = vld [vmem:[%s6222 + $0x350] sm:$0xff]
        %v6330 = vld [vmem:[%s6222 + $0x358] sm:$0xff]
        %v6331 = vld [vmem:[%s6222 + $0x360] sm:$0xff]
        %v6332 = vld [vmem:[%s6222 + $0x368] sm:$0xff]
        %v6333 = vld [vmem:[%s6222 + $0x370] sm:$0xff]
        %v6334 = vld [vmem:[%s6222 + $0x378] sm:$0xff]
        %v6335 = vld [vmem:[%s6222 + $0x380] sm:$0xff]
        %v6336 = vld [vmem:[%s6222 + $0x388] sm:$0xff]
        %v6337 = vld [vmem:[%s6222 + $0x390] sm:$0xff]
        %v6338 = vld [vmem:[%s6222 + $0x398] sm:$0xff]
        %v6339 = vld [vmem:[%s6222 + $0x3a0] sm:$0xff]
        %v6340 = vld [vmem:[%s6222 + $0x3a8] sm:$0xff]
        %v6341 = vld [vmem:[%s6222 + $0x3b0] sm:$0xff]
        %v6342 = vld [vmem:[%s6222 + $0x3b8] sm:$0xff]
        %v6343 = vld [vmem:[%s6222 + $0x3c0] sm:$0xff]
        %v6344 = vld [vmem:[%s6222 + $0x3c8] sm:$0xff]
        %v6345 = vld [vmem:[%s6222 + $0x3d0] sm:$0xff]
        %v6346 = vld [vmem:[%s6222 + $0x3d8] sm:$0xff]
        %v6347 = vld [vmem:[%s6222 + $0x3e0] sm:$0xff]
        %v6348 = vld [vmem:[%s6222 + $0x3e8] sm:$0xff]
        %v6349 = vld [vmem:[%s6222 + $0x3f0] sm:$0xff]
        %v6350 = vld [vmem:[%s6222 + $0x3f8] sm:$0xff]
        %v6351 = vld [vmem:[%s6222 + $0x400] sm:$0xff]
        %v6352 = vld [vmem:[%s6222 + $0x408] sm:$0xff]
        %v6353 = vld [vmem:[%s6222 + $0x410] sm:$0xff]
        %v6354 = vld [vmem:[%s6222 + $0x418] sm:$0xff]
        %v6355 = vld [vmem:[%s6222 + $0x420] sm:$0xff]
        %v6356 = vld [vmem:[%s6222 + $0x428] sm:$0xff]
        %v6357 = vld [vmem:[%s6222 + $0x430] sm:$0xff]
        %v6358 = vld [vmem:[%s6222 + $0x438] sm:$0xff]
        %v6359 = vld [vmem:[%s6222 + $0x440] sm:$0xff]
        %v6360 = vld [vmem:[%s6222 + $0x448] sm:$0xff]
        %v6361 = vld [vmem:[%s6222 + $0x450] sm:$0xff]
        %v6362 = vld [vmem:[%s6222 + $0x458] sm:$0xff]
        %v6363 = vld [vmem:[%s6222 + $0x460] sm:$0xff]
        %v6364 = vld [vmem:[%s6222 + $0x468] sm:$0xff]
        %v6365 = vld [vmem:[%s6222 + $0x470] sm:$0xff]
        %v6366 = vld [vmem:[%s6222 + $0x478] sm:$0xff]
        %v6367 = vld [vmem:[%s6222 + $0x480] sm:$0xff]
        %v6368 = vld [vmem:[%s6222 + $0x488] sm:$0xff]
        %v6369 = vld [vmem:[%s6222 + $0x490] sm:$0xff]
        %v6370 = vld [vmem:[%s6222 + $0x498] sm:$0xff]
        %v6371 = vld [vmem:[%s6222 + $0x4a0] sm:$0xff]
        %v6372 = vld [vmem:[%s6222 + $0x4a8] sm:$0xff]
        %v6373 = vld [vmem:[%s6222 + $0x4b0] sm:$0xff]
        %v6374 = vld [vmem:[%s6222 + $0x4b8] sm:$0xff]
        %v6375 = vld [vmem:[%s6222 + $0x4c0] sm:$0xff]
        %v6376 = vld [vmem:[%s6222 + $0x4c8] sm:$0xff]
        %v6377 = vld [vmem:[%s6222 + $0x4d0] sm:$0xff]
        %v6378 = vld [vmem:[%s6222 + $0x4d8] sm:$0xff]
        %v6379 = vld [vmem:[%s6222 + $0x4e0] sm:$0xff]
        %v6380 = vld [vmem:[%s6222 + $0x4e8] sm:$0xff]
        %v6381 = vld [vmem:[%s6222 + $0x4f0] sm:$0xff]
        %v6382 = vld [vmem:[%s6222 + $0x4f8] sm:$0xff]
        %v6543 = vrot.slane %v6223, 1
        %v6544 = vrot.slane %v6224, 1
        %v6545 = vsel %vm507, %v6543, %v6544
        %v6546 = vrot.slane %v6225, 1
        %v6547 = vsel %vm507, %v6544, %v6546
        %v6548 = vrot.slane %v6226, 1
        %v6549 = vsel %vm507, %v6546, %v6548
        %v6550 = vrot.slane %v6227, 1
        %v6551 = vsel %vm507, %v6548, %v6550
        %v6552 = vrot.slane %v6228, 1
        %v6553 = vrot.slane %v6229, 1
        %v6554 = vsel %vm507, %v6552, %v6553
        %v6555 = vrot.slane %v6230, 1
        %v6556 = vsel %vm507, %v6553, %v6555
        %v6557 = vrot.slane %v6231, 1
        %v6558 = vsel %vm507, %v6555, %v6557
        %v6559 = vrot.slane %v6232, 1
        %v6560 = vsel %vm507, %v6557, %v6559
        %v6561 = vrot.slane %v6233, 1
        %v6562 = vrot.slane %v6234, 1
        %v6563 = vsel %vm507, %v6561, %v6562
        %v6564 = vrot.slane %v6235, 1
        %v6565 = vsel %vm507, %v6562, %v6564
        %v6566 = vrot.slane %v6236, 1
        %v6567 = vsel %vm507, %v6564, %v6566
        %v6568 = vrot.slane %v6237, 1
        %v6569 = vsel %vm507, %v6566, %v6568
        %v6570 = vrot.slane %v6238, 1
        %v6571 = vrot.slane %v6239, 1
        %v6572 = vsel %vm507, %v6570, %v6571
        %v6573 = vrot.slane %v6240, 1
        %v6574 = vsel %vm507, %v6571, %v6573
        %v6575 = vrot.slane %v6241, 1
        %v6576 = vsel %vm507, %v6573, %v6575
        %v6577 = vrot.slane %v6242, 1
        %v6578 = vsel %vm507, %v6575, %v6577
        %v6579 = vrot.slane %v6243, 1
        %v6580 = vrot.slane %v6244, 1
        %v6581 = vsel %vm507, %v6579, %v6580
        %v6582 = vrot.slane %v6245, 1
        %v6583 = vsel %vm507, %v6580, %v6582
        %v6584 = vrot.slane %v6246, 1
        %v6585 = vsel %vm507, %v6582, %v6584
        %v6586 = vrot.slane %v6247, 1
        %v6587 = vsel %vm507, %v6584, %v6586
        %v6588 = vrot.slane %v6248, 1
        %v6589 = vrot.slane %v6249, 1
        %v6590 = vsel %vm507, %v6588, %v6589
        %v6591 = vrot.slane %v6250, 1
        %v6592 = vsel %vm507, %v6589, %v6591
        %v6593 = vrot.slane %v6251, 1
        %v6594 = vsel %vm507, %v6591, %v6593
        %v6595 = vrot.slane %v6252, 1
        %v6596 = vsel %vm507, %v6593, %v6595
        %v6597 = vrot.slane %v6253, 1
        %v6598 = vrot.slane %v6254, 1
        %v6599 = vsel %vm507, %v6597, %v6598
        %v6600 = vrot.slane %v6255, 1
        %v6601 = vsel %vm507, %v6598, %v6600
        %v6602 = vrot.slane %v6256, 1
        %v6603 = vsel %vm507, %v6600, %v6602
        %v6604 = vrot.slane %v6257, 1
        %v6605 = vsel %vm507, %v6602, %v6604
        %v6606 = vrot.slane %v6258, 1
        %v6607 = vrot.slane %v6259, 1
        %v6608 = vsel %vm507, %v6606, %v6607
        %v6609 = vrot.slane %v6260, 1
        %v6610 = vsel %vm507, %v6607, %v6609
        %v6611 = vrot.slane %v6261, 1
        %v6612 = vsel %vm507, %v6609, %v6611
        %v6613 = vrot.slane %v6262, 1
        %v6614 = vsel %vm507, %v6611, %v6613
        %v6615 = vrot.slane %v6263, 1
        %v6616 = vrot.slane %v6264, 1
        %v6617 = vsel %vm507, %v6615, %v6616
        %v6618 = vrot.slane %v6265, 1
        %v6619 = vsel %vm507, %v6616, %v6618
        %v6620 = vrot.slane %v6266, 1
        %v6621 = vsel %vm507, %v6618, %v6620
        %v6622 = vrot.slane %v6267, 1
        %v6623 = vsel %vm507, %v6620, %v6622
        %v6624 = vrot.slane %v6268, 1
        %v6625 = vrot.slane %v6269, 1
        %v6626 = vsel %vm507, %v6624, %v6625
        %v6627 = vrot.slane %v6270, 1
        %v6628 = vsel %vm507, %v6625, %v6627
        %v6629 = vrot.slane %v6271, 1
        %v6630 = vsel %vm507, %v6627, %v6629
        %v6631 = vrot.slane %v6272, 1
        %v6632 = vsel %vm507, %v6629, %v6631
        %v6633 = vrot.slane %v6273, 1
        %v6634 = vrot.slane %v6274, 1
        %v6635 = vsel %vm507, %v6633, %v6634
        %v6636 = vrot.slane %v6275, 1
        %v6637 = vsel %vm507, %v6634, %v6636
        %v6638 = vrot.slane %v6276, 1
        %v6639 = vsel %vm507, %v6636, %v6638
        %v6640 = vrot.slane %v6277, 1
        %v6641 = vsel %vm507, %v6638, %v6640
        %v6642 = vrot.slane %v6278, 1
        %v6643 = vrot.slane %v6279, 1
        %v6644 = vsel %vm507, %v6642, %v6643
        %v6645 = vrot.slane %v6280, 1
        %v6646 = vsel %vm507, %v6643, %v6645
        %v6647 = vrot.slane %v6281, 1
        %v6648 = vsel %vm507, %v6645, %v6647
        %v6649 = vrot.slane %v6282, 1
        %v6650 = vsel %vm507, %v6647, %v6649
        %v6651 = vrot.slane %v6283, 1
        %v6652 = vrot.slane %v6284, 1
        %v6653 = vsel %vm507, %v6651, %v6652
        %v6654 = vrot.slane %v6285, 1
        %v6655 = vsel %vm507, %v6652, %v6654
        %v6656 = vrot.slane %v6286, 1
        %v6657 = vsel %vm507, %v6654, %v6656
        %v6658 = vrot.slane %v6287, 1
        %v6659 = vsel %vm507, %v6656, %v6658
        %v6660 = vrot.slane %v6288, 1
        %v6661 = vrot.slane %v6289, 1
        %v6662 = vsel %vm507, %v6660, %v6661
        %v6663 = vrot.slane %v6290, 1
        %v6664 = vsel %vm507, %v6661, %v6663
        %v6665 = vrot.slane %v6291, 1
        %v6666 = vsel %vm507, %v6663, %v6665
        %v6667 = vrot.slane %v6292, 1
        %v6668 = vsel %vm507, %v6665, %v6667
        %v6669 = vrot.slane %v6293, 1
        %v6670 = vrot.slane %v6294, 1
        %v6671 = vsel %vm507, %v6669, %v6670
        %v6672 = vrot.slane %v6295, 1
        %v6673 = vsel %vm507, %v6670, %v6672
        %v6674 = vrot.slane %v6296, 1
        %v6675 = vsel %vm507, %v6672, %v6674
        %v6676 = vrot.slane %v6297, 1
        %v6677 = vsel %vm507, %v6674, %v6676
        %v6678 = vrot.slane %v6298, 1
        %v6679 = vrot.slane %v6299, 1
        %v6680 = vsel %vm507, %v6678, %v6679
        %v6681 = vrot.slane %v6300, 1
        %v6682 = vsel %vm507, %v6679, %v6681
        %v6683 = vrot.slane %v6301, 1
        %v6684 = vsel %vm507, %v6681, %v6683
        %v6685 = vrot.slane %v6302, 1
        %v6686 = vsel %vm507, %v6683, %v6685
        %v6687 = vrot.slane %v6303, 1
        %v6688 = vrot.slane %v6304, 1
        %v6689 = vsel %vm507, %v6687, %v6688
        %v6690 = vrot.slane %v6305, 1
        %v6691 = vsel %vm507, %v6688, %v6690
        %v6692 = vrot.slane %v6306, 1
        %v6693 = vsel %vm507, %v6690, %v6692
        %v6694 = vrot.slane %v6307, 1
        %v6695 = vsel %vm507, %v6692, %v6694
        %v6696 = vrot.slane %v6308, 1
        %v6697 = vrot.slane %v6309, 1
        %v6698 = vsel %vm507, %v6696, %v6697
        %v6699 = vrot.slane %v6310, 1
        %v6700 = vsel %vm507, %v6697, %v6699
        %v6701 = vrot.slane %v6311, 1
        %v6702 = vsel %vm507, %v6699, %v6701
        %v6703 = vrot.slane %v6312, 1
        %v6704 = vsel %vm507, %v6701, %v6703
        %v6705 = vrot.slane %v6313, 1
        %v6706 = vrot.slane %v6314, 1
        %v6707 = vsel %vm507, %v6705, %v6706
        %v6708 = vrot.slane %v6315, 1
        %v6709 = vsel %vm507, %v6706, %v6708
        %v6710 = vrot.slane %v6316, 1
        %v6711 = vsel %vm507, %v6708, %v6710
        %v6712 = vrot.slane %v6317, 1
        %v6713 = vsel %vm507, %v6710, %v6712
        %v6714 = vrot.slane %v6318, 1
        %v6715 = vrot.slane %v6319, 1
        %v6716 = vsel %vm507, %v6714, %v6715
        %v6717 = vrot.slane %v6320, 1
        %v6718 = vsel %vm507, %v6715, %v6717
        %v6719 = vrot.slane %v6321, 1
        %v6720 = vsel %vm507, %v6717, %v6719
        %v6721 = vrot.slane %v6322, 1
        %v6722 = vsel %vm507, %v6719, %v6721
        %v6723 = vrot.slane %v6323, 1
        %v6724 = vrot.slane %v6324, 1
        %v6725 = vsel %vm507, %v6723, %v6724
        %v6726 = vrot.slane %v6325, 1
        %v6727 = vsel %vm507, %v6724, %v6726
        %v6728 = vrot.slane %v6326, 1
        %v6729 = vsel %vm507, %v6726, %v6728
        %v6730 = vrot.slane %v6327, 1
        %v6731 = vsel %vm507, %v6728, %v6730
        %v6732 = vrot.slane %v6328, 1
        %v6733 = vrot.slane %v6329, 1
        %v6734 = vsel %vm507, %v6732, %v6733
        %v6735 = vrot.slane %v6330, 1
        %v6736 = vsel %vm507, %v6733, %v6735
        %v6737 = vrot.slane %v6331, 1
        %v6738 = vsel %vm507, %v6735, %v6737
        %v6739 = vrot.slane %v6332, 1
        %v6740 = vsel %vm507, %v6737, %v6739
        %v6741 = vrot.slane %v6333, 1
        %v6742 = vrot.slane %v6334, 1
        %v6743 = vsel %vm507, %v6741, %v6742
        %v6744 = vrot.slane %v6335, 1
        %v6745 = vsel %vm507, %v6742, %v6744
        %v6746 = vrot.slane %v6336, 1
        %v6747 = vsel %vm507, %v6744, %v6746
        %v6748 = vrot.slane %v6337, 1
        %v6749 = vsel %vm507, %v6746, %v6748
        %v6750 = vrot.slane %v6338, 1
        %v6751 = vrot.slane %v6339, 1
        %v6752 = vsel %vm507, %v6750, %v6751
        %v6753 = vrot.slane %v6340, 1
        %v6754 = vsel %vm507, %v6751, %v6753
        %v6755 = vrot.slane %v6341, 1
        %v6756 = vsel %vm507, %v6753, %v6755
        %v6757 = vrot.slane %v6342, 1
        %v6758 = vsel %vm507, %v6755, %v6757
        %v6759 = vrot.slane %v6343, 1
        %v6760 = vrot.slane %v6344, 1
        %v6761 = vsel %vm507, %v6759, %v6760
        %v6762 = vrot.slane %v6345, 1
        %v6763 = vsel %vm507, %v6760, %v6762
        %v6764 = vrot.slane %v6346, 1
        %v6765 = vsel %vm507, %v6762, %v6764
        %v6766 = vrot.slane %v6347, 1
        %v6767 = vsel %vm507, %v6764, %v6766
        %v6768 = vrot.slane %v6348, 1
        %v6769 = vrot.slane %v6349, 1
        %v6770 = vsel %vm507, %v6768, %v6769
        %v6771 = vrot.slane %v6350, 1
        %v6772 = vsel %vm507, %v6769, %v6771
        %v6773 = vrot.slane %v6351, 1
        %v6774 = vsel %vm507, %v6771, %v6773
        %v6775 = vrot.slane %v6352, 1
        %v6776 = vsel %vm507, %v6773, %v6775
        %v6777 = vrot.slane %v6353, 1
        %v6778 = vrot.slane %v6354, 1
        %v6779 = vsel %vm507, %v6777, %v6778
        %v6780 = vrot.slane %v6355, 1
        %v6781 = vsel %vm507, %v6778, %v6780
        %v6782 = vrot.slane %v6356, 1
        %v6783 = vsel %vm507, %v6780, %v6782
        %v6784 = vrot.slane %v6357, 1
        %v6785 = vsel %vm507, %v6782, %v6784
        %v6786 = vrot.slane %v6358, 1
        %v6787 = vrot.slane %v6359, 1
        %v6788 = vsel %vm507, %v6786, %v6787
        %v6789 = vrot.slane %v6360, 1
        %v6790 = vsel %vm507, %v6787, %v6789
        %v6791 = vrot.slane %v6361, 1
        %v6792 = vsel %vm507, %v6789, %v6791
        %v6793 = vrot.slane %v6362, 1
        %v6794 = vsel %vm507, %v6791, %v6793
        %v6795 = vrot.slane %v6363, 1
        %v6796 = vrot.slane %v6364, 1
        %v6797 = vsel %vm507, %v6795, %v6796
        %v6798 = vrot.slane %v6365, 1
        %v6799 = vsel %vm507, %v6796, %v6798
        %v6800 = vrot.slane %v6366, 1
        %v6801 = vsel %vm507, %v6798, %v6800
        %v6802 = vrot.slane %v6367, 1
        %v6803 = vsel %vm507, %v6800, %v6802
        %v6804 = vrot.slane %v6368, 1
        %v6805 = vrot.slane %v6369, 1
        %v6806 = vsel %vm507, %v6804, %v6805
        %v6807 = vrot.slane %v6370, 1
        %v6808 = vsel %vm507, %v6805, %v6807
        %v6809 = vrot.slane %v6371, 1
        %v6810 = vsel %vm507, %v6807, %v6809
        %v6811 = vrot.slane %v6372, 1
        %v6812 = vsel %vm507, %v6809, %v6811
        %v6813 = vrot.slane %v6373, 1
        %v6814 = vrot.slane %v6374, 1
        %v6815 = vsel %vm507, %v6813, %v6814
        %v6816 = vrot.slane %v6375, 1
        %v6817 = vsel %vm507, %v6814, %v6816
        %v6818 = vrot.slane %v6376, 1
        %v6819 = vsel %vm507, %v6816, %v6818
        %v6820 = vrot.slane %v6377, 1
        %v6821 = vsel %vm507, %v6818, %v6820
        %v6822 = vrot.slane %v6378, 1
        %v6823 = vrot.slane %v6379, 1
        %v6824 = vsel %vm507, %v6822, %v6823
        %v6825 = vrot.slane %v6380, 1
        %v6826 = vsel %vm507, %v6823, %v6825
        %v6827 = vrot.slane %v6381, 1
        %v6828 = vsel %vm507, %v6825, %v6827
        %v6829 = vrot.slane %v6382, 1
        %v6830 = vsel %vm507, %v6827, %v6829
        %6831 = vrot.lane.b32.xlu0 %v6545, 8
        %v6832 = vpop.permute.xlu0 %6831
        %6833 = vrot.lane.b32.xlu0 %v6547, 8
        %v6834 = vpop.permute.xlu0 %6833
        %6835 = vrot.lane.b32.xlu0 %v6549, 8
        %v6836 = vpop.permute.xlu0 %6835
        %6837 = vrot.lane.b32.xlu0 %v6551, 8
        %v6838 = vpop.permute.xlu0 %6837
        %6839 = vrot.lane.b32.xlu0 %v6554, 8
        %v6840 = vpop.permute.xlu0 %6839
        %6841 = vrot.lane.b32.xlu0 %v6556, 8
        %v6842 = vpop.permute.xlu0 %6841
        %6843 = vrot.lane.b32.xlu0 %v6558, 8
        %v6844 = vpop.permute.xlu0 %6843
        %6845 = vrot.lane.b32.xlu0 %v6560, 8
        %v6846 = vpop.permute.xlu0 %6845
        %6847 = vrot.lane.b32.xlu0 %v6563, 8
        %v6848 = vpop.permute.xlu0 %6847
        %6849 = vrot.lane.b32.xlu0 %v6565, 8
        %v6850 = vpop.permute.xlu0 %6849
        %6851 = vrot.lane.b32.xlu0 %v6567, 8
        %v6852 = vpop.permute.xlu0 %6851
        %6853 = vrot.lane.b32.xlu0 %v6569, 8
        %v6854 = vpop.permute.xlu0 %6853
        %6855 = vrot.lane.b32.xlu0 %v6572, 8
        %v6856 = vpop.permute.xlu0 %6855
        %6857 = vrot.lane.b32.xlu0 %v6574, 8
        %v6858 = vpop.permute.xlu0 %6857
        %6859 = vrot.lane.b32.xlu0 %v6576, 8
        %v6860 = vpop.permute.xlu0 %6859
        %6861 = vrot.lane.b32.xlu0 %v6578, 8
        %v6862 = vpop.permute.xlu0 %6861
        %6863 = vrot.lane.b32.xlu0 %v6581, 8
        %v6864 = vpop.permute.xlu0 %6863
        %6865 = vrot.lane.b32.xlu0 %v6583, 8
        %v6866 = vpop.permute.xlu0 %6865
        %6867 = vrot.lane.b32.xlu0 %v6585, 8
        %v6868 = vpop.permute.xlu0 %6867
        %6869 = vrot.lane.b32.xlu0 %v6587, 8
        %v6870 = vpop.permute.xlu0 %6869
        %6871 = vrot.lane.b32.xlu0 %v6590, 8
        %v6872 = vpop.permute.xlu0 %6871
        %6873 = vrot.lane.b32.xlu0 %v6592, 8
        %v6874 = vpop.permute.xlu0 %6873
        %6875 = vrot.lane.b32.xlu0 %v6594, 8
        %v6876 = vpop.permute.xlu0 %6875
        %6877 = vrot.lane.b32.xlu0 %v6596, 8
        %v6878 = vpop.permute.xlu0 %6877
        %6879 = vrot.lane.b32.xlu0 %v6599, 8
        %v6880 = vpop.permute.xlu0 %6879
        %6881 = vrot.lane.b32.xlu0 %v6601, 8
        %v6882 = vpop.permute.xlu0 %6881
        %6883 = vrot.lane.b32.xlu0 %v6603, 8
        %v6884 = vpop.permute.xlu0 %6883
        %6885 = vrot.lane.b32.xlu0 %v6605, 8
        %v6886 = vpop.permute.xlu0 %6885
        %6887 = vrot.lane.b32.xlu0 %v6608, 8
        %v6888 = vpop.permute.xlu0 %6887
        %6889 = vrot.lane.b32.xlu0 %v6610, 8
        %v6890 = vpop.permute.xlu0 %6889
        %6891 = vrot.lane.b32.xlu0 %v6612, 8
        %v6892 = vpop.permute.xlu0 %6891
        %6893 = vrot.lane.b32.xlu0 %v6614, 8
        %v6894 = vpop.permute.xlu0 %6893
        %6895 = vrot.lane.b32.xlu0 %v6617, 8
        %v6896 = vpop.permute.xlu0 %6895
        %6897 = vrot.lane.b32.xlu0 %v6619, 8
        %v6898 = vpop.permute.xlu0 %6897
        %6899 = vrot.lane.b32.xlu0 %v6621, 8
        %v6900 = vpop.permute.xlu0 %6899
        %6901 = vrot.lane.b32.xlu0 %v6623, 8
        %v6902 = vpop.permute.xlu0 %6901
        %6903 = vrot.lane.b32.xlu0 %v6626, 8
        %v6904 = vpop.permute.xlu0 %6903
        %6905 = vrot.lane.b32.xlu0 %v6628, 8
        %v6906 = vpop.permute.xlu0 %6905
        %6907 = vrot.lane.b32.xlu0 %v6630, 8
        %v6908 = vpop.permute.xlu0 %6907
        %6909 = vrot.lane.b32.xlu0 %v6632, 8
        %v6910 = vpop.permute.xlu0 %6909
        %6911 = vrot.lane.b32.xlu0 %v6635, 8
        %v6912 = vpop.permute.xlu0 %6911
        %6913 = vrot.lane.b32.xlu0 %v6637, 8
        %v6914 = vpop.permute.xlu0 %6913
        %6915 = vrot.lane.b32.xlu0 %v6639, 8
        %v6916 = vpop.permute.xlu0 %6915
        %6917 = vrot.lane.b32.xlu0 %v6641, 8
        %v6918 = vpop.permute.xlu0 %6917
        %6919 = vrot.lane.b32.xlu0 %v6644, 8
        %v6920 = vpop.permute.xlu0 %6919
        %6921 = vrot.lane.b32.xlu0 %v6646, 8
        %v6922 = vpop.permute.xlu0 %6921
        %6923 = vrot.lane.b32.xlu0 %v6648, 8
        %v6924 = vpop.permute.xlu0 %6923
        %6925 = vrot.lane.b32.xlu0 %v6650, 8
        %v6926 = vpop.permute.xlu0 %6925
        %6927 = vrot.lane.b32.xlu0 %v6653, 8
        %v6928 = vpop.permute.xlu0 %6927
        %6929 = vrot.lane.b32.xlu0 %v6655, 8
        %v6930 = vpop.permute.xlu0 %6929
        %6931 = vrot.lane.b32.xlu0 %v6657, 8
        %v6932 = vpop.permute.xlu0 %6931
        %6933 = vrot.lane.b32.xlu0 %v6659, 8
        %v6934 = vpop.permute.xlu0 %6933
        %6935 = vrot.lane.b32.xlu0 %v6662, 8
        %v6936 = vpop.permute.xlu0 %6935
        %6937 = vrot.lane.b32.xlu0 %v6664, 8
        %v6938 = vpop.permute.xlu0 %6937
        %6939 = vrot.lane.b32.xlu0 %v6666, 8
        %v6940 = vpop.permute.xlu0 %6939
        %6941 = vrot.lane.b32.xlu0 %v6668, 8
        %v6942 = vpop.permute.xlu0 %6941
        %6943 = vrot.lane.b32.xlu0 %v6671, 8
        %v6944 = vpop.permute.xlu0 %6943
        %6945 = vrot.lane.b32.xlu0 %v6673, 8
        %v6946 = vpop.permute.xlu0 %6945
        %6947 = vrot.lane.b32.xlu0 %v6675, 8
        %v6948 = vpop.permute.xlu0 %6947
        %6949 = vrot.lane.b32.xlu0 %v6677, 8
        %v6950 = vpop.permute.xlu0 %6949
        %6951 = vrot.lane.b32.xlu0 %v6680, 8
        %v6952 = vpop.permute.xlu0 %6951
        %6953 = vrot.lane.b32.xlu0 %v6682, 8
        %v6954 = vpop.permute.xlu0 %6953
        %6955 = vrot.lane.b32.xlu0 %v6684, 8
        %v6956 = vpop.permute.xlu0 %6955
        %6957 = vrot.lane.b32.xlu0 %v6686, 8
        %v6958 = vpop.permute.xlu0 %6957
        %6959 = vrot.lane.b32.xlu0 %v6689, 8
        %v6960 = vpop.permute.xlu0 %6959
        %6961 = vrot.lane.b32.xlu0 %v6691, 8
        %v6962 = vpop.permute.xlu0 %6961
        %6963 = vrot.lane.b32.xlu0 %v6693, 8
        %v6964 = vpop.permute.xlu0 %6963
        %6965 = vrot.lane.b32.xlu0 %v6695, 8
        %v6966 = vpop.permute.xlu0 %6965
        %6967 = vrot.lane.b32.xlu0 %v6698, 8
        %v6968 = vpop.permute.xlu0 %6967
        %6969 = vrot.lane.b32.xlu0 %v6700, 8
        %v6970 = vpop.permute.xlu0 %6969
        %6971 = vrot.lane.b32.xlu0 %v6702, 8
        %v6972 = vpop.permute.xlu0 %6971
        %6973 = vrot.lane.b32.xlu0 %v6704, 8
        %v6974 = vpop.permute.xlu0 %6973
        %6975 = vrot.lane.b32.xlu0 %v6707, 8
        %v6976 = vpop.permute.xlu0 %6975
        %6977 = vrot.lane.b32.xlu0 %v6709, 8
        %v6978 = vpop.permute.xlu0 %6977
        %6979 = vrot.lane.b32.xlu0 %v6711, 8
        %v6980 = vpop.permute.xlu0 %6979
        %6981 = vrot.lane.b32.xlu0 %v6713, 8
        %v6982 = vpop.permute.xlu0 %6981
        %6983 = vrot.lane.b32.xlu0 %v6716, 8
        %v6984 = vpop.permute.xlu0 %6983
        %6985 = vrot.lane.b32.xlu0 %v6718, 8
        %v6986 = vpop.permute.xlu0 %6985
        %6987 = vrot.lane.b32.xlu0 %v6720, 8
        %v6988 = vpop.permute.xlu0 %6987
        %6989 = vrot.lane.b32.xlu0 %v6722, 8
        %v6990 = vpop.permute.xlu0 %6989
        %6991 = vrot.lane.b32.xlu0 %v6725, 8
        %v6992 = vpop.permute.xlu0 %6991
        %6993 = vrot.lane.b32.xlu0 %v6727, 8
        %v6994 = vpop.permute.xlu0 %6993
        %6995 = vrot.lane.b32.xlu0 %v6729, 8
        %v6996 = vpop.permute.xlu0 %6995
        %6997 = vrot.lane.b32.xlu0 %v6731, 8
        %v6998 = vpop.permute.xlu0 %6997
        %6999 = vrot.lane.b32.xlu0 %v6734, 8
        %v7000 = vpop.permute.xlu0 %6999
        %7001 = vrot.lane.b32.xlu0 %v6736, 8
        %v7002 = vpop.permute.xlu0 %7001
        %7003 = vrot.lane.b32.xlu0 %v6738, 8
        %v7004 = vpop.permute.xlu0 %7003
        %7005 = vrot.lane.b32.xlu0 %v6740, 8
        %v7006 = vpop.permute.xlu0 %7005
        %7007 = vrot.lane.b32.xlu0 %v6743, 8
        %v7008 = vpop.permute.xlu0 %7007
        %7009 = vrot.lane.b32.xlu0 %v6745, 8
        %v7010 = vpop.permute.xlu0 %7009
        %7011 = vrot.lane.b32.xlu0 %v6747, 8
        %v7012 = vpop.permute.xlu0 %7011
        %7013 = vrot.lane.b32.xlu0 %v6749, 8
        %v7014 = vpop.permute.xlu0 %7013
        %7015 = vrot.lane.b32.xlu0 %v6752, 8
        %v7016 = vpop.permute.xlu0 %7015
        %7017 = vrot.lane.b32.xlu0 %v6754, 8
        %v7018 = vpop.permute.xlu0 %7017
        %7019 = vrot.lane.b32.xlu0 %v6756, 8
        %v7020 = vpop.permute.xlu0 %7019
        %7021 = vrot.lane.b32.xlu0 %v6758, 8
        %v7022 = vpop.permute.xlu0 %7021
        %7023 = vrot.lane.b32.xlu0 %v6761, 8
        %v7024 = vpop.permute.xlu0 %7023
        %7025 = vrot.lane.b32.xlu0 %v6763, 8
        %v7026 = vpop.permute.xlu0 %7025
        %7027 = vrot.lane.b32.xlu0 %v6765, 8
        %v7028 = vpop.permute.xlu0 %7027
        %7029 = vrot.lane.b32.xlu0 %v6767, 8
        %v7030 = vpop.permute.xlu0 %7029
        %7031 = vrot.lane.b32.xlu0 %v6770, 8
        %v7032 = vpop.permute.xlu0 %7031
        %7033 = vrot.lane.b32.xlu0 %v6772, 8
        %v7034 = vpop.permute.xlu0 %7033
        %7035 = vrot.lane.b32.xlu0 %v6774, 8
        %v7036 = vpop.permute.xlu0 %7035
        %7037 = vrot.lane.b32.xlu0 %v6776, 8
        %v7038 = vpop.permute.xlu0 %7037
        %7039 = vrot.lane.b32.xlu0 %v6779, 8
        %v7040 = vpop.permute.xlu0 %7039
        %7041 = vrot.lane.b32.xlu0 %v6781, 8
        %v7042 = vpop.permute.xlu0 %7041
        %7043 = vrot.lane.b32.xlu0 %v6783, 8
        %v7044 = vpop.permute.xlu0 %7043
        %7045 = vrot.lane.b32.xlu0 %v6785, 8
        %v7046 = vpop.permute.xlu0 %7045
        %7047 = vrot.lane.b32.xlu0 %v6788, 8
        %v7048 = vpop.permute.xlu0 %7047
        %7049 = vrot.lane.b32.xlu0 %v6790, 8
        %v7050 = vpop.permute.xlu0 %7049
        %7051 = vrot.lane.b32.xlu0 %v6792, 8
        %v7052 = vpop.permute.xlu0 %7051
        %7053 = vrot.lane.b32.xlu0 %v6794, 8
        %v7054 = vpop.permute.xlu0 %7053
        %7055 = vrot.lane.b32.xlu0 %v6797, 8
        %v7056 = vpop.permute.xlu0 %7055
        %7057 = vrot.lane.b32.xlu0 %v6799, 8
        %v7058 = vpop.permute.xlu0 %7057
        %7059 = vrot.lane.b32.xlu0 %v6801, 8
        %v7060 = vpop.permute.xlu0 %7059
        %7061 = vrot.lane.b32.xlu0 %v6803, 8
        %v7062 = vpop.permute.xlu0 %7061
        %7063 = vrot.lane.b32.xlu0 %v6806, 8
        %v7064 = vpop.permute.xlu0 %7063
        %7065 = vrot.lane.b32.xlu0 %v6808, 8
        %v7066 = vpop.permute.xlu0 %7065
        %7067 = vrot.lane.b32.xlu0 %v6810, 8
        %v7068 = vpop.permute.xlu0 %7067
        %7069 = vrot.lane.b32.xlu0 %v6812, 8
        %v7070 = vpop.permute.xlu0 %7069
        %7071 = vrot.lane.b32.xlu0 %v6815, 8
        %v7072 = vpop.permute.xlu0 %7071
        %7073 = vrot.lane.b32.xlu0 %v6817, 8
        %v7074 = vpop.permute.xlu0 %7073
        %7075 = vrot.lane.b32.xlu0 %v6819, 8
        %v7076 = vpop.permute.xlu0 %7075
        %7077 = vrot.lane.b32.xlu0 %v6821, 8
        %v7078 = vpop.permute.xlu0 %7077
        %7079 = vrot.lane.b32.xlu0 %v6824, 8
        %v7080 = vpop.permute.xlu0 %7079
        %7081 = vrot.lane.b32.xlu0 %v6826, 8
        %v7082 = vpop.permute.xlu0 %7081
        %7083 = vrot.lane.b32.xlu0 %v6828, 8
        %v7084 = vpop.permute.xlu0 %7083
        %7085 = vrot.lane.b32.xlu0 %v6830, 8
        %v7086 = vpop.permute.xlu0 %7085
        %v7215 = vrot.slane %v6223, 2
        %v7216 = vrot.slane %v6224, 2
        %v7217 = vsel %vm1180, %v7215, %v7216
        %v7218 = vrot.slane %v6225, 2
        %v7219 = vsel %vm1180, %v7216, %v7218
        %v7220 = vrot.slane %v6226, 2
        %v7221 = vsel %vm1180, %v7218, %v7220
        %v7222 = vrot.slane %v6227, 2
        %v7223 = vsel %vm1180, %v7220, %v7222
        %v7224 = vrot.slane %v6228, 2
        %v7225 = vrot.slane %v6229, 2
        %v7226 = vsel %vm1180, %v7224, %v7225
        %v7227 = vrot.slane %v6230, 2
        %v7228 = vsel %vm1180, %v7225, %v7227
        %v7229 = vrot.slane %v6231, 2
        %v7230 = vsel %vm1180, %v7227, %v7229
        %v7231 = vrot.slane %v6232, 2
        %v7232 = vsel %vm1180, %v7229, %v7231
        %v7233 = vrot.slane %v6233, 2
        %v7234 = vrot.slane %v6234, 2
        %v7235 = vsel %vm1180, %v7233, %v7234
        %v7236 = vrot.slane %v6235, 2
        %v7237 = vsel %vm1180, %v7234, %v7236
        %v7238 = vrot.slane %v6236, 2
        %v7239 = vsel %vm1180, %v7236, %v7238
        %v7240 = vrot.slane %v6237, 2
        %v7241 = vsel %vm1180, %v7238, %v7240
        %v7242 = vrot.slane %v6238, 2
        %v7243 = vrot.slane %v6239, 2
        %v7244 = vsel %vm1180, %v7242, %v7243
        %v7245 = vrot.slane %v6240, 2
        %v7246 = vsel %vm1180, %v7243, %v7245
        %v7247 = vrot.slane %v6241, 2
        %v7248 = vsel %vm1180, %v7245, %v7247
        %v7249 = vrot.slane %v6242, 2
        %v7250 = vsel %vm1180, %v7247, %v7249
        %v7251 = vrot.slane %v6243, 2
        %v7252 = vrot.slane %v6244, 2
        %v7253 = vsel %vm1180, %v7251, %v7252
        %v7254 = vrot.slane %v6245, 2
        %v7255 = vsel %vm1180, %v7252, %v7254
        %v7256 = vrot.slane %v6246, 2
        %v7257 = vsel %vm1180, %v7254, %v7256
        %v7258 = vrot.slane %v6247, 2
        %v7259 = vsel %vm1180, %v7256, %v7258
        %v7260 = vrot.slane %v6248, 2
        %v7261 = vrot.slane %v6249, 2
        %v7262 = vsel %vm1180, %v7260, %v7261
        %v7263 = vrot.slane %v6250, 2
        %v7264 = vsel %vm1180, %v7261, %v7263
        %v7265 = vrot.slane %v6251, 2
        %v7266 = vsel %vm1180, %v7263, %v7265
        %v7267 = vrot.slane %v6252, 2
        %v7268 = vsel %vm1180, %v7265, %v7267
        %v7269 = vrot.slane %v6253, 2
        %v7270 = vrot.slane %v6254, 2
        %v7271 = vsel %vm1180, %v7269, %v7270
        %v7272 = vrot.slane %v6255, 2
        %v7273 = vsel %vm1180, %v7270, %v7272
        %v7274 = vrot.slane %v6256, 2
        %v7275 = vsel %vm1180, %v7272, %v7274
        %v7276 = vrot.slane %v6257, 2
        %v7277 = vsel %vm1180, %v7274, %v7276
        %v7278 = vrot.slane %v6258, 2
        %v7279 = vrot.slane %v6259, 2
        %v7280 = vsel %vm1180, %v7278, %v7279
        %v7281 = vrot.slane %v6260, 2
        %v7282 = vsel %vm1180, %v7279, %v7281
        %v7283 = vrot.slane %v6261, 2
        %v7284 = vsel %vm1180, %v7281, %v7283
        %v7285 = vrot.slane %v6262, 2
        %v7286 = vsel %vm1180, %v7283, %v7285
        %v7287 = vrot.slane %v6263, 2
        %v7288 = vrot.slane %v6264, 2
        %v7289 = vsel %vm1180, %v7287, %v7288
        %v7290 = vrot.slane %v6265, 2
        %v7291 = vsel %vm1180, %v7288, %v7290
        %v7292 = vrot.slane %v6266, 2
        %v7293 = vsel %vm1180, %v7290, %v7292
        %v7294 = vrot.slane %v6267, 2
        %v7295 = vsel %vm1180, %v7292, %v7294
        %v7296 = vrot.slane %v6268, 2
        %v7297 = vrot.slane %v6269, 2
        %v7298 = vsel %vm1180, %v7296, %v7297
        %v7299 = vrot.slane %v6270, 2
        %v7300 = vsel %vm1180, %v7297, %v7299
        %v7301 = vrot.slane %v6271, 2
        %v7302 = vsel %vm1180, %v7299, %v7301
        %v7303 = vrot.slane %v6272, 2
        %v7304 = vsel %vm1180, %v7301, %v7303
        %v7305 = vrot.slane %v6273, 2
        %v7306 = vrot.slane %v6274, 2
        %v7307 = vsel %vm1180, %v7305, %v7306
        %v7308 = vrot.slane %v6275, 2
        %v7309 = vsel %vm1180, %v7306, %v7308
        %v7310 = vrot.slane %v6276, 2
        %v7311 = vsel %vm1180, %v7308, %v7310
        %v7312 = vrot.slane %v6277, 2
        %v7313 = vsel %vm1180, %v7310, %v7312
        %v7314 = vrot.slane %v6278, 2
        %v7315 = vrot.slane %v6279, 2
        %v7316 = vsel %vm1180, %v7314, %v7315
        %v7317 = vrot.slane %v6280, 2
        %v7318 = vsel %vm1180, %v7315, %v7317
        %v7319 = vrot.slane %v6281, 2
        %v7320 = vsel %vm1180, %v7317, %v7319
        %v7321 = vrot.slane %v6282, 2
        %v7322 = vsel %vm1180, %v7319, %v7321
        %v7323 = vrot.slane %v6283, 2
        %v7324 = vrot.slane %v6284, 2
        %v7325 = vsel %vm1180, %v7323, %v7324
        %v7326 = vrot.slane %v6285, 2
        %v7327 = vsel %vm1180, %v7324, %v7326
        %v7328 = vrot.slane %v6286, 2
        %v7329 = vsel %vm1180, %v7326, %v7328
        %v7330 = vrot.slane %v6287, 2
        %v7331 = vsel %vm1180, %v7328, %v7330
        %v7332 = vrot.slane %v6288, 2
        %v7333 = vrot.slane %v6289, 2
        %v7334 = vsel %vm1180, %v7332, %v7333
        %v7335 = vrot.slane %v6290, 2
        %v7336 = vsel %vm1180, %v7333, %v7335
        %v7337 = vrot.slane %v6291, 2
        %v7338 = vsel %vm1180, %v7335, %v7337
        %v7339 = vrot.slane %v6292, 2
        %v7340 = vsel %vm1180, %v7337, %v7339
        %v7341 = vrot.slane %v6293, 2
        %v7342 = vrot.slane %v6294, 2
        %v7343 = vsel %vm1180, %v7341, %v7342
        %v7344 = vrot.slane %v6295, 2
        %v7345 = vsel %vm1180, %v7342, %v7344
        %v7346 = vrot.slane %v6296, 2
        %v7347 = vsel %vm1180, %v7344, %v7346
        %v7348 = vrot.slane %v6297, 2
        %v7349 = vsel %vm1180, %v7346, %v7348
        %v7350 = vrot.slane %v6298, 2
        %v7351 = vrot.slane %v6299, 2
        %v7352 = vsel %vm1180, %v7350, %v7351
        %v7353 = vrot.slane %v6300, 2
        %v7354 = vsel %vm1180, %v7351, %v7353
        %v7355 = vrot.slane %v6301, 2
        %v7356 = vsel %vm1180, %v7353, %v7355
        %v7357 = vrot.slane %v6302, 2
        %v7358 = vsel %vm1180, %v7355, %v7357
        %v7359 = vrot.slane %v6303, 2
        %v7360 = vrot.slane %v6304, 2
        %v7361 = vsel %vm1180, %v7359, %v7360
        %v7362 = vrot.slane %v6305, 2
        %v7363 = vsel %vm1180, %v7360, %v7362
        %v7364 = vrot.slane %v6306, 2
        %v7365 = vsel %vm1180, %v7362, %v7364
        %v7366 = vrot.slane %v6307, 2
        %v7367 = vsel %vm1180, %v7364, %v7366
        %v7368 = vrot.slane %v6308, 2
        %v7369 = vrot.slane %v6309, 2
        %v7370 = vsel %vm1180, %v7368, %v7369
        %v7371 = vrot.slane %v6310, 2
        %v7372 = vsel %vm1180, %v7369, %v7371
        %v7373 = vrot.slane %v6311, 2
        %v7374 = vsel %vm1180, %v7371, %v7373
        %v7375 = vrot.slane %v6312, 2
        %v7376 = vsel %vm1180, %v7373, %v7375
        %v7377 = vrot.slane %v6313, 2
        %v7378 = vrot.slane %v6314, 2
        %v7379 = vsel %vm1180, %v7377, %v7378
        %v7380 = vrot.slane %v6315, 2
        %v7381 = vsel %vm1180, %v7378, %v7380
        %v7382 = vrot.slane %v6316, 2
        %v7383 = vsel %vm1180, %v7380, %v7382
        %v7384 = vrot.slane %v6317, 2
        %v7385 = vsel %vm1180, %v7382, %v7384
        %v7386 = vrot.slane %v6318, 2
        %v7387 = vrot.slane %v6319, 2
        %v7388 = vsel %vm1180, %v7386, %v7387
        %v7389 = vrot.slane %v6320, 2
        %v7390 = vsel %vm1180, %v7387, %v7389
        %v7391 = vrot.slane %v6321, 2
        %v7392 = vsel %vm1180, %v7389, %v7391
        %v7393 = vrot.slane %v6322, 2
        %v7394 = vsel %vm1180, %v7391, %v7393
        %v7395 = vrot.slane %v6323, 2
        %v7396 = vrot.slane %v6324, 2
        %v7397 = vsel %vm1180, %v7395, %v7396
        %v7398 = vrot.slane %v6325, 2
        %v7399 = vsel %vm1180, %v7396, %v7398
        %v7400 = vrot.slane %v6326, 2
        %v7401 = vsel %vm1180, %v7398, %v7400
        %v7402 = vrot.slane %v6327, 2
        %v7403 = vsel %vm1180, %v7400, %v7402
        %v7404 = vrot.slane %v6328, 2
        %v7405 = vrot.slane %v6329, 2
        %v7406 = vsel %vm1180, %v7404, %v7405
        %v7407 = vrot.slane %v6330, 2
        %v7408 = vsel %vm1180, %v7405, %v7407
        %v7409 = vrot.slane %v6331, 2
        %v7410 = vsel %vm1180, %v7407, %v7409
        %v7411 = vrot.slane %v6332, 2
        %v7412 = vsel %vm1180, %v7409, %v7411
        %v7413 = vrot.slane %v6333, 2
        %v7414 = vrot.slane %v6334, 2
        %v7415 = vsel %vm1180, %v7413, %v7414
        %v7416 = vrot.slane %v6335, 2
        %v7417 = vsel %vm1180, %v7414, %v7416
        %v7418 = vrot.slane %v6336, 2
        %v7419 = vsel %vm1180, %v7416, %v7418
        %v7420 = vrot.slane %v6337, 2
        %v7421 = vsel %vm1180, %v7418, %v7420
        %v7422 = vrot.slane %v6338, 2
        %v7423 = vrot.slane %v6339, 2
        %v7424 = vsel %vm1180, %v7422, %v7423
        %v7425 = vrot.slane %v6340, 2
        %v7426 = vsel %vm1180, %v7423, %v7425
        %v7427 = vrot.slane %v6341, 2
        %v7428 = vsel %vm1180, %v7425, %v7427
        %v7429 = vrot.slane %v6342, 2
        %v7430 = vsel %vm1180, %v7427, %v7429
        %v7431 = vrot.slane %v6343, 2
        %v7432 = vrot.slane %v6344, 2
        %v7433 = vsel %vm1180, %v7431, %v7432
        %v7434 = vrot.slane %v6345, 2
        %v7435 = vsel %vm1180, %v7432, %v7434
        %v7436 = vrot.slane %v6346, 2
        %v7437 = vsel %vm1180, %v7434, %v7436
        %v7438 = vrot.slane %v6347, 2
        %v7439 = vsel %vm1180, %v7436, %v7438
        %v7440 = vrot.slane %v6348, 2
        %v7441 = vrot.slane %v6349, 2
        %v7442 = vsel %vm1180, %v7440, %v7441
        %v7443 = vrot.slane %v6350, 2
        %v7444 = vsel %vm1180, %v7441, %v7443
        %v7445 = vrot.slane %v6351, 2
        %v7446 = vsel %vm1180, %v7443, %v7445
        %v7447 = vrot.slane %v6352, 2
        %v7448 = vsel %vm1180, %v7445, %v7447
        %v7449 = vrot.slane %v6353, 2
        %v7450 = vrot.slane %v6354, 2
        %v7451 = vsel %vm1180, %v7449, %v7450
        %v7452 = vrot.slane %v6355, 2
        %v7453 = vsel %vm1180, %v7450, %v7452
        %v7454 = vrot.slane %v6356, 2
        %v7455 = vsel %vm1180, %v7452, %v7454
        %v7456 = vrot.slane %v6357, 2
        %v7457 = vsel %vm1180, %v7454, %v7456
        %v7458 = vrot.slane %v6358, 2
        %v7459 = vrot.slane %v6359, 2
        %v7460 = vsel %vm1180, %v7458, %v7459
        %v7461 = vrot.slane %v6360, 2
        %v7462 = vsel %vm1180, %v7459, %v7461
        %v7463 = vrot.slane %v6361, 2
        %v7464 = vsel %vm1180, %v7461, %v7463
        %v7465 = vrot.slane %v6362, 2
        %v7466 = vsel %vm1180, %v7463, %v7465
        %v7467 = vrot.slane %v6363, 2
        %v7468 = vrot.slane %v6364, 2
        %v7469 = vsel %vm1180, %v7467, %v7468
        %v7470 = vrot.slane %v6365, 2
        %v7471 = vsel %vm1180, %v7468, %v7470
        %v7472 = vrot.slane %v6366, 2
        %v7473 = vsel %vm1180, %v7470, %v7472
        %v7474 = vrot.slane %v6367, 2
        %v7475 = vsel %vm1180, %v7472, %v7474
        %v7476 = vrot.slane %v6368, 2
        %v7477 = vrot.slane %v6369, 2
        %v7478 = vsel %vm1180, %v7476, %v7477
        %v7479 = vrot.slane %v6370, 2
        %v7480 = vsel %vm1180, %v7477, %v7479
        %v7481 = vrot.slane %v6371, 2
        %v7482 = vsel %vm1180, %v7479, %v7481
        %v7483 = vrot.slane %v6372, 2
        %v7484 = vsel %vm1180, %v7481, %v7483
        %v7485 = vrot.slane %v6373, 2
        %v7486 = vrot.slane %v6374, 2
        %v7487 = vsel %vm1180, %v7485, %v7486
        %v7488 = vrot.slane %v6375, 2
        %v7489 = vsel %vm1180, %v7486, %v7488
        %v7490 = vrot.slane %v6376, 2
        %v7491 = vsel %vm1180, %v7488, %v7490
        %v7492 = vrot.slane %v6377, 2
        %v7493 = vsel %vm1180, %v7490, %v7492
        %v7494 = vrot.slane %v6378, 2
        %v7495 = vrot.slane %v6379, 2
        %v7496 = vsel %vm1180, %v7494, %v7495
        %v7497 = vrot.slane %v6380, 2
        %v7498 = vsel %vm1180, %v7495, %v7497
        %v7499 = vrot.slane %v6381, 2
        %v7500 = vsel %vm1180, %v7497, %v7499
        %v7501 = vrot.slane %v6382, 2
        %v7502 = vsel %vm1180, %v7499, %v7501
        %7503 = vrot.lane.b32.xlu0 %v7217, 16
        %v7504 = vpop.permute.xlu0 %7503
        %7505 = vrot.lane.b32.xlu0 %v7219, 16
        %v7506 = vpop.permute.xlu0 %7505
        %7507 = vrot.lane.b32.xlu0 %v7221, 16
        %v7508 = vpop.permute.xlu0 %7507
        %7509 = vrot.lane.b32.xlu0 %v7223, 16
        %v7510 = vpop.permute.xlu0 %7509
        %7511 = vrot.lane.b32.xlu0 %v7226, 16
        %v7512 = vpop.permute.xlu0 %7511
        %7513 = vrot.lane.b32.xlu0 %v7228, 16
        %v7514 = vpop.permute.xlu0 %7513
        %7515 = vrot.lane.b32.xlu0 %v7230, 16
        %v7516 = vpop.permute.xlu0 %7515
        %7517 = vrot.lane.b32.xlu0 %v7232, 16
        %v7518 = vpop.permute.xlu0 %7517
        %7519 = vrot.lane.b32.xlu0 %v7235, 16
        %v7520 = vpop.permute.xlu0 %7519
        %7521 = vrot.lane.b32.xlu0 %v7237, 16
        %v7522 = vpop.permute.xlu0 %7521
        %7523 = vrot.lane.b32.xlu0 %v7239, 16
        %v7524 = vpop.permute.xlu0 %7523
        %7525 = vrot.lane.b32.xlu0 %v7241, 16
        %v7526 = vpop.permute.xlu0 %7525
        %7527 = vrot.lane.b32.xlu0 %v7244, 16
        %v7528 = vpop.permute.xlu0 %7527
        %7529 = vrot.lane.b32.xlu0 %v7246, 16
        %v7530 = vpop.permute.xlu0 %7529
        %7531 = vrot.lane.b32.xlu0 %v7248, 16
        %v7532 = vpop.permute.xlu0 %7531
        %7533 = vrot.lane.b32.xlu0 %v7250, 16
        %v7534 = vpop.permute.xlu0 %7533
        %7535 = vrot.lane.b32.xlu0 %v7253, 16
        %v7536 = vpop.permute.xlu0 %7535
        %7537 = vrot.lane.b32.xlu0 %v7255, 16
        %v7538 = vpop.permute.xlu0 %7537
        %7539 = vrot.lane.b32.xlu0 %v7257, 16
        %v7540 = vpop.permute.xlu0 %7539
        %7541 = vrot.lane.b32.xlu0 %v7259, 16
        %v7542 = vpop.permute.xlu0 %7541
        %7543 = vrot.lane.b32.xlu0 %v7262, 16
        %v7544 = vpop.permute.xlu0 %7543
        %7545 = vrot.lane.b32.xlu0 %v7264, 16
        %v7546 = vpop.permute.xlu0 %7545
        %7547 = vrot.lane.b32.xlu0 %v7266, 16
        %v7548 = vpop.permute.xlu0 %7547
        %7549 = vrot.lane.b32.xlu0 %v7268, 16
        %v7550 = vpop.permute.xlu0 %7549
        %7551 = vrot.lane.b32.xlu0 %v7271, 16
        %v7552 = vpop.permute.xlu0 %7551
        %7553 = vrot.lane.b32.xlu0 %v7273, 16
        %v7554 = vpop.permute.xlu0 %7553
        %7555 = vrot.lane.b32.xlu0 %v7275, 16
        %v7556 = vpop.permute.xlu0 %7555
        %7557 = vrot.lane.b32.xlu0 %v7277, 16
        %v7558 = vpop.permute.xlu0 %7557
        %7559 = vrot.lane.b32.xlu0 %v7280, 16
        %v7560 = vpop.permute.xlu0 %7559
        %7561 = vrot.lane.b32.xlu0 %v7282, 16
        %v7562 = vpop.permute.xlu0 %7561
        %7563 = vrot.lane.b32.xlu0 %v7284, 16
        %v7564 = vpop.permute.xlu0 %7563
        %7565 = vrot.lane.b32.xlu0 %v7286, 16
        %v7566 = vpop.permute.xlu0 %7565
        %7567 = vrot.lane.b32.xlu0 %v7289, 16
        %v7568 = vpop.permute.xlu0 %7567
        %7569 = vrot.lane.b32.xlu0 %v7291, 16
        %v7570 = vpop.permute.xlu0 %7569
        %7571 = vrot.lane.b32.xlu0 %v7293, 16
        %v7572 = vpop.permute.xlu0 %7571
        %7573 = vrot.lane.b32.xlu0 %v7295, 16
        %v7574 = vpop.permute.xlu0 %7573
        %7575 = vrot.lane.b32.xlu0 %v7298, 16
        %v7576 = vpop.permute.xlu0 %7575
        %7577 = vrot.lane.b32.xlu0 %v7300, 16
        %v7578 = vpop.permute.xlu0 %7577
        %7579 = vrot.lane.b32.xlu0 %v7302, 16
        %v7580 = vpop.permute.xlu0 %7579
        %7581 = vrot.lane.b32.xlu0 %v7304, 16
        %v7582 = vpop.permute.xlu0 %7581
        %7583 = vrot.lane.b32.xlu0 %v7307, 16
        %v7584 = vpop.permute.xlu0 %7583
        %7585 = vrot.lane.b32.xlu0 %v7309, 16
        %v7586 = vpop.permute.xlu0 %7585
        %7587 = vrot.lane.b32.xlu0 %v7311, 16
        %v7588 = vpop.permute.xlu0 %7587
        %7589 = vrot.lane.b32.xlu0 %v7313, 16
        %v7590 = vpop.permute.xlu0 %7589
        %7591 = vrot.lane.b32.xlu0 %v7316, 16
        %v7592 = vpop.permute.xlu0 %7591
        %7593 = vrot.lane.b32.xlu0 %v7318, 16
        %v7594 = vpop.permute.xlu0 %7593
        %7595 = vrot.lane.b32.xlu0 %v7320, 16
        %v7596 = vpop.permute.xlu0 %7595
        %7597 = vrot.lane.b32.xlu0 %v7322, 16
        %v7598 = vpop.permute.xlu0 %7597
        %7599 = vrot.lane.b32.xlu0 %v7325, 16
        %v7600 = vpop.permute.xlu0 %7599
        %7601 = vrot.lane.b32.xlu0 %v7327, 16
        %v7602 = vpop.permute.xlu0 %7601
        %7603 = vrot.lane.b32.xlu0 %v7329, 16
        %v7604 = vpop.permute.xlu0 %7603
        %7605 = vrot.lane.b32.xlu0 %v7331, 16
        %v7606 = vpop.permute.xlu0 %7605
        %7607 = vrot.lane.b32.xlu0 %v7334, 16
        %v7608 = vpop.permute.xlu0 %7607
        %7609 = vrot.lane.b32.xlu0 %v7336, 16
        %v7610 = vpop.permute.xlu0 %7609
        %7611 = vrot.lane.b32.xlu0 %v7338, 16
        %v7612 = vpop.permute.xlu0 %7611
        %7613 = vrot.lane.b32.xlu0 %v7340, 16
        %v7614 = vpop.permute.xlu0 %7613
        %7615 = vrot.lane.b32.xlu0 %v7343, 16
        %v7616 = vpop.permute.xlu0 %7615
        %7617 = vrot.lane.b32.xlu0 %v7345, 16
        %v7618 = vpop.permute.xlu0 %7617
        %7619 = vrot.lane.b32.xlu0 %v7347, 16
        %v7620 = vpop.permute.xlu0 %7619
        %7621 = vrot.lane.b32.xlu0 %v7349, 16
        %v7622 = vpop.permute.xlu0 %7621
        %7623 = vrot.lane.b32.xlu0 %v7352, 16
        %v7624 = vpop.permute.xlu0 %7623
        %7625 = vrot.lane.b32.xlu0 %v7354, 16
        %v7626 = vpop.permute.xlu0 %7625
        %7627 = vrot.lane.b32.xlu0 %v7356, 16
        %v7628 = vpop.permute.xlu0 %7627
        %7629 = vrot.lane.b32.xlu0 %v7358, 16
        %v7630 = vpop.permute.xlu0 %7629
        %7631 = vrot.lane.b32.xlu0 %v7361, 16
        %v7632 = vpop.permute.xlu0 %7631
        %7633 = vrot.lane.b32.xlu0 %v7363, 16
        %v7634 = vpop.permute.xlu0 %7633
        %7635 = vrot.lane.b32.xlu0 %v7365, 16
        %v7636 = vpop.permute.xlu0 %7635
        %7637 = vrot.lane.b32.xlu0 %v7367, 16
        %v7638 = vpop.permute.xlu0 %7637
        %7639 = vrot.lane.b32.xlu0 %v7370, 16
        %v7640 = vpop.permute.xlu0 %7639
        %7641 = vrot.lane.b32.xlu0 %v7372, 16
        %v7642 = vpop.permute.xlu0 %7641
        %7643 = vrot.lane.b32.xlu0 %v7374, 16
        %v7644 = vpop.permute.xlu0 %7643
        %7645 = vrot.lane.b32.xlu0 %v7376, 16
        %v7646 = vpop.permute.xlu0 %7645
        %7647 = vrot.lane.b32.xlu0 %v7379, 16
        %v7648 = vpop.permute.xlu0 %7647
        %7649 = vrot.lane.b32.xlu0 %v7381, 16
        %v7650 = vpop.permute.xlu0 %7649
        %7651 = vrot.lane.b32.xlu0 %v7383, 16
        %v7652 = vpop.permute.xlu0 %7651
        %7653 = vrot.lane.b32.xlu0 %v7385, 16
        %v7654 = vpop.permute.xlu0 %7653
        %7655 = vrot.lane.b32.xlu0 %v7388, 16
        %v7656 = vpop.permute.xlu0 %7655
        %7657 = vrot.lane.b32.xlu0 %v7390, 16
        %v7658 = vpop.permute.xlu0 %7657
        %7659 = vrot.lane.b32.xlu0 %v7392, 16
        %v7660 = vpop.permute.xlu0 %7659
        %7661 = vrot.lane.b32.xlu0 %v7394, 16
        %v7662 = vpop.permute.xlu0 %7661
        %7663 = vrot.lane.b32.xlu0 %v7397, 16
        %v7664 = vpop.permute.xlu0 %7663
        %7665 = vrot.lane.b32.xlu0 %v7399, 16
        %v7666 = vpop.permute.xlu0 %7665
        %7667 = vrot.lane.b32.xlu0 %v7401, 16
        %v7668 = vpop.permute.xlu0 %7667
        %7669 = vrot.lane.b32.xlu0 %v7403, 16
        %v7670 = vpop.permute.xlu0 %7669
        %7671 = vrot.lane.b32.xlu0 %v7406, 16
        %v7672 = vpop.permute.xlu0 %7671
        %7673 = vrot.lane.b32.xlu0 %v7408, 16
        %v7674 = vpop.permute.xlu0 %7673
        %7675 = vrot.lane.b32.xlu0 %v7410, 16
        %v7676 = vpop.permute.xlu0 %7675
        %7677 = vrot.lane.b32.xlu0 %v7412, 16
        %v7678 = vpop.permute.xlu0 %7677
        %7679 = vrot.lane.b32.xlu0 %v7415, 16
        %v7680 = vpop.permute.xlu0 %7679
        %7681 = vrot.lane.b32.xlu0 %v7417, 16
        %v7682 = vpop.permute.xlu0 %7681
        %7683 = vrot.lane.b32.xlu0 %v7419, 16
        %v7684 = vpop.permute.xlu0 %7683
        %7685 = vrot.lane.b32.xlu0 %v7421, 16
        %v7686 = vpop.permute.xlu0 %7685
        %7687 = vrot.lane.b32.xlu0 %v7424, 16
        %v7688 = vpop.permute.xlu0 %7687
        %7689 = vrot.lane.b32.xlu0 %v7426, 16
        %v7690 = vpop.permute.xlu0 %7689
        %7691 = vrot.lane.b32.xlu0 %v7428, 16
        %v7692 = vpop.permute.xlu0 %7691
        %7693 = vrot.lane.b32.xlu0 %v7430, 16
        %v7694 = vpop.permute.xlu0 %7693
        %7695 = vrot.lane.b32.xlu0 %v7433, 16
        %v7696 = vpop.permute.xlu0 %7695
        %7697 = vrot.lane.b32.xlu0 %v7435, 16
        %v7698 = vpop.permute.xlu0 %7697
        %7699 = vrot.lane.b32.xlu0 %v7437, 16
        %v7700 = vpop.permute.xlu0 %7699
        %7701 = vrot.lane.b32.xlu0 %v7439, 16
        %v7702 = vpop.permute.xlu0 %7701
        %7703 = vrot.lane.b32.xlu0 %v7442, 16
        %v7704 = vpop.permute.xlu0 %7703
        %7705 = vrot.lane.b32.xlu0 %v7444, 16
        %v7706 = vpop.permute.xlu0 %7705
        %7707 = vrot.lane.b32.xlu0 %v7446, 16
        %v7708 = vpop.permute.xlu0 %7707
        %7709 = vrot.lane.b32.xlu0 %v7448, 16
        %v7710 = vpop.permute.xlu0 %7709
        %7711 = vrot.lane.b32.xlu0 %v7451, 16
        %v7712 = vpop.permute.xlu0 %7711
        %7713 = vrot.lane.b32.xlu0 %v7453, 16
        %v7714 = vpop.permute.xlu0 %7713
        %7715 = vrot.lane.b32.xlu0 %v7455, 16
        %v7716 = vpop.permute.xlu0 %7715
        %7717 = vrot.lane.b32.xlu0 %v7457, 16
        %v7718 = vpop.permute.xlu0 %7717
        %7719 = vrot.lane.b32.xlu0 %v7460, 16
        %v7720 = vpop.permute.xlu0 %7719
        %7721 = vrot.lane.b32.xlu0 %v7462, 16
        %v7722 = vpop.permute.xlu0 %7721
        %7723 = vrot.lane.b32.xlu0 %v7464, 16
        %v7724 = vpop.permute.xlu0 %7723
        %7725 = vrot.lane.b32.xlu0 %v7466, 16
        %v7726 = vpop.permute.xlu0 %7725
        %7727 = vrot.lane.b32.xlu0 %v7469, 16
        %v7728 = vpop.permute.xlu0 %7727
        %7729 = vrot.lane.b32.xlu0 %v7471, 16
        %v7730 = vpop.permute.xlu0 %7729
        %7731 = vrot.lane.b32.xlu0 %v7473, 16
        %v7732 = vpop.permute.xlu0 %7731
        %7733 = vrot.lane.b32.xlu0 %v7475, 16
        %v7734 = vpop.permute.xlu0 %7733
        %7735 = vrot.lane.b32.xlu0 %v7478, 16
        %v7736 = vpop.permute.xlu0 %7735
        %7737 = vrot.lane.b32.xlu0 %v7480, 16
        %v7738 = vpop.permute.xlu0 %7737
        %7739 = vrot.lane.b32.xlu0 %v7482, 16
        %v7740 = vpop.permute.xlu0 %7739
        %7741 = vrot.lane.b32.xlu0 %v7484, 16
        %v7742 = vpop.permute.xlu0 %7741
        %7743 = vrot.lane.b32.xlu0 %v7487, 16
        %v7744 = vpop.permute.xlu0 %7743
        %7745 = vrot.lane.b32.xlu0 %v7489, 16
        %v7746 = vpop.permute.xlu0 %7745
        %7747 = vrot.lane.b32.xlu0 %v7491, 16
        %v7748 = vpop.permute.xlu0 %7747
        %7749 = vrot.lane.b32.xlu0 %v7493, 16
        %v7750 = vpop.permute.xlu0 %7749
        %7751 = vrot.lane.b32.xlu0 %v7496, 16
        %v7752 = vpop.permute.xlu0 %7751
        %7753 = vrot.lane.b32.xlu0 %v7498, 16
        %v7754 = vpop.permute.xlu0 %7753
        %7755 = vrot.lane.b32.xlu0 %v7500, 16
        %v7756 = vpop.permute.xlu0 %7755
        %7757 = vrot.lane.b32.xlu0 %v7502, 16
        %v7758 = vpop.permute.xlu0 %7757
        %v7887 = vsel %vm1853, %v6223, %v6832
        %v7888 = vsel %vm1853, %v6224, %v6834
        %v7889 = vsel %vm1853, %v6225, %v6836
        %v7890 = vsel %vm1853, %v6226, %v6838
        %v7891 = vsel %vm1853, %v6228, %v6840
        %v7892 = vsel %vm1853, %v6229, %v6842
        %v7893 = vsel %vm1853, %v6230, %v6844
        %v7894 = vsel %vm1853, %v6231, %v6846
        %v7895 = vsel %vm1853, %v6233, %v6848
        %v7896 = vsel %vm1853, %v6234, %v6850
        %v7897 = vsel %vm1853, %v6235, %v6852
        %v7898 = vsel %vm1853, %v6236, %v6854
        %v7899 = vsel %vm1853, %v6238, %v6856
        %v7900 = vsel %vm1853, %v6239, %v6858
        %v7901 = vsel %vm1853, %v6240, %v6860
        %v7902 = vsel %vm1853, %v6241, %v6862
        %v7903 = vsel %vm1853, %v6243, %v6864
        %v7904 = vsel %vm1853, %v6244, %v6866
        %v7905 = vsel %vm1853, %v6245, %v6868
        %v7906 = vsel %vm1853, %v6246, %v6870
        %v7907 = vsel %vm1853, %v6248, %v6872
        %v7908 = vsel %vm1853, %v6249, %v6874
        %v7909 = vsel %vm1853, %v6250, %v6876
        %v7910 = vsel %vm1853, %v6251, %v6878
        %v7911 = vsel %vm1853, %v6253, %v6880
        %v7912 = vsel %vm1853, %v6254, %v6882
        %v7913 = vsel %vm1853, %v6255, %v6884
        %v7914 = vsel %vm1853, %v6256, %v6886
        %v7915 = vsel %vm1853, %v6258, %v6888
        %v7916 = vsel %vm1853, %v6259, %v6890
        %v7917 = vsel %vm1853, %v6260, %v6892
        %v7918 = vsel %vm1853, %v6261, %v6894
        %v7919 = vsel %vm1853, %v6263, %v6896
        %v7920 = vsel %vm1853, %v6264, %v6898
        %v7921 = vsel %vm1853, %v6265, %v6900
        %v7922 = vsel %vm1853, %v6266, %v6902
        %v7923 = vsel %vm1853, %v6268, %v6904
        %v7924 = vsel %vm1853, %v6269, %v6906
        %v7925 = vsel %vm1853, %v6270, %v6908
        %v7926 = vsel %vm1853, %v6271, %v6910
        %v7927 = vsel %vm1853, %v6273, %v6912
        %v7928 = vsel %vm1853, %v6274, %v6914
        %v7929 = vsel %vm1853, %v6275, %v6916
        %v7930 = vsel %vm1853, %v6276, %v6918
        %v7931 = vsel %vm1853, %v6278, %v6920
        %v7932 = vsel %vm1853, %v6279, %v6922
        %v7933 = vsel %vm1853, %v6280, %v6924
        %v7934 = vsel %vm1853, %v6281, %v6926
        %v7935 = vsel %vm1853, %v6283, %v6928
        %v7936 = vsel %vm1853, %v6284, %v6930
        %v7937 = vsel %vm1853, %v6285, %v6932
        %v7938 = vsel %vm1853, %v6286, %v6934
        %v7939 = vsel %vm1853, %v6288, %v6936
        %v7940 = vsel %vm1853, %v6289, %v6938
        %v7941 = vsel %vm1853, %v6290, %v6940
        %v7942 = vsel %vm1853, %v6291, %v6942
        %v7943 = vsel %vm1853, %v6293, %v6944
        %v7944 = vsel %vm1853, %v6294, %v6946
        %v7945 = vsel %vm1853, %v6295, %v6948
        %v7946 = vsel %vm1853, %v6296, %v6950
        %v7947 = vsel %vm1853, %v6298, %v6952
        %v7948 = vsel %vm1853, %v6299, %v6954
        %v7949 = vsel %vm1853, %v6300, %v6956
        %v7950 = vsel %vm1853, %v6301, %v6958
        %v7951 = vsel %vm1853, %v6303, %v6960
        %v7952 = vsel %vm1853, %v6304, %v6962
        %v7953 = vsel %vm1853, %v6305, %v6964
        %v7954 = vsel %vm1853, %v6306, %v6966
        %v7955 = vsel %vm1853, %v6308, %v6968
        %v7956 = vsel %vm1853, %v6309, %v6970
        %v7957 = vsel %vm1853, %v6310, %v6972
        %v7958 = vsel %vm1853, %v6311, %v6974
        %v7959 = vsel %vm1853, %v6313, %v6976
        %v7960 = vsel %vm1853, %v6314, %v6978
        %v7961 = vsel %vm1853, %v6315, %v6980
        %v7962 = vsel %vm1853, %v6316, %v6982
        %v7963 = vsel %vm1853, %v6318, %v6984
        %v7964 = vsel %vm1853, %v6319, %v6986
        %v7965 = vsel %vm1853, %v6320, %v6988
        %v7966 = vsel %vm1853, %v6321, %v6990
        %v7967 = vsel %vm1853, %v6323, %v6992
        %v7968 = vsel %vm1853, %v6324, %v6994
        %v7969 = vsel %vm1853, %v6325, %v6996
        %v7970 = vsel %vm1853, %v6326, %v6998
        %v7971 = vsel %vm1853, %v6328, %v7000
        %v7972 = vsel %vm1853, %v6329, %v7002
        %v7973 = vsel %vm1853, %v6330, %v7004
        %v7974 = vsel %vm1853, %v6331, %v7006
        %v7975 = vsel %vm1853, %v6333, %v7008
        %v7976 = vsel %vm1853, %v6334, %v7010
        %v7977 = vsel %vm1853, %v6335, %v7012
        %v7978 = vsel %vm1853, %v6336, %v7014
        %v7979 = vsel %vm1853, %v6338, %v7016
        %v7980 = vsel %vm1853, %v6339, %v7018
        %v7981 = vsel %vm1853, %v6340, %v7020
        %v7982 = vsel %vm1853, %v6341, %v7022
        %v7983 = vsel %vm1853, %v6343, %v7024
        %v7984 = vsel %vm1853, %v6344, %v7026
        %v7985 = vsel %vm1853, %v6345, %v7028
        %v7986 = vsel %vm1853, %v6346, %v7030
        %v7987 = vsel %vm1853, %v6348, %v7032
        %v7988 = vsel %vm1853, %v6349, %v7034
        %v7989 = vsel %vm1853, %v6350, %v7036
        %v7990 = vsel %vm1853, %v6351, %v7038
        %v7991 = vsel %vm1853, %v6353, %v7040
        %v7992 = vsel %vm1853, %v6354, %v7042
        %v7993 = vsel %vm1853, %v6355, %v7044
        %v7994 = vsel %vm1853, %v6356, %v7046
        %v7995 = vsel %vm1853, %v6358, %v7048
        %v7996 = vsel %vm1853, %v6359, %v7050
        %v7997 = vsel %vm1853, %v6360, %v7052
        %v7998 = vsel %vm1853, %v6361, %v7054
        %v7999 = vsel %vm1853, %v6363, %v7056
        %v8000 = vsel %vm1853, %v6364, %v7058
        %v8001 = vsel %vm1853, %v6365, %v7060
        %v8002 = vsel %vm1853, %v6366, %v7062
        %v8003 = vsel %vm1853, %v6368, %v7064
        %v8004 = vsel %vm1853, %v6369, %v7066
        %v8005 = vsel %vm1853, %v6370, %v7068
        %v8006 = vsel %vm1853, %v6371, %v7070
        %v8007 = vsel %vm1853, %v6373, %v7072
        %v8008 = vsel %vm1853, %v6374, %v7074
        %v8009 = vsel %vm1853, %v6375, %v7076
        %v8010 = vsel %vm1853, %v6376, %v7078
        %v8011 = vsel %vm1853, %v6378, %v7080
        %v8012 = vsel %vm1853, %v6379, %v7082
        %v8013 = vsel %vm1853, %v6380, %v7084
        %v8014 = vsel %vm1853, %v6381, %v7086
        %v8015 = vsel %vm1982, %v7887, %v7504
        %v8016 = vsel %vm1982, %v7888, %v7506
        %v8017 = vsel %vm1982, %v7889, %v7508
        %v8018 = vsel %vm1982, %v7890, %v7510
        %v8019 = vsel %vm1982, %v7891, %v7512
        %v8020 = vsel %vm1982, %v7892, %v7514
        %v8021 = vsel %vm1982, %v7893, %v7516
        %v8022 = vsel %vm1982, %v7894, %v7518
        %v8023 = vsel %vm1982, %v7895, %v7520
        %v8024 = vsel %vm1982, %v7896, %v7522
        %v8025 = vsel %vm1982, %v7897, %v7524
        %v8026 = vsel %vm1982, %v7898, %v7526
        %v8027 = vsel %vm1982, %v7899, %v7528
        %v8028 = vsel %vm1982, %v7900, %v7530
        %v8029 = vsel %vm1982, %v7901, %v7532
        %v8030 = vsel %vm1982, %v7902, %v7534
        %v8031 = vsel %vm1982, %v7903, %v7536
        %v8032 = vsel %vm1982, %v7904, %v7538
        %v8033 = vsel %vm1982, %v7905, %v7540
        %v8034 = vsel %vm1982, %v7906, %v7542
        %v8035 = vsel %vm1982, %v7907, %v7544
        %v8036 = vsel %vm1982, %v7908, %v7546
        %v8037 = vsel %vm1982, %v7909, %v7548
        %v8038 = vsel %vm1982, %v7910, %v7550
        %v8039 = vsel %vm1982, %v7911, %v7552
        %v8040 = vsel %vm1982, %v7912, %v7554
        %v8041 = vsel %vm1982, %v7913, %v7556
        %v8042 = vsel %vm1982, %v7914, %v7558
        %v8043 = vsel %vm1982, %v7915, %v7560
        %v8044 = vsel %vm1982, %v7916, %v7562
        %v8045 = vsel %vm1982, %v7917, %v7564
        %v8046 = vsel %vm1982, %v7918, %v7566
        %v8047 = vsel %vm1982, %v7919, %v7568
        %v8048 = vsel %vm1982, %v7920, %v7570
        %v8049 = vsel %vm1982, %v7921, %v7572
        %v8050 = vsel %vm1982, %v7922, %v7574
        %v8051 = vsel %vm1982, %v7923, %v7576
        %v8052 = vsel %vm1982, %v7924, %v7578
        %v8053 = vsel %vm1982, %v7925, %v7580
        %v8054 = vsel %vm1982, %v7926, %v7582
        %v8055 = vsel %vm1982, %v7927, %v7584
        %v8056 = vsel %vm1982, %v7928, %v7586
        %v8057 = vsel %vm1982, %v7929, %v7588
        %v8058 = vsel %vm1982, %v7930, %v7590
        %v8059 = vsel %vm1982, %v7931, %v7592
        %v8060 = vsel %vm1982, %v7932, %v7594
        %v8061 = vsel %vm1982, %v7933, %v7596
        %v8062 = vsel %vm1982, %v7934, %v7598
        %v8063 = vsel %vm1982, %v7935, %v7600
        %v8064 = vsel %vm1982, %v7936, %v7602
        %v8065 = vsel %vm1982, %v7937, %v7604
        %v8066 = vsel %vm1982, %v7938, %v7606
        %v8067 = vsel %vm1982, %v7939, %v7608
        %v8068 = vsel %vm1982, %v7940, %v7610
        %v8069 = vsel %vm1982, %v7941, %v7612
        %v8070 = vsel %vm1982, %v7942, %v7614
        %v8071 = vsel %vm1982, %v7943, %v7616
        %v8072 = vsel %vm1982, %v7944, %v7618
        %v8073 = vsel %vm1982, %v7945, %v7620
        %v8074 = vsel %vm1982, %v7946, %v7622
        %v8075 = vsel %vm1982, %v7947, %v7624
        %v8076 = vsel %vm1982, %v7948, %v7626
        %v8077 = vsel %vm1982, %v7949, %v7628
        %v8078 = vsel %vm1982, %v7950, %v7630
        %v8079 = vsel %vm1982, %v7951, %v7632
        %v8080 = vsel %vm1982, %v7952, %v7634
        %v8081 = vsel %vm1982, %v7953, %v7636
        %v8082 = vsel %vm1982, %v7954, %v7638
        %v8083 = vsel %vm1982, %v7955, %v7640
        %v8084 = vsel %vm1982, %v7956, %v7642
        %v8085 = vsel %vm1982, %v7957, %v7644
        %v8086 = vsel %vm1982, %v7958, %v7646
        %v8087 = vsel %vm1982, %v7959, %v7648
        %v8088 = vsel %vm1982, %v7960, %v7650
        %v8089 = vsel %vm1982, %v7961, %v7652
        %v8090 = vsel %vm1982, %v7962, %v7654
        %v8091 = vsel %vm1982, %v7963, %v7656
        %v8092 = vsel %vm1982, %v7964, %v7658
        %v8093 = vsel %vm1982, %v7965, %v7660
        %v8094 = vsel %vm1982, %v7966, %v7662
        %v8095 = vsel %vm1982, %v7967, %v7664
        %v8096 = vsel %vm1982, %v7968, %v7666
        %v8097 = vsel %vm1982, %v7969, %v7668
        %v8098 = vsel %vm1982, %v7970, %v7670
        %v8099 = vsel %vm1982, %v7971, %v7672
        %v8100 = vsel %vm1982, %v7972, %v7674
        %v8101 = vsel %vm1982, %v7973, %v7676
        %v8102 = vsel %vm1982, %v7974, %v7678
        %v8103 = vsel %vm1982, %v7975, %v7680
        %v8104 = vsel %vm1982, %v7976, %v7682
        %v8105 = vsel %vm1982, %v7977, %v7684
        %v8106 = vsel %vm1982, %v7978, %v7686
        %v8107 = vsel %vm1982, %v7979, %v7688
        %v8108 = vsel %vm1982, %v7980, %v7690
        %v8109 = vsel %vm1982, %v7981, %v7692
        %v8110 = vsel %vm1982, %v7982, %v7694
        %v8111 = vsel %vm1982, %v7983, %v7696
        %v8112 = vsel %vm1982, %v7984, %v7698
        %v8113 = vsel %vm1982, %v7985, %v7700
        %v8114 = vsel %vm1982, %v7986, %v7702
        %v8115 = vsel %vm1982, %v7987, %v7704
        %v8116 = vsel %vm1982, %v7988, %v7706
        %v8117 = vsel %vm1982, %v7989, %v7708
        %v8118 = vsel %vm1982, %v7990, %v7710
        %v8119 = vsel %vm1982, %v7991, %v7712
        %v8120 = vsel %vm1982, %v7992, %v7714
        %v8121 = vsel %vm1982, %v7993, %v7716
        %v8122 = vsel %vm1982, %v7994, %v7718
        %v8123 = vsel %vm1982, %v7995, %v7720
        %v8124 = vsel %vm1982, %v7996, %v7722
        %v8125 = vsel %vm1982, %v7997, %v7724
        %v8126 = vsel %vm1982, %v7998, %v7726
        %v8127 = vsel %vm1982, %v7999, %v7728
        %v8128 = vsel %vm1982, %v8000, %v7730
        %v8129 = vsel %vm1982, %v8001, %v7732
        %v8130 = vsel %vm1982, %v8002, %v7734
        %v8131 = vsel %vm1982, %v8003, %v7736
        %v8132 = vsel %vm1982, %v8004, %v7738
        %v8133 = vsel %vm1982, %v8005, %v7740
        %v8134 = vsel %vm1982, %v8006, %v7742
        %v8135 = vsel %vm1982, %v8007, %v7744
        %v8136 = vsel %vm1982, %v8008, %v7746
        %v8137 = vsel %vm1982, %v8009, %v7748
        %v8138 = vsel %vm1982, %v8010, %v7750
        %v8139 = vsel %vm1982, %v8011, %v7752
        %v8140 = vsel %vm1982, %v8012, %v7754
        %v8141 = vsel %vm1982, %v8013, %v7756
        %v8142 = vsel %vm1982, %v8014, %v7758
        %s8143 = scalar_lea.vmem %s1, 48
        %v8144 = vld [vmem:[%s8143] sm:$0xff]
        %v8145 = vld [vmem:[%s8143 + $0x8] sm:$0xff]
        %v8146 = vld [vmem:[%s8143 + $0x10] sm:$0xff]
        %v8148 = vsel %vm4041, %v8015, 0
        %v8151 = vsel %vm4041, %v8016, 0
        %v8154 = vsel %vm4041, %v8017, 0
        %v8157 = vsel %vm4041, %v8018, 0
        %v8160 = vsel %vm4041, %v8019, 0
        %v8163 = vsel %vm4041, %v8020, 0
        %v8166 = vsel %vm4041, %v8021, 0
        %v8169 = vsel %vm4041, %v8022, 0
        %v8172 = vsel %vm4041, %v8023, 0
        %v8175 = vsel %vm4041, %v8024, 0
        %v8178 = vsel %vm4041, %v8025, 0
        %v8181 = vsel %vm4041, %v8026, 0
        %v8184 = vsel %vm4041, %v8027, 0
        %v8187 = vsel %vm4041, %v8028, 0
        %v8190 = vsel %vm4041, %v8029, 0
        %v8193 = vsel %vm4041, %v8030, 0
        %v8196 = vsel %vm4041, %v8031, 0
        %v8199 = vsel %vm4041, %v8032, 0
        %v8202 = vsel %vm4041, %v8033, 0
        %v8205 = vsel %vm4041, %v8034, 0
        %v8208 = vsel %vm4041, %v8035, 0
        %v8211 = vsel %vm4041, %v8036, 0
        %v8214 = vsel %vm4041, %v8037, 0
        %v8217 = vsel %vm4041, %v8038, 0
        %v8220 = vsel %vm4041, %v8039, 0
        %v8223 = vsel %vm4041, %v8040, 0
        %v8226 = vsel %vm4041, %v8041, 0
        %v8229 = vsel %vm4041, %v8042, 0
        %v8232 = vsel %vm4041, %v8043, 0
        %v8235 = vsel %vm4041, %v8044, 0
        %v8238 = vsel %vm4041, %v8045, 0
        %v8241 = vsel %vm4041, %v8046, 0
        %v8244 = vsel %vm4041, %v8047, 0
        %v8247 = vsel %vm4041, %v8048, 0
        %v8250 = vsel %vm4041, %v8049, 0
        %v8253 = vsel %vm4041, %v8050, 0
        %v8256 = vsel %vm4041, %v8051, 0
        %v8259 = vsel %vm4041, %v8052, 0
        %v8262 = vsel %vm4041, %v8053, 0
        %v8265 = vsel %vm4041, %v8054, 0
        %v8268 = vsel %vm4041, %v8055, 0
        %v8271 = vsel %vm4041, %v8056, 0
        %v8274 = vsel %vm4041, %v8057, 0
        %v8277 = vsel %vm4041, %v8058, 0
        %v8280 = vsel %vm4041, %v8059, 0
        %v8283 = vsel %vm4041, %v8060, 0
        %v8286 = vsel %vm4041, %v8061, 0
        %v8289 = vsel %vm4041, %v8062, 0
        %v8292 = vsel %vm4041, %v8063, 0
        %v8295 = vsel %vm4041, %v8064, 0
        %v8298 = vsel %vm4041, %v8065, 0
        %v8301 = vsel %vm4041, %v8066, 0
        %v8304 = vsel %vm4041, %v8067, 0
        %v8307 = vsel %vm4041, %v8068, 0
        %v8310 = vsel %vm4041, %v8069, 0
        %v8313 = vsel %vm4041, %v8070, 0
        %v8316 = vsel %vm4041, %v8071, 0
        %v8319 = vsel %vm4041, %v8072, 0
        %v8322 = vsel %vm4041, %v8073, 0
        %v8325 = vsel %vm4041, %v8074, 0
        %v8328 = vsel %vm4041, %v8075, 0
        %v8331 = vsel %vm4041, %v8076, 0
        %v8334 = vsel %vm4041, %v8077, 0
        %v8337 = vsel %vm4041, %v8078, 0
        %v8340 = vsel %vm4041, %v8079, 0
        %v8343 = vsel %vm4041, %v8080, 0
        %v8346 = vsel %vm4041, %v8081, 0
        %v8349 = vsel %vm4041, %v8082, 0
        %v8352 = vsel %vm4041, %v8083, 0
        %v8355 = vsel %vm4041, %v8084, 0
        %v8358 = vsel %vm4041, %v8085, 0
        %v8361 = vsel %vm4041, %v8086, 0
        %v8364 = vsel %vm4041, %v8087, 0
        %v8367 = vsel %vm4041, %v8088, 0
        %v8370 = vsel %vm4041, %v8089, 0
        %v8373 = vsel %vm4041, %v8090, 0
        %v8376 = vsel %vm4041, %v8091, 0
        %v8379 = vsel %vm4041, %v8092, 0
        %v8382 = vsel %vm4041, %v8093, 0
        %v8385 = vsel %vm4041, %v8094, 0
        %v8388 = vsel %vm4041, %v8095, 0
        %v8391 = vsel %vm4041, %v8096, 0
        %v8394 = vsel %vm4041, %v8097, 0
        %v8397 = vsel %vm4041, %v8098, 0
        %v8400 = vsel %vm4041, %v8099, 0
        %v8403 = vsel %vm4041, %v8100, 0
        %v8406 = vsel %vm4041, %v8101, 0
        %v8409 = vsel %vm4041, %v8102, 0
        %v8412 = vsel %vm4041, %v8103, 0
        %v8415 = vsel %vm4041, %v8104, 0
        %v8418 = vsel %vm4041, %v8105, 0
        %v8421 = vsel %vm4041, %v8106, 0
        %v8424 = vsel %vm4041, %v8107, 0
        %v8427 = vsel %vm4041, %v8108, 0
        %v8430 = vsel %vm4041, %v8109, 0
        %v8433 = vsel %vm4041, %v8110, 0
        %v8436 = vsel %vm4041, %v8111, 0
        %v8439 = vsel %vm4041, %v8112, 0
        %v8442 = vsel %vm4041, %v8113, 0
        %v8445 = vsel %vm4041, %v8114, 0
        %v8448 = vsel %vm4041, %v8115, 0
        %v8451 = vsel %vm4041, %v8116, 0
        %v8454 = vsel %vm4041, %v8117, 0
        %v8457 = vsel %vm4041, %v8118, 0
        %v8460 = vsel %vm4041, %v8119, 0
        %v8463 = vsel %vm4041, %v8120, 0
        %v8466 = vsel %vm4041, %v8121, 0
        %v8469 = vsel %vm4041, %v8122, 0
        %v8472 = vsel %vm4041, %v8123, 0
        %v8475 = vsel %vm4041, %v8124, 0
        %v8478 = vsel %vm4041, %v8125, 0
        %v8481 = vsel %vm4041, %v8126, 0
        %v8484 = vsel %vm4041, %v8127, 0
        %v8487 = vsel %vm4041, %v8128, 0
        %v8490 = vsel %vm4041, %v8129, 0
        %v8493 = vsel %vm4041, %v8130, 0
        %v8496 = vsel %vm4041, %v8131, 0
        %v8499 = vsel %vm4041, %v8132, 0
        %v8502 = vsel %vm4041, %v8133, 0
        %v8505 = vsel %vm4041, %v8134, 0
        %v8508 = vsel %vm4041, %v8135, 0
        %v8511 = vsel %vm4041, %v8136, 0
        %v8514 = vsel %vm4041, %v8137, 0
        %v8517 = vsel %vm4041, %v8138, 0
        %v8520 = vsel %vm4041, %v8139, 0
        %v8523 = vsel %vm4041, %v8140, 0
        %v8526 = vsel %vm4041, %v8141, 0
        %v8529 = vsel %vm4041, %v8142, 0
        %8531 = vmatprep.subr.mxu0 0.0
        %8532 = vmatpush1.msra.mxu0 %v8144
        %8533 = vmatprep.subr.mxu0 0.0
        %8534 = vmatpush1.msra.mxu0 %v8145
        %8535 = vmatprep.subr.mxu0 0.0
        %8536 = vmatpush1.msra.mxu0 %v8146
        %8537 = vmatprep.subr.mxu0 0.0
        %8538 = vmatpush1.msra.mxu0 0.0
        %8539 = vmatprep.subr.mxu0 0.0
        %8540 = vmatpush1.msra.mxu0 0.0
        %8541 = vmatprep.subr.mxu0 0.0
        %8542 = vmatpush1.msra.mxu0 0.0
        %8543 = vmatprep.subr.mxu0 0.0
        %8544 = vmatpush1.msra.mxu0 0.0
        %8545 = vmatprep.subr.mxu0 0.0
        %8546 = vmatpush1.msra.mxu0 0.0
        %8547 = vmatprep.subr.mxu0 0.0
        %8548 = vmatpush1.msra.mxu0 0.0
        %8549 = vmatprep.subr.mxu0 0.0
        %8550 = vmatpush1.msra.mxu0 0.0
        %8551 = vmatprep.subr.mxu0 0.0
        %8552 = vmatpush1.msra.mxu0 0.0
        %8553 = vmatprep.subr.mxu0 0.0
        %8554 = vmatpush1.msra.mxu0 0.0
        %8555 = vmatprep.subr.mxu0 0.0
        %8556 = vmatpush1.msra.mxu0 0.0
        %8557 = vmatprep.subr.mxu0 0.0
        %8558 = vmatpush1.msra.mxu0 0.0
        %8559 = vmatprep.subr.mxu0 0.0
        %8560 = vmatpush1.msra.mxu0 0.0
        %8561 = vmatprep.subr.mxu0 0.0
        %8562 = vmatpush1.msra.mxu0 0.0
        %8563 = vmatprep.subr.mxu0 0.0
        %8564 = vmatpush1.msra.mxu0 0.0
        %8565 = vmatprep.subr.mxu0 0.0
        %8566 = vmatpush1.msra.mxu0 0.0
        %8567 = vmatprep.subr.mxu0 0.0
        %8568 = vmatpush1.msra.mxu0 0.0
        %8569 = vmatprep.subr.mxu0 0.0
        %8570 = vmatpush1.msra.mxu0 0.0
        %8571 = vmatprep.subr.mxu0 0.0
        %8572 = vmatpush1.msra.mxu0 0.0
        %8573 = vmatprep.subr.mxu0 0.0
        %8574 = vmatpush1.msra.mxu0 0.0
        %8575 = vmatprep.subr.mxu0 0.0
        %8576 = vmatpush1.msra.mxu0 0.0
        %8577 = vmatprep.subr.mxu0 0.0
        %8578 = vmatpush1.msra.mxu0 0.0
        %8579 = vmatprep.subr.mxu0 0.0
        %8580 = vmatpush1.msra.mxu0 0.0
        %8581 = vmatprep.subr.mxu0 0.0
        %8582 = vmatpush1.msra.mxu0 0.0
        %8583 = vmatprep.subr.mxu0 0.0
        %8584 = vmatpush1.msra.mxu0 0.0
        %8585 = vmatprep.subr.mxu0 0.0
        %8586 = vmatpush1.msra.mxu0 0.0
        %8587 = vmatprep.subr.mxu0 0.0
        %8588 = vmatpush1.msra.mxu0 0.0
        %8589 = vmatprep.subr.mxu0 0.0
        %8590 = vmatpush1.msra.mxu0 0.0
        %8591 = vmatprep.subr.mxu0 0.0
        %8592 = vmatpush1.msra.mxu0 0.0
        %8593 = vmatprep.subr.mxu0 0.0
        %8594 = vmatpush1.msra.mxu0 0.0
        %8595 = vmatprep.mubr.f32.mxu0 0.0
        %8596 = vmatmul.mubr.f32.gmra.mrb[0].mxu0 %v8148
        %v8597 = vpop.f32.mrb[0].mxu0
        %v8598 = vadd.f32 0.0, %v8597
        %v8599 = vpop.f32.mrb[0].mxu0
        %8600 = vmatprep.mubr.f32.mxu0 0.0
        %8601 = vmatmul.mubr.f32.gmra.mrb[0].mxu0 %v8151
        %v8602 = vpop.f32.mrb[0].mxu0
        %v8603 = vadd.f32 0.0, %v8602
        %v8604 = vpop.f32.mrb[0].mxu0
        %8605 = vmatprep.mubr.f32.mxu0 0.0
        %8606 = vmatmul.mubr.f32.gmra.mrb[0].mxu0 %v8154
        %v8607 = vpop.f32.mrb[0].mxu0
        %v8608 = vadd.f32 0.0, %v8607
        %v8609 = vpop.f32.mrb[0].mxu0
        %8610 = vmatprep.mubr.f32.mxu0 0.0
        %8611 = vmatmul.mubr.f32.gmra.mrb[0].mxu0 %v8157
        %v8612 = vpop.f32.mrb[0].mxu0
        %v8613 = vadd.f32 0.0, %v8612
        %v8614 = vpop.f32.mrb[0].mxu0
        %8615 = vmatprep.mubr.f32.mxu0 0.0
        %8616 = vmatmul.mubr.f32.gmra.mrb[0].mxu0 %v8160
        %v8617 = vpop.f32.mrb[0].mxu0
        %v8618 = vadd.f32 0.0, %v8617
        %v8619 = vpop.f32.mrb[0].mxu0
        %8620 = vmatprep.mubr.f32.mxu0 0.0
        %8621 = vmatmul.mubr.f32.gmra.mrb[0].mxu0 %v8163
        %v8622 = vpop.f32.mrb[0].mxu0
        %v8623 = vadd.f32 0.0, %v8622
        %v8624 = vpop.f32.mrb[0].mxu0
        %8625 = vmatprep.mubr.f32.mxu0 0.0
        %8626 = vmatmul.mubr.f32.gmra.mrb[0].mxu0 %v8166
        %v8627 = vpop.f32.mrb[0].mxu0
        %v8628 = vadd.f32 0.0, %v8627
        %v8629 = vpop.f32.mrb[0].mxu0
        %8630 = vmatprep.mubr.f32.mxu0 0.0
        %8631 = vmatmul.mubr.f32.gmra.mrb[0].mxu0 %v8169
        %v8632 = vpop.f32.mrb[0].mxu0
        %v8633 = vadd.f32 0.0, %v8632
        %v8634 = vpop.f32.mrb[0].mxu0
        %8635 = vmatprep.mubr.f32.mxu0 0.0
        %8636 = vmatmul.mubr.f32.gmra.mrb[0].mxu0 %v8172
        %v8637 = vpop.f32.mrb[0].mxu0
        %v8638 = vadd.f32 0.0, %v8637
        %v8639 = vpop.f32.mrb[0].mxu0
        %8640 = vmatprep.mubr.f32.mxu0 0.0
        %8641 = vmatmul.mubr.f32.gmra.mrb[0].mxu0 %v8175
        %v8642 = vpop.f32.mrb[0].mxu0
        %v8643 = vadd.f32 0.0, %v8642
        %v8644 = vpop.f32.mrb[0].mxu0
        %8645 = vmatprep.mubr.f32.mxu0 0.0
        %8646 = vmatmul.mubr.f32.gmra.mrb[0].mxu0 %v8178
        %v8647 = vpop.f32.mrb[0].mxu0
        %v8648 = vadd.f32 0.0, %v8647
        %v8649 = vpop.f32.mrb[0].mxu0
        %8650 = vmatprep.mubr.f32.mxu0 0.0
        %8651 = vmatmul.mubr.f32.gmra.mrb[0].mxu0 %v8181
        %v8652 = vpop.f32.mrb[0].mxu0
        %v8653 = vadd.f32 0.0, %v8652
        %v8654 = vpop.f32.mrb[0].mxu0
        %8655 = vmatprep.mubr.f32.mxu0 0.0
        %8656 = vmatmul.mubr.f32.gmra.mrb[0].mxu0 %v8184
        %v8657 = vpop.f32.mrb[0].mxu0
        %v8658 = vadd.f32 0.0, %v8657
        %v8659 = vpop.f32.mrb[0].mxu0
        %8660 = vmatprep.mubr.f32.mxu0 0.0
        %8661 = vmatmul.mubr.f32.gmra.mrb[0].mxu0 %v8187
        %v8662 = vpop.f32.mrb[0].mxu0
        %v8663 = vadd.f32 0.0, %v8662
        %v8664 = vpop.f32.mrb[0].mxu0
        %8665 = vmatprep.mubr.f32.mxu0 0.0
        %8666 = vmatmul.mubr.f32.gmra.mrb[0].mxu0 %v8190
        %v8667 = vpop.f32.mrb[0].mxu0
        %v8668 = vadd.f32 0.0, %v8667
        %v8669 = vpop.f32.mrb[0].mxu0
        %8670 = vmatprep.mubr.f32.mxu0 0.0
        %8671 = vmatmul.mubr.f32.gmra.mrb[0].mxu0 %v8193
        %v8672 = vpop.f32.mrb[0].mxu0
        %v8673 = vadd.f32 0.0, %v8672
        %v8674 = vpop.f32.mrb[0].mxu0
        %8675 = vmatprep.mubr.f32.mxu0 0.0
        %8676 = vmatmul.mubr.f32.gmra.mrb[0].mxu0 %v8196
        %v8677 = vpop.f32.mrb[0].mxu0
        %v8678 = vadd.f32 0.0, %v8677
        %v8679 = vpop.f32.mrb[0].mxu0
        %8680 = vmatprep.mubr.f32.mxu0 0.0
        %8681 = vmatmul.mubr.f32.gmra.mrb[0].mxu0 %v8199
        %v8682 = vpop.f32.mrb[0].mxu0
        %v8683 = vadd.f32 0.0, %v8682
        %v8684 = vpop.f32.mrb[0].mxu0
        %8685 = vmatprep.mubr.f32.mxu0 0.0
        %8686 = vmatmul.mubr.f32.gmra.mrb[0].mxu0 %v8202
        %v8687 = vpop.f32.mrb[0].mxu0
        %v8688 = vadd.f32 0.0, %v8687
        %v8689 = vpop.f32.mrb[0].mxu0
        %8690 = vmatprep.mubr.f32.mxu0 0.0
        %8691 = vmatmul.mubr.f32.gmra.mrb[0].mxu0 %v8205
        %v8692 = vpop.f32.mrb[0].mxu0
        %v8693 = vadd.f32 0.0, %v8692
        %v8694 = vpop.f32.mrb[0].mxu0
        %8695 = vmatprep.mubr.f32.mxu0 0.0
        %8696 = vmatmul.mubr.f32.gmra.mrb[0].mxu0 %v8208
        %v8697 = vpop.f32.mrb[0].mxu0
        %v8698 = vadd.f32 0.0, %v8697
        %v8699 = vpop.f32.mrb[0].mxu0
        %8700 = vmatprep.mubr.f32.mxu0 0.0
        %8701 = vmatmul.mubr.f32.gmra.mrb[0].mxu0 %v8211
        %v8702 = vpop.f32.mrb[0].mxu0
        %v8703 = vadd.f32 0.0, %v8702
        %v8704 = vpop.f32.mrb[0].mxu0
        %8705 = vmatprep.mubr.f32.mxu0 0.0
        %8706 = vmatmul.mubr.f32.gmra.mrb[0].mxu0 %v8214
        %v8707 = vpop.f32.mrb[0].mxu0
        %v8708 = vadd.f32 0.0, %v8707
        %v8709 = vpop.f32.mrb[0].mxu0
        %8710 = vmatprep.mubr.f32.mxu0 0.0
        %8711 = vmatmul.mubr.f32.gmra.mrb[0].mxu0 %v8217
        %v8712 = vpop.f32.mrb[0].mxu0
        %v8713 = vadd.f32 0.0, %v8712
        %v8714 = vpop.f32.mrb[0].mxu0
        %8715 = vmatprep.mubr.f32.mxu0 0.0
        %8716 = vmatmul.mubr.f32.gmra.mrb[0].mxu0 %v8220
        %v8717 = vpop.f32.mrb[0].mxu0
        %v8718 = vadd.f32 0.0, %v8717
        %v8719 = vpop.f32.mrb[0].mxu0
        %8720 = vmatprep.mubr.f32.mxu0 0.0
        %8721 = vmatmul.mubr.f32.gmra.mrb[0].mxu0 %v8223
        %v8722 = vpop.f32.mrb[0].mxu0
        %v8723 = vadd.f32 0.0, %v8722
        %v8724 = vpop.f32.mrb[0].mxu0
        %8725 = vmatprep.mubr.f32.mxu0 0.0
        %8726 = vmatmul.mubr.f32.gmra.mrb[0].mxu0 %v8226
        %v8727 = vpop.f32.mrb[0].mxu0
        %v8728 = vadd.f32 0.0, %v8727
        %v8729 = vpop.f32.mrb[0].mxu0
        %8730 = vmatprep.mubr.f32.mxu0 0.0
        %8731 = vmatmul.mubr.f32.gmra.mrb[0].mxu0 %v8229
        %v8732 = vpop.f32.mrb[0].mxu0
        %v8733 = vadd.f32 0.0, %v8732
        %v8734 = vpop.f32.mrb[0].mxu0
        %8735 = vmatprep.mubr.f32.mxu0 0.0
        %8736 = vmatmul.mubr.f32.gmra.mrb[0].mxu0 %v8232
        %v8737 = vpop.f32.mrb[0].mxu0
        %v8738 = vadd.f32 0.0, %v8737
        %v8739 = vpop.f32.mrb[0].mxu0
        %8740 = vmatprep.mubr.f32.mxu0 0.0
        %8741 = vmatmul.mubr.f32.gmra.mrb[0].mxu0 %v8235
        %v8742 = vpop.f32.mrb[0].mxu0
        %v8743 = vadd.f32 0.0, %v8742
        %v8744 = vpop.f32.mrb[0].mxu0
        %8745 = vmatprep.mubr.f32.mxu0 0.0
        %8746 = vmatmul.mubr.f32.gmra.mrb[0].mxu0 %v8238
        %v8747 = vpop.f32.mrb[0].mxu0
        %v8748 = vadd.f32 0.0, %v8747
        %v8749 = vpop.f32.mrb[0].mxu0
        %8750 = vmatprep.mubr.f32.mxu0 0.0
        %8751 = vmatmul.mubr.f32.gmra.mrb[0].mxu0 %v8241
        %v8752 = vpop.f32.mrb[0].mxu0
        %v8753 = vadd.f32 0.0, %v8752
        %v8754 = vpop.f32.mrb[0].mxu0
        %8755 = vmatprep.mubr.f32.mxu0 0.0
        %8756 = vmatmul.mubr.f32.gmra.mrb[0].mxu0 %v8244
        %v8757 = vpop.f32.mrb[0].mxu0
        %v8758 = vadd.f32 0.0, %v8757
        %v8759 = vpop.f32.mrb[0].mxu0
        %8760 = vmatprep.mubr.f32.mxu0 0.0
        %8761 = vmatmul.mubr.f32.gmra.mrb[0].mxu0 %v8247
        %v8762 = vpop.f32.mrb[0].mxu0
        %v8763 = vadd.f32 0.0, %v8762
        %v8764 = vpop.f32.mrb[0].mxu0
        %8765 = vmatprep.mubr.f32.mxu0 0.0
        %8766 = vmatmul.mubr.f32.gmra.mrb[0].mxu0 %v8250
        %v8767 = vpop.f32.mrb[0].mxu0
        %v8768 = vadd.f32 0.0, %v8767
        %v8769 = vpop.f32.mrb[0].mxu0
        %8770 = vmatprep.mubr.f32.mxu0 0.0
        %8771 = vmatmul.mubr.f32.gmra.mrb[0].mxu0 %v8253
        %v8772 = vpop.f32.mrb[0].mxu0
        %v8773 = vadd.f32 0.0, %v8772
        %v8774 = vpop.f32.mrb[0].mxu0
        %8775 = vmatprep.mubr.f32.mxu0 0.0
        %8776 = vmatmul.mubr.f32.gmra.mrb[0].mxu0 %v8256
        %v8777 = vpop.f32.mrb[0].mxu0
        %v8778 = vadd.f32 0.0, %v8777
        %v8779 = vpop.f32.mrb[0].mxu0
        %8780 = vmatprep.mubr.f32.mxu0 0.0
        %8781 = vmatmul.mubr.f32.gmra.mrb[0].mxu0 %v8259
        %v8782 = vpop.f32.mrb[0].mxu0
        %v8783 = vadd.f32 0.0, %v8782
        %v8784 = vpop.f32.mrb[0].mxu0
        %8785 = vmatprep.mubr.f32.mxu0 0.0
        %8786 = vmatmul.mubr.f32.gmra.mrb[0].mxu0 %v8262
        %v8787 = vpop.f32.mrb[0].mxu0
        %v8788 = vadd.f32 0.0, %v8787
        %v8789 = vpop.f32.mrb[0].mxu0
        %8790 = vmatprep.mubr.f32.mxu0 0.0
        %8791 = vmatmul.mubr.f32.gmra.mrb[0].mxu0 %v8265
        %v8792 = vpop.f32.mrb[0].mxu0
        %v8793 = vadd.f32 0.0, %v8792
        %v8794 = vpop.f32.mrb[0].mxu0
        %8795 = vmatprep.mubr.f32.mxu0 0.0
        %8796 = vmatmul.mubr.f32.gmra.mrb[0].mxu0 %v8268
        %v8797 = vpop.f32.mrb[0].mxu0
        %v8798 = vadd.f32 0.0, %v8797
        %v8799 = vpop.f32.mrb[0].mxu0
        %8800 = vmatprep.mubr.f32.mxu0 0.0
        %8801 = vmatmul.mubr.f32.gmra.mrb[0].mxu0 %v8271
        %v8802 = vpop.f32.mrb[0].mxu0
        %v8803 = vadd.f32 0.0, %v8802
        %v8804 = vpop.f32.mrb[0].mxu0
        %8805 = vmatprep.mubr.f32.mxu0 0.0
        %8806 = vmatmul.mubr.f32.gmra.mrb[0].mxu0 %v8274
        %v8807 = vpop.f32.mrb[0].mxu0
        %v8808 = vadd.f32 0.0, %v8807
        %v8809 = vpop.f32.mrb[0].mxu0
        %8810 = vmatprep.mubr.f32.mxu0 0.0
        %8811 = vmatmul.mubr.f32.gmra.mrb[0].mxu0 %v8277
        %v8812 = vpop.f32.mrb[0].mxu0
        %v8813 = vadd.f32 0.0, %v8812
        %v8814 = vpop.f32.mrb[0].mxu0
        %8815 = vmatprep.mubr.f32.mxu0 0.0
        %8816 = vmatmul.mubr.f32.gmra.mrb[0].mxu0 %v8280
        %v8817 = vpop.f32.mrb[0].mxu0
        %v8818 = vadd.f32 0.0, %v8817
        %v8819 = vpop.f32.mrb[0].mxu0
        %8820 = vmatprep.mubr.f32.mxu0 0.0
        %8821 = vmatmul.mubr.f32.gmra.mrb[0].mxu0 %v8283
        %v8822 = vpop.f32.mrb[0].mxu0
        %v8823 = vadd.f32 0.0, %v8822
        %v8824 = vpop.f32.mrb[0].mxu0
        %8825 = vmatprep.mubr.f32.mxu0 0.0
        %8826 = vmatmul.mubr.f32.gmra.mrb[0].mxu0 %v8286
        %v8827 = vpop.f32.mrb[0].mxu0
        %v8828 = vadd.f32 0.0, %v8827
        %v8829 = vpop.f32.mrb[0].mxu0
        %8830 = vmatprep.mubr.f32.mxu0 0.0
        %8831 = vmatmul.mubr.f32.gmra.mrb[0].mxu0 %v8289
        %v8832 = vpop.f32.mrb[0].mxu0
        %v8833 = vadd.f32 0.0, %v8832
        %v8834 = vpop.f32.mrb[0].mxu0
        %8835 = vmatprep.mubr.f32.mxu0 0.0
        %8836 = vmatmul.mubr.f32.gmra.mrb[0].mxu0 %v8292
        %v8837 = vpop.f32.mrb[0].mxu0
        %v8838 = vadd.f32 0.0, %v8837
        %v8839 = vpop.f32.mrb[0].mxu0
        %8840 = vmatprep.mubr.f32.mxu0 0.0
        %8841 = vmatmul.mubr.f32.gmra.mrb[0].mxu0 %v8295
        %v8842 = vpop.f32.mrb[0].mxu0
        %v8843 = vadd.f32 0.0, %v8842
        %v8844 = vpop.f32.mrb[0].mxu0
        %8845 = vmatprep.mubr.f32.mxu0 0.0
        %8846 = vmatmul.mubr.f32.gmra.mrb[0].mxu0 %v8298
        %v8847 = vpop.f32.mrb[0].mxu0
        %v8848 = vadd.f32 0.0, %v8847
        %v8849 = vpop.f32.mrb[0].mxu0
        %8850 = vmatprep.mubr.f32.mxu0 0.0
        %8851 = vmatmul.mubr.f32.gmra.mrb[0].mxu0 %v8301
        %v8852 = vpop.f32.mrb[0].mxu0
        %v8853 = vadd.f32 0.0, %v8852
        %v8854 = vpop.f32.mrb[0].mxu0
        %8855 = vmatprep.mubr.f32.mxu0 0.0
        %8856 = vmatmul.mubr.f32.gmra.mrb[0].mxu0 %v8304
        %v8857 = vpop.f32.mrb[0].mxu0
        %v8858 = vadd.f32 0.0, %v8857
        %v8859 = vpop.f32.mrb[0].mxu0
        %8860 = vmatprep.mubr.f32.mxu0 0.0
        %8861 = vmatmul.mubr.f32.gmra.mrb[0].mxu0 %v8307
        %v8862 = vpop.f32.mrb[0].mxu0
        %v8863 = vadd.f32 0.0, %v8862
        %v8864 = vpop.f32.mrb[0].mxu0
        %8865 = vmatprep.mubr.f32.mxu0 0.0
        %8866 = vmatmul.mubr.f32.gmra.mrb[0].mxu0 %v8310
        %v8867 = vpop.f32.mrb[0].mxu0
        %v8868 = vadd.f32 0.0, %v8867
        %v8869 = vpop.f32.mrb[0].mxu0
        %8870 = vmatprep.mubr.f32.mxu0 0.0
        %8871 = vmatmul.mubr.f32.gmra.mrb[0].mxu0 %v8313
        %v8872 = vpop.f32.mrb[0].mxu0
        %v8873 = vadd.f32 0.0, %v8872
        %v8874 = vpop.f32.mrb[0].mxu0
        %8875 = vmatprep.mubr.f32.mxu0 0.0
        %8876 = vmatmul.mubr.f32.gmra.mrb[0].mxu0 %v8316
        %v8877 = vpop.f32.mrb[0].mxu0
        %v8878 = vadd.f32 0.0, %v8877
        %v8879 = vpop.f32.mrb[0].mxu0
        %8880 = vmatprep.mubr.f32.mxu0 0.0
        %8881 = vmatmul.mubr.f32.gmra.mrb[0].mxu0 %v8319
        %v8882 = vpop.f32.mrb[0].mxu0
        %v8883 = vadd.f32 0.0, %v8882
        %v8884 = vpop.f32.mrb[0].mxu0
        %8885 = vmatprep.mubr.f32.mxu0 0.0
        %8886 = vmatmul.mubr.f32.gmra.mrb[0].mxu0 %v8322
        %v8887 = vpop.f32.mrb[0].mxu0
        %v8888 = vadd.f32 0.0, %v8887
        %v8889 = vpop.f32.mrb[0].mxu0
        %8890 = vmatprep.mubr.f32.mxu0 0.0
        %8891 = vmatmul.mubr.f32.gmra.mrb[0].mxu0 %v8325
        %v8892 = vpop.f32.mrb[0].mxu0
        %v8893 = vadd.f32 0.0, %v8892
        %v8894 = vpop.f32.mrb[0].mxu0
        %8895 = vmatprep.mubr.f32.mxu0 0.0
        %8896 = vmatmul.mubr.f32.gmra.mrb[0].mxu0 %v8328
        %v8897 = vpop.f32.mrb[0].mxu0
        %v8898 = vadd.f32 0.0, %v8897
        %v8899 = vpop.f32.mrb[0].mxu0
        %8900 = vmatprep.mubr.f32.mxu0 0.0
        %8901 = vmatmul.mubr.f32.gmra.mrb[0].mxu0 %v8331
        %v8902 = vpop.f32.mrb[0].mxu0
        %v8903 = vadd.f32 0.0, %v8902
        %v8904 = vpop.f32.mrb[0].mxu0
        %8905 = vmatprep.mubr.f32.mxu0 0.0
        %8906 = vmatmul.mubr.f32.gmra.mrb[0].mxu0 %v8334
        %v8907 = vpop.f32.mrb[0].mxu0
        %v8908 = vadd.f32 0.0, %v8907
        %v8909 = vpop.f32.mrb[0].mxu0
        %8910 = vmatprep.mubr.f32.mxu0 0.0
        %8911 = vmatmul.mubr.f32.gmra.mrb[0].mxu0 %v8337
        %v8912 = vpop.f32.mrb[0].mxu0
        %v8913 = vadd.f32 0.0, %v8912
        %v8914 = vpop.f32.mrb[0].mxu0
        %8915 = vmatprep.mubr.f32.mxu0 0.0
        %8916 = vmatmul.mubr.f32.gmra.mrb[0].mxu0 %v8340
        %v8917 = vpop.f32.mrb[0].mxu0
        %v8918 = vadd.f32 0.0, %v8917
        %v8919 = vpop.f32.mrb[0].mxu0
        %8920 = vmatprep.mubr.f32.mxu0 0.0
        %8921 = vmatmul.mubr.f32.gmra.mrb[0].mxu0 %v8343
        %v8922 = vpop.f32.mrb[0].mxu0
        %v8923 = vadd.f32 0.0, %v8922
        %v8924 = vpop.f32.mrb[0].mxu0
        %8925 = vmatprep.mubr.f32.mxu0 0.0
        %8926 = vmatmul.mubr.f32.gmra.mrb[0].mxu0 %v8346
        %v8927 = vpop.f32.mrb[0].mxu0
        %v8928 = vadd.f32 0.0, %v8927
        %v8929 = vpop.f32.mrb[0].mxu0
        %8930 = vmatprep.mubr.f32.mxu0 0.0
        %8931 = vmatmul.mubr.f32.gmra.mrb[0].mxu0 %v8349
        %v8932 = vpop.f32.mrb[0].mxu0
        %v8933 = vadd.f32 0.0, %v8932
        %v8934 = vpop.f32.mrb[0].mxu0
        %8935 = vmatprep.mubr.f32.mxu0 0.0
        %8936 = vmatmul.mubr.f32.gmra.mrb[0].mxu0 %v8352
        %v8937 = vpop.f32.mrb[0].mxu0
        %v8938 = vadd.f32 0.0, %v8937
        %v8939 = vpop.f32.mrb[0].mxu0
        %8940 = vmatprep.mubr.f32.mxu0 0.0
        %8941 = vmatmul.mubr.f32.gmra.mrb[0].mxu0 %v8355
        %v8942 = vpop.f32.mrb[0].mxu0
        %v8943 = vadd.f32 0.0, %v8942
        %v8944 = vpop.f32.mrb[0].mxu0
        %8945 = vmatprep.mubr.f32.mxu0 0.0
        %8946 = vmatmul.mubr.f32.gmra.mrb[0].mxu0 %v8358
        %v8947 = vpop.f32.mrb[0].mxu0
        %v8948 = vadd.f32 0.0, %v8947
        %v8949 = vpop.f32.mrb[0].mxu0
        %8950 = vmatprep.mubr.f32.mxu0 0.0
        %8951 = vmatmul.mubr.f32.gmra.mrb[0].mxu0 %v8361
        %v8952 = vpop.f32.mrb[0].mxu0
        %v8953 = vadd.f32 0.0, %v8952
        %v8954 = vpop.f32.mrb[0].mxu0
        %8955 = vmatprep.mubr.f32.mxu0 0.0
        %8956 = vmatmul.mubr.f32.gmra.mrb[0].mxu0 %v8364
        %v8957 = vpop.f32.mrb[0].mxu0
        %v8958 = vadd.f32 0.0, %v8957
        %v8959 = vpop.f32.mrb[0].mxu0
        %8960 = vmatprep.mubr.f32.mxu0 0.0
        %8961 = vmatmul.mubr.f32.gmra.mrb[0].mxu0 %v8367
        %v8962 = vpop.f32.mrb[0].mxu0
        %v8963 = vadd.f32 0.0, %v8962
        %v8964 = vpop.f32.mrb[0].mxu0
        %8965 = vmatprep.mubr.f32.mxu0 0.0
        %8966 = vmatmul.mubr.f32.gmra.mrb[0].mxu0 %v8370
        %v8967 = vpop.f32.mrb[0].mxu0
        %v8968 = vadd.f32 0.0, %v8967
        %v8969 = vpop.f32.mrb[0].mxu0
        %8970 = vmatprep.mubr.f32.mxu0 0.0
        %8971 = vmatmul.mubr.f32.gmra.mrb[0].mxu0 %v8373
        %v8972 = vpop.f32.mrb[0].mxu0
        %v8973 = vadd.f32 0.0, %v8972
        %v8974 = vpop.f32.mrb[0].mxu0
        %8975 = vmatprep.mubr.f32.mxu0 0.0
        %8976 = vmatmul.mubr.f32.gmra.mrb[0].mxu0 %v8376
        %v8977 = vpop.f32.mrb[0].mxu0
        %v8978 = vadd.f32 0.0, %v8977
        %v8979 = vpop.f32.mrb[0].mxu0
        %8980 = vmatprep.mubr.f32.mxu0 0.0
        %8981 = vmatmul.mubr.f32.gmra.mrb[0].mxu0 %v8379
        %v8982 = vpop.f32.mrb[0].mxu0
        %v8983 = vadd.f32 0.0, %v8982
        %v8984 = vpop.f32.mrb[0].mxu0
        %8985 = vmatprep.mubr.f32.mxu0 0.0
        %8986 = vmatmul.mubr.f32.gmra.mrb[0].mxu0 %v8382
        %v8987 = vpop.f32.mrb[0].mxu0
        %v8988 = vadd.f32 0.0, %v8987
        %v8989 = vpop.f32.mrb[0].mxu0
        %8990 = vmatprep.mubr.f32.mxu0 0.0
        %8991 = vmatmul.mubr.f32.gmra.mrb[0].mxu0 %v8385
        %v8992 = vpop.f32.mrb[0].mxu0
        %v8993 = vadd.f32 0.0, %v8992
        %v8994 = vpop.f32.mrb[0].mxu0
        %8995 = vmatprep.mubr.f32.mxu0 0.0
        %8996 = vmatmul.mubr.f32.gmra.mrb[0].mxu0 %v8388
        %v8997 = vpop.f32.mrb[0].mxu0
        %v8998 = vadd.f32 0.0, %v8997
        %v8999 = vpop.f32.mrb[0].mxu0
        %9000 = vmatprep.mubr.f32.mxu0 0.0
        %9001 = vmatmul.mubr.f32.gmra.mrb[0].mxu0 %v8391
        %v9002 = vpop.f32.mrb[0].mxu0
        %v9003 = vadd.f32 0.0, %v9002
        %v9004 = vpop.f32.mrb[0].mxu0
        %9005 = vmatprep.mubr.f32.mxu0 0.0
        %9006 = vmatmul.mubr.f32.gmra.mrb[0].mxu0 %v8394
        %v9007 = vpop.f32.mrb[0].mxu0
        %v9008 = vadd.f32 0.0, %v9007
        %v9009 = vpop.f32.mrb[0].mxu0
        %9010 = vmatprep.mubr.f32.mxu0 0.0
        %9011 = vmatmul.mubr.f32.gmra.mrb[0].mxu0 %v8397
        %v9012 = vpop.f32.mrb[0].mxu0
        %v9013 = vadd.f32 0.0, %v9012
        %v9014 = vpop.f32.mrb[0].mxu0
        %9015 = vmatprep.mubr.f32.mxu0 0.0
        %9016 = vmatmul.mubr.f32.gmra.mrb[0].mxu0 %v8400
        %v9017 = vpop.f32.mrb[0].mxu0
        %v9018 = vadd.f32 0.0, %v9017
        %v9019 = vpop.f32.mrb[0].mxu0
        %9020 = vmatprep.mubr.f32.mxu0 0.0
        %9021 = vmatmul.mubr.f32.gmra.mrb[0].mxu0 %v8403
        %v9022 = vpop.f32.mrb[0].mxu0
        %v9023 = vadd.f32 0.0, %v9022
        %v9024 = vpop.f32.mrb[0].mxu0
        %9025 = vmatprep.mubr.f32.mxu0 0.0
        %9026 = vmatmul.mubr.f32.gmra.mrb[0].mxu0 %v8406
        %v9027 = vpop.f32.mrb[0].mxu0
        %v9028 = vadd.f32 0.0, %v9027
        %v9029 = vpop.f32.mrb[0].mxu0
        %9030 = vmatprep.mubr.f32.mxu0 0.0
        %9031 = vmatmul.mubr.f32.gmra.mrb[0].mxu0 %v8409
        %v9032 = vpop.f32.mrb[0].mxu0
        %v9033 = vadd.f32 0.0, %v9032
        %v9034 = vpop.f32.mrb[0].mxu0
        %9035 = vmatprep.mubr.f32.mxu0 0.0
        %9036 = vmatmul.mubr.f32.gmra.mrb[0].mxu0 %v8412
        %v9037 = vpop.f32.mrb[0].mxu0
        %v9038 = vadd.f32 0.0, %v9037
        %v9039 = vpop.f32.mrb[0].mxu0
        %9040 = vmatprep.mubr.f32.mxu0 0.0
        %9041 = vmatmul.mubr.f32.gmra.mrb[0].mxu0 %v8415
        %v9042 = vpop.f32.mrb[0].mxu0
        %v9043 = vadd.f32 0.0, %v9042
        %v9044 = vpop.f32.mrb[0].mxu0
        %9045 = vmatprep.mubr.f32.mxu0 0.0
        %9046 = vmatmul.mubr.f32.gmra.mrb[0].mxu0 %v8418
        %v9047 = vpop.f32.mrb[0].mxu0
        %v9048 = vadd.f32 0.0, %v9047
        %v9049 = vpop.f32.mrb[0].mxu0
        %9050 = vmatprep.mubr.f32.mxu0 0.0
        %9051 = vmatmul.mubr.f32.gmra.mrb[0].mxu0 %v8421
        %v9052 = vpop.f32.mrb[0].mxu0
        %v9053 = vadd.f32 0.0, %v9052
        %v9054 = vpop.f32.mrb[0].mxu0
        %9055 = vmatprep.mubr.f32.mxu0 0.0
        %9056 = vmatmul.mubr.f32.gmra.mrb[0].mxu0 %v8424
        %v9057 = vpop.f32.mrb[0].mxu0
        %v9058 = vadd.f32 0.0, %v9057
        %v9059 = vpop.f32.mrb[0].mxu0
        %9060 = vmatprep.mubr.f32.mxu0 0.0
        %9061 = vmatmul.mubr.f32.gmra.mrb[0].mxu0 %v8427
        %v9062 = vpop.f32.mrb[0].mxu0
        %v9063 = vadd.f32 0.0, %v9062
        %v9064 = vpop.f32.mrb[0].mxu0
        %9065 = vmatprep.mubr.f32.mxu0 0.0
        %9066 = vmatmul.mubr.f32.gmra.mrb[0].mxu0 %v8430
        %v9067 = vpop.f32.mrb[0].mxu0
        %v9068 = vadd.f32 0.0, %v9067
        %v9069 = vpop.f32.mrb[0].mxu0
        %9070 = vmatprep.mubr.f32.mxu0 0.0
        %9071 = vmatmul.mubr.f32.gmra.mrb[0].mxu0 %v8433
        %v9072 = vpop.f32.mrb[0].mxu0
        %v9073 = vadd.f32 0.0, %v9072
        %v9074 = vpop.f32.mrb[0].mxu0
        %9075 = vmatprep.mubr.f32.mxu0 0.0
        %9076 = vmatmul.mubr.f32.gmra.mrb[0].mxu0 %v8436
        %v9077 = vpop.f32.mrb[0].mxu0
        %v9078 = vadd.f32 0.0, %v9077
        %v9079 = vpop.f32.mrb[0].mxu0
        %9080 = vmatprep.mubr.f32.mxu0 0.0
        %9081 = vmatmul.mubr.f32.gmra.mrb[0].mxu0 %v8439
        %v9082 = vpop.f32.mrb[0].mxu0
        %v9083 = vadd.f32 0.0, %v9082
        %v9084 = vpop.f32.mrb[0].mxu0
        %9085 = vmatprep.mubr.f32.mxu0 0.0
        %9086 = vmatmul.mubr.f32.gmra.mrb[0].mxu0 %v8442
        %v9087 = vpop.f32.mrb[0].mxu0
        %v9088 = vadd.f32 0.0, %v9087
        %v9089 = vpop.f32.mrb[0].mxu0
        %9090 = vmatprep.mubr.f32.mxu0 0.0
        %9091 = vmatmul.mubr.f32.gmra.mrb[0].mxu0 %v8445
        %v9092 = vpop.f32.mrb[0].mxu0
        %v9093 = vadd.f32 0.0, %v9092
        %v9094 = vpop.f32.mrb[0].mxu0
        %9095 = vmatprep.mubr.f32.mxu0 0.0
        %9096 = vmatmul.mubr.f32.gmra.mrb[0].mxu0 %v8448
        %v9097 = vpop.f32.mrb[0].mxu0
        %v9098 = vadd.f32 0.0, %v9097
        %v9099 = vpop.f32.mrb[0].mxu0
        %9100 = vmatprep.mubr.f32.mxu0 0.0
        %9101 = vmatmul.mubr.f32.gmra.mrb[0].mxu0 %v8451
        %v9102 = vpop.f32.mrb[0].mxu0
        %v9103 = vadd.f32 0.0, %v9102
        %v9104 = vpop.f32.mrb[0].mxu0
        %9105 = vmatprep.mubr.f32.mxu0 0.0
        %9106 = vmatmul.mubr.f32.gmra.mrb[0].mxu0 %v8454
        %v9107 = vpop.f32.mrb[0].mxu0
        %v9108 = vadd.f32 0.0, %v9107
        %v9109 = vpop.f32.mrb[0].mxu0
        %9110 = vmatprep.mubr.f32.mxu0 0.0
        %9111 = vmatmul.mubr.f32.gmra.mrb[0].mxu0 %v8457
        %v9112 = vpop.f32.mrb[0].mxu0
        %v9113 = vadd.f32 0.0, %v9112
        %v9114 = vpop.f32.mrb[0].mxu0
        %9115 = vmatprep.mubr.f32.mxu0 0.0
        %9116 = vmatmul.mubr.f32.gmra.mrb[0].mxu0 %v8460
        %v9117 = vpop.f32.mrb[0].mxu0
        %v9118 = vadd.f32 0.0, %v9117
        %v9119 = vpop.f32.mrb[0].mxu0
        %9120 = vmatprep.mubr.f32.mxu0 0.0
        %9121 = vmatmul.mubr.f32.gmra.mrb[0].mxu0 %v8463
        %v9122 = vpop.f32.mrb[0].mxu0
        %v9123 = vadd.f32 0.0, %v9122
        %v9124 = vpop.f32.mrb[0].mxu0
        %9125 = vmatprep.mubr.f32.mxu0 0.0
        %9126 = vmatmul.mubr.f32.gmra.mrb[0].mxu0 %v8466
        %v9127 = vpop.f32.mrb[0].mxu0
        %v9128 = vadd.f32 0.0, %v9127
        %v9129 = vpop.f32.mrb[0].mxu0
        %9130 = vmatprep.mubr.f32.mxu0 0.0
        %9131 = vmatmul.mubr.f32.gmra.mrb[0].mxu0 %v8469
        %v9132 = vpop.f32.mrb[0].mxu0
        %v9133 = vadd.f32 0.0, %v9132
        %v9134 = vpop.f32.mrb[0].mxu0
        %9135 = vmatprep.mubr.f32.mxu0 0.0
        %9136 = vmatmul.mubr.f32.gmra.mrb[0].mxu0 %v8472
        %v9137 = vpop.f32.mrb[0].mxu0
        %v9138 = vadd.f32 0.0, %v9137
        %v9139 = vpop.f32.mrb[0].mxu0
        %9140 = vmatprep.mubr.f32.mxu0 0.0
        %9141 = vmatmul.mubr.f32.gmra.mrb[0].mxu0 %v8475
        %v9142 = vpop.f32.mrb[0].mxu0
        %v9143 = vadd.f32 0.0, %v9142
        %v9144 = vpop.f32.mrb[0].mxu0
        %9145 = vmatprep.mubr.f32.mxu0 0.0
        %9146 = vmatmul.mubr.f32.gmra.mrb[0].mxu0 %v8478
        %v9147 = vpop.f32.mrb[0].mxu0
        %v9148 = vadd.f32 0.0, %v9147
        %v9149 = vpop.f32.mrb[0].mxu0
        %9150 = vmatprep.mubr.f32.mxu0 0.0
        %9151 = vmatmul.mubr.f32.gmra.mrb[0].mxu0 %v8481
        %v9152 = vpop.f32.mrb[0].mxu0
        %v9153 = vadd.f32 0.0, %v9152
        %v9154 = vpop.f32.mrb[0].mxu0
        %9155 = vmatprep.mubr.f32.mxu0 0.0
        %9156 = vmatmul.mubr.f32.gmra.mrb[0].mxu0 %v8484
        %v9157 = vpop.f32.mrb[0].mxu0
        %v9158 = vadd.f32 0.0, %v9157
        %v9159 = vpop.f32.mrb[0].mxu0
        %9160 = vmatprep.mubr.f32.mxu0 0.0
        %9161 = vmatmul.mubr.f32.gmra.mrb[0].mxu0 %v8487
        %v9162 = vpop.f32.mrb[0].mxu0
        %v9163 = vadd.f32 0.0, %v9162
        %v9164 = vpop.f32.mrb[0].mxu0
        %9165 = vmatprep.mubr.f32.mxu0 0.0
        %9166 = vmatmul.mubr.f32.gmra.mrb[0].mxu0 %v8490
        %v9167 = vpop.f32.mrb[0].mxu0
        %v9168 = vadd.f32 0.0, %v9167
        %v9169 = vpop.f32.mrb[0].mxu0
        %9170 = vmatprep.mubr.f32.mxu0 0.0
        %9171 = vmatmul.mubr.f32.gmra.mrb[0].mxu0 %v8493
        %v9172 = vpop.f32.mrb[0].mxu0
        %v9173 = vadd.f32 0.0, %v9172
        %v9174 = vpop.f32.mrb[0].mxu0
        %9175 = vmatprep.mubr.f32.mxu0 0.0
        %9176 = vmatmul.mubr.f32.gmra.mrb[0].mxu0 %v8496
        %v9177 = vpop.f32.mrb[0].mxu0
        %v9178 = vadd.f32 0.0, %v9177
        %v9179 = vpop.f32.mrb[0].mxu0
        %9180 = vmatprep.mubr.f32.mxu0 0.0
        %9181 = vmatmul.mubr.f32.gmra.mrb[0].mxu0 %v8499
        %v9182 = vpop.f32.mrb[0].mxu0
        %v9183 = vadd.f32 0.0, %v9182
        %v9184 = vpop.f32.mrb[0].mxu0
        %9185 = vmatprep.mubr.f32.mxu0 0.0
        %9186 = vmatmul.mubr.f32.gmra.mrb[0].mxu0 %v8502
        %v9187 = vpop.f32.mrb[0].mxu0
        %v9188 = vadd.f32 0.0, %v9187
        %v9189 = vpop.f32.mrb[0].mxu0
        %9190 = vmatprep.mubr.f32.mxu0 0.0
        %9191 = vmatmul.mubr.f32.gmra.mrb[0].mxu0 %v8505
        %v9192 = vpop.f32.mrb[0].mxu0
        %v9193 = vadd.f32 0.0, %v9192
        %v9194 = vpop.f32.mrb[0].mxu0
        %9195 = vmatprep.mubr.f32.mxu0 0.0
        %9196 = vmatmul.mubr.f32.gmra.mrb[0].mxu0 %v8508
        %v9197 = vpop.f32.mrb[0].mxu0
        %v9198 = vadd.f32 0.0, %v9197
        %v9199 = vpop.f32.mrb[0].mxu0
        %9200 = vmatprep.mubr.f32.mxu0 0.0
        %9201 = vmatmul.mubr.f32.gmra.mrb[0].mxu0 %v8511
        %v9202 = vpop.f32.mrb[0].mxu0
        %v9203 = vadd.f32 0.0, %v9202
        %v9204 = vpop.f32.mrb[0].mxu0
        %9205 = vmatprep.mubr.f32.mxu0 0.0
        %9206 = vmatmul.mubr.f32.gmra.mrb[0].mxu0 %v8514
        %v9207 = vpop.f32.mrb[0].mxu0
        %v9208 = vadd.f32 0.0, %v9207
        %v9209 = vpop.f32.mrb[0].mxu0
        %9210 = vmatprep.mubr.f32.mxu0 0.0
        %9211 = vmatmul.mubr.f32.gmra.mrb[0].mxu0 %v8517
        %v9212 = vpop.f32.mrb[0].mxu0
        %v9213 = vadd.f32 0.0, %v9212
        %v9214 = vpop.f32.mrb[0].mxu0
        %9215 = vmatprep.mubr.f32.mxu0 0.0
        %9216 = vmatmul.mubr.f32.gmra.mrb[0].mxu0 %v8520
        %v9217 = vpop.f32.mrb[0].mxu0
        %v9218 = vadd.f32 0.0, %v9217
        %v9219 = vpop.f32.mrb[0].mxu0
        %9220 = vmatprep.mubr.f32.mxu0 0.0
        %9221 = vmatmul.mubr.f32.gmra.mrb[0].mxu0 %v8523
        %v9222 = vpop.f32.mrb[0].mxu0
        %v9223 = vadd.f32 0.0, %v9222
        %v9224 = vpop.f32.mrb[0].mxu0
        %9225 = vmatprep.mubr.f32.mxu0 0.0
        %9226 = vmatmul.mubr.f32.gmra.mrb[0].mxu0 %v8526
        %v9227 = vpop.f32.mrb[0].mxu0
        %v9228 = vadd.f32 0.0, %v9227
        %v9229 = vpop.f32.mrb[0].mxu0
        %9230 = vmatprep.mubr.f32.mxu0 0.0
        %9231 = vmatmul.mubr.f32.gmra.mrb[0].mxu0 %v8529
        %v9232 = vpop.f32.mrb[0].mxu0
        %v9233 = vadd.f32 0.0, %v9232
        %v9234 = vpop.f32.mrb[0].mxu0
        %9235 = vdwg.mxu0
        %v9236 = vadd.f32 %v5582, %v8598
        %v9237 = vadd.f32 %v5587, %v8603
        %v9238 = vadd.f32 %v5592, %v8608
        %v9239 = vadd.f32 %v5597, %v8613
        %v9240 = vadd.f32 %v5602, %v8618
        %v9241 = vadd.f32 %v5607, %v8623
        %v9242 = vadd.f32 %v5612, %v8628
        %v9243 = vadd.f32 %v5617, %v8633
        %v9244 = vadd.f32 %v5622, %v8638
        %v9245 = vadd.f32 %v5627, %v8643
        %v9246 = vadd.f32 %v5632, %v8648
        %v9247 = vadd.f32 %v5637, %v8653
        %v9248 = vadd.f32 %v5642, %v8658
        %v9249 = vadd.f32 %v5647, %v8663
        %v9250 = vadd.f32 %v5652, %v8668
        %v9251 = vadd.f32 %v5657, %v8673
        %v9252 = vadd.f32 %v5662, %v8678
        %v9253 = vadd.f32 %v5667, %v8683
        %v9254 = vadd.f32 %v5672, %v8688
        %v9255 = vadd.f32 %v5677, %v8693
        %v9256 = vadd.f32 %v5682, %v8698
        %v9257 = vadd.f32 %v5687, %v8703
        %v9258 = vadd.f32 %v5692, %v8708
        %v9259 = vadd.f32 %v5697, %v8713
        %v9260 = vadd.f32 %v5702, %v8718
        %v9261 = vadd.f32 %v5707, %v8723
        %v9262 = vadd.f32 %v5712, %v8728
        %v9263 = vadd.f32 %v5717, %v8733
        %v9264 = vadd.f32 %v5722, %v8738
        %v9265 = vadd.f32 %v5727, %v8743
        %v9266 = vadd.f32 %v5732, %v8748
        %v9267 = vadd.f32 %v5737, %v8753
        %v9268 = vadd.f32 %v5742, %v8758
        %v9269 = vadd.f32 %v5747, %v8763
        %v9270 = vadd.f32 %v5752, %v8768
        %v9271 = vadd.f32 %v5757, %v8773
        %v9272 = vadd.f32 %v5762, %v8778
        %v9273 = vadd.f32 %v5767, %v8783
        %v9274 = vadd.f32 %v5772, %v8788
        %v9275 = vadd.f32 %v5777, %v8793
        %v9276 = vadd.f32 %v5782, %v8798
        %v9277 = vadd.f32 %v5787, %v8803
        %v9278 = vadd.f32 %v5792, %v8808
        %v9279 = vadd.f32 %v5797, %v8813
        %v9280 = vadd.f32 %v5802, %v8818
        %v9281 = vadd.f32 %v5807, %v8823
        %v9282 = vadd.f32 %v5812, %v8828
        %v9283 = vadd.f32 %v5817, %v8833
        %v9284 = vadd.f32 %v5822, %v8838
        %v9285 = vadd.f32 %v5827, %v8843
        %v9286 = vadd.f32 %v5832, %v8848
        %v9287 = vadd.f32 %v5837, %v8853
        %v9288 = vadd.f32 %v5842, %v8858
        %v9289 = vadd.f32 %v5847, %v8863
        %v9290 = vadd.f32 %v5852, %v8868
        %v9291 = vadd.f32 %v5857, %v8873
        %v9292 = vadd.f32 %v5862, %v8878
        %v9293 = vadd.f32 %v5867, %v8883
        %v9294 = vadd.f32 %v5872, %v8888
        %v9295 = vadd.f32 %v5877, %v8893
        %v9296 = vadd.f32 %v5882, %v8898
        %v9297 = vadd.f32 %v5887, %v8903
        %v9298 = vadd.f32 %v5892, %v8908
        %v9299 = vadd.f32 %v5897, %v8913
        %v9300 = vadd.f32 %v5902, %v8918
        %v9301 = vadd.f32 %v5907, %v8923
        %v9302 = vadd.f32 %v5912, %v8928
        %v9303 = vadd.f32 %v5917, %v8933
        %v9304 = vadd.f32 %v5922, %v8938
        %v9305 = vadd.f32 %v5927, %v8943
        %v9306 = vadd.f32 %v5932, %v8948
        %v9307 = vadd.f32 %v5937, %v8953
        %v9308 = vadd.f32 %v5942, %v8958
        %v9309 = vadd.f32 %v5947, %v8963
        %v9310 = vadd.f32 %v5952, %v8968
        %v9311 = vadd.f32 %v5957, %v8973
        %v9312 = vadd.f32 %v5962, %v8978
        %v9313 = vadd.f32 %v5967, %v8983
        %v9314 = vadd.f32 %v5972, %v8988
        %v9315 = vadd.f32 %v5977, %v8993
        %v9316 = vadd.f32 %v5982, %v8998
        %v9317 = vadd.f32 %v5987, %v9003
        %v9318 = vadd.f32 %v5992, %v9008
        %v9319 = vadd.f32 %v5997, %v9013
        %v9320 = vadd.f32 %v6002, %v9018
        %v9321 = vadd.f32 %v6007, %v9023
        %v9322 = vadd.f32 %v6012, %v9028
        %v9323 = vadd.f32 %v6017, %v9033
        %v9324 = vadd.f32 %v6022, %v9038
        %v9325 = vadd.f32 %v6027, %v9043
        %v9326 = vadd.f32 %v6032, %v9048
        %v9327 = vadd.f32 %v6037, %v9053
        %v9328 = vadd.f32 %v6042, %v9058
        %v9329 = vadd.f32 %v6047, %v9063
        %v9330 = vadd.f32 %v6052, %v9068
        %v9331 = vadd.f32 %v6057, %v9073
        %v9332 = vadd.f32 %v6062, %v9078
        %v9333 = vadd.f32 %v6067, %v9083
        %v9334 = vadd.f32 %v6072, %v9088
        %v9335 = vadd.f32 %v6077, %v9093
        %v9336 = vadd.f32 %v6082, %v9098
        %v9337 = vadd.f32 %v6087, %v9103
        %v9338 = vadd.f32 %v6092, %v9108
        %v9339 = vadd.f32 %v6097, %v9113
        %v9340 = vadd.f32 %v6102, %v9118
        %v9341 = vadd.f32 %v6107, %v9123
        %v9342 = vadd.f32 %v6112, %v9128
        %v9343 = vadd.f32 %v6117, %v9133
        %v9344 = vadd.f32 %v6122, %v9138
        %v9345 = vadd.f32 %v6127, %v9143
        %v9346 = vadd.f32 %v6132, %v9148
        %v9347 = vadd.f32 %v6137, %v9153
        %v9348 = vadd.f32 %v6142, %v9158
        %v9349 = vadd.f32 %v6147, %v9163
        %v9350 = vadd.f32 %v6152, %v9168
        %v9351 = vadd.f32 %v6157, %v9173
        %v9352 = vadd.f32 %v6162, %v9178
        %v9353 = vadd.f32 %v6167, %v9183
        %v9354 = vadd.f32 %v6172, %v9188
        %v9355 = vadd.f32 %v6177, %v9193
        %v9356 = vadd.f32 %v6182, %v9198
        %v9357 = vadd.f32 %v6187, %v9203
        %v9358 = vadd.f32 %v6192, %v9208
        %v9359 = vadd.f32 %v6197, %v9213
        %v9360 = vadd.f32 %v6202, %v9218
        %v9361 = vadd.f32 %v6207, %v9223
        %v9362 = vadd.f32 %v6212, %v9228
        %v9363 = vadd.f32 %v6217, %v9233
        %v9364 = vld [vmem:[%s2] sm:$0x1]
        %v9366 = vlaneseq
        %v9367 = vshrl.u32 %v9366, 7
        %v9368 = vsub.s32 0, %v9367
        %v9369 = vrot.slane %v9364, %v9368
        %v9371 = vadd.f32 %v9236, %v9369
        %v9372 = vadd.f32 %v9237, %v9369
        %v9373 = vadd.f32 %v9238, %v9369
        %v9374 = vadd.f32 %v9239, %v9369
        %v9375 = vadd.f32 %v9240, %v9369
        %v9376 = vadd.f32 %v9241, %v9369
        %v9377 = vadd.f32 %v9242, %v9369
        %v9378 = vadd.f32 %v9243, %v9369
        %v9379 = vadd.f32 %v9244, %v9369
        %v9380 = vadd.f32 %v9245, %v9369
        %v9381 = vadd.f32 %v9246, %v9369
        %v9382 = vadd.f32 %v9247, %v9369
        %v9383 = vadd.f32 %v9248, %v9369
        %v9384 = vadd.f32 %v9249, %v9369
        %v9385 = vadd.f32 %v9250, %v9369
        %v9386 = vadd.f32 %v9251, %v9369
        %v9387 = vadd.f32 %v9252, %v9369
        %v9388 = vadd.f32 %v9253, %v9369
        %v9389 = vadd.f32 %v9254, %v9369
        %v9390 = vadd.f32 %v9255, %v9369
        %v9391 = vadd.f32 %v9256, %v9369
        %v9392 = vadd.f32 %v9257, %v9369
        %v9393 = vadd.f32 %v9258, %v9369
        %v9394 = vadd.f32 %v9259, %v9369
        %v9395 = vadd.f32 %v9260, %v9369
        %v9396 = vadd.f32 %v9261, %v9369
        %v9397 = vadd.f32 %v9262, %v9369
        %v9398 = vadd.f32 %v9263, %v9369
        %v9399 = vadd.f32 %v9264, %v9369
        %v9400 = vadd.f32 %v9265, %v9369
        %v9401 = vadd.f32 %v9266, %v9369
        %v9402 = vadd.f32 %v9267, %v9369
        %v9403 = vadd.f32 %v9268, %v9369
        %v9404 = vadd.f32 %v9269, %v9369
        %v9405 = vadd.f32 %v9270, %v9369
        %v9406 = vadd.f32 %v9271, %v9369
        %v9407 = vadd.f32 %v9272, %v9369
        %v9408 = vadd.f32 %v9273, %v9369
        %v9409 = vadd.f32 %v9274, %v9369
        %v9410 = vadd.f32 %v9275, %v9369
        %v9411 = vadd.f32 %v9276, %v9369
        %v9412 = vadd.f32 %v9277, %v9369
        %v9413 = vadd.f32 %v9278, %v9369
        %v9414 = vadd.f32 %v9279, %v9369
        %v9415 = vadd.f32 %v9280, %v9369
        %v9416 = vadd.f32 %v9281, %v9369
        %v9417 = vadd.f32 %v9282, %v9369
        %v9418 = vadd.f32 %v9283, %v9369
        %v9419 = vadd.f32 %v9284, %v9369
        %v9420 = vadd.f32 %v9285, %v9369
        %v9421 = vadd.f32 %v9286, %v9369
        %v9422 = vadd.f32 %v9287, %v9369
        %v9423 = vadd.f32 %v9288, %v9369
        %v9424 = vadd.f32 %v9289, %v9369
        %v9425 = vadd.f32 %v9290, %v9369
        %v9426 = vadd.f32 %v9291, %v9369
        %v9427 = vadd.f32 %v9292, %v9369
        %v9428 = vadd.f32 %v9293, %v9369
        %v9429 = vadd.f32 %v9294, %v9369
        %v9430 = vadd.f32 %v9295, %v9369
        %v9431 = vadd.f32 %v9296, %v9369
        %v9432 = vadd.f32 %v9297, %v9369
        %v9433 = vadd.f32 %v9298, %v9369
        %v9434 = vadd.f32 %v9299, %v9369
        %v9435 = vadd.f32 %v9300, %v9369
        %v9436 = vadd.f32 %v9301, %v9369
        %v9437 = vadd.f32 %v9302, %v9369
        %v9438 = vadd.f32 %v9303, %v9369
        %v9439 = vadd.f32 %v9304, %v9369
        %v9440 = vadd.f32 %v9305, %v9369
        %v9441 = vadd.f32 %v9306, %v9369
        %v9442 = vadd.f32 %v9307, %v9369
        %v9443 = vadd.f32 %v9308, %v9369
        %v9444 = vadd.f32 %v9309, %v9369
        %v9445 = vadd.f32 %v9310, %v9369
        %v9446 = vadd.f32 %v9311, %v9369
        %v9447 = vadd.f32 %v9312, %v9369
        %v9448 = vadd.f32 %v9313, %v9369
        %v9449 = vadd.f32 %v9314, %v9369
        %v9450 = vadd.f32 %v9315, %v9369
        %v9451 = vadd.f32 %v9316, %v9369
        %v9452 = vadd.f32 %v9317, %v9369
        %v9453 = vadd.f32 %v9318, %v9369
        %v9454 = vadd.f32 %v9319, %v9369
        %v9455 = vadd.f32 %v9320, %v9369
        %v9456 = vadd.f32 %v9321, %v9369
        %v9457 = vadd.f32 %v9322, %v9369
        %v9458 = vadd.f32 %v9323, %v9369
        %v9459 = vadd.f32 %v9324, %v9369
        %v9460 = vadd.f32 %v9325, %v9369
        %v9461 = vadd.f32 %v9326, %v9369
        %v9462 = vadd.f32 %v9327, %v9369
        %v9463 = vadd.f32 %v9328, %v9369
        %v9464 = vadd.f32 %v9329, %v9369
        %v9465 = vadd.f32 %v9330, %v9369
        %v9466 = vadd.f32 %v9331, %v9369
        %v9467 = vadd.f32 %v9332, %v9369
        %v9468 = vadd.f32 %v9333, %v9369
        %v9469 = vadd.f32 %v9334, %v9369
        %v9470 = vadd.f32 %v9335, %v9369
        %v9471 = vadd.f32 %v9336, %v9369
        %v9472 = vadd.f32 %v9337, %v9369
        %v9473 = vadd.f32 %v9338, %v9369
        %v9474 = vadd.f32 %v9339, %v9369
        %v9475 = vadd.f32 %v9340, %v9369
        %v9476 = vadd.f32 %v9341, %v9369
        %v9477 = vadd.f32 %v9342, %v9369
        %v9478 = vadd.f32 %v9343, %v9369
        %v9479 = vadd.f32 %v9344, %v9369
        %v9480 = vadd.f32 %v9345, %v9369
        %v9481 = vadd.f32 %v9346, %v9369
        %v9482 = vadd.f32 %v9347, %v9369
        %v9483 = vadd.f32 %v9348, %v9369
        %v9484 = vadd.f32 %v9349, %v9369
        %v9485 = vadd.f32 %v9350, %v9369
        %v9486 = vadd.f32 %v9351, %v9369
        %v9487 = vadd.f32 %v9352, %v9369
        %v9488 = vadd.f32 %v9353, %v9369
        %v9489 = vadd.f32 %v9354, %v9369
        %v9490 = vadd.f32 %v9355, %v9369
        %v9491 = vadd.f32 %v9356, %v9369
        %v9492 = vadd.f32 %v9357, %v9369
        %v9493 = vadd.f32 %v9358, %v9369
        %v9494 = vadd.f32 %v9359, %v9369
        %v9495 = vadd.f32 %v9360, %v9369
        %v9496 = vadd.f32 %v9361, %v9369
        %v9497 = vadd.f32 %v9362, %v9369
        %v9498 = vadd.f32 %v9363, %v9369
        %v9499 = vmax.f32 %v9371, 0.0
        %v9500 = vmax.f32 %v9372, 0.0
        %v9501 = vmax.f32 %v9373, 0.0
        %v9502 = vmax.f32 %v9374, 0.0
        %v9503 = vmax.f32 %v9375, 0.0
        %v9504 = vmax.f32 %v9376, 0.0
        %v9505 = vmax.f32 %v9377, 0.0
        %v9506 = vmax.f32 %v9378, 0.0
        %v9507 = vmax.f32 %v9379, 0.0
        %v9508 = vmax.f32 %v9380, 0.0
        %v9509 = vmax.f32 %v9381, 0.0
        %v9510 = vmax.f32 %v9382, 0.0
        %v9511 = vmax.f32 %v9383, 0.0
        %v9512 = vmax.f32 %v9384, 0.0
        %v9513 = vmax.f32 %v9385, 0.0
        %v9514 = vmax.f32 %v9386, 0.0
        %v9515 = vmax.f32 %v9387, 0.0
        %v9516 = vmax.f32 %v9388, 0.0
        %v9517 = vmax.f32 %v9389, 0.0
        %v9518 = vmax.f32 %v9390, 0.0
        %v9519 = vmax.f32 %v9391, 0.0
        %v9520 = vmax.f32 %v9392, 0.0
        %v9521 = vmax.f32 %v9393, 0.0
        %v9522 = vmax.f32 %v9394, 0.0
        %v9523 = vmax.f32 %v9395, 0.0
        %v9524 = vmax.f32 %v9396, 0.0
        %v9525 = vmax.f32 %v9397, 0.0
        %v9526 = vmax.f32 %v9398, 0.0
        %v9527 = vmax.f32 %v9399, 0.0
        %v9528 = vmax.f32 %v9400, 0.0
        %v9529 = vmax.f32 %v9401, 0.0
        %v9530 = vmax.f32 %v9402, 0.0
        %v9531 = vmax.f32 %v9403, 0.0
        %v9532 = vmax.f32 %v9404, 0.0
        %v9533 = vmax.f32 %v9405, 0.0
        %v9534 = vmax.f32 %v9406, 0.0
        %v9535 = vmax.f32 %v9407, 0.0
        %v9536 = vmax.f32 %v9408, 0.0
        %v9537 = vmax.f32 %v9409, 0.0
        %v9538 = vmax.f32 %v9410, 0.0
        %v9539 = vmax.f32 %v9411, 0.0
        %v9540 = vmax.f32 %v9412, 0.0
        %v9541 = vmax.f32 %v9413, 0.0
        %v9542 = vmax.f32 %v9414, 0.0
        %v9543 = vmax.f32 %v9415, 0.0
        %v9544 = vmax.f32 %v9416, 0.0
        %v9545 = vmax.f32 %v9417, 0.0
        %v9546 = vmax.f32 %v9418, 0.0
        %v9547 = vmax.f32 %v9419, 0.0
        %v9548 = vmax.f32 %v9420, 0.0
        %v9549 = vmax.f32 %v9421, 0.0
        %v9550 = vmax.f32 %v9422, 0.0
        %v9551 = vmax.f32 %v9423, 0.0
        %v9552 = vmax.f32 %v9424, 0.0
        %v9553 = vmax.f32 %v9425, 0.0
        %v9554 = vmax.f32 %v9426, 0.0
        %v9555 = vmax.f32 %v9427, 0.0
        %v9556 = vmax.f32 %v9428, 0.0
        %v9557 = vmax.f32 %v9429, 0.0
        %v9558 = vmax.f32 %v9430, 0.0
        %v9559 = vmax.f32 %v9431, 0.0
        %v9560 = vmax.f32 %v9432, 0.0
        %v9561 = vmax.f32 %v9433, 0.0
        %v9562 = vmax.f32 %v9434, 0.0
        %v9563 = vmax.f32 %v9435, 0.0
        %v9564 = vmax.f32 %v9436, 0.0
        %v9565 = vmax.f32 %v9437, 0.0
        %v9566 = vmax.f32 %v9438, 0.0
        %v9567 = vmax.f32 %v9439, 0.0
        %v9568 = vmax.f32 %v9440, 0.0
        %v9569 = vmax.f32 %v9441, 0.0
        %v9570 = vmax.f32 %v9442, 0.0
        %v9571 = vmax.f32 %v9443, 0.0
        %v9572 = vmax.f32 %v9444, 0.0
        %v9573 = vmax.f32 %v9445, 0.0
        %v9574 = vmax.f32 %v9446, 0.0
        %v9575 = vmax.f32 %v9447, 0.0
        %v9576 = vmax.f32 %v9448, 0.0
        %v9577 = vmax.f32 %v9449, 0.0
        %v9578 = vmax.f32 %v9450, 0.0
        %v9579 = vmax.f32 %v9451, 0.0
        %v9580 = vmax.f32 %v9452, 0.0
        %v9581 = vmax.f32 %v9453, 0.0
        %v9582 = vmax.f32 %v9454, 0.0
        %v9583 = vmax.f32 %v9455, 0.0
        %v9584 = vmax.f32 %v9456, 0.0
        %v9585 = vmax.f32 %v9457, 0.0
        %v9586 = vmax.f32 %v9458, 0.0
        %v9587 = vmax.f32 %v9459, 0.0
        %v9588 = vmax.f32 %v9460, 0.0
        %v9589 = vmax.f32 %v9461, 0.0
        %v9590 = vmax.f32 %v9462, 0.0
        %v9591 = vmax.f32 %v9463, 0.0
        %v9592 = vmax.f32 %v9464, 0.0
        %v9593 = vmax.f32 %v9465, 0.0
        %v9594 = vmax.f32 %v9466, 0.0
        %v9595 = vmax.f32 %v9467, 0.0
        %v9596 = vmax.f32 %v9468, 0.0
        %v9597 = vmax.f32 %v9469, 0.0
        %v9598 = vmax.f32 %v9470, 0.0
        %v9599 = vmax.f32 %v9471, 0.0
        %v9600 = vmax.f32 %v9472, 0.0
        %v9601 = vmax.f32 %v9473, 0.0
        %v9602 = vmax.f32 %v9474, 0.0
        %v9603 = vmax.f32 %v9475, 0.0
        %v9604 = vmax.f32 %v9476, 0.0
        %v9605 = vmax.f32 %v9477, 0.0
        %v9606 = vmax.f32 %v9478, 0.0
        %v9607 = vmax.f32 %v9479, 0.0
        %v9608 = vmax.f32 %v9480, 0.0
        %v9609 = vmax.f32 %v9481, 0.0
        %v9610 = vmax.f32 %v9482, 0.0
        %v9611 = vmax.f32 %v9483, 0.0
        %v9612 = vmax.f32 %v9484, 0.0
        %v9613 = vmax.f32 %v9485, 0.0
        %v9614 = vmax.f32 %v9486, 0.0
        %v9615 = vmax.f32 %v9487, 0.0
        %v9616 = vmax.f32 %v9488, 0.0
        %v9617 = vmax.f32 %v9489, 0.0
        %v9618 = vmax.f32 %v9490, 0.0
        %v9619 = vmax.f32 %v9491, 0.0
        %v9620 = vmax.f32 %v9492, 0.0
        %v9621 = vmax.f32 %v9493, 0.0
        %v9622 = vmax.f32 %v9494, 0.0
        %v9623 = vmax.f32 %v9495, 0.0
        %v9624 = vmax.f32 %v9496, 0.0
        %v9625 = vmax.f32 %v9497, 0.0
        %v9626 = vmax.f32 %v9498, 0.0
        %vm9627 = vcmask 523264
        %9628 = vst.msk [vmem:[%s177] sm:$0xff] %vm9627, %v9499
        %9629 = vst.msk [vmem:[%s177 + $0x8] sm:$0xff] %vm9627, %v9500
        %9630 = vst.msk [vmem:[%s177 + $0x10] sm:$0xff] %vm9627, %v9501
        %9631 = vst.msk [vmem:[%s177 + $0x18] sm:$0xff] %vm9627, %v9502
        %9632 = vst.msk [vmem:[%s177 + $0x20] sm:$0xff] %vm9627, %v9503
        %9633 = vst.msk [vmem:[%s177 + $0x28] sm:$0xff] %vm9627, %v9504
        %9634 = vst.msk [vmem:[%s177 + $0x30] sm:$0xff] %vm9627, %v9505
        %9635 = vst.msk [vmem:[%s177 + $0x38] sm:$0xff] %vm9627, %v9506
        %9636 = vst.msk [vmem:[%s177 + $0x40] sm:$0xff] %vm9627, %v9507
        %9637 = vst.msk [vmem:[%s177 + $0x48] sm:$0xff] %vm9627, %v9508
        %9638 = vst.msk [vmem:[%s177 + $0x50] sm:$0xff] %vm9627, %v9509
        %9639 = vst.msk [vmem:[%s177 + $0x58] sm:$0xff] %vm9627, %v9510
        %9640 = vst.msk [vmem:[%s177 + $0x60] sm:$0xff] %vm9627, %v9511
        %9641 = vst.msk [vmem:[%s177 + $0x68] sm:$0xff] %vm9627, %v9512
        %9642 = vst.msk [vmem:[%s177 + $0x70] sm:$0xff] %vm9627, %v9513
        %9643 = vst.msk [vmem:[%s177 + $0x78] sm:$0xff] %vm9627, %v9514
        %9644 = vst.msk [vmem:[%s177 + $0x80] sm:$0xff] %vm9627, %v9515
        %9645 = vst.msk [vmem:[%s177 + $0x88] sm:$0xff] %vm9627, %v9516
        %9646 = vst.msk [vmem:[%s177 + $0x90] sm:$0xff] %vm9627, %v9517
        %9647 = vst.msk [vmem:[%s177 + $0x98] sm:$0xff] %vm9627, %v9518
        %9648 = vst.msk [vmem:[%s177 + $0xa0] sm:$0xff] %vm9627, %v9519
        %9649 = vst.msk [vmem:[%s177 + $0xa8] sm:$0xff] %vm9627, %v9520
        %9650 = vst.msk [vmem:[%s177 + $0xb0] sm:$0xff] %vm9627, %v9521
        %9651 = vst.msk [vmem:[%s177 + $0xb8] sm:$0xff] %vm9627, %v9522
        %9652 = vst.msk [vmem:[%s177 + $0xc0] sm:$0xff] %vm9627, %v9523
        %9653 = vst.msk [vmem:[%s177 + $0xc8] sm:$0xff] %vm9627, %v9524
        %9654 = vst.msk [vmem:[%s177 + $0xd0] sm:$0xff] %vm9627, %v9525
        %9655 = vst.msk [vmem:[%s177 + $0xd8] sm:$0xff] %vm9627, %v9526
        %9656 = vst.msk [vmem:[%s177 + $0xe0] sm:$0xff] %vm9627, %v9527
        %9657 = vst.msk [vmem:[%s177 + $0xe8] sm:$0xff] %vm9627, %v9528
        %9658 = vst.msk [vmem:[%s177 + $0xf0] sm:$0xff] %vm9627, %v9529
        %9659 = vst.msk [vmem:[%s177 + $0xf8] sm:$0xff] %vm9627, %v9530
        %9660 = vst.msk [vmem:[%s177 + $0x100] sm:$0xff] %vm9627, %v9531
        %9661 = vst.msk [vmem:[%s177 + $0x108] sm:$0xff] %vm9627, %v9532
        %9662 = vst.msk [vmem:[%s177 + $0x110] sm:$0xff] %vm9627, %v9533
        %9663 = vst.msk [vmem:[%s177 + $0x118] sm:$0xff] %vm9627, %v9534
        %9664 = vst.msk [vmem:[%s177 + $0x120] sm:$0xff] %vm9627, %v9535
        %9665 = vst.msk [vmem:[%s177 + $0x128] sm:$0xff] %vm9627, %v9536
        %9666 = vst.msk [vmem:[%s177 + $0x130] sm:$0xff] %vm9627, %v9537
        %9667 = vst.msk [vmem:[%s177 + $0x138] sm:$0xff] %vm9627, %v9538
        %9668 = vst.msk [vmem:[%s177 + $0x140] sm:$0xff] %vm9627, %v9539
        %9669 = vst.msk [vmem:[%s177 + $0x148] sm:$0xff] %vm9627, %v9540
        %9670 = vst.msk [vmem:[%s177 + $0x150] sm:$0xff] %vm9627, %v9541
        %9671 = vst.msk [vmem:[%s177 + $0x158] sm:$0xff] %vm9627, %v9542
        %9672 = vst.msk [vmem:[%s177 + $0x160] sm:$0xff] %vm9627, %v9543
        %9673 = vst.msk [vmem:[%s177 + $0x168] sm:$0xff] %vm9627, %v9544
        %9674 = vst.msk [vmem:[%s177 + $0x170] sm:$0xff] %vm9627, %v9545
        %9675 = vst.msk [vmem:[%s177 + $0x178] sm:$0xff] %vm9627, %v9546
        %9676 = vst.msk [vmem:[%s177 + $0x180] sm:$0xff] %vm9627, %v9547
        %9677 = vst.msk [vmem:[%s177 + $0x188] sm:$0xff] %vm9627, %v9548
        %9678 = vst.msk [vmem:[%s177 + $0x190] sm:$0xff] %vm9627, %v9549
        %9679 = vst.msk [vmem:[%s177 + $0x198] sm:$0xff] %vm9627, %v9550
        %9680 = vst.msk [vmem:[%s177 + $0x1a0] sm:$0xff] %vm9627, %v9551
        %9681 = vst.msk [vmem:[%s177 + $0x1a8] sm:$0xff] %vm9627, %v9552
        %9682 = vst.msk [vmem:[%s177 + $0x1b0] sm:$0xff] %vm9627, %v9553
        %9683 = vst.msk [vmem:[%s177 + $0x1b8] sm:$0xff] %vm9627, %v9554
        %9684 = vst.msk [vmem:[%s177 + $0x1c0] sm:$0xff] %vm9627, %v9555
        %9685 = vst.msk [vmem:[%s177 + $0x1c8] sm:$0xff] %vm9627, %v9556
        %9686 = vst.msk [vmem:[%s177 + $0x1d0] sm:$0xff] %vm9627, %v9557
        %9687 = vst.msk [vmem:[%s177 + $0x1d8] sm:$0xff] %vm9627, %v9558
        %9688 = vst.msk [vmem:[%s177 + $0x1e0] sm:$0xff] %vm9627, %v9559
        %9689 = vst.msk [vmem:[%s177 + $0x1e8] sm:$0xff] %vm9627, %v9560
        %9690 = vst.msk [vmem:[%s177 + $0x1f0] sm:$0xff] %vm9627, %v9561
        %9691 = vst.msk [vmem:[%s177 + $0x1f8] sm:$0xff] %vm9627, %v9562
        %9692 = vst.msk [vmem:[%s177 + $0x200] sm:$0xff] %vm9627, %v9563
        %9693 = vst.msk [vmem:[%s177 + $0x208] sm:$0xff] %vm9627, %v9564
        %9694 = vst.msk [vmem:[%s177 + $0x210] sm:$0xff] %vm9627, %v9565
        %9695 = vst.msk [vmem:[%s177 + $0x218] sm:$0xff] %vm9627, %v9566
        %9696 = vst.msk [vmem:[%s177 + $0x220] sm:$0xff] %vm9627, %v9567
        %9697 = vst.msk [vmem:[%s177 + $0x228] sm:$0xff] %vm9627, %v9568
        %9698 = vst.msk [vmem:[%s177 + $0x230] sm:$0xff] %vm9627, %v9569
        %9699 = vst.msk [vmem:[%s177 + $0x238] sm:$0xff] %vm9627, %v9570
        %9700 = vst.msk [vmem:[%s177 + $0x240] sm:$0xff] %vm9627, %v9571
        %9701 = vst.msk [vmem:[%s177 + $0x248] sm:$0xff] %vm9627, %v9572
        %9702 = vst.msk [vmem:[%s177 + $0x250] sm:$0xff] %vm9627, %v9573
        %9703 = vst.msk [vmem:[%s177 + $0x258] sm:$0xff] %vm9627, %v9574
        %9704 = vst.msk [vmem:[%s177 + $0x260] sm:$0xff] %vm9627, %v9575
        %9705 = vst.msk [vmem:[%s177 + $0x268] sm:$0xff] %vm9627, %v9576
        %9706 = vst.msk [vmem:[%s177 + $0x270] sm:$0xff] %vm9627, %v9577
        %9707 = vst.msk [vmem:[%s177 + $0x278] sm:$0xff] %vm9627, %v9578
        %9708 = vst.msk [vmem:[%s177 + $0x280] sm:$0xff] %vm9627, %v9579
        %9709 = vst.msk [vmem:[%s177 + $0x288] sm:$0xff] %vm9627, %v9580
        %9710 = vst.msk [vmem:[%s177 + $0x290] sm:$0xff] %vm9627, %v9581
        %9711 = vst.msk [vmem:[%s177 + $0x298] sm:$0xff] %vm9627, %v9582
        %9712 = vst.msk [vmem:[%s177 + $0x2a0] sm:$0xff] %vm9627, %v9583
        %9713 = vst.msk [vmem:[%s177 + $0x2a8] sm:$0xff] %vm9627, %v9584
        %9714 = vst.msk [vmem:[%s177 + $0x2b0] sm:$0xff] %vm9627, %v9585
        %9715 = vst.msk [vmem:[%s177 + $0x2b8] sm:$0xff] %vm9627, %v9586
        %9716 = vst.msk [vmem:[%s177 + $0x2c0] sm:$0xff] %vm9627, %v9587
        %9717 = vst.msk [vmem:[%s177 + $0x2c8] sm:$0xff] %vm9627, %v9588
        %9718 = vst.msk [vmem:[%s177 + $0x2d0] sm:$0xff] %vm9627, %v9589
        %9719 = vst.msk [vmem:[%s177 + $0x2d8] sm:$0xff] %vm9627, %v9590
        %9720 = vst.msk [vmem:[%s177 + $0x2e0] sm:$0xff] %vm9627, %v9591
        %9721 = vst.msk [vmem:[%s177 + $0x2e8] sm:$0xff] %vm9627, %v9592
        %9722 = vst.msk [vmem:[%s177 + $0x2f0] sm:$0xff] %vm9627, %v9593
        %9723 = vst.msk [vmem:[%s177 + $0x2f8] sm:$0xff] %vm9627, %v9594
        %9724 = vst.msk [vmem:[%s177 + $0x300] sm:$0xff] %vm9627, %v9595
        %9725 = vst.msk [vmem:[%s177 + $0x308] sm:$0xff] %vm9627, %v9596
        %9726 = vst.msk [vmem:[%s177 + $0x310] sm:$0xff] %vm9627, %v9597
        %9727 = vst.msk [vmem:[%s177 + $0x318] sm:$0xff] %vm9627, %v9598
        %9728 = vst.msk [vmem:[%s177 + $0x320] sm:$0xff] %vm9627, %v9599
        %9729 = vst.msk [vmem:[%s177 + $0x328] sm:$0xff] %vm9627, %v9600
        %9730 = vst.msk [vmem:[%s177 + $0x330] sm:$0xff] %vm9627, %v9601
        %9731 = vst.msk [vmem:[%s177 + $0x338] sm:$0xff] %vm9627, %v9602
        %9732 = vst.msk [vmem:[%s177 + $0x340] sm:$0xff] %vm9627, %v9603
        %9733 = vst.msk [vmem:[%s177 + $0x348] sm:$0xff] %vm9627, %v9604
        %9734 = vst.msk [vmem:[%s177 + $0x350] sm:$0xff] %vm9627, %v9605
        %9735 = vst.msk [vmem:[%s177 + $0x358] sm:$0xff] %vm9627, %v9606
        %9736 = vst.msk [vmem:[%s177 + $0x360] sm:$0xff] %vm9627, %v9607
        %9737 = vst.msk [vmem:[%s177 + $0x368] sm:$0xff] %vm9627, %v9608
        %9738 = vst.msk [vmem:[%s177 + $0x370] sm:$0xff] %vm9627, %v9609
        %9739 = vst.msk [vmem:[%s177 + $0x378] sm:$0xff] %vm9627, %v9610
        %9740 = vst.msk [vmem:[%s177 + $0x380] sm:$0xff] %vm9627, %v9611
        %9741 = vst.msk [vmem:[%s177 + $0x388] sm:$0xff] %vm9627, %v9612
        %9742 = vst.msk [vmem:[%s177 + $0x390] sm:$0xff] %vm9627, %v9613
        %9743 = vst.msk [vmem:[%s177 + $0x398] sm:$0xff] %vm9627, %v9614
        %9744 = vst.msk [vmem:[%s177 + $0x3a0] sm:$0xff] %vm9627, %v9615
        %9745 = vst.msk [vmem:[%s177 + $0x3a8] sm:$0xff] %vm9627, %v9616
        %9746 = vst.msk [vmem:[%s177 + $0x3b0] sm:$0xff] %vm9627, %v9617
        %9747 = vst.msk [vmem:[%s177 + $0x3b8] sm:$0xff] %vm9627, %v9618
        %9748 = vst.msk [vmem:[%s177 + $0x3c0] sm:$0xff] %vm9627, %v9619
        %9749 = vst.msk [vmem:[%s177 + $0x3c8] sm:$0xff] %vm9627, %v9620
        %9750 = vst.msk [vmem:[%s177 + $0x3d0] sm:$0xff] %vm9627, %v9621
        %9751 = vst.msk [vmem:[%s177 + $0x3d8] sm:$0xff] %vm9627, %v9622
        %9752 = vst.msk [vmem:[%s177 + $0x3e0] sm:$0xff] %vm9627, %v9623
        %9753 = vst.msk [vmem:[%s177 + $0x3e8] sm:$0xff] %vm9627, %v9624
        %9754 = vst.msk [vmem:[%s177 + $0x3f0] sm:$0xff] %vm9627, %v9625
        %9755 = vst.msk [vmem:[%s177 + $0x3f8] sm:$0xff] %vm9627, %v9626
        %s9756 = sand.u32 %s107, 1
        %s9757 = scalar_lea.sflag [#allocation3], %s9756
        %s9758 = sand.u32 %s107, 1
        %s9759 = smul.addr %s9758, 1024
        %s9760 = scalar_lea.vmem [#allocation2], %s9759
        // Predicated region
        $region33: #{tpu_custom_call.1} parent=31 // pred_check
          %p9761 = pneg %p117
        $region34: #{tpu_custom_call.1} parent=31 // pred_check_branch
          %9763 = sbr.rel (%p9761) target = $region36
        $region35: #{tpu_custom_call.1} parent=31 // pred_region
          %s9764 = smul.u32 32, %s22
          %s9766 = ssub.s32 16384, 16384
          %9767 = vsyncadd %s9757, %s9766
          %s9768 = smul.addr %s9764, 4
          %s9769 = smul.addr %s21, 128
          %s9770 = sadd.s32 %s9768, %s9769
          %s9771 = smul.addr %s9770, 128
          %s9772 = scalar_lea.hbm %s3, %s9771
          %s9773 = sshll.u32 %s9760, 4
          %s9774 = int_to_ptr.vmem [resolvable:$true] %s9773
          %9779 = dma.vmem_to_hbm [thread:$0]  %s9774, 16384, %s9772, %s9757, 128, 128, 8
        $region36: #{tpu_custom_call.1} parent=31 // pred_fallthru
          _
      $region32: #{tpu_custom_call.1} parent=5 // pred_fallthru
        _
      %p9780 = scmp.le.s32.totalorder 2, %s12
      // Predicated region
      $region37: #{tpu_custom_call.1} parent=5 // pred_check
        %p9781 = pneg %p9780
      $region38: #{tpu_custom_call.1} parent=5 // pred_check_branch
        %9783 = sbr.rel (%p9781) target = $region40
      $region39: #{tpu_custom_call.1} parent=5 // pred_region
        %s9784 = ssub.s32 %s12, 2
        // Predicated region
        $region41: #{tpu_custom_call.1} parent=39 // pred_check
          %p9785 = pneg %p123
        $region42: #{tpu_custom_call.1} parent=39 // pred_check_branch
          %9787 = sbr.rel (%p9785) target = $region44
        $region43: #{tpu_custom_call.1} parent=39 // pred_region
          %s9788 = sand.u32 %s108, 1
          %s9789 = scalar_lea.sflag [#allocation3], %s9788
          %s9790 = sand.u32 %s108, 1
          %s9791 = smul.addr %s9790, 1024
          %s9792 = scalar_lea.vmem [#allocation2], %s9791
          %9793 = dma.done %s9789, 16384
        $region44: #{tpu_custom_call.1} parent=39 // pred_fallthru
          _
      $region40: #{tpu_custom_call.1} parent=5 // pred_fallthru
        _
    $region6: #{tpu_custom_call.1} parent=1 // loop_footer
      %s16 = sadd.s32 1, %s12
    $region7: #{tpu_custom_call.1} parent=1 // loop_footer_branch
      %11 = sbr.rel target = $region3
    $region8: #{tpu_custom_call.1} parent=1 // loop_exit
      _
    %9794 = vsyncpa [#allocation3], 1
    %s9795 = scalar_lea.sflag [#allocation3], 1
    %9796 = vsyncpa %s9795, 1

</llo_original>
